<compile_context>
chip_gen: v6e
topology: v6e:2x2x1
jax: 0.10.0
libtpu: 0.0.40
codegen_flags: <defaults>
</compile_context>

<pallas_src>
import functools

import jax
import jax.numpy as jnp
from jax.experimental import pallas as pl
from jax.experimental.pallas import tpu as pltpu

EPS = 1e-5


def _has_multiple_tensorcores():
    """True on chips with >1 TensorCore per device (v4/v5p/v7x megacore)."""
    try:
        kind = jax.devices()[0].device_kind.lower()
    except Exception:
        return False
    return any(tag in kind for tag in ("v4", "v5p", "v7", "7x"))


_MULTI_TC = _has_multiple_tensorcores()


# ----------------------------- Pallas kernels ------------------------------

def _conv_gemm_kernel(w_ref, x_ref, b_ref, *rest, relu, has_res, emit_raw):
    """One-shot MXU GEMM (Cout,K)@(K,tm) with fp32 accumulation and a fused
    epilogue: BN shift (scale pre-folded into W, except when emit_raw),
    optional residual add, optional ReLU, optional raw-conv second output."""
    i = 0
    s_ref = None
    if emit_raw:                 # stem only: scale kept separate from weights
        s_ref = rest[i]
        i += 1
    r_ref = None
    if has_res:
        r_ref = rest[i]
        i += 1
    o_ref = rest[i]
    i += 1
    raw_ref = rest[i] if emit_raw else None

    acc = jnp.dot(w_ref[...], x_ref[...], preferred_element_type=jnp.float32)

    if emit_raw:
        raw_ref[...] = acc.astype(raw_ref.dtype)          # raw conv output (x1)
        y = acc * s_ref[...] + b_ref[...]
    else:
        y = acc + b_ref[...]                              # scale folded into W
    if has_res:
        y = y + r_ref[...].astype(jnp.float32)
    if relu:
        y = jnp.maximum(y, 0.0)
    o_ref[...] = y.astype(o_ref.dtype)


def _avgpool_fc_kernel(x_ref, wt_ref, b_ref, o_ref, *, inv_hw):
    # x: [C, N, H*W]; mean over spatial axis, then (NC,C)@(C,N) + b -> (NC, N).
    pooled_t = jnp.sum(x_ref[...].astype(jnp.float32), axis=2) * inv_hw  # (C,N)
    o_ref[...] = (jnp.dot(wt_ref[...], pooled_t,
                          preferred_element_type=jnp.float32) + b_ref[...])


# ------------------------------ GEMM wrapper --------------------------------

def conv_gemm(wt, cols, shift, scale=None, residual=None, relu=False,
              emit_raw=False):
    """act(W^T @ X^T [*scale] + shift [+ residual]) in lane-dense (Cout, M)
    orientation; bf16 MXU inputs, fp32 epilogue, bf16 activation output."""
    Cout, K = wt.shape
    K2, M = cols.shape
    assert K == K2
    has_res = residual is not None
    if emit_raw:
        assert scale is not None

    # M is the lane dim: split it only on multi-TC chips (so both cores get
    # work) and only when it yields >= 2 full 128-lane tiles; single block on
    # v5e/v6e to avoid per-step pipeline overhead.
    tm = 128 if (_MULTI_TC and M % 128 == 0 and M >= 256) else M
    grid = (M // tm,)

    args = [wt.astype(jnp.bfloat16), cols.astype(jnp.bfloat16),
            shift.reshape(Cout, 1).astype(jnp.float32)]
    in_specs = [
        pl.BlockSpec((Cout, K), lambda i: (0, 0)),
        pl.BlockSpec((K, tm), lambda i: (0, i)),
        pl.BlockSpec((Cout, 1), lambda i: (0, 0)),
    ]
    if emit_raw:
        args.append(scale.reshape(Cout, 1).astype(jnp.float32))
        in_specs.append(pl.BlockSpec((Cout, 1), lambda i: (0, 0)))
    if has_res:
        args.append(residual.astype(jnp.bfloat16))
        in_specs.append(pl.BlockSpec((Cout, tm), lambda i: (0, i)))

    o_spec = pl.BlockSpec((Cout, tm), lambda i: (0, i))
    o_sds = jax.ShapeDtypeStruct((Cout, M), jnp.bfloat16)
    if emit_raw:
        out_specs = (o_spec, pl.BlockSpec((Cout, tm), lambda i: (0, i)))
        out_shape = (o_sds, jax.ShapeDtypeStruct((Cout, M), jnp.float32))
    else:
        out_specs = o_spec
        out_shape = o_sds

    bytes_accessed = (Cout * K * 2 + K * M * 2 + Cout * 4
                      + (Cout * 4 if emit_raw else 0)
                      + (Cout * M * 2 if has_res else 0)
                      + Cout * M * 2 + (Cout * M * 4 if emit_raw else 0))
    cost = pl.CostEstimate(flops=2 * M * K * Cout, transcendentals=0,
                           bytes_accessed=bytes_accessed)

    return pl.pallas_call(
        functools.partial(_conv_gemm_kernel, relu=relu, has_res=has_res,
                          emit_raw=emit_raw),
        grid=grid,
        in_specs=in_specs,
        out_specs=out_specs,
        out_shape=out_shape,
        compiler_params=pltpu.CompilerParams(
            dimension_semantics=("parallel",)),
        cost_estimate=cost,
    )(*args)


# ------------------------------ conv helpers --------------------------------

def im2col_t(x, kh, kw, stride, pad):
    """x: [C, N, H, W] -> (X^T = [kh*kw*C, N*Ho*Wo], Ho, Wo). Zero padding.
    K-major layout so the GEMM RHS needs no extra transpose."""
    C, N, H, W = x.shape
    Ho = (H + 2 * pad - kh) // stride + 1
    Wo = (W + 2 * pad - kw) // stride + 1
    xp = jnp.pad(x, ((0, 0), (0, 0), (pad, pad), (pad, pad)))
    rows = []
    for ky in range(kh):
        for kx in range(kw):
            rows.append(xp[:, :, ky:ky + stride * Ho:stride,
                           kx:kx + stride * Wo:stride])
    patches = jnp.stack(rows, axis=0)            # [kh*kw, C, N, Ho, Wo]
    return patches.reshape(kh * kw * C, N * Ho * Wo), Ho, Wo


def conv_bn(x, w, bnp, stride, pad, relu, residual=None, emit_raw=False):
    """Conv (no bias) + folded eval-mode BN (+ residual add) (+ ReLU).
    Activations use (C, N, H, W) layout; output dtype bf16 (raw output fp32)."""
    Cin, N, H, W_ = x.shape
    kh, kw, _, Cout = w.shape
    cols, Ho, Wo = im2col_t(x, kh, kw, stride, pad)
    scale = bnp["gamma"] * jax.lax.rsqrt(bnp["var"] + EPS)
    shift = bnp["beta"] - bnp["mean"] * scale
    wk = w.reshape(kh * kw * Cin, Cout)
    if emit_raw:
        wt = wk.T                                 # keep scale in the epilogue
    else:
        wt = (wk * scale[None, :]).T              # fold BN scale into weights
    res2d = None if residual is None else residual.reshape(Cout, N * Ho * Wo)
    out = conv_gemm(wt, cols, shift, scale=scale if emit_raw else None,
                    residual=res2d, relu=relu, emit_raw=emit_raw)
    if emit_raw:
        y, raw = out
        return y.reshape(Cout, N, Ho, Wo), raw.reshape(Cout, N, Ho, Wo)
    return out.reshape(Cout, N, Ho, Wo)


def maxpool_3x3_s2_p1(x):
    """Running-maximum tree over the 9 strided windows (single fused XLA pass).
    Zero padding is equivalent to ignore-padding here because inputs are
    post-ReLU (non-negative)."""
    C, N, H, W = x.shape
    Ho = (H + 2 - 3) // 2 + 1
    Wo = (W + 2 - 3) // 2 + 1
    xp = jnp.pad(x, ((0, 0), (0, 0), (1, 1), (1, 1)))
    out = None
    for ky in range(3):
        for kx in range(3):
            win = xp[:, :, ky:ky + 2 * Ho:2, kx:kx + 2 * Wo:2]
            out = win if out is None else jnp.maximum(out, win)
    return out


def avgpool_fc(x, fc_w, fc_b):
    """Fused global average pool + classifier in one small Pallas kernel.
    Computes the transposed logits (NC, N) so no in-kernel transpose is
    needed; the final (N, NC) transpose happens on a 10x2 array in XLA."""
    C, N, H, W = x.shape
    HW = H * W
    NC = fc_w.shape[1]
    xr = x.reshape(C, N, HW)
    wt = fc_w.T.astype(jnp.float32)               # (NC, C), compile-time const
    b2 = fc_b.reshape(NC, 1).astype(jnp.float32)
    out_t = pl.pallas_call(
        functools.partial(_avgpool_fc_kernel, inv_hw=1.0 / float(HW)),
        grid=(1,),
        in_specs=[pl.BlockSpec((C, N, HW), lambda i: (0, 0, 0)),
                  pl.BlockSpec((NC, C), lambda i: (0, 0)),
                  pl.BlockSpec((NC, 1), lambda i: (0, 0))],
        out_specs=pl.BlockSpec((NC, N), lambda i: (0, 0)),
        out_shape=jax.ShapeDtypeStruct((NC, N), jnp.float32),
    )(xr, wt, b2)
    return out_t.T


# ------------------------------ model params --------------------------------

WIDTHS = (16, 32, 64, 128)     # scaled-down ResNet-18 widths
BLOCKS = (2, 2, 2, 2)
NUM_CLASSES = 10
IN_CH = 3


def init_params(key):
    ks = iter(jax.random.split(key, 256))

    def conv_w(kh, kw, cin, cout):
        fan_in = kh * kw * cin
        return (jax.random.normal(next(ks), (kh, kw, cin, cout), jnp.float32)
                * jnp.sqrt(2.0 / fan_in))

    def bn(c):
        return dict(gamma=1.0 + 0.1 * jax.random.normal(next(ks), (c,), jnp.float32),
                    beta=0.1 * jax.random.normal(next(ks), (c,), jnp.float32),
                    mean=jnp.zeros((c,), jnp.float32),
                    var=jnp.ones((c,), jnp.float32))

    def basic_block(cin, cout, stride):
        p = dict(conv1_w=conv_w(3, 3, cin, cout), bn1=bn(cout),
                 conv2_w=conv_w(3, 3, cout, cout), bn2=bn(cout))
        if stride != 1 or cin != cout:
            p["down_w"] = conv_w(1, 1, cin, cout)
            p["down_bn"] = bn(cout)
        return p

    params = dict(conv1_w=conv_w(7, 7, IN_CH, WIDTHS[0]), bn1=bn(WIDTHS[0]))
    cin = WIDTHS[0]
    for li, (cout, nblk) in enumerate(zip(WIDTHS, BLOCKS), start=1):
        stride = 1 if li == 1 else 2
        blocks = []
        for b in range(nblk):
            blocks.append(basic_block(cin if b == 0 else cout, cout,
                                      stride if b == 0 else 1))
        params[f"layer{li}"] = blocks
        cin = cout
    params["fc_w"] = (jax.random.normal(next(ks), (WIDTHS[-1], NUM_CLASSES),
                                        jnp.float32)
                      * jnp.sqrt(1.0 / WIDTHS[-1]))
    params["fc_b"] = 0.01 * jax.random.normal(next(ks), (NUM_CLASSES,),
                                              jnp.float32)
    return params


# ------------------------------ forward pass ---------------------------------

def basic_block_fwd(x, p, stride):
    if "down_w" in p:
        identity = conv_bn(x, p["down_w"], p["down_bn"], stride, 0, relu=False)
    else:
        identity = x
    out = conv_bn(x, p["conv1_w"], p["bn1"], stride, 1, relu=True)
    # conv2 + bn2 + residual add + final ReLU fused in one Pallas GEMM call.
    out = conv_bn(out, p["conv2_w"], p["bn2"], 1, 1, relu=True,
                  residual=identity)
    return out


def resnet_forward(params, x_nchw):
    # NCHW -> CNHW (channel-major) so every GEMM output is lane-dense over
    # M = N*Ho*Wo; activations stay bf16 between layers.
    x = jnp.transpose(x_nchw, (1, 0, 2, 3)).astype(jnp.bfloat16)
    # 7x7 stem computed once; the kernel emits both the raw conv output (x1)
    # and the conv+bn1+relu activation (x3).
    x3, x1 = conv_bn(x, params["conv1_w"], params["bn1"],
                     stride=2, pad=3, relu=True, emit_raw=True)
    x4 = maxpool_3x3_s2_p1(x3)

    feats = []
    h = x4
    for li in range(1, 5):
        for b, bp in enumerate(params[f"layer{li}"]):
            stride = 2 if (li > 1 and b == 0) else 1
            h = basic_block_fwd(h, bp, stride)
        feats.append(h)
    x5, x6, x7, x8 = feats

    x11 = avgpool_fc(x8, params["fc_w"], params["fc_b"])   # avgpool+flatten+fc

    to_nchw = lambda t: jnp.transpose(t, (1, 0, 2, 3)).astype(jnp.float32)
    return (x11, jnp.transpose(x1, (1, 0, 2, 3)),
            to_nchw(x5), to_nchw(x6), to_nchw(x7), to_nchw(x8))


# ---------------------------------- main -------------------------------------

if __name__ == "__main__":
    x = jax.random.normal(jax.random.PRNGKey(0), (2, 3, 32, 32), jnp.float32)
    params = init_params(jax.random.PRNGKey(1))

    fwd = jax.jit(lambda inp: resnet_forward(params, inp))
    outs = fwd(x)
    outs = jax.block_until_ready(outs)

    expected = [(2, NUM_CLASSES), (2, 16, 16, 16), (2, 16, 8, 8),
                (2, 32, 4, 4), (2, 64, 2, 2), (2, 128, 1, 1)]
    assert [tuple(o.shape) for o in outs] == expected, \
        [tuple(o.shape) for o in outs]
    print("KERNEL_OK")
</pallas_src>

<mosaic_0001>
module attributes {stable_mosaic.version = 11 : i64} {
  func.func @_conv_gemm_kernel(%arg0: i32, %arg1: memref<16x147xbf16, #tpu.memory_space<vmem>>, %arg2: memref<147x512xbf16, #tpu.memory_space<vmem>>, %arg3: memref<16x1xf32, #tpu.memory_space<vmem>>, %arg4: memref<16x1xf32, #tpu.memory_space<vmem>>, %arg5: memref<16x512xbf16, #tpu.memory_space<vmem>>, %arg6: memref<16x512xf32, #tpu.memory_space<vmem>>) attributes {dimension_semantics = [#tpu.dimension_semantics<parallel>], iteration_bounds = array<i64: 1>, scalar_prefetch = 0 : i64, scratch_operands = 0 : i64, tpu.core_type = #tpu.core_type<tc>, window_params = [{pipeline_mode = #tpu.pipeline_mode<synchronous>, transform_indices = @transform_0, window_bounds = array<i64: 16, 147>}, {transform_indices = @transform_1, window_bounds = array<i64: 147, 512>}, {pipeline_mode = #tpu.pipeline_mode<synchronous>, transform_indices = @transform_2, window_bounds = array<i64: 16, 1>}, {pipeline_mode = #tpu.pipeline_mode<synchronous>, transform_indices = @transform_3, window_bounds = array<i64: 16, 1>}, {transform_indices = @transform_4, window_bounds = array<i64: 16, 512>}, {transform_indices = @transform_5, window_bounds = array<i64: 16, 512>}]} {
    %c0 = arith.constant 0 : index
    %c0_0 = arith.constant 0 : index
    %0 = vector.load %arg1[%c0, %c0_0] : memref<16x147xbf16, #tpu.memory_space<vmem>>, vector<16x147xbf16>
    %c0_1 = arith.constant 0 : index
    %c0_2 = arith.constant 0 : index
    %1 = vector.load %arg2[%c0_1, %c0_2] : memref<147x512xbf16, #tpu.memory_space<vmem>>, vector<147x512xbf16>
    %cst = arith.constant dense<0.000000e+00> : vector<16x512xf32>
    %2 = tpu.matmul %0, %1, %cst {dimension_numbers = #tpu.dot_dimension_numbers<[1], [0], [0], [1], [0, 0, 1, 1], [], []>} : vector<16x147xbf16>, vector<147x512xbf16>, vector<16x512xf32> -> vector<16x512xf32>
    %c0_3 = arith.constant 0 : index
    %c0_4 = arith.constant 0 : index
    %3 = vector.load %arg6[%c0_3, %c0_4] : memref<16x512xf32, #tpu.memory_space<vmem>>, vector<16x512xf32>
    tpu.vector_store %arg6[%c0_3, %c0_4], %2 {strides = array<i32>} : memref<16x512xf32, #tpu.memory_space<vmem>>, vector<16x512xf32>,
    %c0_5 = arith.constant 0 : index
    %c0_6 = arith.constant 0 : index
    %4 = vector.load %arg4[%c0_5, %c0_6] : memref<16x1xf32, #tpu.memory_space<vmem>>, vector<16x1xf32>
    %5 = vector.broadcast %4 : vector<16x1xf32> to vector<16x512xf32>
    %6 = arith.mulf %2, %5 : vector<16x512xf32>
    %c0_7 = arith.constant 0 : index
    %c0_8 = arith.constant 0 : index
    %7 = vector.load %arg3[%c0_7, %c0_8] : memref<16x1xf32, #tpu.memory_space<vmem>>, vector<16x1xf32>
    %8 = vector.broadcast %7 : vector<16x1xf32> to vector<16x512xf32>
    %9 = arith.addf %6, %8 : vector<16x512xf32>
    %cst_9 = arith.constant 0.000000e+00 : f32
    %10 = vector.broadcast %cst_9 : f32 to vector<16x512xf32>
    %11 = arith.maximumf %9, %10 : vector<16x512xf32>
    %12 = arith.truncf %11 : vector<16x512xf32> to vector<16x512xbf16>
    %c0_10 = arith.constant 0 : index
    %c0_11 = arith.constant 0 : index
    %13 = vector.load %arg5[%c0_10, %c0_11] : memref<16x512xbf16, #tpu.memory_space<vmem>>, vector<16x512xbf16>
    tpu.vector_store %arg5[%c0_10, %c0_11], %12 {strides = array<i32>} : memref<16x512xbf16, #tpu.memory_space<vmem>>, vector<16x512xbf16>,
    return
  }
  func.func @transform_0(%arg0: i32) -> (i32, i32) {
    %c0_i32 = arith.constant 0 : i32
    %c0_i32_0 = arith.constant 0 : i32
    %c0_i32_1 = arith.constant 0 : i32
    return %c0_i32, %c0_i32_0 : i32, i32
  }
  func.func @transform_1(%arg0: i32) -> (i32, i32) {
    %c0_i32 = arith.constant 0 : i32
    %c0_i32_0 = arith.constant 0 : i32
    return %c0_i32, %arg0 : i32, i32
  }
  func.func @transform_2(%arg0: i32) -> (i32, i32) {
    %c0_i32 = arith.constant 0 : i32
    %c0_i32_0 = arith.constant 0 : i32
    %c0_i32_1 = arith.constant 0 : i32
    return %c0_i32, %c0_i32_0 : i32, i32
  }
  func.func @transform_3(%arg0: i32) -> (i32, i32) {
    %c0_i32 = arith.constant 0 : i32
    %c0_i32_0 = arith.constant 0 : i32
    %c0_i32_1 = arith.constant 0 : i32
    return %c0_i32, %c0_i32_0 : i32, i32
  }
  func.func @transform_4(%arg0: i32) -> (i32, i32) {
    %c0_i32 = arith.constant 0 : i32
    %c0_i32_0 = arith.constant 0 : i32
    return %c0_i32, %arg0 : i32, i32
  }
  func.func @transform_5(%arg0: i32) -> (i32, i32) {
    %c0_i32 = arith.constant 0 : i32
    %c0_i32_0 = arith.constant 0 : i32
    return %c0_i32, %arg0 : i32, i32
  }
}

module attributes {stable_mosaic.version = 11 : i64} {
  func.func @_conv_gemm_kernel(%arg0: i32, %arg1: memref<16x144xbf16, #tpu.memory_space<vmem>>, %arg2: memref<144x128xbf16, #tpu.memory_space<vmem>>, %arg3: memref<16x1xf32, #tpu.memory_space<vmem>>, %arg4: memref<16x128xbf16, #tpu.memory_space<vmem>>) attributes {dimension_semantics = [#tpu.dimension_semantics<parallel>], iteration_bounds = array<i64: 1>, scalar_prefetch = 0 : i64, scratch_operands = 0 : i64, tpu.core_type = #tpu.core_type<tc>, window_params = [{pipeline_mode = #tpu.pipeline_mode<synchronous>, transform_indices = @transform_0, window_bounds = array<i64: 16, 144>}, {transform_indices = @transform_1, window_bounds = array<i64: 144, 128>}, {pipeline_mode = #tpu.pipeline_mode<synchronous>, transform_indices = @transform_2, window_bounds = array<i64: 16, 1>}, {transform_indices = @transform_3, window_bounds = array<i64: 16, 128>}]} {
    %c0 = arith.constant 0 : index
    %c0_0 = arith.constant 0 : index
    %0 = vector.load %arg1[%c0, %c0_0] : memref<16x144xbf16, #tpu.memory_space<vmem>>, vector<16x144xbf16>
    %c0_1 = arith.constant 0 : index
    %c0_2 = arith.constant 0 : index
    %1 = vector.load %arg2[%c0_1, %c0_2] : memref<144x128xbf16, #tpu.memory_space<vmem>>, vector<144x128xbf16>
    %cst = arith.constant dense<0.000000e+00> : vector<16x128xf32>
    %2 = tpu.matmul %0, %1, %cst {dimension_numbers = #tpu.dot_dimension_numbers<[1], [0], [0], [1], [0, 0, 1, 1], [], []>} : vector<16x144xbf16>, vector<144x128xbf16>, vector<16x128xf32> -> vector<16x128xf32>
    %c0_3 = arith.constant 0 : index
    %c0_4 = arith.constant 0 : index
    %3 = vector.load %arg3[%c0_3, %c0_4] : memref<16x1xf32, #tpu.memory_space<vmem>>, vector<16x1xf32>
    %4 = vector.broadcast %3 : vector<16x1xf32> to vector<16x128xf32>
    %5 = arith.addf %2, %4 : vector<16x128xf32>
    %cst_5 = arith.constant 0.000000e+00 : f32
    %6 = vector.broadcast %cst_5 : f32 to vector<16x128xf32>
    %7 = arith.maximumf %5, %6 : vector<16x128xf32>
    %8 = arith.truncf %7 : vector<16x128xf32> to vector<16x128xbf16>
    %c0_6 = arith.constant 0 : index
    %c0_7 = arith.constant 0 : index
    %9 = vector.load %arg4[%c0_6, %c0_7] : memref<16x128xbf16, #tpu.memory_space<vmem>>, vector<16x128xbf16>
    tpu.vector_store %arg4[%c0_6, %c0_7], %8 {strides = array<i32>} : memref<16x128xbf16, #tpu.memory_space<vmem>>, vector<16x128xbf16>,
    return
  }
  func.func @transform_0(%arg0: i32) -> (i32, i32) {
    %c0_i32 = arith.constant 0 : i32
    %c0_i32_0 = arith.constant 0 : i32
    %c0_i32_1 = arith.constant 0 : i32
    return %c0_i32, %c0_i32_0 : i32, i32
  }
  func.func @transform_1(%arg0: i32) -> (i32, i32) {
    %c0_i32 = arith.constant 0 : i32
    %c0_i32_0 = arith.constant 0 : i32
    return %c0_i32, %arg0 : i32, i32
  }
  func.func @transform_2(%arg0: i32) -> (i32, i32) {
    %c0_i32 = arith.constant 0 : i32
    %c0_i32_0 = arith.constant 0 : i32
    %c0_i32_1 = arith.constant 0 : i32
    return %c0_i32, %c0_i32_0 : i32, i32
  }
  func.func @transform_3(%arg0: i32) -> (i32, i32) {
    %c0_i32 = arith.constant 0 : i32
    %c0_i32_0 = arith.constant 0 : i32
    return %c0_i32, %arg0 : i32, i32
  }
}

module attributes {stable_mosaic.version = 11 : i64} {
  func.func @_conv_gemm_kernel(%arg0: i32, %arg1: memref<16x144xbf16, #tpu.memory_space<vmem>>, %arg2: memref<144x128xbf16, #tpu.memory_space<vmem>>, %arg3: memref<16x1xf32, #tpu.memory_space<vmem>>, %arg4: memref<16x128xbf16, #tpu.memory_space<vmem>>, %arg5: memref<16x128xbf16, #tpu.memory_space<vmem>>) attributes {dimension_semantics = [#tpu.dimension_semantics<parallel>], iteration_bounds = array<i64: 1>, scalar_prefetch = 0 : i64, scratch_operands = 0 : i64, tpu.core_type = #tpu.core_type<tc>, window_params = [{pipeline_mode = #tpu.pipeline_mode<synchronous>, transform_indices = @transform_0, window_bounds = array<i64: 16, 144>}, {transform_indices = @transform_1, window_bounds = array<i64: 144, 128>}, {pipeline_mode = #tpu.pipeline_mode<synchronous>, transform_indices = @transform_2, window_bounds = array<i64: 16, 1>}, {transform_indices = @transform_3, window_bounds = array<i64: 16, 128>}, {transform_indices = @transform_4, window_bounds = array<i64: 16, 128>}]} {
    %c0 = arith.constant 0 : index
    %c0_0 = arith.constant 0 : index
    %0 = vector.load %arg1[%c0, %c0_0] : memref<16x144xbf16, #tpu.memory_space<vmem>>, vector<16x144xbf16>
    %c0_1 = arith.constant 0 : index
    %c0_2 = arith.constant 0 : index
    %1 = vector.load %arg2[%c0_1, %c0_2] : memref<144x128xbf16, #tpu.memory_space<vmem>>, vector<144x128xbf16>
    %cst = arith.constant dense<0.000000e+00> : vector<16x128xf32>
    %2 = tpu.matmul %0, %1, %cst {dimension_numbers = #tpu.dot_dimension_numbers<[1], [0], [0], [1], [0, 0, 1, 1], [], []>} : vector<16x144xbf16>, vector<144x128xbf16>, vector<16x128xf32> -> vector<16x128xf32>
    %c0_3 = arith.constant 0 : index
    %c0_4 = arith.constant 0 : index
    %3 = vector.load %arg3[%c0_3, %c0_4] : memref<16x1xf32, #tpu.memory_space<vmem>>, vector<16x1xf32>
    %4 = vector.broadcast %3 : vector<16x1xf32> to vector<16x128xf32>
    %5 = arith.addf %2, %4 : vector<16x128xf32>
    %c0_5 = arith.constant 0 : index
    %c0_6 = arith.constant 0 : index
    %6 = vector.load %arg4[%c0_5, %c0_6] : memref<16x128xbf16, #tpu.memory_space<vmem>>, vector<16x128xbf16>
    %7 = arith.extf %6 : vector<16x128xbf16> to vector<16x128xf32>
    %8 = arith.addf %5, %7 : vector<16x128xf32>
    %cst_7 = arith.constant 0.000000e+00 : f32
    %9 = vector.broadcast %cst_7 : f32 to vector<16x128xf32>
    %10 = arith.maximumf %8, %9 : vector<16x128xf32>
    %11 = arith.truncf %10 : vector<16x128xf32> to vector<16x128xbf16>
    %c0_8 = arith.constant 0 : index
    %c0_9 = arith.constant 0 : index
    %12 = vector.load %arg5[%c0_8, %c0_9] : memref<16x128xbf16, #tpu.memory_space<vmem>>, vector<16x128xbf16>
    tpu.vector_store %arg5[%c0_8, %c0_9], %11 {strides = array<i32>} : memref<16x128xbf16, #tpu.memory_space<vmem>>, vector<16x128xbf16>,
    return
  }
  func.func @transform_0(%arg0: i32) -> (i32, i32) {
    %c0_i32 = arith.constant 0 : i32
    %c0_i32_0 = arith.constant 0 : i32
    %c0_i32_1 = arith.constant 0 : i32
    return %c0_i32, %c0_i32_0 : i32, i32
  }
  func.func @transform_1(%arg0: i32) -> (i32, i32) {
    %c0_i32 = arith.constant 0 : i32
    %c0_i32_0 = arith.constant 0 : i32
    return %c0_i32, %arg0 : i32, i32
  }
  func.func @transform_2(%arg0: i32) -> (i32, i32) {
    %c0_i32 = arith.constant 0 : i32
    %c0_i32_0 = arith.constant 0 : i32
    %c0_i32_1 = arith.constant 0 : i32
    return %c0_i32, %c0_i32_0 : i32, i32
  }
  func.func @transform_3(%arg0: i32) -> (i32, i32) {
    %c0_i32 = arith.constant 0 : i32
    %c0_i32_0 = arith.constant 0 : i32
    return %c0_i32, %arg0 : i32, i32
  }
  func.func @transform_4(%arg0: i32) -> (i32, i32) {
    %c0_i32 = arith.constant 0 : i32
    %c0_i32_0 = arith.constant 0 : i32
    return %c0_i32, %arg0 : i32, i32
  }
}

module attributes {stable_mosaic.version = 11 : i64} {
  func.func @_conv_gemm_kernel(%arg0: i32, %arg1: memref<32x144xbf16, #tpu.memory_space<vmem>>, %arg2: memref<144x32xbf16, #tpu.memory_space<vmem>>, %arg3: memref<32x1xf32, #tpu.memory_space<vmem>>, %arg4: memref<32x32xbf16, #tpu.memory_space<vmem>>) attributes {dimension_semantics = [#tpu.dimension_semantics<parallel>], iteration_bounds = array<i64: 1>, scalar_prefetch = 0 : i64, scratch_operands = 0 : i64, tpu.core_type = #tpu.core_type<tc>, window_params = [{pipeline_mode = #tpu.pipeline_mode<synchronous>, transform_indices = @transform_0, window_bounds = array<i64: 32, 144>}, {transform_indices = @transform_1, window_bounds = array<i64: 144, 32>}, {pipeline_mode = #tpu.pipeline_mode<synchronous>, transform_indices = @transform_2, window_bounds = array<i64: 32, 1>}, {transform_indices = @transform_3, window_bounds = array<i64: 32, 32>}]} {
    %c0 = arith.constant 0 : index
    %c0_0 = arith.constant 0 : index
    %0 = vector.load %arg1[%c0, %c0_0] : memref<32x144xbf16, #tpu.memory_space<vmem>>, vector<32x144xbf16>
    %c0_1 = arith.constant 0 : index
    %c0_2 = arith.constant 0 : index
    %1 = vector.load %arg2[%c0_1, %c0_2] : memref<144x32xbf16, #tpu.memory_space<vmem>>, vector<144x32xbf16>
    %cst = arith.constant dense<0.000000e+00> : vector<32x32xf32>
    %2 = tpu.matmul %0, %1, %cst {dimension_numbers = #tpu.dot_dimension_numbers<[1], [0], [0], [1], [0, 0, 1, 1], [], []>} : vector<32x144xbf16>, vector<144x32xbf16>, vector<32x32xf32> -> vector<32x32xf32>
    %c0_3 = arith.constant 0 : index
    %c0_4 = arith.constant 0 : index
    %3 = vector.load %arg3[%c0_3, %c0_4] : memref<32x1xf32, #tpu.memory_space<vmem>>, vector<32x1xf32>
    %4 = vector.broadcast %3 : vector<32x1xf32> to vector<32x32xf32>
    %5 = arith.addf %2, %4 : vector<32x32xf32>
    %cst_5 = arith.constant 0.000000e+00 : f32
    %6 = vector.broadcast %cst_5 : f32 to vector<32x32xf32>
    %7 = arith.maximumf %5, %6 : vector<32x32xf32>
    %8 = arith.truncf %7 : vector<32x32xf32> to vector<32x32xbf16>
    %c0_6 = arith.constant 0 : index
    %c0_7 = arith.constant 0 : index
    %9 = vector.load %arg4[%c0_6, %c0_7] : memref<32x32xbf16, #tpu.memory_space<vmem>>, vector<32x32xbf16>
    tpu.vector_store %arg4[%c0_6, %c0_7], %8 {strides = array<i32>} : memref<32x32xbf16, #tpu.memory_space<vmem>>, vector<32x32xbf16>,
    return
  }
  func.func @transform_0(%arg0: i32) -> (i32, i32) {
    %c0_i32 = arith.constant 0 : i32
    %c0_i32_0 = arith.constant 0 : i32
    %c0_i32_1 = arith.constant 0 : i32
    return %c0_i32, %c0_i32_0 : i32, i32
  }
  func.func @transform_1(%arg0: i32) -> (i32, i32) {
    %c0_i32 = arith.constant 0 : i32
    %c0_i32_0 = arith.constant 0 : i32
    return %c0_i32, %arg0 : i32, i32
  }
  func.func @transform_2(%arg0: i32) -> (i32, i32) {
    %c0_i32 = arith.constant 0 : i32
    %c0_i32_0 = arith.constant 0 : i32
    %c0_i32_1 = arith.constant 0 : i32
    return %c0_i32, %c0_i32_0 : i32, i32
  }
  func.func @transform_3(%arg0: i32) -> (i32, i32) {
    %c0_i32 = arith.constant 0 : i32
    %c0_i32_0 = arith.constant 0 : i32
    return %c0_i32, %arg0 : i32, i32
  }
}

module attributes {stable_mosaic.version = 11 : i64} {
  func.func @_conv_gemm_kernel(%arg0: i32, %arg1: memref<32x16xbf16, #tpu.memory_space<vmem>>, %arg2: memref<16x32xbf16, #tpu.memory_space<vmem>>, %arg3: memref<32x1xf32, #tpu.memory_space<vmem>>, %arg4: memref<32x32xbf16, #tpu.memory_space<vmem>>) attributes {dimension_semantics = [#tpu.dimension_semantics<parallel>], iteration_bounds = array<i64: 1>, scalar_prefetch = 0 : i64, scratch_operands = 0 : i64, tpu.core_type = #tpu.core_type<tc>, window_params = [{pipeline_mode = #tpu.pipeline_mode<synchronous>, transform_indices = @transform_0, window_bounds = array<i64: 32, 16>}, {transform_indices = @transform_1, window_bounds = array<i64: 16, 32>}, {pipeline_mode = #tpu.pipeline_mode<synchronous>, transform_indices = @transform_2, window_bounds = array<i64: 32, 1>}, {transform_indices = @transform_3, window_bounds = array<i64: 32, 32>}]} {
    %c0 = arith.constant 0 : index
    %c0_0 = arith.constant 0 : index
    %0 = vector.load %arg1[%c0, %c0_0] : memref<32x16xbf16, #tpu.memory_space<vmem>>, vector<32x16xbf16>
    %c0_1 = arith.constant 0 : index
    %c0_2 = arith.constant 0 : index
    %1 = vector.load %arg2[%c0_1, %c0_2] : memref<16x32xbf16, #tpu.memory_space<vmem>>, vector<16x32xbf16>
    %cst = arith.constant dense<0.000000e+00> : vector<32x32xf32>
    %2 = tpu.matmul %0, %1, %cst {dimension_numbers = #tpu.dot_dimension_numbers<[1], [0], [0], [1], [0, 0, 1, 1], [], []>} : vector<32x16xbf16>, vector<16x32xbf16>, vector<32x32xf32> -> vector<32x32xf32>
    %c0_3 = arith.constant 0 : index
    %c0_4 = arith.constant 0 : index
    %3 = vector.load %arg3[%c0_3, %c0_4] : memref<32x1xf32, #tpu.memory_space<vmem>>, vector<32x1xf32>
    %4 = vector.broadcast %3 : vector<32x1xf32> to vector<32x32xf32>
    %5 = arith.addf %2, %4 : vector<32x32xf32>
    %6 = arith.truncf %5 : vector<32x32xf32> to vector<32x32xbf16>
    %c0_5 = arith.constant 0 : index
    %c0_6 = arith.constant 0 : index
    %7 = vector.load %arg4[%c0_5, %c0_6] : memref<32x32xbf16, #tpu.memory_space<vmem>>, vector<32x32xbf16>
    tpu.vector_store %arg4[%c0_5, %c0_6], %6 {strides = array<i32>} : memref<32x32xbf16, #tpu.memory_space<vmem>>, vector<32x32xbf16>,
    return
  }
  func.func @transform_0(%arg0: i32) -> (i32, i32) {
    %c0_i32 = arith.constant 0 : i32
    %c0_i32_0 = arith.constant 0 : i32
    %c0_i32_1 = arith.constant 0 : i32
    return %c0_i32, %c0_i32_0 : i32, i32
  }
  func.func @transform_1(%arg0: i32) -> (i32, i32) {
    %c0_i32 = arith.constant 0 : i32
    %c0_i32_0 = arith.constant 0 : i32
    return %c0_i32, %arg0 : i32, i32
  }
  func.func @transform_2(%arg0: i32) -> (i32, i32) {
    %c0_i32 = arith.constant 0 : i32
    %c0_i32_0 = arith.constant 0 : i32
    %c0_i32_1 = arith.constant 0 : i32
    return %c0_i32, %c0_i32_0 : i32, i32
  }
  func.func @transform_3(%arg0: i32) -> (i32, i32) {
    %c0_i32 = arith.constant 0 : i32
    %c0_i32_0 = arith.constant 0 : i32
    return %c0_i32, %arg0 : i32, i32
  }
}

module attributes {stable_mosaic.version = 11 : i64} {
  func.func @_conv_gemm_kernel(%arg0: i32, %arg1: memref<32x288xbf16, #tpu.memory_space<vmem>>, %arg2: memref<288x32xbf16, #tpu.memory_space<vmem>>, %arg3: memref<32x1xf32, #tpu.memory_space<vmem>>, %arg4: memref<32x32xbf16, #tpu.memory_space<vmem>>, %arg5: memref<32x32xbf16, #tpu.memory_space<vmem>>) attributes {dimension_semantics = [#tpu.dimension_semantics<parallel>], iteration_bounds = array<i64: 1>, scalar_prefetch = 0 : i64, scratch_operands = 0 : i64, tpu.core_type = #tpu.core_type<tc>, window_params = [{pipeline_mode = #tpu.pipeline_mode<synchronous>, transform_indices = @transform_0, window_bounds = array<i64: 32, 288>}, {transform_indices = @transform_1, window_bounds = array<i64: 288, 32>}, {pipeline_mode = #tpu.pipeline_mode<synchronous>, transform_indices = @transform_2, window_bounds = array<i64: 32, 1>}, {transform_indices = @transform_3, window_bounds = array<i64: 32, 32>}, {transform_indices = @transform_4, window_bounds = array<i64: 32, 32>}]} {
    %c0 = arith.constant 0 : index
    %c0_0 = arith.constant 0 : index
    %0 = vector.load %arg1[%c0, %c0_0] : memref<32x288xbf16, #tpu.memory_space<vmem>>, vector<32x288xbf16>
    %c0_1 = arith.constant 0 : index
    %c0_2 = arith.constant 0 : index
    %1 = vector.load %arg2[%c0_1, %c0_2] : memref<288x32xbf16, #tpu.memory_space<vmem>>, vector<288x32xbf16>
    %cst = arith.constant dense<0.000000e+00> : vector<32x32xf32>
    %2 = tpu.matmul %0, %1, %cst {dimension_numbers = #tpu.dot_dimension_numbers<[1], [0], [0], [1], [0, 0, 1, 1], [], []>} : vector<32x288xbf16>, vector<288x32xbf16>, vector<32x32xf32> -> vector<32x32xf32>
    %c0_3 = arith.constant 0 : index
    %c0_4 = arith.constant 0 : index
    %3 = vector.load %arg3[%c0_3, %c0_4] : memref<32x1xf32, #tpu.memory_space<vmem>>, vector<32x1xf32>
    %4 = vector.broadcast %3 : vector<32x1xf32> to vector<32x32xf32>
    %5 = arith.addf %2, %4 : vector<32x32xf32>
    %c0_5 = arith.constant 0 : index
    %c0_6 = arith.constant 0 : index
    %6 = vector.load %arg4[%c0_5, %c0_6] : memref<32x32xbf16, #tpu.memory_space<vmem>>, vector<32x32xbf16>
    %7 = arith.extf %6 : vector<32x32xbf16> to vector<32x32xf32>
    %8 = arith.addf %5, %7 : vector<32x32xf32>
    %cst_7 = arith.constant 0.000000e+00 : f32
    %9 = vector.broadcast %cst_7 : f32 to vector<32x32xf32>
    %10 = arith.maximumf %8, %9 : vector<32x32xf32>
    %11 = arith.truncf %10 : vector<32x32xf32> to vector<32x32xbf16>
    %c0_8 = arith.constant 0 : index
    %c0_9 = arith.constant 0 : index
    %12 = vector.load %arg5[%c0_8, %c0_9] : memref<32x32xbf16, #tpu.memory_space<vmem>>, vector<32x32xbf16>
    tpu.vector_store %arg5[%c0_8, %c0_9], %11 {strides = array<i32>} : memref<32x32xbf16, #tpu.memory_space<vmem>>, vector<32x32xbf16>,
    return
  }
  func.func @transform_0(%arg0: i32) -> (i32, i32) {
    %c0_i32 = arith.constant 0 : i32
    %c0_i32_0 = arith.constant 0 : i32
    %c0_i32_1 = arith.constant 0 : i32
    return %c0_i32, %c0_i32_0 : i32, i32
  }
  func.func @transform_1(%arg0: i32) -> (i32, i32) {
    %c0_i32 = arith.constant 0 : i32
    %c0_i32_0 = arith.constant 0 : i32
    return %c0_i32, %arg0 : i32, i32
  }
  func.func @transform_2(%arg0: i32) -> (i32, i32) {
    %c0_i32 = arith.constant 0 : i32
    %c0_i32_0 = arith.constant 0 : i32
    %c0_i32_1 = arith.constant 0 : i32
    return %c0_i32, %c0_i32_0 : i32, i32
  }
  func.func @transform_3(%arg0: i32) -> (i32, i32) {
    %c0_i32 = arith.constant 0 : i32
    %c0_i32_0 = arith.constant 0 : i32
    return %c0_i32, %arg0 : i32, i32
  }
  func.func @transform_4(%arg0: i32) -> (i32, i32) {
    %c0_i32 = arith.constant 0 : i32
    %c0_i32_0 = arith.constant 0 : i32
    return %c0_i32, %arg0 : i32, i32
  }
}

module attributes {stable_mosaic.version = 11 : i64} {
  func.func @_conv_gemm_kernel(%arg0: i32, %arg1: memref<32x288xbf16, #tpu.memory_space<vmem>>, %arg2: memref<288x32xbf16, #tpu.memory_space<vmem>>, %arg3: memref<32x1xf32, #tpu.memory_space<vmem>>, %arg4: memref<32x32xbf16, #tpu.memory_space<vmem>>) attributes {dimension_semantics = [#tpu.dimension_semantics<parallel>], iteration_bounds = array<i64: 1>, scalar_prefetch = 0 : i64, scratch_operands = 0 : i64, tpu.core_type = #tpu.core_type<tc>, window_params = [{pipeline_mode = #tpu.pipeline_mode<synchronous>, transform_indices = @transform_0, window_bounds = array<i64: 32, 288>}, {transform_indices = @transform_1, window_bounds = array<i64: 288, 32>}, {pipeline_mode = #tpu.pipeline_mode<synchronous>, transform_indices = @transform_2, window_bounds = array<i64: 32, 1>}, {transform_indices = @transform_3, window_bounds = array<i64: 32, 32>}]} {
    %c0 = arith.constant 0 : index
    %c0_0 = arith.constant 0 : index
    %0 = vector.load %arg1[%c0, %c0_0] : memref<32x288xbf16, #tpu.memory_space<vmem>>, vector<32x288xbf16>
    %c0_1 = arith.constant 0 : index
    %c0_2 = arith.constant 0 : index
    %1 = vector.load %arg2[%c0_1, %c0_2] : memref<288x32xbf16, #tpu.memory_space<vmem>>, vector<288x32xbf16>
    %cst = arith.constant dense<0.000000e+00> : vector<32x32xf32>
    %2 = tpu.matmul %0, %1, %cst {dimension_numbers = #tpu.dot_dimension_numbers<[1], [0], [0], [1], [0, 0, 1, 1], [], []>} : vector<32x288xbf16>, vector<288x32xbf16>, vector<32x32xf32> -> vector<32x32xf32>
    %c0_3 = arith.constant 0 : index
    %c0_4 = arith.constant 0 : index
    %3 = vector.load %arg3[%c0_3, %c0_4] : memref<32x1xf32, #tpu.memory_space<vmem>>, vector<32x1xf32>
    %4 = vector.broadcast %3 : vector<32x1xf32> to vector<32x32xf32>
    %5 = arith.addf %2, %4 : vector<32x32xf32>
    %cst_5 = arith.constant 0.000000e+00 : f32
    %6 = vector.broadcast %cst_5 : f32 to vector<32x32xf32>
    %7 = arith.maximumf %5, %6 : vector<32x32xf32>
    %8 = arith.truncf %7 : vector<32x32xf32> to vector<32x32xbf16>
    %c0_6 = arith.constant 0 : index
    %c0_7 = arith.constant 0 : index
    %9 = vector.load %arg4[%c0_6, %c0_7] : memref<32x32xbf16, #tpu.memory_space<vmem>>, vector<32x32xbf16>
    tpu.vector_store %arg4[%c0_6, %c0_7], %8 {strides = array<i32>} : memref<32x32xbf16, #tpu.memory_space<vmem>>, vector<32x32xbf16>,
    return
  }
  func.func @transform_0(%arg0: i32) -> (i32, i32) {
    %c0_i32 = arith.constant 0 : i32
    %c0_i32_0 = arith.constant 0 : i32
    %c0_i32_1 = arith.constant 0 : i32
    return %c0_i32, %c0_i32_0 : i32, i32
  }
  func.func @transform_1(%arg0: i32) -> (i32, i32) {
    %c0_i32 = arith.constant 0 : i32
    %c0_i32_0 = arith.constant 0 : i32
    return %c0_i32, %arg0 : i32, i32
  }
  func.func @transform_2(%arg0: i32) -> (i32, i32) {
    %c0_i32 = arith.constant 0 : i32
    %c0_i32_0 = arith.constant 0 : i32
    %c0_i32_1 = arith.constant 0 : i32
    return %c0_i32, %c0_i32_0 : i32, i32
  }
  func.func @transform_3(%arg0: i32) -> (i32, i32) {
    %c0_i32 = arith.constant 0 : i32
    %c0_i32_0 = arith.constant 0 : i32
    return %c0_i32, %arg0 : i32, i32
  }
}

module attributes {stable_mosaic.version = 11 : i64} {
  func.func @_conv_gemm_kernel(%arg0: i32, %arg1: memref<64x288xbf16, #tpu.memory_space<vmem>>, %arg2: memref<288x8xbf16, #tpu.memory_space<vmem>>, %arg3: memref<64x1xf32, #tpu.memory_space<vmem>>, %arg4: memref<64x8xbf16, #tpu.memory_space<vmem>>) attributes {dimension_semantics = [#tpu.dimension_semantics<parallel>], iteration_bounds = array<i64: 1>, scalar_prefetch = 0 : i64, scratch_operands = 0 : i64, tpu.core_type = #tpu.core_type<tc>, window_params = [{pipeline_mode = #tpu.pipeline_mode<synchronous>, transform_indices = @transform_0, window_bounds = array<i64: 64, 288>}, {transform_indices = @transform_1, window_bounds = array<i64: 288, 8>}, {pipeline_mode = #tpu.pipeline_mode<synchronous>, transform_indices = @transform_2, window_bounds = array<i64: 64, 1>}, {transform_indices = @transform_3, window_bounds = array<i64: 64, 8>}]} {
    %c0 = arith.constant 0 : index
    %c0_0 = arith.constant 0 : index
    %0 = vector.load %arg1[%c0, %c0_0] : memref<64x288xbf16, #tpu.memory_space<vmem>>, vector<64x288xbf16>
    %c0_1 = arith.constant 0 : index
    %c0_2 = arith.constant 0 : index
    %1 = vector.load %arg2[%c0_1, %c0_2] : memref<288x8xbf16, #tpu.memory_space<vmem>>, vector<288x8xbf16>
    %cst = arith.constant dense<0.000000e+00> : vector<64x8xf32>
    %2 = tpu.matmul %0, %1, %cst {dimension_numbers = #tpu.dot_dimension_numbers<[1], [0], [0], [1], [0, 0, 1, 1], [], []>} : vector<64x288xbf16>, vector<288x8xbf16>, vector<64x8xf32> -> vector<64x8xf32>
    %c0_3 = arith.constant 0 : index
    %c0_4 = arith.constant 0 : index
    %3 = vector.load %arg3[%c0_3, %c0_4] : memref<64x1xf32, #tpu.memory_space<vmem>>, vector<64x1xf32>
    %4 = vector.broadcast %3 : vector<64x1xf32> to vector<64x8xf32>
    %5 = arith.addf %2, %4 : vector<64x8xf32>
    %cst_5 = arith.constant 0.000000e+00 : f32
    %6 = vector.broadcast %cst_5 : f32 to vector<64x8xf32>
    %7 = arith.maximumf %5, %6 : vector<64x8xf32>
    %8 = arith.truncf %7 : vector<64x8xf32> to vector<64x8xbf16>
    %c0_6 = arith.constant 0 : index
    %c0_7 = arith.constant 0 : index
    %9 = vector.load %arg4[%c0_6, %c0_7] : memref<64x8xbf16, #tpu.memory_space<vmem>>, vector<64x8xbf16>
    tpu.vector_store %arg4[%c0_6, %c0_7], %8 {strides = array<i32>} : memref<64x8xbf16, #tpu.memory_space<vmem>>, vector<64x8xbf16>,
    return
  }
  func.func @transform_0(%arg0: i32) -> (i32, i32) {
    %c0_i32 = arith.constant 0 : i32
    %c0_i32_0 = arith.constant 0 : i32
    %c0_i32_1 = arith.constant 0 : i32
    return %c0_i32, %c0_i32_0 : i32, i32
  }
  func.func @transform_1(%arg0: i32) -> (i32, i32) {
    %c0_i32 = arith.constant 0 : i32
    %c0_i32_0 = arith.constant 0 : i32
    return %c0_i32, %arg0 : i32, i32
  }
  func.func @transform_2(%arg0: i32) -> (i32, i32) {
    %c0_i32 = arith.constant 0 : i32
    %c0_i32_0 = arith.constant 0 : i32
    %c0_i32_1 = arith.constant 0 : i32
    return %c0_i32, %c0_i32_0 : i32, i32
  }
  func.func @transform_3(%arg0: i32) -> (i32, i32) {
    %c0_i32 = arith.constant 0 : i32
    %c0_i32_0 = arith.constant 0 : i32
    return %c0_i32, %arg0 : i32, i32
  }
}

module attributes {stable_mosaic.version = 11 : i64} {
  func.func @_conv_gemm_kernel(%arg0: i32, %arg1: memref<64x32xbf16, #tpu.memory_space<vmem>>, %arg2: memref<32x8xbf16, #tpu.memory_space<vmem>>, %arg3: memref<64x1xf32, #tpu.memory_space<vmem>>, %arg4: memref<64x8xbf16, #tpu.memory_space<vmem>>) attributes {dimension_semantics = [#tpu.dimension_semantics<parallel>], iteration_bounds = array<i64: 1>, scalar_prefetch = 0 : i64, scratch_operands = 0 : i64, tpu.core_type = #tpu.core_type<tc>, window_params = [{pipeline_mode = #tpu.pipeline_mode<synchronous>, transform_indices = @transform_0, window_bounds = array<i64: 64, 32>}, {transform_indices = @transform_1, window_bounds = array<i64: 32, 8>}, {pipeline_mode = #tpu.pipeline_mode<synchronous>, transform_indices = @transform_2, window_bounds = array<i64: 64, 1>}, {transform_indices = @transform_3, window_bounds = array<i64: 64, 8>}]} {
    %c0 = arith.constant 0 : index
    %c0_0 = arith.constant 0 : index
    %0 = vector.load %arg1[%c0, %c0_0] : memref<64x32xbf16, #tpu.memory_space<vmem>>, vector<64x32xbf16>
    %c0_1 = arith.constant 0 : index
    %c0_2 = arith.constant 0 : index
    %1 = vector.load %arg2[%c0_1, %c0_2] : memref<32x8xbf16, #tpu.memory_space<vmem>>, vector<32x8xbf16>
    %cst = arith.constant dense<0.000000e+00> : vector<64x8xf32>
    %2 = tpu.matmul %0, %1, %cst {dimension_numbers = #tpu.dot_dimension_numbers<[1], [0], [0], [1], [0, 0, 1, 1], [], []>} : vector<64x32xbf16>, vector<32x8xbf16>, vector<64x8xf32> -> vector<64x8xf32>
    %c0_3 = arith.constant 0 : index
    %c0_4 = arith.constant 0 : index
    %3 = vector.load %arg3[%c0_3, %c0_4] : memref<64x1xf32, #tpu.memory_space<vmem>>, vector<64x1xf32>
    %4 = vector.broadcast %3 : vector<64x1xf32> to vector<64x8xf32>
    %5 = arith.addf %2, %4 : vector<64x8xf32>
    %6 = arith.truncf %5 : vector<64x8xf32> to vector<64x8xbf16>
    %c0_5 = arith.constant 0 : index
    %c0_6 = arith.constant 0 : index
    %7 = vector.load %arg4[%c0_5, %c0_6] : memref<64x8xbf16, #tpu.memory_space<vmem>>, vector<64x8xbf16>
    tpu.vector_store %arg4[%c0_5, %c0_6], %6 {strides = array<i32>} : memref<64x8xbf16, #tpu.memory_space<vmem>>, vector<64x8xbf16>,
    return
  }
  func.func @transform_0(%arg0: i32) -> (i32, i32) {
    %c0_i32 = arith.constant 0 : i32
    %c0_i32_0 = arith.constant 0 : i32
    %c0_i32_1 = arith.constant 0 : i32
    return %c0_i32, %c0_i32_0 : i32, i32
  }
  func.func @transform_1(%arg0: i32) -> (i32, i32) {
    %c0_i32 = arith.constant 0 : i32
    %c0_i32_0 = arith.constant 0 : i32
    return %c0_i32, %arg0 : i32, i32
  }
  func.func @transform_2(%arg0: i32) -> (i32, i32) {
    %c0_i32 = arith.constant 0 : i32
    %c0_i32_0 = arith.constant 0 : i32
    %c0_i32_1 = arith.constant 0 : i32
    return %c0_i32, %c0_i32_0 : i32, i32
  }
  func.func @transform_3(%arg0: i32) -> (i32, i32) {
    %c0_i32 = arith.constant 0 : i32
    %c0_i32_0 = arith.constant 0 : i32
    return %c0_i32, %arg0 : i32, i32
  }
}

module attributes {stable_mosaic.version = 11 : i64} {
  func.func @_conv_gemm_kernel(%arg0: i32, %arg1: memref<64x576xbf16, #tpu.memory_space<vmem>>, %arg2: memref<576x8xbf16, #tpu.memory_space<vmem>>, %arg3: memref<64x1xf32, #tpu.memory_space<vmem>>, %arg4: memref<64x8xbf16, #tpu.memory_space<vmem>>) attributes {dimension_semantics = [#tpu.dimension_semantics<parallel>], iteration_bounds = array<i64: 1>, scalar_prefetch = 0 : i64, scratch_operands = 0 : i64, tpu.core_type = #tpu.core_type<tc>, window_params = [{pipeline_mode = #tpu.pipeline_mode<synchronous>, transform_indices = @transform_0, window_bounds = array<i64: 64, 576>}, {transform_indices = @transform_1, window_bounds = array<i64: 576, 8>}, {pipeline_mode = #tpu.pipeline_mode<synchronous>, transform_indices = @transform_2, window_bounds = array<i64: 64, 1>}, {transform_indices = @transform_3, window_bounds = array<i64: 64, 8>}]} {
    %c0 = arith.constant 0 : index
    %c0_0 = arith.constant 0 : index
    %0 = vector.load %arg1[%c0, %c0_0] : memref<64x576xbf16, #tpu.memory_space<vmem>>, vector<64x576xbf16>
    %c0_1 = arith.constant 0 : index
    %c0_2 = arith.constant 0 : index
    %1 = vector.load %arg2[%c0_1, %c0_2] : memref<576x8xbf16, #tpu.memory_space<vmem>>, vector<576x8xbf16>
    %cst = arith.constant dense<0.000000e+00> : vector<64x8xf32>
    %2 = tpu.matmul %0, %1, %cst {dimension_numbers = #tpu.dot_dimension_numbers<[1], [0], [0], [1], [0, 0, 1, 1], [], []>} : vector<64x576xbf16>, vector<576x8xbf16>, vector<64x8xf32> -> vector<64x8xf32>
    %c0_3 = arith.constant 0 : index
    %c0_4 = arith.constant 0 : index
    %3 = vector.load %arg3[%c0_3, %c0_4] : memref<64x1xf32, #tpu.memory_space<vmem>>, vector<64x1xf32>
    %4 = vector.broadcast %3 : vector<64x1xf32> to vector<64x8xf32>
    %5 = arith.addf %2, %4 : vector<64x8xf32>
    %cst_5 = arith.constant 0.000000e+00 : f32
    %6 = vector.broadcast %cst_5 : f32 to vector<64x8xf32>
    %7 = arith.maximumf %5, %6 : vector<64x8xf32>
    %8 = arith.truncf %7 : vector<64x8xf32> to vector<64x8xbf16>
    %c0_6 = arith.constant 0 : index
    %c0_7 = arith.constant 0 : index
    %9 = vector.load %arg4[%c0_6, %c0_7] : memref<64x8xbf16, #tpu.memory_space<vmem>>, vector<64x8xbf16>
    tpu.vector_store %arg4[%c0_6, %c0_7], %8 {strides = array<i32>} : memref<64x8xbf16, #tpu.memory_space<vmem>>, vector<64x8xbf16>,
    return
  }
  func.func @transform_0(%arg0: i32) -> (i32, i32) {
    %c0_i32 = arith.constant 0 : i32
    %c0_i32_0 = arith.constant 0 : i32
    %c0_i32_1 = arith.constant 0 : i32
    return %c0_i32, %c0_i32_0 : i32, i32
  }
  func.func @transform_1(%arg0: i32) -> (i32, i32) {
    %c0_i32 = arith.constant 0 : i32
    %c0_i32_0 = arith.constant 0 : i32
    return %c0_i32, %arg0 : i32, i32
  }
  func.func @transform_2(%arg0: i32) -> (i32, i32) {
    %c0_i32 = arith.constant 0 : i32
    %c0_i32_0 = arith.constant 0 : i32
    %c0_i32_1 = arith.constant 0 : i32
    return %c0_i32, %c0_i32_0 : i32, i32
  }
  func.func @transform_3(%arg0: i32) -> (i32, i32) {
    %c0_i32 = arith.constant 0 : i32
    %c0_i32_0 = arith.constant 0 : i32
    return %c0_i32, %arg0 : i32, i32
  }
}

module attributes {stable_mosaic.version = 11 : i64} {
  func.func @_conv_gemm_kernel(%arg0: i32, %arg1: memref<64x576xbf16, #tpu.memory_space<vmem>>, %arg2: memref<576x8xbf16, #tpu.memory_space<vmem>>, %arg3: memref<64x1xf32, #tpu.memory_space<vmem>>, %arg4: memref<64x8xbf16, #tpu.memory_space<vmem>>, %arg5: memref<64x8xbf16, #tpu.memory_space<vmem>>) attributes {dimension_semantics = [#tpu.dimension_semantics<parallel>], iteration_bounds = array<i64: 1>, scalar_prefetch = 0 : i64, scratch_operands = 0 : i64, tpu.core_type = #tpu.core_type<tc>, window_params = [{pipeline_mode = #tpu.pipeline_mode<synchronous>, transform_indices = @transform_0, window_bounds = array<i64: 64, 576>}, {transform_indices = @transform_1, window_bounds = array<i64: 576, 8>}, {pipeline_mode = #tpu.pipeline_mode<synchronous>, transform_indices = @transform_2, window_bounds = array<i64: 64, 1>}, {transform_indices = @transform_3, window_bounds = array<i64: 64, 8>}, {transform_indices = @transform_4, window_bounds = array<i64: 64, 8>}]} {
    %c0 = arith.constant 0 : index
    %c0_0 = arith.constant 0 : index
    %0 = vector.load %arg1[%c0, %c0_0] : memref<64x576xbf16, #tpu.memory_space<vmem>>, vector<64x576xbf16>
    %c0_1 = arith.constant 0 : index
    %c0_2 = arith.constant 0 : index
    %1 = vector.load %arg2[%c0_1, %c0_2] : memref<576x8xbf16, #tpu.memory_space<vmem>>, vector<576x8xbf16>
    %cst = arith.constant dense<0.000000e+00> : vector<64x8xf32>
    %2 = tpu.matmul %0, %1, %cst {dimension_numbers = #tpu.dot_dimension_numbers<[1], [0], [0], [1], [0, 0, 1, 1], [], []>} : vector<64x576xbf16>, vector<576x8xbf16>, vector<64x8xf32> -> vector<64x8xf32>
    %c0_3 = arith.constant 0 : index
    %c0_4 = arith.constant 0 : index
    %3 = vector.load %arg3[%c0_3, %c0_4] : memref<64x1xf32, #tpu.memory_space<vmem>>, vector<64x1xf32>
    %4 = vector.broadcast %3 : vector<64x1xf32> to vector<64x8xf32>
    %5 = arith.addf %2, %4 : vector<64x8xf32>
    %c0_5 = arith.constant 0 : index
    %c0_6 = arith.constant 0 : index
    %6 = vector.load %arg4[%c0_5, %c0_6] : memref<64x8xbf16, #tpu.memory_space<vmem>>, vector<64x8xbf16>
    %7 = arith.extf %6 : vector<64x8xbf16> to vector<64x8xf32>
    %8 = arith.addf %5, %7 : vector<64x8xf32>
    %cst_7 = arith.constant 0.000000e+00 : f32
    %9 = vector.broadcast %cst_7 : f32 to vector<64x8xf32>
    %10 = arith.maximumf %8, %9 : vector<64x8xf32>
    %11 = arith.truncf %10 : vector<64x8xf32> to vector<64x8xbf16>
    %c0_8 = arith.constant 0 : index
    %c0_9 = arith.constant 0 : index
    %12 = vector.load %arg5[%c0_8, %c0_9] : memref<64x8xbf16, #tpu.memory_space<vmem>>, vector<64x8xbf16>
    tpu.vector_store %arg5[%c0_8, %c0_9], %11 {strides = array<i32>} : memref<64x8xbf16, #tpu.memory_space<vmem>>, vector<64x8xbf16>,
    return
  }
  func.func @transform_0(%arg0: i32) -> (i32, i32) {
    %c0_i32 = arith.constant 0 : i32
    %c0_i32_0 = arith.constant 0 : i32
    %c0_i32_1 = arith.constant 0 : i32
    return %c0_i32, %c0_i32_0 : i32, i32
  }
  func.func @transform_1(%arg0: i32) -> (i32, i32) {
    %c0_i32 = arith.constant 0 : i32
    %c0_i32_0 = arith.constant 0 : i32
    return %c0_i32, %arg0 : i32, i32
  }
  func.func @transform_2(%arg0: i32) -> (i32, i32) {
    %c0_i32 = arith.constant 0 : i32
    %c0_i32_0 = arith.constant 0 : i32
    %c0_i32_1 = arith.constant 0 : i32
    return %c0_i32, %c0_i32_0 : i32, i32
  }
  func.func @transform_3(%arg0: i32) -> (i32, i32) {
    %c0_i32 = arith.constant 0 : i32
    %c0_i32_0 = arith.constant 0 : i32
    return %c0_i32, %arg0 : i32, i32
  }
  func.func @transform_4(%arg0: i32) -> (i32, i32) {
    %c0_i32 = arith.constant 0 : i32
    %c0_i32_0 = arith.constant 0 : i32
    return %c0_i32, %arg0 : i32, i32
  }
}

module attributes {stable_mosaic.version = 11 : i64} {
  func.func @_conv_gemm_kernel(%arg0: i32, %arg1: memref<128x576xbf16, #tpu.memory_space<vmem>>, %arg2: memref<576x2xbf16, #tpu.memory_space<vmem>>, %arg3: memref<128x1xf32, #tpu.memory_space<vmem>>, %arg4: memref<128x2xbf16, #tpu.memory_space<vmem>>) attributes {dimension_semantics = [#tpu.dimension_semantics<parallel>], iteration_bounds = array<i64: 1>, scalar_prefetch = 0 : i64, scratch_operands = 0 : i64, tpu.core_type = #tpu.core_type<tc>, window_params = [{pipeline_mode = #tpu.pipeline_mode<synchronous>, transform_indices = @transform_0, window_bounds = array<i64: 128, 576>}, {transform_indices = @transform_1, window_bounds = array<i64: 576, 2>}, {pipeline_mode = #tpu.pipeline_mode<synchronous>, transform_indices = @transform_2, window_bounds = array<i64: 128, 1>}, {transform_indices = @transform_3, window_bounds = array<i64: 128, 2>}]} {
    %c0 = arith.constant 0 : index
    %c0_0 = arith.constant 0 : index
    %0 = vector.load %arg1[%c0, %c0_0] : memref<128x576xbf16, #tpu.memory_space<vmem>>, vector<128x576xbf16>
    %c0_1 = arith.constant 0 : index
    %c0_2 = arith.constant 0 : index
    %1 = vector.load %arg2[%c0_1, %c0_2] : memref<576x2xbf16, #tpu.memory_space<vmem>>, vector<576x2xbf16>
    %cst = arith.constant dense<0.000000e+00> : vector<128x2xf32>
    %2 = tpu.matmul %0, %1, %cst {dimension_numbers = #tpu.dot_dimension_numbers<[1], [0], [0], [1], [0, 0, 1, 1], [], []>} : vector<128x576xbf16>, vector<576x2xbf16>, vector<128x2xf32> -> vector<128x2xf32>
    %c0_3 = arith.constant 0 : index
    %c0_4 = arith.constant 0 : index
    %3 = vector.load %arg3[%c0_3, %c0_4] : memref<128x1xf32, #tpu.memory_space<vmem>>, vector<128x1xf32>
    %4 = vector.broadcast %3 : vector<128x1xf32> to vector<128x2xf32>
    %5 = arith.addf %2, %4 : vector<128x2xf32>
    %cst_5 = arith.constant 0.000000e+00 : f32
    %6 = vector.broadcast %cst_5 : f32 to vector<128x2xf32>
    %7 = arith.maximumf %5, %6 : vector<128x2xf32>
    %8 = arith.truncf %7 : vector<128x2xf32> to vector<128x2xbf16>
    %c0_6 = arith.constant 0 : index
    %c0_7 = arith.constant 0 : index
    %9 = vector.load %arg4[%c0_6, %c0_7] : memref<128x2xbf16, #tpu.memory_space<vmem>>, vector<128x2xbf16>
    tpu.vector_store %arg4[%c0_6, %c0_7], %8 {strides = array<i32>} : memref<128x2xbf16, #tpu.memory_space<vmem>>, vector<128x2xbf16>,
    return
  }
  func.func @transform_0(%arg0: i32) -> (i32, i32) {
    %c0_i32 = arith.constant 0 : i32
    %c0_i32_0 = arith.constant 0 : i32
    %c0_i32_1 = arith.constant 0 : i32
    return %c0_i32, %c0_i32_0 : i32, i32
  }
  func.func @transform_1(%arg0: i32) -> (i32, i32) {
    %c0_i32 = arith.constant 0 : i32
    %c0_i32_0 = arith.constant 0 : i32
    return %c0_i32, %arg0 : i32, i32
  }
  func.func @transform_2(%arg0: i32) -> (i32, i32) {
    %c0_i32 = arith.constant 0 : i32
    %c0_i32_0 = arith.constant 0 : i32
    %c0_i32_1 = arith.constant 0 : i32
    return %c0_i32, %c0_i32_0 : i32, i32
  }
  func.func @transform_3(%arg0: i32) -> (i32, i32) {
    %c0_i32 = arith.constant 0 : i32
    %c0_i32_0 = arith.constant 0 : i32
    return %c0_i32, %arg0 : i32, i32
  }
}

module attributes {stable_mosaic.version = 11 : i64} {
  func.func @_conv_gemm_kernel(%arg0: i32, %arg1: memref<128x1152xbf16, #tpu.memory_space<vmem>>, %arg2: memref<1152x2xbf16, #tpu.memory_space<vmem>>, %arg3: memref<128x1xf32, #tpu.memory_space<vmem>>, %arg4: memref<128x2xbf16, #tpu.memory_space<vmem>>, %arg5: memref<128x2xbf16, #tpu.memory_space<vmem>>) attributes {dimension_semantics = [#tpu.dimension_semantics<parallel>], iteration_bounds = array<i64: 1>, scalar_prefetch = 0 : i64, scratch_operands = 0 : i64, tpu.core_type = #tpu.core_type<tc>, window_params = [{pipeline_mode = #tpu.pipeline_mode<synchronous>, transform_indices = @transform_0, window_bounds = array<i64: 128, 1152>}, {transform_indices = @transform_1, window_bounds = array<i64: 1152, 2>}, {pipeline_mode = #tpu.pipeline_mode<synchronous>, transform_indices = @transform_2, window_bounds = array<i64: 128, 1>}, {transform_indices = @transform_3, window_bounds = array<i64: 128, 2>}, {transform_indices = @transform_4, window_bounds = array<i64: 128, 2>}]} {
    %c0 = arith.constant 0 : index
    %c0_0 = arith.constant 0 : index
    %0 = vector.load %arg1[%c0, %c0_0] : memref<128x1152xbf16, #tpu.memory_space<vmem>>, vector<128x1152xbf16>
    %c0_1 = arith.constant 0 : index
    %c0_2 = arith.constant 0 : index
    %1 = vector.load %arg2[%c0_1, %c0_2] : memref<1152x2xbf16, #tpu.memory_space<vmem>>, vector<1152x2xbf16>
    %cst = arith.constant dense<0.000000e+00> : vector<128x2xf32>
    %2 = tpu.matmul %0, %1, %cst {dimension_numbers = #tpu.dot_dimension_numbers<[1], [0], [0], [1], [0, 0, 1, 1], [], []>} : vector<128x1152xbf16>, vector<1152x2xbf16>, vector<128x2xf32> -> vector<128x2xf32>
    %c0_3 = arith.constant 0 : index
    %c0_4 = arith.constant 0 : index
    %3 = vector.load %arg3[%c0_3, %c0_4] : memref<128x1xf32, #tpu.memory_space<vmem>>, vector<128x1xf32>
    %4 = vector.broadcast %3 : vector<128x1xf32> to vector<128x2xf32>
    %5 = arith.addf %2, %4 : vector<128x2xf32>
    %c0_5 = arith.constant 0 : index
    %c0_6 = arith.constant 0 : index
    %6 = vector.load %arg4[%c0_5, %c0_6] : memref<128x2xbf16, #tpu.memory_space<vmem>>, vector<128x2xbf16>
    %7 = arith.extf %6 : vector<128x2xbf16> to vector<128x2xf32>
    %8 = arith.addf %5, %7 : vector<128x2xf32>
    %cst_7 = arith.constant 0.000000e+00 : f32
    %9 = vector.broadcast %cst_7 : f32 to vector<128x2xf32>
    %10 = arith.maximumf %8, %9 : vector<128x2xf32>
    %11 = arith.truncf %10 : vector<128x2xf32> to vector<128x2xbf16>
    %c0_8 = arith.constant 0 : index
    %c0_9 = arith.constant 0 : index
    %12 = vector.load %arg5[%c0_8, %c0_9] : memref<128x2xbf16, #tpu.memory_space<vmem>>, vector<128x2xbf16>
    tpu.vector_store %arg5[%c0_8, %c0_9], %11 {strides = array<i32>} : memref<128x2xbf16, #tpu.memory_space<vmem>>, vector<128x2xbf16>,
    return
  }
  func.func @transform_0(%arg0: i32) -> (i32, i32) {
    %c0_i32 = arith.constant 0 : i32
    %c0_i32_0 = arith.constant 0 : i32
    %c0_i32_1 = arith.constant 0 : i32
    return %c0_i32, %c0_i32_0 : i32, i32
  }
  func.func @transform_1(%arg0: i32) -> (i32, i32) {
    %c0_i32 = arith.constant 0 : i32
    %c0_i32_0 = arith.constant 0 : i32
    return %c0_i32, %arg0 : i32, i32
  }
  func.func @transform_2(%arg0: i32) -> (i32, i32) {
    %c0_i32 = arith.constant 0 : i32
    %c0_i32_0 = arith.constant 0 : i32
    %c0_i32_1 = arith.constant 0 : i32
    return %c0_i32, %c0_i32_0 : i32, i32
  }
  func.func @transform_3(%arg0: i32) -> (i32, i32) {
    %c0_i32 = arith.constant 0 : i32
    %c0_i32_0 = arith.constant 0 : i32
    return %c0_i32, %arg0 : i32, i32
  }
  func.func @transform_4(%arg0: i32) -> (i32, i32) {
    %c0_i32 = arith.constant 0 : i32
    %c0_i32_0 = arith.constant 0 : i32
    return %c0_i32, %arg0 : i32, i32
  }
}

module attributes {stable_mosaic.version = 11 : i64} {
  func.func @_conv_gemm_kernel(%arg0: i32, %arg1: memref<128x64xbf16, #tpu.memory_space<vmem>>, %arg2: memref<64x2xbf16, #tpu.memory_space<vmem>>, %arg3: memref<128x1xf32, #tpu.memory_space<vmem>>, %arg4: memref<128x2xbf16, #tpu.memory_space<vmem>>) attributes {dimension_semantics = [#tpu.dimension_semantics<parallel>], iteration_bounds = array<i64: 1>, scalar_prefetch = 0 : i64, scratch_operands = 0 : i64, tpu.core_type = #tpu.core_type<tc>, window_params = [{pipeline_mode = #tpu.pipeline_mode<synchronous>, transform_indices = @transform_0, window_bounds = array<i64: 128, 64>}, {transform_indices = @transform_1, window_bounds = array<i64: 64, 2>}, {pipeline_mode = #tpu.pipeline_mode<synchronous>, transform_indices = @transform_2, window_bounds = array<i64: 128, 1>}, {transform_indices = @transform_3, window_bounds = array<i64: 128, 2>}]} {
    %c0 = arith.constant 0 : index
    %c0_0 = arith.constant 0 : index
    %0 = vector.load %arg1[%c0, %c0_0] : memref<128x64xbf16, #tpu.memory_space<vmem>>, vector<128x64xbf16>
    %c0_1 = arith.constant 0 : index
    %c0_2 = arith.constant 0 : index
    %1 = vector.load %arg2[%c0_1, %c0_2] : memref<64x2xbf16, #tpu.memory_space<vmem>>, vector<64x2xbf16>
    %cst = arith.constant dense<0.000000e+00> : vector<128x2xf32>
    %2 = tpu.matmul %0, %1, %cst {dimension_numbers = #tpu.dot_dimension_numbers<[1], [0], [0], [1], [0, 0, 1, 1], [], []>} : vector<128x64xbf16>, vector<64x2xbf16>, vector<128x2xf32> -> vector<128x2xf32>
    %c0_3 = arith.constant 0 : index
    %c0_4 = arith.constant 0 : index
    %3 = vector.load %arg3[%c0_3, %c0_4] : memref<128x1xf32, #tpu.memory_space<vmem>>, vector<128x1xf32>
    %4 = vector.broadcast %3 : vector<128x1xf32> to vector<128x2xf32>
    %5 = arith.addf %2, %4 : vector<128x2xf32>
    %6 = arith.truncf %5 : vector<128x2xf32> to vector<128x2xbf16>
    %c0_5 = arith.constant 0 : index
    %c0_6 = arith.constant 0 : index
    %7 = vector.load %arg4[%c0_5, %c0_6] : memref<128x2xbf16, #tpu.memory_space<vmem>>, vector<128x2xbf16>
    tpu.vector_store %arg4[%c0_5, %c0_6], %6 {strides = array<i32>} : memref<128x2xbf16, #tpu.memory_space<vmem>>, vector<128x2xbf16>,
    return
  }
  func.func @transform_0(%arg0: i32) -> (i32, i32) {
    %c0_i32 = arith.constant 0 : i32
    %c0_i32_0 = arith.constant 0 : i32
    %c0_i32_1 = arith.constant 0 : i32
    return %c0_i32, %c0_i32_0 : i32, i32
  }
  func.func @transform_1(%arg0: i32) -> (i32, i32) {
    %c0_i32 = arith.constant 0 : i32
    %c0_i32_0 = arith.constant 0 : i32
    return %c0_i32, %arg0 : i32, i32
  }
  func.func @transform_2(%arg0: i32) -> (i32, i32) {
    %c0_i32 = arith.constant 0 : i32
    %c0_i32_0 = arith.constant 0 : i32
    %c0_i32_1 = arith.constant 0 : i32
    return %c0_i32, %c0_i32_0 : i32, i32
  }
  func.func @transform_3(%arg0: i32) -> (i32, i32) {
    %c0_i32 = arith.constant 0 : i32
    %c0_i32_0 = arith.constant 0 : i32
    return %c0_i32, %arg0 : i32, i32
  }
}

module attributes {stable_mosaic.version = 11 : i64} {
  func.func @_conv_gemm_kernel(%arg0: i32, %arg1: memref<128x1152xbf16, #tpu.memory_space<vmem>>, %arg2: memref<1152x2xbf16, #tpu.memory_space<vmem>>, %arg3: memref<128x1xf32, #tpu.memory_space<vmem>>, %arg4: memref<128x2xbf16, #tpu.memory_space<vmem>>) attributes {dimension_semantics = [#tpu.dimension_semantics<parallel>], iteration_bounds = array<i64: 1>, scalar_prefetch = 0 : i64, scratch_operands = 0 : i64, tpu.core_type = #tpu.core_type<tc>, window_params = [{pipeline_mode = #tpu.pipeline_mode<synchronous>, transform_indices = @transform_0, window_bounds = array<i64: 128, 1152>}, {transform_indices = @transform_1, window_bounds = array<i64: 1152, 2>}, {pipeline_mode = #tpu.pipeline_mode<synchronous>, transform_indices = @transform_2, window_bounds = array<i64: 128, 1>}, {transform_indices = @transform_3, window_bounds = array<i64: 128, 2>}]} {
    %c0 = arith.constant 0 : index
    %c0_0 = arith.constant 0 : index
    %0 = vector.load %arg1[%c0, %c0_0] : memref<128x1152xbf16, #tpu.memory_space<vmem>>, vector<128x1152xbf16>
    %c0_1 = arith.constant 0 : index
    %c0_2 = arith.constant 0 : index
    %1 = vector.load %arg2[%c0_1, %c0_2] : memref<1152x2xbf16, #tpu.memory_space<vmem>>, vector<1152x2xbf16>
    %cst = arith.constant dense<0.000000e+00> : vector<128x2xf32>
    %2 = tpu.matmul %0, %1, %cst {dimension_numbers = #tpu.dot_dimension_numbers<[1], [0], [0], [1], [0, 0, 1, 1], [], []>} : vector<128x1152xbf16>, vector<1152x2xbf16>, vector<128x2xf32> -> vector<128x2xf32>
    %c0_3 = arith.constant 0 : index
    %c0_4 = arith.constant 0 : index
    %3 = vector.load %arg3[%c0_3, %c0_4] : memref<128x1xf32, #tpu.memory_space<vmem>>, vector<128x1xf32>
    %4 = vector.broadcast %3 : vector<128x1xf32> to vector<128x2xf32>
    %5 = arith.addf %2, %4 : vector<128x2xf32>
    %cst_5 = arith.constant 0.000000e+00 : f32
    %6 = vector.broadcast %cst_5 : f32 to vector<128x2xf32>
    %7 = arith.maximumf %5, %6 : vector<128x2xf32>
    %8 = arith.truncf %7 : vector<128x2xf32> to vector<128x2xbf16>
    %c0_6 = arith.constant 0 : index
    %c0_7 = arith.constant 0 : index
    %9 = vector.load %arg4[%c0_6, %c0_7] : memref<128x2xbf16, #tpu.memory_space<vmem>>, vector<128x2xbf16>
    tpu.vector_store %arg4[%c0_6, %c0_7], %8 {strides = array<i32>} : memref<128x2xbf16, #tpu.memory_space<vmem>>, vector<128x2xbf16>,
    return
  }
  func.func @transform_0(%arg0: i32) -> (i32, i32) {
    %c0_i32 = arith.constant 0 : i32
    %c0_i32_0 = arith.constant 0 : i32
    %c0_i32_1 = arith.constant 0 : i32
    return %c0_i32, %c0_i32_0 : i32, i32
  }
  func.func @transform_1(%arg0: i32) -> (i32, i32) {
    %c0_i32 = arith.constant 0 : i32
    %c0_i32_0 = arith.constant 0 : i32
    return %c0_i32, %arg0 : i32, i32
  }
  func.func @transform_2(%arg0: i32) -> (i32, i32) {
    %c0_i32 = arith.constant 0 : i32
    %c0_i32_0 = arith.constant 0 : i32
    %c0_i32_1 = arith.constant 0 : i32
    return %c0_i32, %c0_i32_0 : i32, i32
  }
  func.func @transform_3(%arg0: i32) -> (i32, i32) {
    %c0_i32 = arith.constant 0 : i32
    %c0_i32_0 = arith.constant 0 : i32
    return %c0_i32, %arg0 : i32, i32
  }
}

module attributes {stable_mosaic.version = 11 : i64} {
  func.func @_avgpool_fc_kernel(%arg0: i32, %arg1: memref<128x2x1xbf16, #tpu.memory_space<vmem>>, %arg2: memref<10x128xf32, #tpu.memory_space<vmem>>, %arg3: memref<10x1xf32, #tpu.memory_space<vmem>>, %arg4: memref<10x2xf32, #tpu.memory_space<vmem>>) attributes {dimension_semantics = [#tpu.dimension_semantics<arbitrary>], iteration_bounds = array<i64: 1>, scalar_prefetch = 0 : i64, scratch_operands = 0 : i64, tpu.core_type = #tpu.core_type<tc>, window_params = [{pipeline_mode = #tpu.pipeline_mode<synchronous>, transform_indices = @transform_0, window_bounds = array<i64: 128, 2, 1>}, {pipeline_mode = #tpu.pipeline_mode<synchronous>, transform_indices = @transform_1, window_bounds = array<i64: 10, 128>}, {pipeline_mode = #tpu.pipeline_mode<synchronous>, transform_indices = @transform_2, window_bounds = array<i64: 10, 1>}, {pipeline_mode = #tpu.pipeline_mode<synchronous>, transform_indices = @transform_3, window_bounds = array<i64: 10, 2>}]} {
    %c0 = arith.constant 0 : index
    %c0_0 = arith.constant 0 : index
    %c0_1 = arith.constant 0 : index
    %0 = vector.load %arg1[%c0, %c0_0, %c0_1] : memref<128x2x1xbf16, #tpu.memory_space<vmem>>, vector<128x2x1xbf16>
    %1 = arith.extf %0 : vector<128x2x1xbf16> to vector<128x2x1xf32>
    %cst = arith.constant dense<0.000000e+00> : vector<128x2xf32>
    %2 = vector.multi_reduction <add>, %1, %cst [2] : vector<128x2x1xf32> to vector<128x2xf32>
    %cst_2 = arith.constant 1.000000e+00 : f32
    %3 = vector.broadcast %cst_2 : f32 to vector<128x2xf32>
    %4 = arith.mulf %2, %3 : vector<128x2xf32>
    %c0_3 = arith.constant 0 : index
    %c0_4 = arith.constant 0 : index
    %5 = vector.load %arg2[%c0_3, %c0_4] : memref<10x128xf32, #tpu.memory_space<vmem>>, vector<10x128xf32>
    %cst_5 = arith.constant dense<0.000000e+00> : vector<10x2xf32>
    %6 = tpu.matmul %5, %4, %cst_5 {dimension_numbers = #tpu.dot_dimension_numbers<[1], [0], [0], [1], [0, 0, 1, 1], [], []>} : vector<10x128xf32>, vector<128x2xf32>, vector<10x2xf32> -> vector<10x2xf32>
    %c0_6 = arith.constant 0 : index
    %c0_7 = arith.constant 0 : index
    %7 = vector.load %arg3[%c0_6, %c0_7] : memref<10x1xf32, #tpu.memory_space<vmem>>, vector<10x1xf32>
    %8 = vector.broadcast %7 : vector<10x1xf32> to vector<10x2xf32>
    %9 = arith.addf %6, %8 : vector<10x2xf32>
    %c0_8 = arith.constant 0 : index
    %c0_9 = arith.constant 0 : index
    %10 = vector.load %arg4[%c0_8, %c0_9] : memref<10x2xf32, #tpu.memory_space<vmem>>, vector<10x2xf32>
    tpu.vector_store %arg4[%c0_8, %c0_9], %9 {strides = array<i32>} : memref<10x2xf32, #tpu.memory_space<vmem>>, vector<10x2xf32>,
    return
  }
  func.func @transform_0(%arg0: i32) -> (i32, i32, i32) {
    %c0_i32 = arith.constant 0 : i32
    %c0_i32_0 = arith.constant 0 : i32
    %c0_i32_1 = arith.constant 0 : i32
    %c0_i32_2 = arith.constant 0 : i32
    return %c0_i32, %c0_i32_0, %c0_i32_1 : i32, i32, i32
  }
  func.func @transform_1(%arg0: i32) -> (i32, i32) {
    %c0_i32 = arith.constant 0 : i32
    %c0_i32_0 = arith.constant 0 : i32
    %c0_i32_1 = arith.constant 0 : i32
    return %c0_i32, %c0_i32_0 : i32, i32
  }
  func.func @transform_2(%arg0: i32) -> (i32, i32) {
    %c0_i32 = arith.constant 0 : i32
    %c0_i32_0 = arith.constant 0 : i32
    %c0_i32_1 = arith.constant 0 : i32
    return %c0_i32, %c0_i32_0 : i32, i32
  }
  func.func @transform_3(%arg0: i32) -> (i32, i32) {
    %c0_i32 = arith.constant 0 : i32
    %c0_i32_0 = arith.constant 0 : i32
    %c0_i32_1 = arith.constant 0 : i32
    return %c0_i32, %c0_i32_0 : i32, i32
  }
}

</mosaic_0001>

<llo_original>
// kernel: _lambda_.23
$region0: #{_lambda_.23}
  #allocation0 [shape = 'u32[]', space=smem, size = 0x4, offset = 0x4, fixed_abs, tag = 'smem constant byte address 0x4 - core index']
  #allocation1 [shape = 'u32[144,128]{1,0:T(1,128)}', space=vmem, size = 0x12000, scoped, tag = 'internal scratch']
  %s0 = inlined_call_operand.vmem [shape: bf16[16,147], index: 0, kind: input, shape index: {}]
  %s1 = inlined_call_operand.vmem [shape: bf16[147,512], index: 1, kind: input, shape index: {}]
  %s2 = inlined_call_operand.vmem [shape: f32[16,1], index: 2, kind: input, shape index: {}]
  %s3 = inlined_call_operand.vmem [shape: f32[16,1], index: 3, kind: input, shape index: {}]
  %s4 = inlined_call_operand.vmem [shape: bf16[16,512], index: 4, kind: output, shape index: {0}]
  %s5 = inlined_call_operand.vmem [shape: f32[16,512], index: 5, kind: output, shape index: {1}]
  %6 = xla_tuple %s4, %s5
  %s7 = sld [smem:[#allocation0]]
  $region34: #{_lambda_.23} parent=0
    _
  %s9 = ssub.s32 1, %s7
  %s10 = scalar_select 0, %s9, %s7
  // Predicated region
  $region2: #{_lambda_.23} parent=0 // pred_check
    _
  $region3: #{_lambda_.23} parent=0 // pred_check_branch
    %12 = sbr.rel (0) target = $region5
  $region4: #{_lambda_.23} parent=0 // pred_region
    _
  $region5: #{_lambda_.23} parent=0 // pred_fallthru
    _
  // Predicated region
  $region6: #{_lambda_.23} parent=0 // pred_check
    _
  $region7: #{_lambda_.23} parent=0 // pred_check_branch
    %14 = sbr.rel (0) target = $region9
  $region8: #{_lambda_.23} parent=0 // pred_region
    _
  $region9: #{_lambda_.23} parent=0 // pred_fallthru
    _
  // Predicated region
  $region10: #{_lambda_.23} parent=0 // pred_check
    _
  $region11: #{_lambda_.23} parent=0 // pred_check_branch
    %16 = sbr.rel (0) target = $region13
  $region12: #{_lambda_.23} parent=0 // pred_region
    _
  $region13: #{_lambda_.23} parent=0 // pred_fallthru
    _
  // Predicated region
  $region14: #{_lambda_.23} parent=0 // pred_check
    _
  $region15: #{_lambda_.23} parent=0 // pred_check_branch
    %18 = sbr.rel (0) target = $region17
  $region16: #{_lambda_.23} parent=0 // pred_region
    _
  $region17: #{_lambda_.23} parent=0 // pred_fallthru
    _
  %v20 = vld [vmem:[%s0] sm:$0xff]
  %v21 = vld [vmem:[%s0 + $0x8] sm:$0xff]
  %v22 = vld [vmem:[%s1] sm:$0xff]
  %v23 = vld [vmem:[%s1 + $0x8] sm:$0xff]
  %v24 = vld [vmem:[%s1 + $0x10] sm:$0xff]
  %v25 = vld [vmem:[%s1 + $0x18] sm:$0xff]
  %v26 = vld [vmem:[%s1 + $0x20] sm:$0xff]
  %v27 = vld [vmem:[%s1 + $0x28] sm:$0xff]
  %v28 = vld [vmem:[%s1 + $0x30] sm:$0xff]
  %v29 = vld [vmem:[%s1 + $0x38] sm:$0xff]
  %v30 = vld [vmem:[%s1 + $0x40] sm:$0xff]
  %v31 = vld [vmem:[%s1 + $0x48] sm:$0xff]
  %v32 = vld [vmem:[%s1 + $0x50] sm:$0xff]
  %v33 = vld [vmem:[%s1 + $0x58] sm:$0xff]
  %v34 = vld [vmem:[%s1 + $0x60] sm:$0xff]
  %v35 = vld [vmem:[%s1 + $0x68] sm:$0xff]
  %v36 = vld [vmem:[%s1 + $0x70] sm:$0xff]
  %v37 = vld [vmem:[%s1 + $0x78] sm:$0xff]
  %v38 = vld [vmem:[%s1 + $0x80] sm:$0xff]
  %v39 = vld [vmem:[%s1 + $0x88] sm:$0xff]
  %v40 = vld [vmem:[%s1 + $0x90] sm:$0xff]
  %v41 = vld [vmem:[%s1 + $0x98] sm:$0xff]
  %v42 = vld [vmem:[%s1 + $0xa0] sm:$0xff]
  %v43 = vld [vmem:[%s1 + $0xa8] sm:$0xff]
  %v44 = vld [vmem:[%s1 + $0xb0] sm:$0xff]
  %v45 = vld [vmem:[%s1 + $0xb8] sm:$0xff]
  %v46 = vld [vmem:[%s1 + $0xc0] sm:$0xff]
  %v47 = vld [vmem:[%s1 + $0xc8] sm:$0xff]
  %v48 = vld [vmem:[%s1 + $0xd0] sm:$0xff]
  %v49 = vld [vmem:[%s1 + $0xd8] sm:$0xff]
  %v50 = vld [vmem:[%s1 + $0xe0] sm:$0xff]
  %v51 = vld [vmem:[%s1 + $0xe8] sm:$0xff]
  %v52 = vld [vmem:[%s1 + $0xf0] sm:$0xff]
  %v53 = vld [vmem:[%s1 + $0xf8] sm:$0xff]
  %v54 = vld [vmem:[%s1 + $0x100] sm:$0xff]
  %v55 = vld [vmem:[%s1 + $0x108] sm:$0xff]
  %v56 = vld [vmem:[%s1 + $0x110] sm:$0xff]
  %v57 = vld [vmem:[%s1 + $0x118] sm:$0xff]
  %v58 = vld [vmem:[%s1 + $0x120] sm:$0x33]
  %v59 = vld [vmem:[%s1 + $0x128] sm:$0x33]
  %v62 = vunpack.c.l.b16 %v20
  %v63 = vunpack.c.h.b16 %v20
  %v64 = vunpack.c.l.b16 %v21
  %v65 = vunpack.c.h.b16 %v21
  %v66 = vpack.c.b16 %v64, %v62
  %v67 = vpack.c.b16 %v65, %v63
  %v107 = vunpack.c.l.b16 %v22
  %v108 = vunpack.c.h.b16 %v22
  %v109 = vunpack.c.l.b16 %v23
  %v110 = vunpack.c.h.b16 %v23
  %v111 = vunpack.c.l.b16 %v24
  %v112 = vunpack.c.h.b16 %v24
  %v113 = vunpack.c.l.b16 %v25
  %v114 = vunpack.c.h.b16 %v25
  %v115 = vunpack.c.l.b16 %v26
  %v116 = vunpack.c.h.b16 %v26
  %v117 = vunpack.c.l.b16 %v27
  %v118 = vunpack.c.h.b16 %v27
  %v119 = vunpack.c.l.b16 %v28
  %v120 = vunpack.c.h.b16 %v28
  %v121 = vunpack.c.l.b16 %v29
  %v122 = vunpack.c.h.b16 %v29
  %v123 = vunpack.c.l.b16 %v30
  %v124 = vunpack.c.h.b16 %v30
  %v125 = vunpack.c.l.b16 %v31
  %v126 = vunpack.c.h.b16 %v31
  %v127 = vunpack.c.l.b16 %v32
  %v128 = vunpack.c.h.b16 %v32
  %v129 = vunpack.c.l.b16 %v33
  %v130 = vunpack.c.h.b16 %v33
  %v131 = vunpack.c.l.b16 %v34
  %v132 = vunpack.c.h.b16 %v34
  %v133 = vunpack.c.l.b16 %v35
  %v134 = vunpack.c.h.b16 %v35
  %v135 = vunpack.c.l.b16 %v36
  %v136 = vunpack.c.h.b16 %v36
  %v137 = vunpack.c.l.b16 %v37
  %v138 = vunpack.c.h.b16 %v37
  %v139 = vunpack.c.l.b16 %v38
  %v140 = vunpack.c.h.b16 %v38
  %v141 = vunpack.c.l.b16 %v39
  %v142 = vunpack.c.h.b16 %v39
  %v143 = vunpack.c.l.b16 %v40
  %v144 = vunpack.c.h.b16 %v40
  %v145 = vunpack.c.l.b16 %v41
  %v146 = vunpack.c.h.b16 %v41
  %v147 = vunpack.c.l.b16 %v42
  %v148 = vunpack.c.h.b16 %v42
  %v149 = vunpack.c.l.b16 %v43
  %v150 = vunpack.c.h.b16 %v43
  %v151 = vunpack.c.l.b16 %v44
  %v152 = vunpack.c.h.b16 %v44
  %v153 = vunpack.c.l.b16 %v45
  %v154 = vunpack.c.h.b16 %v45
  %v155 = vunpack.c.l.b16 %v46
  %v156 = vunpack.c.h.b16 %v46
  %v157 = vunpack.c.l.b16 %v47
  %v158 = vunpack.c.h.b16 %v47
  %v159 = vunpack.c.l.b16 %v48
  %v160 = vunpack.c.h.b16 %v48
  %v161 = vunpack.c.l.b16 %v49
  %v162 = vunpack.c.h.b16 %v49
  %v163 = vunpack.c.l.b16 %v50
  %v164 = vunpack.c.h.b16 %v50
  %v165 = vunpack.c.l.b16 %v51
  %v166 = vunpack.c.h.b16 %v51
  %v167 = vunpack.c.l.b16 %v52
  %v168 = vunpack.c.h.b16 %v52
  %v169 = vunpack.c.l.b16 %v53
  %v170 = vunpack.c.h.b16 %v53
  %v171 = vunpack.c.l.b16 %v54
  %v172 = vunpack.c.h.b16 %v54
  %v173 = vunpack.c.l.b16 %v55
  %v174 = vunpack.c.h.b16 %v55
  %v175 = vunpack.c.l.b16 %v56
  %v176 = vunpack.c.h.b16 %v56
  %v177 = vunpack.c.l.b16 %v57
  %v178 = vunpack.c.h.b16 %v57
  %v179 = vunpack.c.l.b16 %v58
  %v180 = vunpack.c.h.b16 %v58
  %v181 = vunpack.c.l.b16 %v59
  %v182 = vunpack.c.h.b16 %v59
  %v183 = vpack.c.b16 %v111, %v107
  %v184 = vpack.c.b16 %v112, %v108
  %v185 = vpack.c.b16 %v113, %v109
  %v186 = vpack.c.b16 %v114, %v110
  %v187 = vpack.c.b16 %v119, %v115
  %v188 = vpack.c.b16 %v120, %v116
  %v189 = vpack.c.b16 %v121, %v117
  %v190 = vpack.c.b16 %v122, %v118
  %v191 = vpack.c.b16 %v127, %v123
  %v192 = vpack.c.b16 %v128, %v124
  %v193 = vpack.c.b16 %v129, %v125
  %v194 = vpack.c.b16 %v130, %v126
  %v195 = vpack.c.b16 %v135, %v131
  %v196 = vpack.c.b16 %v136, %v132
  %v197 = vpack.c.b16 %v137, %v133
  %v198 = vpack.c.b16 %v138, %v134
  %v199 = vpack.c.b16 %v143, %v139
  %v200 = vpack.c.b16 %v144, %v140
  %v201 = vpack.c.b16 %v145, %v141
  %v202 = vpack.c.b16 %v146, %v142
  %v203 = vpack.c.b16 %v151, %v147
  %v204 = vpack.c.b16 %v152, %v148
  %v205 = vpack.c.b16 %v153, %v149
  %v206 = vpack.c.b16 %v154, %v150
  %v207 = vpack.c.b16 %v159, %v155
  %v208 = vpack.c.b16 %v160, %v156
  %v209 = vpack.c.b16 %v161, %v157
  %v210 = vpack.c.b16 %v162, %v158
  %v211 = vpack.c.b16 %v167, %v163
  %v212 = vpack.c.b16 %v168, %v164
  %v213 = vpack.c.b16 %v169, %v165
  %v214 = vpack.c.b16 %v170, %v166
  %v215 = vpack.c.b16 %v175, %v171
  %v216 = vpack.c.b16 %v176, %v172
  %v217 = vpack.c.b16 %v177, %v173
  %v218 = vpack.c.b16 %v178, %v174
  %v219 = vpack.c.b16 %v179, %v179
  %v220 = vpack.c.b16 %v180, %v180
  %v221 = vpack.c.b16 %v181, %v181
  %v222 = vpack.c.b16 %v182, %v182
  %vm259 = vcmask 154624
  %v261 = vsel %vm259, %v67, 0
  %vm263 = vcmask 1040384
  %vm264 = vcmask 1041408
  %v265 = vsel %vm263, 4294967295, 65535
  %v266 = vsel %vm264, %v265, 0
  %v268 = vand.u32 %v219, %v266
  %v271 = vand.u32 %v220, %v266
  %v274 = vand.u32 %v221, %v266
  %v277 = vand.u32 %v222, %v266
  %279 = vmatprep.subr.bf16.mxu0 %v212
  %280 = vmatpush1.bf16.msra.mxu0 %v211
  %281 = vmatprep.subr.bf16.mxu0 %v208
  %282 = vmatpush1.bf16.msra.mxu0 %v207
  %283 = vmatprep.subr.bf16.mxu0 %v204
  %284 = vmatpush1.bf16.msra.mxu0 %v203
  %285 = vmatprep.subr.bf16.mxu0 %v200
  %286 = vmatpush1.bf16.msra.mxu0 %v199
  %287 = vmatprep.subr.bf16.mxu0 %v196
  %288 = vmatpush1.bf16.msra.mxu0 %v195
  %289 = vmatprep.subr.bf16.mxu0 %v192
  %290 = vmatpush1.bf16.msra.mxu0 %v191
  %291 = vmatprep.subr.bf16.mxu0 %v188
  %292 = vmatpush1.bf16.msra.mxu0 %v187
  %293 = vmatprep.subr.bf16.mxu0 %v184
  %294 = vmatpush1.bf16.msra.mxu0 %v183
  %295 = vmatprep.subr.bf16.mxu0 0
  %296 = vmatpush2.bf16.msra.mxu0 0
  %297 = vmatprep.subr.bf16.mxu0 0
  %298 = vmatpush2.bf16.msra.mxu0 0
  %299 = vmatprep.subr.bf16.mxu0 0
  %300 = vmatpush2.bf16.msra.mxu0 0
  %301 = vmatprep.subr.bf16.mxu0 0
  %302 = vmatpush2.bf16.msra.mxu0 0
  %303 = vmatprep.subr.bf16.mxu0 0
  %304 = vmatpush2.bf16.msra.mxu0 0
  %305 = vmatprep.subr.bf16.mxu0 0
  %306 = vmatpush2.bf16.msra.mxu0 0
  %307 = vmatprep.subr.bf16.mxu0 %v271
  %308 = vmatpush2.bf16.msra.mxu0 %v268
  %309 = vmatprep.subr.bf16.mxu0 %v216
  %310 = vmatpush2.bf16.msra.mxu0 %v215
  %311 = vmatprep.mubr.bf16.mxu0 %v261
  %312 = vmatmul.mubr.bf16.gmra.mxu0 %v66
  %v313 = vpop.f32.mrf.mxu0
  %v314 = vadd.f32 0.0, %v313
  %v315 = vpop.f32.mrf.mxu0
  %v316 = vadd.f32 0.0, %v315
  %v317 = vpop.f32.mrf.mxu0
  %v318 = vadd.f32 0.0, %v317
  %v319 = vpop.f32.mrf.mxu0
  %v320 = vadd.f32 0.0, %v319
  %321 = vdwg.mxu0
  %322 = vmatprep.subr.bf16.mxu0 %v214
  %323 = vmatpush1.bf16.msra.mxu0 %v213
  %324 = vmatprep.subr.bf16.mxu0 %v210
  %325 = vmatpush1.bf16.msra.mxu0 %v209
  %326 = vmatprep.subr.bf16.mxu0 %v206
  %327 = vmatpush1.bf16.msra.mxu0 %v205
  %328 = vmatprep.subr.bf16.mxu0 %v202
  %329 = vmatpush1.bf16.msra.mxu0 %v201
  %330 = vmatprep.subr.bf16.mxu0 %v198
  %331 = vmatpush1.bf16.msra.mxu0 %v197
  %332 = vmatprep.subr.bf16.mxu0 %v194
  %333 = vmatpush1.bf16.msra.mxu0 %v193
  %334 = vmatprep.subr.bf16.mxu0 %v190
  %335 = vmatpush1.bf16.msra.mxu0 %v189
  %336 = vmatprep.subr.bf16.mxu0 %v186
  %337 = vmatpush1.bf16.msra.mxu0 %v185
  %338 = vmatprep.subr.bf16.mxu0 0
  %339 = vmatpush2.bf16.msra.mxu0 0
  %340 = vmatprep.subr.bf16.mxu0 0
  %341 = vmatpush2.bf16.msra.mxu0 0
  %342 = vmatprep.subr.bf16.mxu0 0
  %343 = vmatpush2.bf16.msra.mxu0 0
  %344 = vmatprep.subr.bf16.mxu0 0
  %345 = vmatpush2.bf16.msra.mxu0 0
  %346 = vmatprep.subr.bf16.mxu0 0
  %347 = vmatpush2.bf16.msra.mxu0 0
  %348 = vmatprep.subr.bf16.mxu0 0
  %349 = vmatpush2.bf16.msra.mxu0 0
  %350 = vmatprep.subr.bf16.mxu0 %v277
  %351 = vmatpush2.bf16.msra.mxu0 %v274
  %352 = vmatprep.subr.bf16.mxu0 %v218
  %353 = vmatpush2.bf16.msra.mxu0 %v217
  %354 = vmatprep.mubr.bf16.mxu0 %v261
  %355 = vmatmul.mubr.bf16.gmra.mxu0 %v66
  %v356 = vpop.f32.mrf.mxu0
  %v357 = vadd.f32 0.0, %v356
  %v358 = vpop.f32.mrf.mxu0
  %v359 = vadd.f32 0.0, %v358
  %v360 = vpop.f32.mrf.mxu0
  %v361 = vadd.f32 0.0, %v360
  %v362 = vpop.f32.mrf.mxu0
  %v363 = vadd.f32 0.0, %v362
  %364 = vdwg.mxu0
  %365 = vst [vmem:[%s5] sm:$0xff] %v314
  %366 = vst [vmem:[%s5 + $0x8] sm:$0xff] %v316
  %367 = vst [vmem:[%s5 + $0x10] sm:$0xff] %v357
  %368 = vst [vmem:[%s5 + $0x18] sm:$0xff] %v359
  %369 = vst [vmem:[%s5 + $0x20] sm:$0xff] %v318
  %370 = vst [vmem:[%s5 + $0x28] sm:$0xff] %v320
  %371 = vst [vmem:[%s5 + $0x30] sm:$0xff] %v361
  %372 = vst [vmem:[%s5 + $0x38] sm:$0xff] %v363
  %v373 = vld [vmem:[%s3] sm:$0xff]
  %v374 = vld [vmem:[%s3 + $0x8] sm:$0xff]
  %376 = vset.pattern.permute.xlu0 0
  %377 = vperm.xlu0 %376, %v373
  %v378 = vpop.permute.xlu0 %377
  %381 = vset.pattern.permute.xlu0 0
  %382 = vperm.xlu0 %381, %v374
  %v383 = vpop.permute.xlu0 %382
  %v385 = vmul.f32 %v314, %v378
  %v386 = vmul.f32 %v316, %v378
  %v387 = vmul.f32 %v357, %v378
  %v388 = vmul.f32 %v359, %v378
  %v389 = vmul.f32 %v318, %v383
  %v390 = vmul.f32 %v320, %v383
  %v391 = vmul.f32 %v361, %v383
  %v392 = vmul.f32 %v363, %v383
  %v393 = vld [vmem:[%s2] sm:$0xff]
  %v394 = vld [vmem:[%s2 + $0x8] sm:$0xff]
  %396 = vset.pattern.permute.xlu0 0
  %397 = vperm.xlu0 %396, %v393
  %v398 = vpop.permute.xlu0 %397
  %401 = vset.pattern.permute.xlu0 0
  %402 = vperm.xlu0 %401, %v394
  %v403 = vpop.permute.xlu0 %402
  %v405 = vadd.f32 %v385, %v398
  %v406 = vadd.f32 %v386, %v398
  %v407 = vadd.f32 %v387, %v398
  %v408 = vadd.f32 %v388, %v398
  %v409 = vadd.f32 %v389, %v403
  %v410 = vadd.f32 %v390, %v403
  %v411 = vadd.f32 %v391, %v403
  %v412 = vadd.f32 %v392, %v403
  %v413 = vmax.f32 %v405, 0.0
  %v414 = vmax.f32 %v406, 0.0
  %v415 = vmax.f32 %v407, 0.0
  %v416 = vmax.f32 %v408, 0.0
  %v417 = vmax.f32 %v409, 0.0
  %v418 = vmax.f32 %v410, 0.0
  %v419 = vmax.f32 %v411, 0.0
  %v420 = vmax.f32 %v412, 0.0
  %v421 = vpack.c.bf16 %v417, %v413
  %v422 = vpack.c.bf16 %v418, %v414
  %v423 = vpack.c.bf16 %v419, %v415
  %v424 = vpack.c.bf16 %v420, %v416
  %v429 = vunpack.c.l.b16 %v421
  %v430 = vunpack.c.l.b16 %v422
  %v431 = vunpack.c.l.b16 %v423
  %v432 = vunpack.c.l.b16 %v424
  %v433 = vunpack.c.h.b16 %v421
  %v434 = vunpack.c.h.b16 %v422
  %v435 = vunpack.c.h.b16 %v423
  %v436 = vunpack.c.h.b16 %v424
  %v437 = vpack.c.b16 %v430, %v429
  %v438 = vpack.c.b16 %v432, %v431
  %v439 = vpack.c.b16 %v434, %v433
  %v440 = vpack.c.b16 %v436, %v435
  %445 = vst [vmem:[%s4] sm:$0xff] %v437
  %446 = vst [vmem:[%s4 + $0x8] sm:$0xff] %v438
  %447 = vst [vmem:[%s4 + $0x10] sm:$0xff] %v439
  %448 = vst [vmem:[%s4 + $0x18] sm:$0xff] %v440
  // Predicated region
  $region18: #{_lambda_.23} parent=0 // pred_check
    _
  $region19: #{_lambda_.23} parent=0 // pred_check_branch
    %450 = sbr.rel (0) target = $region21
  $region20: #{_lambda_.23} parent=0 // pred_region
    _
  $region21: #{_lambda_.23} parent=0 // pred_fallthru
    _
  // Predicated region
  $region22: #{_lambda_.23} parent=0 // pred_check
    _
  $region23: #{_lambda_.23} parent=0 // pred_check_branch
    %452 = sbr.rel (0) target = $region25
  $region24: #{_lambda_.23} parent=0 // pred_region
    _
  $region25: #{_lambda_.23} parent=0 // pred_fallthru
    _
  // Predicated region
  $region26: #{_lambda_.23} parent=0 // pred_check
    _
  $region27: #{_lambda_.23} parent=0 // pred_check_branch
    %454 = sbr.rel (0) target = $region29
  $region28: #{_lambda_.23} parent=0 // pred_region
    _
  $region29: #{_lambda_.23} parent=0 // pred_fallthru
    _
  // Predicated region
  $region30: #{_lambda_.23} parent=0 // pred_check
    _
  $region31: #{_lambda_.23} parent=0 // pred_check_branch
    %456 = sbr.rel (0) target = $region33
  $region32: #{_lambda_.23} parent=0 // pred_region
    _
  $region33: #{_lambda_.23} parent=0 // pred_fallthru
    _

// kernel: _lambda_.24
$region0: #{_lambda_.24}
  #allocation0 [shape = 'u32[]', space=smem, size = 0x4, offset = 0x4, fixed_abs, tag = 'smem constant byte address 0x4 - core index']
  #allocation1 [shape = 'u32[144,128]{1,0:T(1,128)}', space=vmem, size = 0x12000, scoped, tag = 'internal scratch']
  %s0 = inlined_call_operand.vmem [shape: bf16[16,144], index: 0, kind: input, shape index: {}]
  %s1 = inlined_call_operand.vmem [shape: bf16[144,128], index: 1, kind: input, shape index: {}]
  %s2 = inlined_call_operand.vmem [shape: f32[16,1], index: 2, kind: input, shape index: {}]
  %s3 = inlined_call_operand.vmem [shape: bf16[16,128], index: 3, kind: output, shape index: {}]
  %s4 = sld [smem:[#allocation0]]
  $region22: #{_lambda_.24} parent=0
    _
  %s6 = ssub.s32 1, %s4
  %s7 = scalar_select 0, %s6, %s4
  // Predicated region
  $region2: #{_lambda_.24} parent=0 // pred_check
    _
  $region3: #{_lambda_.24} parent=0 // pred_check_branch
    %9 = sbr.rel (0) target = $region5
  $region4: #{_lambda_.24} parent=0 // pred_region
    _
  $region5: #{_lambda_.24} parent=0 // pred_fallthru
    _
  // Predicated region
  $region6: #{_lambda_.24} parent=0 // pred_check
    _
  $region7: #{_lambda_.24} parent=0 // pred_check_branch
    %11 = sbr.rel (0) target = $region9
  $region8: #{_lambda_.24} parent=0 // pred_region
    _
  $region9: #{_lambda_.24} parent=0 // pred_fallthru
    _
  // Predicated region
  $region10: #{_lambda_.24} parent=0 // pred_check
    _
  $region11: #{_lambda_.24} parent=0 // pred_check_branch
    %13 = sbr.rel (0) target = $region13
  $region12: #{_lambda_.24} parent=0 // pred_region
    _
  $region13: #{_lambda_.24} parent=0 // pred_fallthru
    _
  %v15 = vld [vmem:[%s0] sm:$0xff]
  %v16 = vld [vmem:[%s0 + $0x8] sm:$0xff]
  %v17 = vld [vmem:[%s1] sm:$0xf]
  %v18 = vld [vmem:[%s1 + $0x4] sm:$0xf]
  %v19 = vld [vmem:[%s1 + $0x8] sm:$0xf]
  %v20 = vld [vmem:[%s1 + $0xc] sm:$0xf]
  %v21 = vld [vmem:[%s1 + $0x10] sm:$0xf]
  %v22 = vld [vmem:[%s1 + $0x14] sm:$0xf]
  %v23 = vld [vmem:[%s1 + $0x18] sm:$0xf]
  %v24 = vld [vmem:[%s1 + $0x1c] sm:$0xf]
  %v25 = vld [vmem:[%s1 + $0x20] sm:$0xf]
  %v26 = vld [vmem:[%s1 + $0x24] sm:$0xf]
  %v27 = vld [vmem:[%s1 + $0x28] sm:$0xf]
  %v28 = vld [vmem:[%s1 + $0x2c] sm:$0xf]
  %v29 = vld [vmem:[%s1 + $0x30] sm:$0xf]
  %v30 = vld [vmem:[%s1 + $0x34] sm:$0xf]
  %v31 = vld [vmem:[%s1 + $0x38] sm:$0xf]
  %v32 = vld [vmem:[%s1 + $0x3c] sm:$0xf]
  %v33 = vld [vmem:[%s1 + $0x40] sm:$0xf]
  %v34 = vld [vmem:[%s1 + $0x44] sm:$0xf]
  %v35 = vld [vmem:[%s2] sm:$0xff]
  %v36 = vld [vmem:[%s2 + $0x8] sm:$0xff]
  %38 = vset.pattern.permute.xlu0 0
  %39 = vperm.xlu0 %38, %v35
  %v40 = vpop.permute.xlu0 %39
  %43 = vset.pattern.permute.xlu0 0
  %44 = vperm.xlu0 %43, %v36
  %v45 = vpop.permute.xlu0 %44
  %v49 = vunpack.c.l.b16 %v15
  %v50 = vunpack.c.h.b16 %v15
  %v51 = vunpack.c.l.b16 %v16
  %v52 = vunpack.c.h.b16 %v16
  %v53 = vpack.c.b16 %v51, %v49
  %v54 = vpack.c.b16 %v52, %v50
  %v74 = vunpack.c.l.b16 %v17
  %v75 = vunpack.c.l.b16 %v18
  %v76 = vunpack.c.l.b16 %v19
  %v77 = vunpack.c.l.b16 %v20
  %v78 = vunpack.c.l.b16 %v21
  %v79 = vunpack.c.l.b16 %v22
  %v80 = vunpack.c.l.b16 %v23
  %v81 = vunpack.c.l.b16 %v24
  %v82 = vunpack.c.l.b16 %v25
  %v83 = vunpack.c.l.b16 %v26
  %v84 = vunpack.c.l.b16 %v27
  %v85 = vunpack.c.l.b16 %v28
  %v86 = vunpack.c.l.b16 %v29
  %v87 = vunpack.c.l.b16 %v30
  %v88 = vunpack.c.l.b16 %v31
  %v89 = vunpack.c.l.b16 %v32
  %v90 = vunpack.c.l.b16 %v33
  %v91 = vunpack.c.l.b16 %v34
  %v92 = vpack.c.b16 %v75, %v74
  %v93 = vpack.c.b16 %v77, %v76
  %v94 = vpack.c.b16 %v79, %v78
  %v95 = vpack.c.b16 %v81, %v80
  %v96 = vpack.c.b16 %v83, %v82
  %v97 = vpack.c.b16 %v85, %v84
  %v98 = vpack.c.b16 %v87, %v86
  %v99 = vpack.c.b16 %v89, %v88
  %v100 = vpack.c.b16 %v91, %v90
  %vm110 = vcmask 130048
  %v112 = vsel %vm110, %v54, 0
  %114 = vmatprep.subr.bf16.mxu0 0
  %115 = vmatpush1.bf16.msra.mxu0 %v99
  %116 = vmatprep.subr.bf16.mxu0 0
  %117 = vmatpush1.bf16.msra.mxu0 %v98
  %118 = vmatprep.subr.bf16.mxu0 0
  %119 = vmatpush1.bf16.msra.mxu0 %v97
  %120 = vmatprep.subr.bf16.mxu0 0
  %121 = vmatpush1.bf16.msra.mxu0 %v96
  %122 = vmatprep.subr.bf16.mxu0 0
  %123 = vmatpush1.bf16.msra.mxu0 %v95
  %124 = vmatprep.subr.bf16.mxu0 0
  %125 = vmatpush1.bf16.msra.mxu0 %v94
  %126 = vmatprep.subr.bf16.mxu0 0
  %127 = vmatpush1.bf16.msra.mxu0 %v93
  %128 = vmatprep.subr.bf16.mxu0 0
  %129 = vmatpush1.bf16.msra.mxu0 %v92
  %130 = vmatprep.subr.bf16.mxu0 0
  %131 = vmatpush2.bf16.msra.mxu0 0
  %132 = vmatprep.subr.bf16.mxu0 0
  %133 = vmatpush2.bf16.msra.mxu0 0
  %134 = vmatprep.subr.bf16.mxu0 0
  %135 = vmatpush2.bf16.msra.mxu0 0
  %136 = vmatprep.subr.bf16.mxu0 0
  %137 = vmatpush2.bf16.msra.mxu0 0
  %138 = vmatprep.subr.bf16.mxu0 0
  %139 = vmatpush2.bf16.msra.mxu0 0
  %140 = vmatprep.subr.bf16.mxu0 0
  %141 = vmatpush2.bf16.msra.mxu0 0
  %142 = vmatprep.subr.bf16.mxu0 0
  %143 = vmatpush2.bf16.msra.mxu0 0
  %144 = vmatprep.subr.bf16.mxu0 0
  %145 = vmatpush2.bf16.msra.mxu0 %v100
  %146 = vmatprep.mubr.bf16.mxu0 %v112
  %147 = vmatmul.mubr.bf16.gmra.mxu0 %v53
  %v148 = vpop.f32.mrf.mxu0
  %v149 = vadd.f32 %v40, %v148
  %v150 = vpop.f32.mrf.mxu0
  %v151 = vpop.f32.mrf.mxu0
  %v152 = vadd.f32 %v45, %v151
  %v153 = vpop.f32.mrf.mxu0
  %154 = vdwg.mxu0
  %v155 = vmax.f32 %v149, 0.0
  %v156 = vmax.f32 %v152, 0.0
  %v157 = vpack.c.bf16 %v156, %v155
  %v159 = vunpack.c.l.b16 %v157
  %v160 = vunpack.c.h.b16 %v157
  %v161 = vpack.c.b16 %v159, %v159
  %v162 = vpack.c.b16 %v160, %v160
  %165 = vst [vmem:[%s3] sm:$0xf] %v161
  %166 = vst [vmem:[%s3 + $0x4] sm:$0xf] %v162
  // Predicated region
  $region14: #{_lambda_.24} parent=0 // pred_check
    _
  $region15: #{_lambda_.24} parent=0 // pred_check_branch
    %168 = sbr.rel (0) target = $region17
  $region16: #{_lambda_.24} parent=0 // pred_region
    _
  $region17: #{_lambda_.24} parent=0 // pred_fallthru
    _
  // Predicated region
  $region18: #{_lambda_.24} parent=0 // pred_check
    _
  $region19: #{_lambda_.24} parent=0 // pred_check_branch
    %170 = sbr.rel (0) target = $region21
  $region20: #{_lambda_.24} parent=0 // pred_region
    _
  $region21: #{_lambda_.24} parent=0 // pred_fallthru
    _

// kernel: _lambda_.25
$region0: #{_lambda_.25}
  #allocation0 [shape = 'u32[]', space=smem, size = 0x4, offset = 0x4, fixed_abs, tag = 'smem constant byte address 0x4 - core index']
  #allocation1 [shape = 'u32[144,128]{1,0:T(1,128)}', space=vmem, size = 0x12000, scoped, tag = 'internal scratch']
  %s0 = inlined_call_operand.vmem [shape: bf16[16,144], index: 0, kind: input, shape index: {}]
  %s1 = inlined_call_operand.vmem [shape: bf16[144,128], index: 1, kind: input, shape index: {}]
  %s2 = inlined_call_operand.vmem [shape: f32[16,1], index: 2, kind: input, shape index: {}]
  %s3 = inlined_call_operand.vmem [shape: bf16[16,128], index: 3, kind: input, shape index: {}]
  %s4 = inlined_call_operand.vmem [shape: bf16[16,128], index: 4, kind: output, shape index: {}]
  %s5 = sld [smem:[#allocation0]]
  $region26: #{_lambda_.25} parent=0
    _
  %s7 = ssub.s32 1, %s5
  %s8 = scalar_select 0, %s7, %s5
  // Predicated region
  $region2: #{_lambda_.25} parent=0 // pred_check
    _
  $region3: #{_lambda_.25} parent=0 // pred_check_branch
    %10 = sbr.rel (0) target = $region5
  $region4: #{_lambda_.25} parent=0 // pred_region
    _
  $region5: #{_lambda_.25} parent=0 // pred_fallthru
    _
  // Predicated region
  $region6: #{_lambda_.25} parent=0 // pred_check
    _
  $region7: #{_lambda_.25} parent=0 // pred_check_branch
    %12 = sbr.rel (0) target = $region9
  $region8: #{_lambda_.25} parent=0 // pred_region
    _
  $region9: #{_lambda_.25} parent=0 // pred_fallthru
    _
  // Predicated region
  $region10: #{_lambda_.25} parent=0 // pred_check
    _
  $region11: #{_lambda_.25} parent=0 // pred_check_branch
    %14 = sbr.rel (0) target = $region13
  $region12: #{_lambda_.25} parent=0 // pred_region
    _
  $region13: #{_lambda_.25} parent=0 // pred_fallthru
    _
  // Predicated region
  $region14: #{_lambda_.25} parent=0 // pred_check
    _
  $region15: #{_lambda_.25} parent=0 // pred_check_branch
    %16 = sbr.rel (0) target = $region17
  $region16: #{_lambda_.25} parent=0 // pred_region
    _
  $region17: #{_lambda_.25} parent=0 // pred_fallthru
    _
  %v18 = vld [vmem:[%s0] sm:$0xff]
  %v19 = vld [vmem:[%s0 + $0x8] sm:$0xff]
  %v20 = vld [vmem:[%s1] sm:$0xf]
  %v21 = vld [vmem:[%s1 + $0x4] sm:$0xf]
  %v22 = vld [vmem:[%s1 + $0x8] sm:$0xf]
  %v23 = vld [vmem:[%s1 + $0xc] sm:$0xf]
  %v24 = vld [vmem:[%s1 + $0x10] sm:$0xf]
  %v25 = vld [vmem:[%s1 + $0x14] sm:$0xf]
  %v26 = vld [vmem:[%s1 + $0x18] sm:$0xf]
  %v27 = vld [vmem:[%s1 + $0x1c] sm:$0xf]
  %v28 = vld [vmem:[%s1 + $0x20] sm:$0xf]
  %v29 = vld [vmem:[%s1 + $0x24] sm:$0xf]
  %v30 = vld [vmem:[%s1 + $0x28] sm:$0xf]
  %v31 = vld [vmem:[%s1 + $0x2c] sm:$0xf]
  %v32 = vld [vmem:[%s1 + $0x30] sm:$0xf]
  %v33 = vld [vmem:[%s1 + $0x34] sm:$0xf]
  %v34 = vld [vmem:[%s1 + $0x38] sm:$0xf]
  %v35 = vld [vmem:[%s1 + $0x3c] sm:$0xf]
  %v36 = vld [vmem:[%s1 + $0x40] sm:$0xf]
  %v37 = vld [vmem:[%s1 + $0x44] sm:$0xf]
  %v38 = vld [vmem:[%s2] sm:$0xff]
  %v39 = vld [vmem:[%s2 + $0x8] sm:$0xff]
  %41 = vset.pattern.permute.xlu0 0
  %42 = vperm.xlu0 %41, %v38
  %v43 = vpop.permute.xlu0 %42
  %46 = vset.pattern.permute.xlu0 0
  %47 = vperm.xlu0 %46, %v39
  %v48 = vpop.permute.xlu0 %47
  %v52 = vunpack.c.l.b16 %v18
  %v53 = vunpack.c.h.b16 %v18
  %v54 = vunpack.c.l.b16 %v19
  %v55 = vunpack.c.h.b16 %v19
  %v56 = vpack.c.b16 %v54, %v52
  %v57 = vpack.c.b16 %v55, %v53
  %v77 = vunpack.c.l.b16 %v20
  %v78 = vunpack.c.l.b16 %v21
  %v79 = vunpack.c.l.b16 %v22
  %v80 = vunpack.c.l.b16 %v23
  %v81 = vunpack.c.l.b16 %v24
  %v82 = vunpack.c.l.b16 %v25
  %v83 = vunpack.c.l.b16 %v26
  %v84 = vunpack.c.l.b16 %v27
  %v85 = vunpack.c.l.b16 %v28
  %v86 = vunpack.c.l.b16 %v29
  %v87 = vunpack.c.l.b16 %v30
  %v88 = vunpack.c.l.b16 %v31
  %v89 = vunpack.c.l.b16 %v32
  %v90 = vunpack.c.l.b16 %v33
  %v91 = vunpack.c.l.b16 %v34
  %v92 = vunpack.c.l.b16 %v35
  %v93 = vunpack.c.l.b16 %v36
  %v94 = vunpack.c.l.b16 %v37
  %v95 = vpack.c.b16 %v78, %v77
  %v96 = vpack.c.b16 %v80, %v79
  %v97 = vpack.c.b16 %v82, %v81
  %v98 = vpack.c.b16 %v84, %v83
  %v99 = vpack.c.b16 %v86, %v85
  %v100 = vpack.c.b16 %v88, %v87
  %v101 = vpack.c.b16 %v90, %v89
  %v102 = vpack.c.b16 %v92, %v91
  %v103 = vpack.c.b16 %v94, %v93
  %vm113 = vcmask 130048
  %v115 = vsel %vm113, %v57, 0
  %117 = vmatprep.subr.bf16.mxu0 0
  %118 = vmatpush1.bf16.msra.mxu0 %v102
  %119 = vmatprep.subr.bf16.mxu0 0
  %120 = vmatpush1.bf16.msra.mxu0 %v101
  %121 = vmatprep.subr.bf16.mxu0 0
  %122 = vmatpush1.bf16.msra.mxu0 %v100
  %123 = vmatprep.subr.bf16.mxu0 0
  %124 = vmatpush1.bf16.msra.mxu0 %v99
  %125 = vmatprep.subr.bf16.mxu0 0
  %126 = vmatpush1.bf16.msra.mxu0 %v98
  %127 = vmatprep.subr.bf16.mxu0 0
  %128 = vmatpush1.bf16.msra.mxu0 %v97
  %129 = vmatprep.subr.bf16.mxu0 0
  %130 = vmatpush1.bf16.msra.mxu0 %v96
  %131 = vmatprep.subr.bf16.mxu0 0
  %132 = vmatpush1.bf16.msra.mxu0 %v95
  %133 = vmatprep.subr.bf16.mxu0 0
  %134 = vmatpush2.bf16.msra.mxu0 0
  %135 = vmatprep.subr.bf16.mxu0 0
  %136 = vmatpush2.bf16.msra.mxu0 0
  %137 = vmatprep.subr.bf16.mxu0 0
  %138 = vmatpush2.bf16.msra.mxu0 0
  %139 = vmatprep.subr.bf16.mxu0 0
  %140 = vmatpush2.bf16.msra.mxu0 0
  %141 = vmatprep.subr.bf16.mxu0 0
  %142 = vmatpush2.bf16.msra.mxu0 0
  %143 = vmatprep.subr.bf16.mxu0 0
  %144 = vmatpush2.bf16.msra.mxu0 0
  %145 = vmatprep.subr.bf16.mxu0 0
  %146 = vmatpush2.bf16.msra.mxu0 0
  %147 = vmatprep.subr.bf16.mxu0 0
  %148 = vmatpush2.bf16.msra.mxu0 %v103
  %149 = vmatprep.mubr.bf16.mxu0 %v115
  %150 = vmatmul.mubr.bf16.gmra.mxu0 %v56
  %v151 = vpop.f32.mrf.mxu0
  %v152 = vadd.f32 %v43, %v151
  %v153 = vpop.f32.mrf.mxu0
  %v154 = vpop.f32.mrf.mxu0
  %v155 = vadd.f32 %v48, %v154
  %v156 = vpop.f32.mrf.mxu0
  %157 = vdwg.mxu0
  %v158 = vld [vmem:[%s3] sm:$0xf]
  %v159 = vld [vmem:[%s3 + $0x4] sm:$0xf]
  %v160 = vunpack.c.l.bf16 %v158
  %v161 = vunpack.c.l.bf16 %v159
  %v162 = vadd.f32 %v152, %v160
  %v163 = vadd.f32 %v155, %v161
  %v164 = vmax.f32 %v162, 0.0
  %v165 = vmax.f32 %v163, 0.0
  %v166 = vpack.c.bf16 %v165, %v164
  %v168 = vunpack.c.l.b16 %v166
  %v169 = vunpack.c.h.b16 %v166
  %v170 = vpack.c.b16 %v168, %v168
  %v171 = vpack.c.b16 %v169, %v169
  %174 = vst [vmem:[%s4] sm:$0xf] %v170
  %175 = vst [vmem:[%s4 + $0x4] sm:$0xf] %v171
  // Predicated region
  $region18: #{_lambda_.25} parent=0 // pred_check
    _
  $region19: #{_lambda_.25} parent=0 // pred_check_branch
    %177 = sbr.rel (0) target = $region21
  $region20: #{_lambda_.25} parent=0 // pred_region
    _
  $region21: #{_lambda_.25} parent=0 // pred_fallthru
    _
  // Predicated region
  $region22: #{_lambda_.25} parent=0 // pred_check
    _
  $region23: #{_lambda_.25} parent=0 // pred_check_branch
    %179 = sbr.rel (0) target = $region25
  $region24: #{_lambda_.25} parent=0 // pred_region
    _
  $region25: #{_lambda_.25} parent=0 // pred_fallthru
    _

// kernel: _lambda_.29
$region0: #{_lambda_.29}
  #allocation0 [shape = 'u32[]', space=smem, size = 0x4, offset = 0x4, fixed_abs, tag = 'smem constant byte address 0x4 - core index']
  #allocation1 [shape = 'u32[144,128]{1,0:T(1,128)}', space=vmem, size = 0x12000, scoped, tag = 'internal scratch']
  %s0 = inlined_call_operand.vmem [shape: bf16[32,144], index: 0, kind: input, shape index: {}]
  %s1 = inlined_call_operand.vmem [shape: bf16[144,32], index: 1, kind: input, shape index: {}]
  %s2 = inlined_call_operand.vmem [shape: f32[32,1], index: 2, kind: input, shape index: {}]
  %s3 = inlined_call_operand.vmem [shape: bf16[32,32], index: 3, kind: output, shape index: {}]
  %s4 = sld [smem:[#allocation0]]
  $region22: #{_lambda_.29} parent=0
    _
  %s6 = ssub.s32 1, %s4
  %s7 = scalar_select 0, %s6, %s4
  // Predicated region
  $region2: #{_lambda_.29} parent=0 // pred_check
    _
  $region3: #{_lambda_.29} parent=0 // pred_check_branch
    %9 = sbr.rel (0) target = $region5
  $region4: #{_lambda_.29} parent=0 // pred_region
    _
  $region5: #{_lambda_.29} parent=0 // pred_fallthru
    _
  // Predicated region
  $region6: #{_lambda_.29} parent=0 // pred_check
    _
  $region7: #{_lambda_.29} parent=0 // pred_check_branch
    %11 = sbr.rel (0) target = $region9
  $region8: #{_lambda_.29} parent=0 // pred_region
    _
  $region9: #{_lambda_.29} parent=0 // pred_fallthru
    _
  // Predicated region
  $region10: #{_lambda_.29} parent=0 // pred_check
    _
  $region11: #{_lambda_.29} parent=0 // pred_check_branch
    %13 = sbr.rel (0) target = $region13
  $region12: #{_lambda_.29} parent=0 // pred_region
    _
  $region13: #{_lambda_.29} parent=0 // pred_fallthru
    _
  %v15 = vld [vmem:[%s0] sm:$0xff]
  %v16 = vld [vmem:[%s0 + $0x8] sm:$0xff]
  %v17 = vld [vmem:[%s0 + $0x10] sm:$0xff]
  %v18 = vld [vmem:[%s0 + $0x18] sm:$0xff]
  %v19 = vld [vmem:[%s1] sm:$0xf]
  %v20 = vld [vmem:[%s1 + $0x4] sm:$0xf]
  %v21 = vld [vmem:[%s1 + $0x8] sm:$0xf]
  %v22 = vld [vmem:[%s1 + $0xc] sm:$0xf]
  %v23 = vld [vmem:[%s1 + $0x10] sm:$0xf]
  %v24 = vld [vmem:[%s1 + $0x14] sm:$0xf]
  %v25 = vld [vmem:[%s1 + $0x18] sm:$0xf]
  %v26 = vld [vmem:[%s1 + $0x1c] sm:$0xf]
  %v27 = vld [vmem:[%s1 + $0x20] sm:$0xf]
  %v28 = vld [vmem:[%s1 + $0x24] sm:$0xf]
  %v29 = vld [vmem:[%s1 + $0x28] sm:$0xf]
  %v30 = vld [vmem:[%s1 + $0x2c] sm:$0xf]
  %v31 = vld [vmem:[%s1 + $0x30] sm:$0xf]
  %v32 = vld [vmem:[%s1 + $0x34] sm:$0xf]
  %v33 = vld [vmem:[%s1 + $0x38] sm:$0xf]
  %v34 = vld [vmem:[%s1 + $0x3c] sm:$0xf]
  %v35 = vld [vmem:[%s1 + $0x40] sm:$0xf]
  %v36 = vld [vmem:[%s1 + $0x44] sm:$0xf]
  %v37 = vld [vmem:[%s2] sm:$0xff]
  %v38 = vld [vmem:[%s2 + $0x8] sm:$0xff]
  %v39 = vld [vmem:[%s2 + $0x10] sm:$0xff]
  %v40 = vld [vmem:[%s2 + $0x18] sm:$0xff]
  %42 = vset.pattern.permute.xlu0 0
  %43 = vperm.xlu0 %42, %v37
  %v44 = vpop.permute.xlu0 %43
  %47 = vset.pattern.permute.xlu0 0
  %48 = vperm.xlu0 %47, %v38
  %v49 = vpop.permute.xlu0 %48
  %52 = vset.pattern.permute.xlu0 0
  %53 = vperm.xlu0 %52, %v39
  %v54 = vpop.permute.xlu0 %53
  %57 = vset.pattern.permute.xlu0 0
  %58 = vperm.xlu0 %57, %v40
  %v59 = vpop.permute.xlu0 %58
  %v65 = vunpack.c.l.b16 %v15
  %v66 = vunpack.c.h.b16 %v15
  %v67 = vunpack.c.l.b16 %v16
  %v68 = vunpack.c.h.b16 %v16
  %v69 = vunpack.c.l.b16 %v17
  %v70 = vunpack.c.h.b16 %v17
  %v71 = vunpack.c.l.b16 %v18
  %v72 = vunpack.c.h.b16 %v18
  %v73 = vpack.c.b16 %v67, %v65
  %v74 = vpack.c.b16 %v68, %v66
  %v75 = vpack.c.b16 %v71, %v69
  %v76 = vpack.c.b16 %v72, %v70
  %v97 = vunpack.c.l.b16 %v19
  %v98 = vunpack.c.l.b16 %v20
  %v99 = vunpack.c.l.b16 %v21
  %v100 = vunpack.c.l.b16 %v22
  %v101 = vunpack.c.l.b16 %v23
  %v102 = vunpack.c.l.b16 %v24
  %v103 = vunpack.c.l.b16 %v25
  %v104 = vunpack.c.l.b16 %v26
  %v105 = vunpack.c.l.b16 %v27
  %v106 = vunpack.c.l.b16 %v28
  %v107 = vunpack.c.l.b16 %v29
  %v108 = vunpack.c.l.b16 %v30
  %v109 = vunpack.c.l.b16 %v31
  %v110 = vunpack.c.l.b16 %v32
  %v111 = vunpack.c.l.b16 %v33
  %v112 = vunpack.c.l.b16 %v34
  %v113 = vunpack.c.l.b16 %v35
  %v114 = vunpack.c.l.b16 %v36
  %v115 = vpack.c.b16 %v98, %v97
  %v116 = vpack.c.b16 %v100, %v99
  %v117 = vpack.c.b16 %v102, %v101
  %v118 = vpack.c.b16 %v104, %v103
  %v119 = vpack.c.b16 %v106, %v105
  %v120 = vpack.c.b16 %v108, %v107
  %v121 = vpack.c.b16 %v110, %v109
  %v122 = vpack.c.b16 %v112, %v111
  %v123 = vpack.c.b16 %v114, %v113
  %vm133 = vcmask 130048
  %v135 = vsel %vm133, %v74, 0
  %v138 = vsel %vm133, %v76, 0
  %140 = vmatprep.subr.bf16.mxu0 0
  %141 = vmatpush1.bf16.msra.mxu0 %v122
  %142 = vmatprep.subr.bf16.mxu0 0
  %143 = vmatpush1.bf16.msra.mxu0 %v121
  %144 = vmatprep.subr.bf16.mxu0 0
  %145 = vmatpush1.bf16.msra.mxu0 %v120
  %146 = vmatprep.subr.bf16.mxu0 0
  %147 = vmatpush1.bf16.msra.mxu0 %v119
  %148 = vmatprep.subr.bf16.mxu0 0
  %149 = vmatpush1.bf16.msra.mxu0 %v118
  %150 = vmatprep.subr.bf16.mxu0 0
  %151 = vmatpush1.bf16.msra.mxu0 %v117
  %152 = vmatprep.subr.bf16.mxu0 0
  %153 = vmatpush1.bf16.msra.mxu0 %v116
  %154 = vmatprep.subr.bf16.mxu0 0
  %155 = vmatpush1.bf16.msra.mxu0 %v115
  %156 = vmatprep.subr.bf16.mxu0 0
  %157 = vmatpush2.bf16.msra.mxu0 0
  %158 = vmatprep.subr.bf16.mxu0 0
  %159 = vmatpush2.bf16.msra.mxu0 0
  %160 = vmatprep.subr.bf16.mxu0 0
  %161 = vmatpush2.bf16.msra.mxu0 0
  %162 = vmatprep.subr.bf16.mxu0 0
  %163 = vmatpush2.bf16.msra.mxu0 0
  %164 = vmatprep.subr.bf16.mxu0 0
  %165 = vmatpush2.bf16.msra.mxu0 0
  %166 = vmatprep.subr.bf16.mxu0 0
  %167 = vmatpush2.bf16.msra.mxu0 0
  %168 = vmatprep.subr.bf16.mxu0 0
  %169 = vmatpush2.bf16.msra.mxu0 0
  %170 = vmatprep.subr.bf16.mxu0 0
  %171 = vmatpush2.bf16.msra.mxu0 %v123
  %172 = vmatprep.mubr.bf16.mxu0 %v135
  %173 = vmatmul.mubr.bf16.gmra.mxu0 %v73
  %v174 = vpop.f32.mrf.mxu0
  %v175 = vadd.f32 %v44, %v174
  %v176 = vpop.f32.mrf.mxu0
  %v177 = vpop.f32.mrf.mxu0
  %v178 = vadd.f32 %v49, %v177
  %v179 = vpop.f32.mrf.mxu0
  %180 = vmatprep.mubr.bf16.mxu0 %v138
  %181 = vmatmul.mubr.bf16.gmra.mxu0 %v75
  %v182 = vpop.f32.mrf.mxu0
  %v183 = vadd.f32 %v54, %v182
  %v184 = vpop.f32.mrf.mxu0
  %v185 = vpop.f32.mrf.mxu0
  %v186 = vadd.f32 %v59, %v185
  %v187 = vpop.f32.mrf.mxu0
  %188 = vdwg.mxu0
  %v189 = vmax.f32 %v175, 0.0
  %v190 = vmax.f32 %v178, 0.0
  %v191 = vmax.f32 %v183, 0.0
  %v192 = vmax.f32 %v186, 0.0
  %v193 = vpack.c.bf16 %v190, %v189
  %v194 = vpack.c.bf16 %v192, %v191
  %v197 = vunpack.c.l.b16 %v193
  %v198 = vunpack.c.h.b16 %v193
  %v199 = vunpack.c.l.b16 %v194
  %v200 = vunpack.c.h.b16 %v194
  %v201 = vpack.c.b16 %v197, %v197
  %v202 = vpack.c.b16 %v198, %v198
  %v203 = vpack.c.b16 %v199, %v199
  %v204 = vpack.c.b16 %v200, %v200
  %vm209 = vcmask 257024
  %210 = vst.msk [vmem:[%s3] sm:$0xf] %vm209, %v201
  %211 = vst.msk [vmem:[%s3 + $0x4] sm:$0xf] %vm209, %v202
  %212 = vst.msk [vmem:[%s3 + $0x8] sm:$0xf] %vm209, %v203
  %213 = vst.msk [vmem:[%s3 + $0xc] sm:$0xf] %vm209, %v204
  // Predicated region
  $region14: #{_lambda_.29} parent=0 // pred_check
    _
  $region15: #{_lambda_.29} parent=0 // pred_check_branch
    %215 = sbr.rel (0) target = $region17
  $region16: #{_lambda_.29} parent=0 // pred_region
    _
  $region17: #{_lambda_.29} parent=0 // pred_fallthru
    _
  // Predicated region
  $region18: #{_lambda_.29} parent=0 // pred_check
    _
  $region19: #{_lambda_.29} parent=0 // pred_check_branch
    %217 = sbr.rel (0) target = $region21
  $region20: #{_lambda_.29} parent=0 // pred_region
    _
  $region21: #{_lambda_.29} parent=0 // pred_fallthru
    _

// kernel: _lambda_.28
$region0: #{_lambda_.28}
  #allocation0 [shape = 'u32[]', space=smem, size = 0x4, offset = 0x4, fixed_abs, tag = 'smem constant byte address 0x4 - core index']
  #allocation1 [shape = 'u32[144,128]{1,0:T(1,128)}', space=vmem, size = 0x12000, scoped, tag = 'internal scratch']
  %s0 = inlined_call_operand.vmem [shape: bf16[32,16], index: 0, kind: input, shape index: {}]
  %s1 = inlined_call_operand.vmem [shape: bf16[16,32], index: 1, kind: input, shape index: {}]
  %s2 = inlined_call_operand.vmem [shape: f32[32,1], index: 2, kind: input, shape index: {}]
  %s3 = inlined_call_operand.vmem [shape: bf16[32,32], index: 3, kind: output, shape index: {}]
  %s4 = sld [smem:[#allocation0]]
  $region22: #{_lambda_.28} parent=0
    _
  %s6 = ssub.s32 1, %s4
  %s7 = scalar_select 0, %s6, %s4
  // Predicated region
  $region2: #{_lambda_.28} parent=0 // pred_check
    _
  $region3: #{_lambda_.28} parent=0 // pred_check_branch
    %9 = sbr.rel (0) target = $region5
  $region4: #{_lambda_.28} parent=0 // pred_region
    _
  $region5: #{_lambda_.28} parent=0 // pred_fallthru
    _
  // Predicated region
  $region6: #{_lambda_.28} parent=0 // pred_check
    _
  $region7: #{_lambda_.28} parent=0 // pred_check_branch
    %11 = sbr.rel (0) target = $region9
  $region8: #{_lambda_.28} parent=0 // pred_region
    _
  $region9: #{_lambda_.28} parent=0 // pred_fallthru
    _
  // Predicated region
  $region10: #{_lambda_.28} parent=0 // pred_check
    _
  $region11: #{_lambda_.28} parent=0 // pred_check_branch
    %13 = sbr.rel (0) target = $region13
  $region12: #{_lambda_.28} parent=0 // pred_region
    _
  $region13: #{_lambda_.28} parent=0 // pred_fallthru
    _
  %v15 = vld [vmem:[%s0] sm:$0xf]
  %v16 = vld [vmem:[%s0 + $0x4] sm:$0xf]
  %v17 = vld [vmem:[%s0 + $0x8] sm:$0xf]
  %v18 = vld [vmem:[%s0 + $0xc] sm:$0xf]
  %v19 = vld [vmem:[%s1] sm:$0xf]
  %v20 = vld [vmem:[%s1 + $0x4] sm:$0xf]
  %v21 = vld [vmem:[%s2] sm:$0xff]
  %v22 = vld [vmem:[%s2 + $0x8] sm:$0xff]
  %v23 = vld [vmem:[%s2 + $0x10] sm:$0xff]
  %v24 = vld [vmem:[%s2 + $0x18] sm:$0xff]
  %26 = vset.pattern.permute.xlu0 0
  %27 = vperm.xlu0 %26, %v21
  %v28 = vpop.permute.xlu0 %27
  %31 = vset.pattern.permute.xlu0 0
  %32 = vperm.xlu0 %31, %v22
  %v33 = vpop.permute.xlu0 %32
  %36 = vset.pattern.permute.xlu0 0
  %37 = vperm.xlu0 %36, %v23
  %v38 = vpop.permute.xlu0 %37
  %41 = vset.pattern.permute.xlu0 0
  %42 = vperm.xlu0 %41, %v24
  %v43 = vpop.permute.xlu0 %42
  %v49 = vunpack.c.l.b16 %v15
  %v50 = vunpack.c.l.b16 %v16
  %v51 = vunpack.c.l.b16 %v17
  %v52 = vunpack.c.l.b16 %v18
  %v53 = vpack.c.b16 %v50, %v49
  %v54 = vpack.c.b16 %v52, %v51
  %v57 = vunpack.c.l.b16 %v19
  %v58 = vunpack.c.l.b16 %v20
  %v59 = vpack.c.b16 %v58, %v57
  %vm61 = vcmask 130048
  %v63 = vsel %vm61, %v53, 0
  %v66 = vsel %vm61, %v54, 0
  %68 = vmatprep.subr.bf16.mxu0 0
  %69 = vmatpush1.bf16.msra.mxu0 0
  %70 = vmatprep.subr.bf16.mxu0 0
  %71 = vmatpush1.bf16.msra.mxu0 0
  %72 = vmatprep.subr.bf16.mxu0 0
  %73 = vmatpush1.bf16.msra.mxu0 0
  %74 = vmatprep.subr.bf16.mxu0 0
  %75 = vmatpush1.bf16.msra.mxu0 0
  %76 = vmatprep.subr.bf16.mxu0 0
  %77 = vmatpush1.bf16.msra.mxu0 0
  %78 = vmatprep.subr.bf16.mxu0 0
  %79 = vmatpush1.bf16.msra.mxu0 0
  %80 = vmatprep.subr.bf16.mxu0 0
  %81 = vmatpush1.bf16.msra.mxu0 0
  %82 = vmatprep.subr.bf16.mxu0 0
  %83 = vmatpush1.bf16.msra.mxu0 %v59
  %84 = vmatprep.subr.bf16.mxu0 0
  %85 = vmatpush2.bf16.msra.mxu0 0
  %86 = vmatprep.subr.bf16.mxu0 0
  %87 = vmatpush2.bf16.msra.mxu0 0
  %88 = vmatprep.subr.bf16.mxu0 0
  %89 = vmatpush2.bf16.msra.mxu0 0
  %90 = vmatprep.subr.bf16.mxu0 0
  %91 = vmatpush2.bf16.msra.mxu0 0
  %92 = vmatprep.subr.bf16.mxu0 0
  %93 = vmatpush2.bf16.msra.mxu0 0
  %94 = vmatprep.subr.bf16.mxu0 0
  %95 = vmatpush2.bf16.msra.mxu0 0
  %96 = vmatprep.subr.bf16.mxu0 0
  %97 = vmatpush2.bf16.msra.mxu0 0
  %98 = vmatprep.subr.bf16.mxu0 0
  %99 = vmatpush2.bf16.msra.mxu0 0
  %100 = vmatprep.mubr.bf16.mxu0 0
  %101 = vmatmul.mubr.bf16.gmra.mxu0 %v63
  %v102 = vpop.f32.mrf.mxu0
  %v103 = vadd.f32 %v28, %v102
  %v104 = vpop.f32.mrf.mxu0
  %v105 = vpop.f32.mrf.mxu0
  %v106 = vadd.f32 %v33, %v105
  %v107 = vpop.f32.mrf.mxu0
  %108 = vmatprep.mubr.bf16.mxu0 0
  %109 = vmatmul.mubr.bf16.gmra.mxu0 %v66
  %v110 = vpop.f32.mrf.mxu0
  %v111 = vadd.f32 %v38, %v110
  %v112 = vpop.f32.mrf.mxu0
  %v113 = vpop.f32.mrf.mxu0
  %v114 = vadd.f32 %v43, %v113
  %v115 = vpop.f32.mrf.mxu0
  %116 = vdwg.mxu0
  %v117 = vpack.c.bf16 %v106, %v103
  %v118 = vpack.c.bf16 %v114, %v111
  %v121 = vunpack.c.l.b16 %v117
  %v122 = vunpack.c.h.b16 %v117
  %v123 = vunpack.c.l.b16 %v118
  %v124 = vunpack.c.h.b16 %v118
  %v125 = vpack.c.b16 %v121, %v121
  %v126 = vpack.c.b16 %v122, %v122
  %v127 = vpack.c.b16 %v123, %v123
  %v128 = vpack.c.b16 %v124, %v124
  %vm133 = vcmask 257024
  %134 = vst.msk [vmem:[%s3] sm:$0xf] %vm133, %v125
  %135 = vst.msk [vmem:[%s3 + $0x4] sm:$0xf] %vm133, %v126
  %136 = vst.msk [vmem:[%s3 + $0x8] sm:$0xf] %vm133, %v127
  %137 = vst.msk [vmem:[%s3 + $0xc] sm:$0xf] %vm133, %v128
  // Predicated region
  $region14: #{_lambda_.28} parent=0 // pred_check
    _
  $region15: #{_lambda_.28} parent=0 // pred_check_branch
    %139 = sbr.rel (0) target = $region17
  $region16: #{_lambda_.28} parent=0 // pred_region
    _
  $region17: #{_lambda_.28} parent=0 // pred_fallthru
    _
  // Predicated region
  $region18: #{_lambda_.28} parent=0 // pred_check
    _
  $region19: #{_lambda_.28} parent=0 // pred_check_branch
    %141 = sbr.rel (0) target = $region21
  $region20: #{_lambda_.28} parent=0 // pred_region
    _
  $region21: #{_lambda_.28} parent=0 // pred_fallthru
    _

// kernel: _lambda_.30
$region0: #{_lambda_.30}
  #allocation0 [shape = 'u32[]', space=smem, size = 0x4, offset = 0x4, fixed_abs, tag = 'smem constant byte address 0x4 - core index']
  #allocation1 [shape = 'u32[144,128]{1,0:T(1,128)}', space=vmem, size = 0x12000, scoped, tag = 'internal scratch']
  %s0 = inlined_call_operand.vmem [shape: bf16[32,288], index: 0, kind: input, shape index: {}]
  %s1 = inlined_call_operand.vmem [shape: bf16[288,32], index: 1, kind: input, shape index: {}]
  %s2 = inlined_call_operand.vmem [shape: f32[32,1], index: 2, kind: input, shape index: {}]
  %s3 = inlined_call_operand.vmem [shape: bf16[32,32], index: 3, kind: input, shape index: {}]
  %s4 = inlined_call_operand.vmem [shape: bf16[32,32], index: 4, kind: output, shape index: {}]
  %s5 = sld [smem:[#allocation0]]
  $region26: #{_lambda_.30} parent=0
    _
  %s7 = ssub.s32 1, %s5
  %s8 = scalar_select 0, %s7, %s5
  // Predicated region
  $region2: #{_lambda_.30} parent=0 // pred_check
    _
  $region3: #{_lambda_.30} parent=0 // pred_check_branch
    %10 = sbr.rel (0) target = $region5
  $region4: #{_lambda_.30} parent=0 // pred_region
    _
  $region5: #{_lambda_.30} parent=0 // pred_fallthru
    _
  // Predicated region
  $region6: #{_lambda_.30} parent=0 // pred_check
    _
  $region7: #{_lambda_.30} parent=0 // pred_check_branch
    %12 = sbr.rel (0) target = $region9
  $region8: #{_lambda_.30} parent=0 // pred_region
    _
  $region9: #{_lambda_.30} parent=0 // pred_fallthru
    _
  // Predicated region
  $region10: #{_lambda_.30} parent=0 // pred_check
    _
  $region11: #{_lambda_.30} parent=0 // pred_check_branch
    %14 = sbr.rel (0) target = $region13
  $region12: #{_lambda_.30} parent=0 // pred_region
    _
  $region13: #{_lambda_.30} parent=0 // pred_fallthru
    _
  // Predicated region
  $region14: #{_lambda_.30} parent=0 // pred_check
    _
  $region15: #{_lambda_.30} parent=0 // pred_check_branch
    %16 = sbr.rel (0) target = $region17
  $region16: #{_lambda_.30} parent=0 // pred_region
    _
  $region17: #{_lambda_.30} parent=0 // pred_fallthru
    _
  %v18 = vld [vmem:[%s0] sm:$0xff]
  %v19 = vld [vmem:[%s0 + $0x8] sm:$0xf]
  %v20 = vld [vmem:[%s0 + $0xc] sm:$0xff]
  %v21 = vld [vmem:[%s0 + $0x14] sm:$0xf]
  %v22 = vld [vmem:[%s0 + $0x18] sm:$0xff]
  %v23 = vld [vmem:[%s0 + $0x20] sm:$0xf]
  %v24 = vld [vmem:[%s0 + $0x24] sm:$0xff]
  %v25 = vld [vmem:[%s0 + $0x2c] sm:$0xf]
  %v26 = vld [vmem:[%s1] sm:$0xf]
  %v27 = vld [vmem:[%s1 + $0x4] sm:$0xf]
  %v28 = vld [vmem:[%s1 + $0x8] sm:$0xf]
  %v29 = vld [vmem:[%s1 + $0xc] sm:$0xf]
  %v30 = vld [vmem:[%s1 + $0x10] sm:$0xf]
  %v31 = vld [vmem:[%s1 + $0x14] sm:$0xf]
  %v32 = vld [vmem:[%s1 + $0x18] sm:$0xf]
  %v33 = vld [vmem:[%s1 + $0x1c] sm:$0xf]
  %v34 = vld [vmem:[%s1 + $0x20] sm:$0xf]
  %v35 = vld [vmem:[%s1 + $0x24] sm:$0xf]
  %v36 = vld [vmem:[%s1 + $0x28] sm:$0xf]
  %v37 = vld [vmem:[%s1 + $0x2c] sm:$0xf]
  %v38 = vld [vmem:[%s1 + $0x30] sm:$0xf]
  %v39 = vld [vmem:[%s1 + $0x34] sm:$0xf]
  %v40 = vld [vmem:[%s1 + $0x38] sm:$0xf]
  %v41 = vld [vmem:[%s1 + $0x3c] sm:$0xf]
  %v42 = vld [vmem:[%s1 + $0x40] sm:$0xf]
  %v43 = vld [vmem:[%s1 + $0x44] sm:$0xf]
  %v44 = vld [vmem:[%s1 + $0x48] sm:$0xf]
  %v45 = vld [vmem:[%s1 + $0x4c] sm:$0xf]
  %v46 = vld [vmem:[%s1 + $0x50] sm:$0xf]
  %v47 = vld [vmem:[%s1 + $0x54] sm:$0xf]
  %v48 = vld [vmem:[%s1 + $0x58] sm:$0xf]
  %v49 = vld [vmem:[%s1 + $0x5c] sm:$0xf]
  %v50 = vld [vmem:[%s1 + $0x60] sm:$0xf]
  %v51 = vld [vmem:[%s1 + $0x64] sm:$0xf]
  %v52 = vld [vmem:[%s1 + $0x68] sm:$0xf]
  %v53 = vld [vmem:[%s1 + $0x6c] sm:$0xf]
  %v54 = vld [vmem:[%s1 + $0x70] sm:$0xf]
  %v55 = vld [vmem:[%s1 + $0x74] sm:$0xf]
  %v56 = vld [vmem:[%s1 + $0x78] sm:$0xf]
  %v57 = vld [vmem:[%s1 + $0x7c] sm:$0xf]
  %v58 = vld [vmem:[%s1 + $0x80] sm:$0xf]
  %v59 = vld [vmem:[%s1 + $0x84] sm:$0xf]
  %v60 = vld [vmem:[%s1 + $0x88] sm:$0xf]
  %v61 = vld [vmem:[%s1 + $0x8c] sm:$0xf]
  %v62 = vld [vmem:[%s2] sm:$0xff]
  %v63 = vld [vmem:[%s2 + $0x8] sm:$0xff]
  %v64 = vld [vmem:[%s2 + $0x10] sm:$0xff]
  %v65 = vld [vmem:[%s2 + $0x18] sm:$0xff]
  %67 = vset.pattern.permute.xlu0 0
  %68 = vperm.xlu0 %67, %v62
  %v69 = vpop.permute.xlu0 %68
  %72 = vset.pattern.permute.xlu0 0
  %73 = vperm.xlu0 %72, %v63
  %v74 = vpop.permute.xlu0 %73
  %77 = vset.pattern.permute.xlu0 0
  %78 = vperm.xlu0 %77, %v64
  %v79 = vpop.permute.xlu0 %78
  %82 = vset.pattern.permute.xlu0 0
  %83 = vperm.xlu0 %82, %v65
  %v84 = vpop.permute.xlu0 %83
  %v94 = vunpack.c.l.b16 %v18
  %v95 = vunpack.c.h.b16 %v18
  %v96 = vunpack.c.l.b16 %v19
  %v97 = vunpack.c.l.b16 %v20
  %v98 = vunpack.c.h.b16 %v20
  %v99 = vunpack.c.l.b16 %v21
  %v100 = vunpack.c.l.b16 %v22
  %v101 = vunpack.c.h.b16 %v22
  %v102 = vunpack.c.l.b16 %v23
  %v103 = vunpack.c.l.b16 %v24
  %v104 = vunpack.c.h.b16 %v24
  %v105 = vunpack.c.l.b16 %v25
  %v106 = vpack.c.b16 %v97, %v94
  %v107 = vpack.c.b16 %v98, %v95
  %v108 = vpack.c.b16 %v99, %v96
  %v109 = vpack.c.b16 %v103, %v100
  %v110 = vpack.c.b16 %v104, %v101
  %v111 = vpack.c.b16 %v105, %v102
  %v152 = vunpack.c.l.b16 %v26
  %v153 = vunpack.c.l.b16 %v27
  %v154 = vunpack.c.l.b16 %v28
  %v155 = vunpack.c.l.b16 %v29
  %v156 = vunpack.c.l.b16 %v30
  %v157 = vunpack.c.l.b16 %v31
  %v158 = vunpack.c.l.b16 %v32
  %v159 = vunpack.c.l.b16 %v33
  %v160 = vunpack.c.l.b16 %v34
  %v161 = vunpack.c.l.b16 %v35
  %v162 = vunpack.c.l.b16 %v36
  %v163 = vunpack.c.l.b16 %v37
  %v164 = vunpack.c.l.b16 %v38
  %v165 = vunpack.c.l.b16 %v39
  %v166 = vunpack.c.l.b16 %v40
  %v167 = vunpack.c.l.b16 %v41
  %v168 = vunpack.c.l.b16 %v42
  %v169 = vunpack.c.l.b16 %v43
  %v170 = vunpack.c.l.b16 %v44
  %v171 = vunpack.c.l.b16 %v45
  %v172 = vunpack.c.l.b16 %v46
  %v173 = vunpack.c.l.b16 %v47
  %v174 = vunpack.c.l.b16 %v48
  %v175 = vunpack.c.l.b16 %v49
  %v176 = vunpack.c.l.b16 %v50
  %v177 = vunpack.c.l.b16 %v51
  %v178 = vunpack.c.l.b16 %v52
  %v179 = vunpack.c.l.b16 %v53
  %v180 = vunpack.c.l.b16 %v54
  %v181 = vunpack.c.l.b16 %v55
  %v182 = vunpack.c.l.b16 %v56
  %v183 = vunpack.c.l.b16 %v57
  %v184 = vunpack.c.l.b16 %v58
  %v185 = vunpack.c.l.b16 %v59
  %v186 = vunpack.c.l.b16 %v60
  %v187 = vunpack.c.l.b16 %v61
  %v188 = vpack.c.b16 %v153, %v152
  %v189 = vpack.c.b16 %v155, %v154
  %v190 = vpack.c.b16 %v157, %v156
  %v191 = vpack.c.b16 %v159, %v158
  %v192 = vpack.c.b16 %v161, %v160
  %v193 = vpack.c.b16 %v163, %v162
  %v194 = vpack.c.b16 %v165, %v164
  %v195 = vpack.c.b16 %v167, %v166
  %v196 = vpack.c.b16 %v169, %v168
  %v197 = vpack.c.b16 %v171, %v170
  %v198 = vpack.c.b16 %v173, %v172
  %v199 = vpack.c.b16 %v175, %v174
  %v200 = vpack.c.b16 %v177, %v176
  %v201 = vpack.c.b16 %v179, %v178
  %v202 = vpack.c.b16 %v181, %v180
  %v203 = vpack.c.b16 %v183, %v182
  %v204 = vpack.c.b16 %v185, %v184
  %v205 = vpack.c.b16 %v187, %v186
  %vm224 = vcmask 261120
  %v226 = vsel %vm224, %v108, 0
  %v229 = vsel %vm224, %v111, 0
  %231 = vmatprep.subr.bf16.mxu0 0
  %232 = vmatpush1.bf16.msra.mxu0 %v195
  %233 = vmatprep.subr.bf16.mxu0 0
  %234 = vmatpush1.bf16.msra.mxu0 %v194
  %235 = vmatprep.subr.bf16.mxu0 0
  %236 = vmatpush1.bf16.msra.mxu0 %v193
  %237 = vmatprep.subr.bf16.mxu0 0
  %238 = vmatpush1.bf16.msra.mxu0 %v192
  %239 = vmatprep.subr.bf16.mxu0 0
  %240 = vmatpush1.bf16.msra.mxu0 %v191
  %241 = vmatprep.subr.bf16.mxu0 0
  %242 = vmatpush1.bf16.msra.mxu0 %v190
  %243 = vmatprep.subr.bf16.mxu0 0
  %244 = vmatpush1.bf16.msra.mxu0 %v189
  %245 = vmatprep.subr.bf16.mxu0 0
  %246 = vmatpush1.bf16.msra.mxu0 %v188
  %247 = vmatprep.subr.bf16.mxu0 0
  %248 = vmatpush2.bf16.msra.mxu0 %v203
  %249 = vmatprep.subr.bf16.mxu0 0
  %250 = vmatpush2.bf16.msra.mxu0 %v202
  %251 = vmatprep.subr.bf16.mxu0 0
  %252 = vmatpush2.bf16.msra.mxu0 %v201
  %253 = vmatprep.subr.bf16.mxu0 0
  %254 = vmatpush2.bf16.msra.mxu0 %v200
  %255 = vmatprep.subr.bf16.mxu0 0
  %256 = vmatpush2.bf16.msra.mxu0 %v199
  %257 = vmatprep.subr.bf16.mxu0 0
  %258 = vmatpush2.bf16.msra.mxu0 %v198
  %259 = vmatprep.subr.bf16.mxu0 0
  %260 = vmatpush2.bf16.msra.mxu0 %v197
  %261 = vmatprep.subr.bf16.mxu0 0
  %262 = vmatpush2.bf16.msra.mxu0 %v196
  %263 = vmatprep.mubr.bf16.mxu0 %v107
  %264 = vmatmul.mubr.bf16.gmra.mxu0 %v106
  %v265 = vpop.f32.mrf.mxu0
  %v266 = vadd.f32 %v69, %v265
  %v267 = vpop.f32.mrf.mxu0
  %v268 = vpop.f32.mrf.mxu0
  %v269 = vadd.f32 %v74, %v268
  %v270 = vpop.f32.mrf.mxu0
  %271 = vmatprep.mubr.bf16.mxu0 %v110
  %272 = vmatmul.mubr.bf16.gmra.mxu0 %v109
  %v273 = vpop.f32.mrf.mxu0
  %v274 = vadd.f32 %v79, %v273
  %v275 = vpop.f32.mrf.mxu0
  %v276 = vpop.f32.mrf.mxu0
  %v277 = vadd.f32 %v84, %v276
  %v278 = vpop.f32.mrf.mxu0
  %279 = vdwg.mxu0
  %280 = vmatprep.subr.bf16.mxu0 0
  %281 = vmatpush1.bf16.msra.mxu0 0
  %282 = vmatprep.subr.bf16.mxu0 0
  %283 = vmatpush1.bf16.msra.mxu0 0
  %284 = vmatprep.subr.bf16.mxu0 0
  %285 = vmatpush1.bf16.msra.mxu0 0
  %286 = vmatprep.subr.bf16.mxu0 0
  %287 = vmatpush1.bf16.msra.mxu0 0
  %288 = vmatprep.subr.bf16.mxu0 0
  %289 = vmatpush1.bf16.msra.mxu0 0
  %290 = vmatprep.subr.bf16.mxu0 0
  %291 = vmatpush1.bf16.msra.mxu0 0
  %292 = vmatprep.subr.bf16.mxu0 0
  %293 = vmatpush1.bf16.msra.mxu0 %v205
  %294 = vmatprep.subr.bf16.mxu0 0
  %295 = vmatpush1.bf16.msra.mxu0 %v204
  %296 = vmatprep.subr.bf16.mxu0 0
  %297 = vmatpush2.bf16.msra.mxu0 0
  %298 = vmatprep.subr.bf16.mxu0 0
  %299 = vmatpush2.bf16.msra.mxu0 0
  %300 = vmatprep.subr.bf16.mxu0 0
  %301 = vmatpush2.bf16.msra.mxu0 0
  %302 = vmatprep.subr.bf16.mxu0 0
  %303 = vmatpush2.bf16.msra.mxu0 0
  %304 = vmatprep.subr.bf16.mxu0 0
  %305 = vmatpush2.bf16.msra.mxu0 0
  %306 = vmatprep.subr.bf16.mxu0 0
  %307 = vmatpush2.bf16.msra.mxu0 0
  %308 = vmatprep.subr.bf16.mxu0 0
  %309 = vmatpush2.bf16.msra.mxu0 0
  %310 = vmatprep.subr.bf16.mxu0 0
  %311 = vmatpush2.bf16.msra.mxu0 0
  %312 = vmatprep.mubr.bf16.mxu0 0
  %313 = vmatmul.mubr.bf16.gmra.mxu0 %v226
  %v314 = vpop.f32.mrf.mxu0
  %v315 = vadd.f32 %v266, %v314
  %v316 = vpop.f32.mrf.mxu0
  %v317 = vpop.f32.mrf.mxu0
  %v318 = vadd.f32 %v269, %v317
  %v319 = vpop.f32.mrf.mxu0
  %320 = vmatprep.mubr.bf16.mxu0 0
  %321 = vmatmul.mubr.bf16.gmra.mxu0 %v229
  %v322 = vpop.f32.mrf.mxu0
  %v323 = vadd.f32 %v274, %v322
  %v324 = vpop.f32.mrf.mxu0
  %v325 = vpop.f32.mrf.mxu0
  %v326 = vadd.f32 %v277, %v325
  %v327 = vpop.f32.mrf.mxu0
  %328 = vdwg.mxu0
  %v329 = vld [vmem:[%s3] sm:$0xf]
  %v330 = vld [vmem:[%s3 + $0x4] sm:$0xf]
  %v331 = vld [vmem:[%s3 + $0x8] sm:$0xf]
  %v332 = vld [vmem:[%s3 + $0xc] sm:$0xf]
  %v333 = vunpack.c.l.bf16 %v329
  %v334 = vunpack.c.l.bf16 %v330
  %v335 = vunpack.c.l.bf16 %v331
  %v336 = vunpack.c.l.bf16 %v332
  %v337 = vadd.f32 %v315, %v333
  %v338 = vadd.f32 %v318, %v334
  %v339 = vadd.f32 %v323, %v335
  %v340 = vadd.f32 %v326, %v336
  %v341 = vmax.f32 %v337, 0.0
  %v342 = vmax.f32 %v338, 0.0
  %v343 = vmax.f32 %v339, 0.0
  %v344 = vmax.f32 %v340, 0.0
  %v345 = vpack.c.bf16 %v342, %v341
  %v346 = vpack.c.bf16 %v344, %v343
  %v349 = vunpack.c.l.b16 %v345
  %v350 = vunpack.c.h.b16 %v345
  %v351 = vunpack.c.l.b16 %v346
  %v352 = vunpack.c.h.b16 %v346
  %v353 = vpack.c.b16 %v349, %v349
  %v354 = vpack.c.b16 %v350, %v350
  %v355 = vpack.c.b16 %v351, %v351
  %v356 = vpack.c.b16 %v352, %v352
  %vm361 = vcmask 257024
  %362 = vst.msk [vmem:[%s4] sm:$0xf] %vm361, %v353
  %363 = vst.msk [vmem:[%s4 + $0x4] sm:$0xf] %vm361, %v354
  %364 = vst.msk [vmem:[%s4 + $0x8] sm:$0xf] %vm361, %v355
  %365 = vst.msk [vmem:[%s4 + $0xc] sm:$0xf] %vm361, %v356
  // Predicated region
  $region18: #{_lambda_.30} parent=0 // pred_check
    _
  $region19: #{_lambda_.30} parent=0 // pred_check_branch
    %367 = sbr.rel (0) target = $region21
  $region20: #{_lambda_.30} parent=0 // pred_region
    _
  $region21: #{_lambda_.30} parent=0 // pred_fallthru
    _
  // Predicated region
  $region22: #{_lambda_.30} parent=0 // pred_check
    _
  $region23: #{_lambda_.30} parent=0 // pred_check_branch
    %369 = sbr.rel (0) target = $region25
  $region24: #{_lambda_.30} parent=0 // pred_region
    _
  $region25: #{_lambda_.30} parent=0 // pred_fallthru
    _

// kernel: _lambda_.31
$region0: #{_lambda_.31}
  #allocation0 [shape = 'u32[]', space=smem, size = 0x4, offset = 0x4, fixed_abs, tag = 'smem constant byte address 0x4 - core index']
  #allocation1 [shape = 'u32[144,128]{1,0:T(1,128)}', space=vmem, size = 0x12000, scoped, tag = 'internal scratch']
  %s0 = inlined_call_operand.vmem [shape: bf16[32,288], index: 0, kind: input, shape index: {}]
  %s1 = inlined_call_operand.vmem [shape: bf16[288,32], index: 1, kind: input, shape index: {}]
  %s2 = inlined_call_operand.vmem [shape: f32[32,1], index: 2, kind: input, shape index: {}]
  %s3 = inlined_call_operand.vmem [shape: bf16[32,32], index: 3, kind: output, shape index: {}]
  %s4 = sld [smem:[#allocation0]]
  $region22: #{_lambda_.31} parent=0
    _
  %s6 = ssub.s32 1, %s4
  %s7 = scalar_select 0, %s6, %s4
  // Predicated region
  $region2: #{_lambda_.31} parent=0 // pred_check
    _
  $region3: #{_lambda_.31} parent=0 // pred_check_branch
    %9 = sbr.rel (0) target = $region5
  $region4: #{_lambda_.31} parent=0 // pred_region
    _
  $region5: #{_lambda_.31} parent=0 // pred_fallthru
    _
  // Predicated region
  $region6: #{_lambda_.31} parent=0 // pred_check
    _
  $region7: #{_lambda_.31} parent=0 // pred_check_branch
    %11 = sbr.rel (0) target = $region9
  $region8: #{_lambda_.31} parent=0 // pred_region
    _
  $region9: #{_lambda_.31} parent=0 // pred_fallthru
    _
  // Predicated region
  $region10: #{_lambda_.31} parent=0 // pred_check
    _
  $region11: #{_lambda_.31} parent=0 // pred_check_branch
    %13 = sbr.rel (0) target = $region13
  $region12: #{_lambda_.31} parent=0 // pred_region
    _
  $region13: #{_lambda_.31} parent=0 // pred_fallthru
    _
  %v15 = vld [vmem:[%s0] sm:$0xff]
  %v16 = vld [vmem:[%s0 + $0x8] sm:$0xf]
  %v17 = vld [vmem:[%s0 + $0xc] sm:$0xff]
  %v18 = vld [vmem:[%s0 + $0x14] sm:$0xf]
  %v19 = vld [vmem:[%s0 + $0x18] sm:$0xff]
  %v20 = vld [vmem:[%s0 + $0x20] sm:$0xf]
  %v21 = vld [vmem:[%s0 + $0x24] sm:$0xff]
  %v22 = vld [vmem:[%s0 + $0x2c] sm:$0xf]
  %v23 = vld [vmem:[%s1] sm:$0xf]
  %v24 = vld [vmem:[%s1 + $0x4] sm:$0xf]
  %v25 = vld [vmem:[%s1 + $0x8] sm:$0xf]
  %v26 = vld [vmem:[%s1 + $0xc] sm:$0xf]
  %v27 = vld [vmem:[%s1 + $0x10] sm:$0xf]
  %v28 = vld [vmem:[%s1 + $0x14] sm:$0xf]
  %v29 = vld [vmem:[%s1 + $0x18] sm:$0xf]
  %v30 = vld [vmem:[%s1 + $0x1c] sm:$0xf]
  %v31 = vld [vmem:[%s1 + $0x20] sm:$0xf]
  %v32 = vld [vmem:[%s1 + $0x24] sm:$0xf]
  %v33 = vld [vmem:[%s1 + $0x28] sm:$0xf]
  %v34 = vld [vmem:[%s1 + $0x2c] sm:$0xf]
  %v35 = vld [vmem:[%s1 + $0x30] sm:$0xf]
  %v36 = vld [vmem:[%s1 + $0x34] sm:$0xf]
  %v37 = vld [vmem:[%s1 + $0x38] sm:$0xf]
  %v38 = vld [vmem:[%s1 + $0x3c] sm:$0xf]
  %v39 = vld [vmem:[%s1 + $0x40] sm:$0xf]
  %v40 = vld [vmem:[%s1 + $0x44] sm:$0xf]
  %v41 = vld [vmem:[%s1 + $0x48] sm:$0xf]
  %v42 = vld [vmem:[%s1 + $0x4c] sm:$0xf]
  %v43 = vld [vmem:[%s1 + $0x50] sm:$0xf]
  %v44 = vld [vmem:[%s1 + $0x54] sm:$0xf]
  %v45 = vld [vmem:[%s1 + $0x58] sm:$0xf]
  %v46 = vld [vmem:[%s1 + $0x5c] sm:$0xf]
  %v47 = vld [vmem:[%s1 + $0x60] sm:$0xf]
  %v48 = vld [vmem:[%s1 + $0x64] sm:$0xf]
  %v49 = vld [vmem:[%s1 + $0x68] sm:$0xf]
  %v50 = vld [vmem:[%s1 + $0x6c] sm:$0xf]
  %v51 = vld [vmem:[%s1 + $0x70] sm:$0xf]
  %v52 = vld [vmem:[%s1 + $0x74] sm:$0xf]
  %v53 = vld [vmem:[%s1 + $0x78] sm:$0xf]
  %v54 = vld [vmem:[%s1 + $0x7c] sm:$0xf]
  %v55 = vld [vmem:[%s1 + $0x80] sm:$0xf]
  %v56 = vld [vmem:[%s1 + $0x84] sm:$0xf]
  %v57 = vld [vmem:[%s1 + $0x88] sm:$0xf]
  %v58 = vld [vmem:[%s1 + $0x8c] sm:$0xf]
  %v59 = vld [vmem:[%s2] sm:$0xff]
  %v60 = vld [vmem:[%s2 + $0x8] sm:$0xff]
  %v61 = vld [vmem:[%s2 + $0x10] sm:$0xff]
  %v62 = vld [vmem:[%s2 + $0x18] sm:$0xff]
  %64 = vset.pattern.permute.xlu0 0
  %65 = vperm.xlu0 %64, %v59
  %v66 = vpop.permute.xlu0 %65
  %69 = vset.pattern.permute.xlu0 0
  %70 = vperm.xlu0 %69, %v60
  %v71 = vpop.permute.xlu0 %70
  %74 = vset.pattern.permute.xlu0 0
  %75 = vperm.xlu0 %74, %v61
  %v76 = vpop.permute.xlu0 %75
  %79 = vset.pattern.permute.xlu0 0
  %80 = vperm.xlu0 %79, %v62
  %v81 = vpop.permute.xlu0 %80
  %v91 = vunpack.c.l.b16 %v15
  %v92 = vunpack.c.h.b16 %v15
  %v93 = vunpack.c.l.b16 %v16
  %v94 = vunpack.c.l.b16 %v17
  %v95 = vunpack.c.h.b16 %v17
  %v96 = vunpack.c.l.b16 %v18
  %v97 = vunpack.c.l.b16 %v19
  %v98 = vunpack.c.h.b16 %v19
  %v99 = vunpack.c.l.b16 %v20
  %v100 = vunpack.c.l.b16 %v21
  %v101 = vunpack.c.h.b16 %v21
  %v102 = vunpack.c.l.b16 %v22
  %v103 = vpack.c.b16 %v94, %v91
  %v104 = vpack.c.b16 %v95, %v92
  %v105 = vpack.c.b16 %v96, %v93
  %v106 = vpack.c.b16 %v100, %v97
  %v107 = vpack.c.b16 %v101, %v98
  %v108 = vpack.c.b16 %v102, %v99
  %v149 = vunpack.c.l.b16 %v23
  %v150 = vunpack.c.l.b16 %v24
  %v151 = vunpack.c.l.b16 %v25
  %v152 = vunpack.c.l.b16 %v26
  %v153 = vunpack.c.l.b16 %v27
  %v154 = vunpack.c.l.b16 %v28
  %v155 = vunpack.c.l.b16 %v29
  %v156 = vunpack.c.l.b16 %v30
  %v157 = vunpack.c.l.b16 %v31
  %v158 = vunpack.c.l.b16 %v32
  %v159 = vunpack.c.l.b16 %v33
  %v160 = vunpack.c.l.b16 %v34
  %v161 = vunpack.c.l.b16 %v35
  %v162 = vunpack.c.l.b16 %v36
  %v163 = vunpack.c.l.b16 %v37
  %v164 = vunpack.c.l.b16 %v38
  %v165 = vunpack.c.l.b16 %v39
  %v166 = vunpack.c.l.b16 %v40
  %v167 = vunpack.c.l.b16 %v41
  %v168 = vunpack.c.l.b16 %v42
  %v169 = vunpack.c.l.b16 %v43
  %v170 = vunpack.c.l.b16 %v44
  %v171 = vunpack.c.l.b16 %v45
  %v172 = vunpack.c.l.b16 %v46
  %v173 = vunpack.c.l.b16 %v47
  %v174 = vunpack.c.l.b16 %v48
  %v175 = vunpack.c.l.b16 %v49
  %v176 = vunpack.c.l.b16 %v50
  %v177 = vunpack.c.l.b16 %v51
  %v178 = vunpack.c.l.b16 %v52
  %v179 = vunpack.c.l.b16 %v53
  %v180 = vunpack.c.l.b16 %v54
  %v181 = vunpack.c.l.b16 %v55
  %v182 = vunpack.c.l.b16 %v56
  %v183 = vunpack.c.l.b16 %v57
  %v184 = vunpack.c.l.b16 %v58
  %v185 = vpack.c.b16 %v150, %v149
  %v186 = vpack.c.b16 %v152, %v151
  %v187 = vpack.c.b16 %v154, %v153
  %v188 = vpack.c.b16 %v156, %v155
  %v189 = vpack.c.b16 %v158, %v157
  %v190 = vpack.c.b16 %v160, %v159
  %v191 = vpack.c.b16 %v162, %v161
  %v192 = vpack.c.b16 %v164, %v163
  %v193 = vpack.c.b16 %v166, %v165
  %v194 = vpack.c.b16 %v168, %v167
  %v195 = vpack.c.b16 %v170, %v169
  %v196 = vpack.c.b16 %v172, %v171
  %v197 = vpack.c.b16 %v174, %v173
  %v198 = vpack.c.b16 %v176, %v175
  %v199 = vpack.c.b16 %v178, %v177
  %v200 = vpack.c.b16 %v180, %v179
  %v201 = vpack.c.b16 %v182, %v181
  %v202 = vpack.c.b16 %v184, %v183
  %vm221 = vcmask 261120
  %v223 = vsel %vm221, %v105, 0
  %v226 = vsel %vm221, %v108, 0
  %228 = vmatprep.subr.bf16.mxu0 0
  %229 = vmatpush1.bf16.msra.mxu0 %v192
  %230 = vmatprep.subr.bf16.mxu0 0
  %231 = vmatpush1.bf16.msra.mxu0 %v191
  %232 = vmatprep.subr.bf16.mxu0 0
  %233 = vmatpush1.bf16.msra.mxu0 %v190
  %234 = vmatprep.subr.bf16.mxu0 0
  %235 = vmatpush1.bf16.msra.mxu0 %v189
  %236 = vmatprep.subr.bf16.mxu0 0
  %237 = vmatpush1.bf16.msra.mxu0 %v188
  %238 = vmatprep.subr.bf16.mxu0 0
  %239 = vmatpush1.bf16.msra.mxu0 %v187
  %240 = vmatprep.subr.bf16.mxu0 0
  %241 = vmatpush1.bf16.msra.mxu0 %v186
  %242 = vmatprep.subr.bf16.mxu0 0
  %243 = vmatpush1.bf16.msra.mxu0 %v185
  %244 = vmatprep.subr.bf16.mxu0 0
  %245 = vmatpush2.bf16.msra.mxu0 %v200
  %246 = vmatprep.subr.bf16.mxu0 0
  %247 = vmatpush2.bf16.msra.mxu0 %v199
  %248 = vmatprep.subr.bf16.mxu0 0
  %249 = vmatpush2.bf16.msra.mxu0 %v198
  %250 = vmatprep.subr.bf16.mxu0 0
  %251 = vmatpush2.bf16.msra.mxu0 %v197
  %252 = vmatprep.subr.bf16.mxu0 0
  %253 = vmatpush2.bf16.msra.mxu0 %v196
  %254 = vmatprep.subr.bf16.mxu0 0
  %255 = vmatpush2.bf16.msra.mxu0 %v195
  %256 = vmatprep.subr.bf16.mxu0 0
  %257 = vmatpush2.bf16.msra.mxu0 %v194
  %258 = vmatprep.subr.bf16.mxu0 0
  %259 = vmatpush2.bf16.msra.mxu0 %v193
  %260 = vmatprep.mubr.bf16.mxu0 %v104
  %261 = vmatmul.mubr.bf16.gmra.mxu0 %v103
  %v262 = vpop.f32.mrf.mxu0
  %v263 = vadd.f32 %v66, %v262
  %v264 = vpop.f32.mrf.mxu0
  %v265 = vpop.f32.mrf.mxu0
  %v266 = vadd.f32 %v71, %v265
  %v267 = vpop.f32.mrf.mxu0
  %268 = vmatprep.mubr.bf16.mxu0 %v107
  %269 = vmatmul.mubr.bf16.gmra.mxu0 %v106
  %v270 = vpop.f32.mrf.mxu0
  %v271 = vadd.f32 %v76, %v270
  %v272 = vpop.f32.mrf.mxu0
  %v273 = vpop.f32.mrf.mxu0
  %v274 = vadd.f32 %v81, %v273
  %v275 = vpop.f32.mrf.mxu0
  %276 = vdwg.mxu0
  %277 = vmatprep.subr.bf16.mxu0 0
  %278 = vmatpush1.bf16.msra.mxu0 0
  %279 = vmatprep.subr.bf16.mxu0 0
  %280 = vmatpush1.bf16.msra.mxu0 0
  %281 = vmatprep.subr.bf16.mxu0 0
  %282 = vmatpush1.bf16.msra.mxu0 0
  %283 = vmatprep.subr.bf16.mxu0 0
  %284 = vmatpush1.bf16.msra.mxu0 0
  %285 = vmatprep.subr.bf16.mxu0 0
  %286 = vmatpush1.bf16.msra.mxu0 0
  %287 = vmatprep.subr.bf16.mxu0 0
  %288 = vmatpush1.bf16.msra.mxu0 0
  %289 = vmatprep.subr.bf16.mxu0 0
  %290 = vmatpush1.bf16.msra.mxu0 %v202
  %291 = vmatprep.subr.bf16.mxu0 0
  %292 = vmatpush1.bf16.msra.mxu0 %v201
  %293 = vmatprep.subr.bf16.mxu0 0
  %294 = vmatpush2.bf16.msra.mxu0 0
  %295 = vmatprep.subr.bf16.mxu0 0
  %296 = vmatpush2.bf16.msra.mxu0 0
  %297 = vmatprep.subr.bf16.mxu0 0
  %298 = vmatpush2.bf16.msra.mxu0 0
  %299 = vmatprep.subr.bf16.mxu0 0
  %300 = vmatpush2.bf16.msra.mxu0 0
  %301 = vmatprep.subr.bf16.mxu0 0
  %302 = vmatpush2.bf16.msra.mxu0 0
  %303 = vmatprep.subr.bf16.mxu0 0
  %304 = vmatpush2.bf16.msra.mxu0 0
  %305 = vmatprep.subr.bf16.mxu0 0
  %306 = vmatpush2.bf16.msra.mxu0 0
  %307 = vmatprep.subr.bf16.mxu0 0
  %308 = vmatpush2.bf16.msra.mxu0 0
  %309 = vmatprep.mubr.bf16.mxu0 0
  %310 = vmatmul.mubr.bf16.gmra.mxu0 %v223
  %v311 = vpop.f32.mrf.mxu0
  %v312 = vadd.f32 %v263, %v311
  %v313 = vpop.f32.mrf.mxu0
  %v314 = vpop.f32.mrf.mxu0
  %v315 = vadd.f32 %v266, %v314
  %v316 = vpop.f32.mrf.mxu0
  %317 = vmatprep.mubr.bf16.mxu0 0
  %318 = vmatmul.mubr.bf16.gmra.mxu0 %v226
  %v319 = vpop.f32.mrf.mxu0
  %v320 = vadd.f32 %v271, %v319
  %v321 = vpop.f32.mrf.mxu0
  %v322 = vpop.f32.mrf.mxu0
  %v323 = vadd.f32 %v274, %v322
  %v324 = vpop.f32.mrf.mxu0
  %325 = vdwg.mxu0
  %v326 = vmax.f32 %v312, 0.0
  %v327 = vmax.f32 %v315, 0.0
  %v328 = vmax.f32 %v320, 0.0
  %v329 = vmax.f32 %v323, 0.0
  %v330 = vpack.c.bf16 %v327, %v326
  %v331 = vpack.c.bf16 %v329, %v328
  %v334 = vunpack.c.l.b16 %v330
  %v335 = vunpack.c.h.b16 %v330
  %v336 = vunpack.c.l.b16 %v331
  %v337 = vunpack.c.h.b16 %v331
  %v338 = vpack.c.b16 %v334, %v334
  %v339 = vpack.c.b16 %v335, %v335
  %v340 = vpack.c.b16 %v336, %v336
  %v341 = vpack.c.b16 %v337, %v337
  %vm346 = vcmask 257024
  %347 = vst.msk [vmem:[%s3] sm:$0xf] %vm346, %v338
  %348 = vst.msk [vmem:[%s3 + $0x4] sm:$0xf] %vm346, %v339
  %349 = vst.msk [vmem:[%s3 + $0x8] sm:$0xf] %vm346, %v340
  %350 = vst.msk [vmem:[%s3 + $0xc] sm:$0xf] %vm346, %v341
  // Predicated region
  $region14: #{_lambda_.31} parent=0 // pred_check
    _
  $region15: #{_lambda_.31} parent=0 // pred_check_branch
    %352 = sbr.rel (0) target = $region17
  $region16: #{_lambda_.31} parent=0 // pred_region
    _
  $region17: #{_lambda_.31} parent=0 // pred_fallthru
    _
  // Predicated region
  $region18: #{_lambda_.31} parent=0 // pred_check
    _
  $region19: #{_lambda_.31} parent=0 // pred_check_branch
    %354 = sbr.rel (0) target = $region21
  $region20: #{_lambda_.31} parent=0 // pred_region
    _
  $region21: #{_lambda_.31} parent=0 // pred_fallthru
    _

// kernel: _lambda_.34
$region0: #{_lambda_.34}
  #allocation0 [shape = 'u32[]', space=smem, size = 0x4, offset = 0x4, fixed_abs, tag = 'smem constant byte address 0x4 - core index']
  #allocation1 [shape = 'u32[144,128]{1,0:T(1,128)}', space=vmem, size = 0x12000, scoped, tag = 'internal scratch']
  %s0 = inlined_call_operand.vmem [shape: bf16[64,288], index: 0, kind: input, shape index: {}]
  %s1 = inlined_call_operand.vmem [shape: bf16[288,8], index: 1, kind: input, shape index: {}]
  %s2 = inlined_call_operand.vmem [shape: f32[64,1], index: 2, kind: input, shape index: {}]
  %s3 = inlined_call_operand.vmem [shape: bf16[64,8], index: 3, kind: output, shape index: {}]
  %s4 = sld [smem:[#allocation0]]
  $region22: #{_lambda_.34} parent=0
    _
  %s6 = ssub.s32 1, %s4
  %s7 = scalar_select 0, %s6, %s4
  // Predicated region
  $region2: #{_lambda_.34} parent=0 // pred_check
    _
  $region3: #{_lambda_.34} parent=0 // pred_check_branch
    %9 = sbr.rel (0) target = $region5
  $region4: #{_lambda_.34} parent=0 // pred_region
    _
  $region5: #{_lambda_.34} parent=0 // pred_fallthru
    _
  // Predicated region
  $region6: #{_lambda_.34} parent=0 // pred_check
    _
  $region7: #{_lambda_.34} parent=0 // pred_check_branch
    %11 = sbr.rel (0) target = $region9
  $region8: #{_lambda_.34} parent=0 // pred_region
    _
  $region9: #{_lambda_.34} parent=0 // pred_fallthru
    _
  // Predicated region
  $region10: #{_lambda_.34} parent=0 // pred_check
    _
  $region11: #{_lambda_.34} parent=0 // pred_check_branch
    %13 = sbr.rel (0) target = $region13
  $region12: #{_lambda_.34} parent=0 // pred_region
    _
  $region13: #{_lambda_.34} parent=0 // pred_fallthru
    _
  %v15 = vld [vmem:[%s0] sm:$0xff]
  %v16 = vld [vmem:[%s0 + $0x8] sm:$0xf]
  %v17 = vld [vmem:[%s0 + $0xc] sm:$0xff]
  %v18 = vld [vmem:[%s0 + $0x14] sm:$0xf]
  %v19 = vld [vmem:[%s0 + $0x18] sm:$0xff]
  %v20 = vld [vmem:[%s0 + $0x20] sm:$0xf]
  %v21 = vld [vmem:[%s0 + $0x24] sm:$0xff]
  %v22 = vld [vmem:[%s0 + $0x2c] sm:$0xf]
  %v23 = vld [vmem:[%s0 + $0x30] sm:$0xff]
  %v24 = vld [vmem:[%s0 + $0x38] sm:$0xf]
  %v25 = vld [vmem:[%s0 + $0x3c] sm:$0xff]
  %v26 = vld [vmem:[%s0 + $0x44] sm:$0xf]
  %v27 = vld [vmem:[%s0 + $0x48] sm:$0xff]
  %v28 = vld [vmem:[%s0 + $0x50] sm:$0xf]
  %v29 = vld [vmem:[%s0 + $0x54] sm:$0xff]
  %v30 = vld [vmem:[%s0 + $0x5c] sm:$0xf]
  %v31 = vld [vmem:[%s1] sm:$0xf]
  %v32 = vld [vmem:[%s1 + $0x4] sm:$0xf]
  %v33 = vld [vmem:[%s1 + $0x8] sm:$0xf]
  %v34 = vld [vmem:[%s1 + $0xc] sm:$0xf]
  %v35 = vld [vmem:[%s1 + $0x10] sm:$0xf]
  %v36 = vld [vmem:[%s1 + $0x14] sm:$0xf]
  %v37 = vld [vmem:[%s1 + $0x18] sm:$0xf]
  %v38 = vld [vmem:[%s1 + $0x1c] sm:$0xf]
  %v39 = vld [vmem:[%s1 + $0x20] sm:$0xf]
  %v40 = vld [vmem:[%s1 + $0x24] sm:$0xf]
  %v41 = vld [vmem:[%s1 + $0x28] sm:$0xf]
  %v42 = vld [vmem:[%s1 + $0x2c] sm:$0xf]
  %v43 = vld [vmem:[%s1 + $0x30] sm:$0xf]
  %v44 = vld [vmem:[%s1 + $0x34] sm:$0xf]
  %v45 = vld [vmem:[%s1 + $0x38] sm:$0xf]
  %v46 = vld [vmem:[%s1 + $0x3c] sm:$0xf]
  %v47 = vld [vmem:[%s1 + $0x40] sm:$0xf]
  %v48 = vld [vmem:[%s1 + $0x44] sm:$0xf]
  %v49 = vld [vmem:[%s1 + $0x48] sm:$0xf]
  %v50 = vld [vmem:[%s1 + $0x4c] sm:$0xf]
  %v51 = vld [vmem:[%s1 + $0x50] sm:$0xf]
  %v52 = vld [vmem:[%s1 + $0x54] sm:$0xf]
  %v53 = vld [vmem:[%s1 + $0x58] sm:$0xf]
  %v54 = vld [vmem:[%s1 + $0x5c] sm:$0xf]
  %v55 = vld [vmem:[%s1 + $0x60] sm:$0xf]
  %v56 = vld [vmem:[%s1 + $0x64] sm:$0xf]
  %v57 = vld [vmem:[%s1 + $0x68] sm:$0xf]
  %v58 = vld [vmem:[%s1 + $0x6c] sm:$0xf]
  %v59 = vld [vmem:[%s1 + $0x70] sm:$0xf]
  %v60 = vld [vmem:[%s1 + $0x74] sm:$0xf]
  %v61 = vld [vmem:[%s1 + $0x78] sm:$0xf]
  %v62 = vld [vmem:[%s1 + $0x7c] sm:$0xf]
  %v63 = vld [vmem:[%s1 + $0x80] sm:$0xf]
  %v64 = vld [vmem:[%s1 + $0x84] sm:$0xf]
  %v65 = vld [vmem:[%s1 + $0x88] sm:$0xf]
  %v66 = vld [vmem:[%s1 + $0x8c] sm:$0xf]
  %v67 = vld [vmem:[%s2] sm:$0xff]
  %v68 = vld [vmem:[%s2 + $0x8] sm:$0xff]
  %v69 = vld [vmem:[%s2 + $0x10] sm:$0xff]
  %v70 = vld [vmem:[%s2 + $0x18] sm:$0xff]
  %v71 = vld [vmem:[%s2 + $0x20] sm:$0xff]
  %v72 = vld [vmem:[%s2 + $0x28] sm:$0xff]
  %v73 = vld [vmem:[%s2 + $0x30] sm:$0xff]
  %v74 = vld [vmem:[%s2 + $0x38] sm:$0xff]
  %76 = vset.pattern.permute.xlu0 0
  %77 = vperm.xlu0 %76, %v67
  %v78 = vpop.permute.xlu0 %77
  %81 = vset.pattern.permute.xlu0 0
  %82 = vperm.xlu0 %81, %v68
  %v83 = vpop.permute.xlu0 %82
  %86 = vset.pattern.permute.xlu0 0
  %87 = vperm.xlu0 %86, %v69
  %v88 = vpop.permute.xlu0 %87
  %91 = vset.pattern.permute.xlu0 0
  %92 = vperm.xlu0 %91, %v70
  %v93 = vpop.permute.xlu0 %92
  %96 = vset.pattern.permute.xlu0 0
  %97 = vperm.xlu0 %96, %v71
  %v98 = vpop.permute.xlu0 %97
  %101 = vset.pattern.permute.xlu0 0
  %102 = vperm.xlu0 %101, %v72
  %v103 = vpop.permute.xlu0 %102
  %106 = vset.pattern.permute.xlu0 0
  %107 = vperm.xlu0 %106, %v73
  %v108 = vpop.permute.xlu0 %107
  %111 = vset.pattern.permute.xlu0 0
  %112 = vperm.xlu0 %111, %v74
  %v113 = vpop.permute.xlu0 %112
  %v131 = vunpack.c.l.b16 %v15
  %v132 = vunpack.c.h.b16 %v15
  %v133 = vunpack.c.l.b16 %v16
  %v134 = vunpack.c.l.b16 %v17
  %v135 = vunpack.c.h.b16 %v17
  %v136 = vunpack.c.l.b16 %v18
  %v137 = vunpack.c.l.b16 %v19
  %v138 = vunpack.c.h.b16 %v19
  %v139 = vunpack.c.l.b16 %v20
  %v140 = vunpack.c.l.b16 %v21
  %v141 = vunpack.c.h.b16 %v21
  %v142 = vunpack.c.l.b16 %v22
  %v143 = vunpack.c.l.b16 %v23
  %v144 = vunpack.c.h.b16 %v23
  %v145 = vunpack.c.l.b16 %v24
  %v146 = vunpack.c.l.b16 %v25
  %v147 = vunpack.c.h.b16 %v25
  %v148 = vunpack.c.l.b16 %v26
  %v149 = vunpack.c.l.b16 %v27
  %v150 = vunpack.c.h.b16 %v27
  %v151 = vunpack.c.l.b16 %v28
  %v152 = vunpack.c.l.b16 %v29
  %v153 = vunpack.c.h.b16 %v29
  %v154 = vunpack.c.l.b16 %v30
  %v155 = vpack.c.b16 %v134, %v131
  %v156 = vpack.c.b16 %v135, %v132
  %v157 = vpack.c.b16 %v136, %v133
  %v158 = vpack.c.b16 %v140, %v137
  %v159 = vpack.c.b16 %v141, %v138
  %v160 = vpack.c.b16 %v142, %v139
  %v161 = vpack.c.b16 %v146, %v143
  %v162 = vpack.c.b16 %v147, %v144
  %v163 = vpack.c.b16 %v148, %v145
  %v164 = vpack.c.b16 %v152, %v149
  %v165 = vpack.c.b16 %v153, %v150
  %v166 = vpack.c.b16 %v154, %v151
  %v211 = vunpack.c.l.b16 %v31
  %v212 = vunpack.c.l.b16 %v32
  %v213 = vunpack.c.l.b16 %v33
  %v214 = vunpack.c.l.b16 %v34
  %v215 = vunpack.c.l.b16 %v35
  %v216 = vunpack.c.l.b16 %v36
  %v217 = vunpack.c.l.b16 %v37
  %v218 = vunpack.c.l.b16 %v38
  %v219 = vunpack.c.l.b16 %v39
  %v220 = vunpack.c.l.b16 %v40
  %v221 = vunpack.c.l.b16 %v41
  %v222 = vunpack.c.l.b16 %v42
  %v223 = vunpack.c.l.b16 %v43
  %v224 = vunpack.c.l.b16 %v44
  %v225 = vunpack.c.l.b16 %v45
  %v226 = vunpack.c.l.b16 %v46
  %v227 = vunpack.c.l.b16 %v47
  %v228 = vunpack.c.l.b16 %v48
  %v229 = vunpack.c.l.b16 %v49
  %v230 = vunpack.c.l.b16 %v50
  %v231 = vunpack.c.l.b16 %v51
  %v232 = vunpack.c.l.b16 %v52
  %v233 = vunpack.c.l.b16 %v53
  %v234 = vunpack.c.l.b16 %v54
  %v235 = vunpack.c.l.b16 %v55
  %v236 = vunpack.c.l.b16 %v56
  %v237 = vunpack.c.l.b16 %v57
  %v238 = vunpack.c.l.b16 %v58
  %v239 = vunpack.c.l.b16 %v59
  %v240 = vunpack.c.l.b16 %v60
  %v241 = vunpack.c.l.b16 %v61
  %v242 = vunpack.c.l.b16 %v62
  %v243 = vunpack.c.l.b16 %v63
  %v244 = vunpack.c.l.b16 %v64
  %v245 = vunpack.c.l.b16 %v65
  %v246 = vunpack.c.l.b16 %v66
  %v247 = vpack.c.b16 %v212, %v211
  %v248 = vpack.c.b16 %v214, %v213
  %v249 = vpack.c.b16 %v216, %v215
  %v250 = vpack.c.b16 %v218, %v217
  %v251 = vpack.c.b16 %v220, %v219
  %v252 = vpack.c.b16 %v222, %v221
  %v253 = vpack.c.b16 %v224, %v223
  %v254 = vpack.c.b16 %v226, %v225
  %v255 = vpack.c.b16 %v228, %v227
  %v256 = vpack.c.b16 %v230, %v229
  %v257 = vpack.c.b16 %v232, %v231
  %v258 = vpack.c.b16 %v234, %v233
  %v259 = vpack.c.b16 %v236, %v235
  %v260 = vpack.c.b16 %v238, %v237
  %v261 = vpack.c.b16 %v240, %v239
  %v262 = vpack.c.b16 %v242, %v241
  %v263 = vpack.c.b16 %v244, %v243
  %v264 = vpack.c.b16 %v246, %v245
  %vm283 = vcmask 261120
  %v285 = vsel %vm283, %v157, 0
  %v288 = vsel %vm283, %v160, 0
  %v291 = vsel %vm283, %v163, 0
  %v294 = vsel %vm283, %v166, 0
  %296 = vmatprep.subr.bf16.mxu0 0
  %297 = vmatpush1.bf16.msra.mxu0 %v254
  %298 = vmatprep.subr.bf16.mxu0 0
  %299 = vmatpush1.bf16.msra.mxu0 %v253
  %300 = vmatprep.subr.bf16.mxu0 0
  %301 = vmatpush1.bf16.msra.mxu0 %v252
  %302 = vmatprep.subr.bf16.mxu0 0
  %303 = vmatpush1.bf16.msra.mxu0 %v251
  %304 = vmatprep.subr.bf16.mxu0 0
  %305 = vmatpush1.bf16.msra.mxu0 %v250
  %306 = vmatprep.subr.bf16.mxu0 0
  %307 = vmatpush1.bf16.msra.mxu0 %v249
  %308 = vmatprep.subr.bf16.mxu0 0
  %309 = vmatpush1.bf16.msra.mxu0 %v248
  %310 = vmatprep.subr.bf16.mxu0 0
  %311 = vmatpush1.bf16.msra.mxu0 %v247
  %312 = vmatprep.subr.bf16.mxu0 0
  %313 = vmatpush2.bf16.msra.mxu0 %v262
  %314 = vmatprep.subr.bf16.mxu0 0
  %315 = vmatpush2.bf16.msra.mxu0 %v261
  %316 = vmatprep.subr.bf16.mxu0 0
  %317 = vmatpush2.bf16.msra.mxu0 %v260
  %318 = vmatprep.subr.bf16.mxu0 0
  %319 = vmatpush2.bf16.msra.mxu0 %v259
  %320 = vmatprep.subr.bf16.mxu0 0
  %321 = vmatpush2.bf16.msra.mxu0 %v258
  %322 = vmatprep.subr.bf16.mxu0 0
  %323 = vmatpush2.bf16.msra.mxu0 %v257
  %324 = vmatprep.subr.bf16.mxu0 0
  %325 = vmatpush2.bf16.msra.mxu0 %v256
  %326 = vmatprep.subr.bf16.mxu0 0
  %327 = vmatpush2.bf16.msra.mxu0 %v255
  %328 = vmatprep.mubr.bf16.mxu0 %v156
  %329 = vmatmul.mubr.bf16.gmra.mxu0 %v155
  %v330 = vpop.f32.mrf.mxu0
  %v331 = vadd.f32 %v78, %v330
  %v332 = vpop.f32.mrf.mxu0
  %v333 = vpop.f32.mrf.mxu0
  %v334 = vadd.f32 %v83, %v333
  %v335 = vpop.f32.mrf.mxu0
  %336 = vmatprep.mubr.bf16.mxu0 %v159
  %337 = vmatmul.mubr.bf16.gmra.mxu0 %v158
  %v338 = vpop.f32.mrf.mxu0
  %v339 = vadd.f32 %v88, %v338
  %v340 = vpop.f32.mrf.mxu0
  %v341 = vpop.f32.mrf.mxu0
  %v342 = vadd.f32 %v93, %v341
  %v343 = vpop.f32.mrf.mxu0
  %344 = vmatprep.mubr.bf16.mxu0 %v162
  %345 = vmatmul.mubr.bf16.gmra.mxu0 %v161
  %v346 = vpop.f32.mrf.mxu0
  %v347 = vadd.f32 %v98, %v346
  %v348 = vpop.f32.mrf.mxu0
  %v349 = vpop.f32.mrf.mxu0
  %v350 = vadd.f32 %v103, %v349
  %v351 = vpop.f32.mrf.mxu0
  %352 = vmatprep.mubr.bf16.mxu0 %v165
  %353 = vmatmul.mubr.bf16.gmra.mxu0 %v164
  %v354 = vpop.f32.mrf.mxu0
  %v355 = vadd.f32 %v108, %v354
  %v356 = vpop.f32.mrf.mxu0
  %v357 = vpop.f32.mrf.mxu0
  %v358 = vadd.f32 %v113, %v357
  %v359 = vpop.f32.mrf.mxu0
  %360 = vdwg.mxu0
  %361 = vmatprep.subr.bf16.mxu0 0
  %362 = vmatpush1.bf16.msra.mxu0 0
  %363 = vmatprep.subr.bf16.mxu0 0
  %364 = vmatpush1.bf16.msra.mxu0 0
  %365 = vmatprep.subr.bf16.mxu0 0
  %366 = vmatpush1.bf16.msra.mxu0 0
  %367 = vmatprep.subr.bf16.mxu0 0
  %368 = vmatpush1.bf16.msra.mxu0 0
  %369 = vmatprep.subr.bf16.mxu0 0
  %370 = vmatpush1.bf16.msra.mxu0 0
  %371 = vmatprep.subr.bf16.mxu0 0
  %372 = vmatpush1.bf16.msra.mxu0 0
  %373 = vmatprep.subr.bf16.mxu0 0
  %374 = vmatpush1.bf16.msra.mxu0 %v264
  %375 = vmatprep.subr.bf16.mxu0 0
  %376 = vmatpush1.bf16.msra.mxu0 %v263
  %377 = vmatprep.subr.bf16.mxu0 0
  %378 = vmatpush2.bf16.msra.mxu0 0
  %379 = vmatprep.subr.bf16.mxu0 0
  %380 = vmatpush2.bf16.msra.mxu0 0
  %381 = vmatprep.subr.bf16.mxu0 0
  %382 = vmatpush2.bf16.msra.mxu0 0
  %383 = vmatprep.subr.bf16.mxu0 0
  %384 = vmatpush2.bf16.msra.mxu0 0
  %385 = vmatprep.subr.bf16.mxu0 0
  %386 = vmatpush2.bf16.msra.mxu0 0
  %387 = vmatprep.subr.bf16.mxu0 0
  %388 = vmatpush2.bf16.msra.mxu0 0
  %389 = vmatprep.subr.bf16.mxu0 0
  %390 = vmatpush2.bf16.msra.mxu0 0
  %391 = vmatprep.subr.bf16.mxu0 0
  %392 = vmatpush2.bf16.msra.mxu0 0
  %393 = vmatprep.mubr.bf16.mxu0 0
  %394 = vmatmul.mubr.bf16.gmra.mxu0 %v285
  %v395 = vpop.f32.mrf.mxu0
  %v396 = vadd.f32 %v331, %v395
  %v397 = vpop.f32.mrf.mxu0
  %v398 = vpop.f32.mrf.mxu0
  %v399 = vadd.f32 %v334, %v398
  %v400 = vpop.f32.mrf.mxu0
  %401 = vmatprep.mubr.bf16.mxu0 0
  %402 = vmatmul.mubr.bf16.gmra.mxu0 %v288
  %v403 = vpop.f32.mrf.mxu0
  %v404 = vadd.f32 %v339, %v403
  %v405 = vpop.f32.mrf.mxu0
  %v406 = vpop.f32.mrf.mxu0
  %v407 = vadd.f32 %v342, %v406
  %v408 = vpop.f32.mrf.mxu0
  %409 = vmatprep.mubr.bf16.mxu0 0
  %410 = vmatmul.mubr.bf16.gmra.mxu0 %v291
  %v411 = vpop.f32.mrf.mxu0
  %v412 = vadd.f32 %v347, %v411
  %v413 = vpop.f32.mrf.mxu0
  %v414 = vpop.f32.mrf.mxu0
  %v415 = vadd.f32 %v350, %v414
  %v416 = vpop.f32.mrf.mxu0
  %417 = vmatprep.mubr.bf16.mxu0 0
  %418 = vmatmul.mubr.bf16.gmra.mxu0 %v294
  %v419 = vpop.f32.mrf.mxu0
  %v420 = vadd.f32 %v355, %v419
  %v421 = vpop.f32.mrf.mxu0
  %v422 = vpop.f32.mrf.mxu0
  %v423 = vadd.f32 %v358, %v422
  %v424 = vpop.f32.mrf.mxu0
  %425 = vdwg.mxu0
  %v426 = vmax.f32 %v396, 0.0
  %v427 = vmax.f32 %v399, 0.0
  %v428 = vmax.f32 %v404, 0.0
  %v429 = vmax.f32 %v407, 0.0
  %v430 = vmax.f32 %v412, 0.0
  %v431 = vmax.f32 %v415, 0.0
  %v432 = vmax.f32 %v420, 0.0
  %v433 = vmax.f32 %v423, 0.0
  %v434 = vpack.c.bf16 %v427, %v426
  %v435 = vpack.c.bf16 %v429, %v428
  %v436 = vpack.c.bf16 %v431, %v430
  %v437 = vpack.c.bf16 %v433, %v432
  %v442 = vunpack.c.l.b16 %v434
  %v443 = vunpack.c.h.b16 %v434
  %v444 = vunpack.c.l.b16 %v435
  %v445 = vunpack.c.h.b16 %v435
  %v446 = vunpack.c.l.b16 %v436
  %v447 = vunpack.c.h.b16 %v436
  %v448 = vunpack.c.l.b16 %v437
  %v449 = vunpack.c.h.b16 %v437
  %v450 = vpack.c.b16 %v442, %v442
  %v451 = vpack.c.b16 %v443, %v443
  %v452 = vpack.c.b16 %v444, %v444
  %v453 = vpack.c.b16 %v445, %v445
  %v454 = vpack.c.b16 %v446, %v446
  %v455 = vpack.c.b16 %v447, %v447
  %v456 = vpack.c.b16 %v448, %v448
  %v457 = vpack.c.b16 %v449, %v449
  %vm466 = vcmask 60416
  %467 = vst.msk [vmem:[%s3] sm:$0xf] %vm466, %v450
  %468 = vst.msk [vmem:[%s3 + $0x4] sm:$0xf] %vm466, %v451
  %469 = vst.msk [vmem:[%s3 + $0x8] sm:$0xf] %vm466, %v452
  %470 = vst.msk [vmem:[%s3 + $0xc] sm:$0xf] %vm466, %v453
  %471 = vst.msk [vmem:[%s3 + $0x10] sm:$0xf] %vm466, %v454
  %472 = vst.msk [vmem:[%s3 + $0x14] sm:$0xf] %vm466, %v455
  %473 = vst.msk [vmem:[%s3 + $0x18] sm:$0xf] %vm466, %v456
  %474 = vst.msk [vmem:[%s3 + $0x1c] sm:$0xf] %vm466, %v457
  // Predicated region
  $region14: #{_lambda_.34} parent=0 // pred_check
    _
  $region15: #{_lambda_.34} parent=0 // pred_check_branch
    %476 = sbr.rel (0) target = $region17
  $region16: #{_lambda_.34} parent=0 // pred_region
    _
  $region17: #{_lambda_.34} parent=0 // pred_fallthru
    _
  // Predicated region
  $region18: #{_lambda_.34} parent=0 // pred_check
    _
  $region19: #{_lambda_.34} parent=0 // pred_check_branch
    %478 = sbr.rel (0) target = $region21
  $region20: #{_lambda_.34} parent=0 // pred_region
    _
  $region21: #{_lambda_.34} parent=0 // pred_fallthru
    _

// kernel: _lambda_.33
$region0: #{_lambda_.33}
  #allocation0 [shape = 'u32[]', space=smem, size = 0x4, offset = 0x4, fixed_abs, tag = 'smem constant byte address 0x4 - core index']
  #allocation1 [shape = 'u32[144,128]{1,0:T(1,128)}', space=vmem, size = 0x12000, scoped, tag = 'internal scratch']
  %s0 = inlined_call_operand.vmem [shape: bf16[64,32], index: 0, kind: input, shape index: {}]
  %s1 = inlined_call_operand.vmem [shape: bf16[32,8], index: 1, kind: input, shape index: {}]
  %s2 = inlined_call_operand.vmem [shape: f32[64,1], index: 2, kind: input, shape index: {}]
  %s3 = inlined_call_operand.vmem [shape: bf16[64,8], index: 3, kind: output, shape index: {}]
  %s4 = sld [smem:[#allocation0]]
  $region22: #{_lambda_.33} parent=0
    _
  %s6 = ssub.s32 1, %s4
  %s7 = scalar_select 0, %s6, %s4
  // Predicated region
  $region2: #{_lambda_.33} parent=0 // pred_check
    _
  $region3: #{_lambda_.33} parent=0 // pred_check_branch
    %9 = sbr.rel (0) target = $region5
  $region4: #{_lambda_.33} parent=0 // pred_region
    _
  $region5: #{_lambda_.33} parent=0 // pred_fallthru
    _
  // Predicated region
  $region6: #{_lambda_.33} parent=0 // pred_check
    _
  $region7: #{_lambda_.33} parent=0 // pred_check_branch
    %11 = sbr.rel (0) target = $region9
  $region8: #{_lambda_.33} parent=0 // pred_region
    _
  $region9: #{_lambda_.33} parent=0 // pred_fallthru
    _
  // Predicated region
  $region10: #{_lambda_.33} parent=0 // pred_check
    _
  $region11: #{_lambda_.33} parent=0 // pred_check_branch
    %13 = sbr.rel (0) target = $region13
  $region12: #{_lambda_.33} parent=0 // pred_region
    _
  $region13: #{_lambda_.33} parent=0 // pred_fallthru
    _
  %v15 = vld [vmem:[%s0] sm:$0xf]
  %v16 = vld [vmem:[%s0 + $0x4] sm:$0xf]
  %v17 = vld [vmem:[%s0 + $0x8] sm:$0xf]
  %v18 = vld [vmem:[%s0 + $0xc] sm:$0xf]
  %v19 = vld [vmem:[%s0 + $0x10] sm:$0xf]
  %v20 = vld [vmem:[%s0 + $0x14] sm:$0xf]
  %v21 = vld [vmem:[%s0 + $0x18] sm:$0xf]
  %v22 = vld [vmem:[%s0 + $0x1c] sm:$0xf]
  %v23 = vld [vmem:[%s1] sm:$0xf]
  %v24 = vld [vmem:[%s1 + $0x4] sm:$0xf]
  %v25 = vld [vmem:[%s1 + $0x8] sm:$0xf]
  %v26 = vld [vmem:[%s1 + $0xc] sm:$0xf]
  %v27 = vld [vmem:[%s2] sm:$0xff]
  %v28 = vld [vmem:[%s2 + $0x8] sm:$0xff]
  %v29 = vld [vmem:[%s2 + $0x10] sm:$0xff]
  %v30 = vld [vmem:[%s2 + $0x18] sm:$0xff]
  %v31 = vld [vmem:[%s2 + $0x20] sm:$0xff]
  %v32 = vld [vmem:[%s2 + $0x28] sm:$0xff]
  %v33 = vld [vmem:[%s2 + $0x30] sm:$0xff]
  %v34 = vld [vmem:[%s2 + $0x38] sm:$0xff]
  %36 = vset.pattern.permute.xlu0 0
  %37 = vperm.xlu0 %36, %v27
  %v38 = vpop.permute.xlu0 %37
  %41 = vset.pattern.permute.xlu0 0
  %42 = vperm.xlu0 %41, %v28
  %v43 = vpop.permute.xlu0 %42
  %46 = vset.pattern.permute.xlu0 0
  %47 = vperm.xlu0 %46, %v29
  %v48 = vpop.permute.xlu0 %47
  %51 = vset.pattern.permute.xlu0 0
  %52 = vperm.xlu0 %51, %v30
  %v53 = vpop.permute.xlu0 %52
  %56 = vset.pattern.permute.xlu0 0
  %57 = vperm.xlu0 %56, %v31
  %v58 = vpop.permute.xlu0 %57
  %61 = vset.pattern.permute.xlu0 0
  %62 = vperm.xlu0 %61, %v32
  %v63 = vpop.permute.xlu0 %62
  %66 = vset.pattern.permute.xlu0 0
  %67 = vperm.xlu0 %66, %v33
  %v68 = vpop.permute.xlu0 %67
  %71 = vset.pattern.permute.xlu0 0
  %72 = vperm.xlu0 %71, %v34
  %v73 = vpop.permute.xlu0 %72
  %v83 = vunpack.c.l.b16 %v15
  %v84 = vunpack.c.l.b16 %v16
  %v85 = vunpack.c.l.b16 %v17
  %v86 = vunpack.c.l.b16 %v18
  %v87 = vunpack.c.l.b16 %v19
  %v88 = vunpack.c.l.b16 %v20
  %v89 = vunpack.c.l.b16 %v21
  %v90 = vunpack.c.l.b16 %v22
  %v91 = vpack.c.b16 %v84, %v83
  %v92 = vpack.c.b16 %v86, %v85
  %v93 = vpack.c.b16 %v88, %v87
  %v94 = vpack.c.b16 %v90, %v89
  %v99 = vunpack.c.l.b16 %v23
  %v100 = vunpack.c.l.b16 %v24
  %v101 = vunpack.c.l.b16 %v25
  %v102 = vunpack.c.l.b16 %v26
  %v103 = vpack.c.b16 %v100, %v99
  %v104 = vpack.c.b16 %v102, %v101
  %vm107 = vcmask 261120
  %v109 = vsel %vm107, %v91, 0
  %v112 = vsel %vm107, %v92, 0
  %v115 = vsel %vm107, %v93, 0
  %v118 = vsel %vm107, %v94, 0
  %120 = vmatprep.subr.bf16.mxu0 0
  %121 = vmatpush1.bf16.msra.mxu0 0
  %122 = vmatprep.subr.bf16.mxu0 0
  %123 = vmatpush1.bf16.msra.mxu0 0
  %124 = vmatprep.subr.bf16.mxu0 0
  %125 = vmatpush1.bf16.msra.mxu0 0
  %126 = vmatprep.subr.bf16.mxu0 0
  %127 = vmatpush1.bf16.msra.mxu0 0
  %128 = vmatprep.subr.bf16.mxu0 0
  %129 = vmatpush1.bf16.msra.mxu0 0
  %130 = vmatprep.subr.bf16.mxu0 0
  %131 = vmatpush1.bf16.msra.mxu0 0
  %132 = vmatprep.subr.bf16.mxu0 0
  %133 = vmatpush1.bf16.msra.mxu0 %v104
  %134 = vmatprep.subr.bf16.mxu0 0
  %135 = vmatpush1.bf16.msra.mxu0 %v103
  %136 = vmatprep.subr.bf16.mxu0 0
  %137 = vmatpush2.bf16.msra.mxu0 0
  %138 = vmatprep.subr.bf16.mxu0 0
  %139 = vmatpush2.bf16.msra.mxu0 0
  %140 = vmatprep.subr.bf16.mxu0 0
  %141 = vmatpush2.bf16.msra.mxu0 0
  %142 = vmatprep.subr.bf16.mxu0 0
  %143 = vmatpush2.bf16.msra.mxu0 0
  %144 = vmatprep.subr.bf16.mxu0 0
  %145 = vmatpush2.bf16.msra.mxu0 0
  %146 = vmatprep.subr.bf16.mxu0 0
  %147 = vmatpush2.bf16.msra.mxu0 0
  %148 = vmatprep.subr.bf16.mxu0 0
  %149 = vmatpush2.bf16.msra.mxu0 0
  %150 = vmatprep.subr.bf16.mxu0 0
  %151 = vmatpush2.bf16.msra.mxu0 0
  %152 = vmatprep.mubr.bf16.mxu0 0
  %153 = vmatmul.mubr.bf16.gmra.mxu0 %v109
  %v154 = vpop.f32.mrf.mxu0
  %v155 = vadd.f32 %v38, %v154
  %v156 = vpop.f32.mrf.mxu0
  %v157 = vpop.f32.mrf.mxu0
  %v158 = vadd.f32 %v43, %v157
  %v159 = vpop.f32.mrf.mxu0
  %160 = vmatprep.mubr.bf16.mxu0 0
  %161 = vmatmul.mubr.bf16.gmra.mxu0 %v112
  %v162 = vpop.f32.mrf.mxu0
  %v163 = vadd.f32 %v48, %v162
  %v164 = vpop.f32.mrf.mxu0
  %v165 = vpop.f32.mrf.mxu0
  %v166 = vadd.f32 %v53, %v165
  %v167 = vpop.f32.mrf.mxu0
  %168 = vmatprep.mubr.bf16.mxu0 0
  %169 = vmatmul.mubr.bf16.gmra.mxu0 %v115
  %v170 = vpop.f32.mrf.mxu0
  %v171 = vadd.f32 %v58, %v170
  %v172 = vpop.f32.mrf.mxu0
  %v173 = vpop.f32.mrf.mxu0
  %v174 = vadd.f32 %v63, %v173
  %v175 = vpop.f32.mrf.mxu0
  %176 = vmatprep.mubr.bf16.mxu0 0
  %177 = vmatmul.mubr.bf16.gmra.mxu0 %v118
  %v178 = vpop.f32.mrf.mxu0
  %v179 = vadd.f32 %v68, %v178
  %v180 = vpop.f32.mrf.mxu0
  %v181 = vpop.f32.mrf.mxu0
  %v182 = vadd.f32 %v73, %v181
  %v183 = vpop.f32.mrf.mxu0
  %184 = vdwg.mxu0
  %v185 = vpack.c.bf16 %v158, %v155
  %v186 = vpack.c.bf16 %v166, %v163
  %v187 = vpack.c.bf16 %v174, %v171
  %v188 = vpack.c.bf16 %v182, %v179
  %v193 = vunpack.c.l.b16 %v185
  %v194 = vunpack.c.h.b16 %v185
  %v195 = vunpack.c.l.b16 %v186
  %v196 = vunpack.c.h.b16 %v186
  %v197 = vunpack.c.l.b16 %v187
  %v198 = vunpack.c.h.b16 %v187
  %v199 = vunpack.c.l.b16 %v188
  %v200 = vunpack.c.h.b16 %v188
  %v201 = vpack.c.b16 %v193, %v193
  %v202 = vpack.c.b16 %v194, %v194
  %v203 = vpack.c.b16 %v195, %v195
  %v204 = vpack.c.b16 %v196, %v196
  %v205 = vpack.c.b16 %v197, %v197
  %v206 = vpack.c.b16 %v198, %v198
  %v207 = vpack.c.b16 %v199, %v199
  %v208 = vpack.c.b16 %v200, %v200
  %vm217 = vcmask 60416
  %218 = vst.msk [vmem:[%s3] sm:$0xf] %vm217, %v201
  %219 = vst.msk [vmem:[%s3 + $0x4] sm:$0xf] %vm217, %v202
  %220 = vst.msk [vmem:[%s3 + $0x8] sm:$0xf] %vm217, %v203
  %221 = vst.msk [vmem:[%s3 + $0xc] sm:$0xf] %vm217, %v204
  %222 = vst.msk [vmem:[%s3 + $0x10] sm:$0xf] %vm217, %v205
  %223 = vst.msk [vmem:[%s3 + $0x14] sm:$0xf] %vm217, %v206
  %224 = vst.msk [vmem:[%s3 + $0x18] sm:$0xf] %vm217, %v207
  %225 = vst.msk [vmem:[%s3 + $0x1c] sm:$0xf] %vm217, %v208
  // Predicated region
  $region14: #{_lambda_.33} parent=0 // pred_check
    _
  $region15: #{_lambda_.33} parent=0 // pred_check_branch
    %227 = sbr.rel (0) target = $region17
  $region16: #{_lambda_.33} parent=0 // pred_region
    _
  $region17: #{_lambda_.33} parent=0 // pred_fallthru
    _
  // Predicated region
  $region18: #{_lambda_.33} parent=0 // pred_check
    _
  $region19: #{_lambda_.33} parent=0 // pred_check_branch
    %229 = sbr.rel (0) target = $region21
  $region20: #{_lambda_.33} parent=0 // pred_region
    _
  $region21: #{_lambda_.33} parent=0 // pred_fallthru
    _

// kernel: _lambda_.36
$region0: #{_lambda_.36}
  #allocation0 [shape = 'u32[]', space=smem, size = 0x4, offset = 0x4, fixed_abs, tag = 'smem constant byte address 0x4 - core index']
  #allocation1 [shape = 'u32[144,128]{1,0:T(1,128)}', space=vmem, size = 0x12000, scoped, tag = 'internal scratch']
  %s0 = inlined_call_operand.vmem [shape: bf16[64,576], index: 0, kind: input, shape index: {}]
  %s1 = inlined_call_operand.vmem [shape: bf16[576,8], index: 1, kind: input, shape index: {}]
  %s2 = inlined_call_operand.vmem [shape: f32[64,1], index: 2, kind: input, shape index: {}]
  %s3 = inlined_call_operand.vmem [shape: bf16[64,8], index: 3, kind: output, shape index: {}]
  %s4 = sld [smem:[#allocation0]]
  $region22: #{_lambda_.36} parent=0
    _
  %s6 = ssub.s32 1, %s4
  %s7 = scalar_select 0, %s6, %s4
  // Predicated region
  $region2: #{_lambda_.36} parent=0 // pred_check
    _
  $region3: #{_lambda_.36} parent=0 // pred_check_branch
    %9 = sbr.rel (0) target = $region5
  $region4: #{_lambda_.36} parent=0 // pred_region
    _
  $region5: #{_lambda_.36} parent=0 // pred_fallthru
    _
  // Predicated region
  $region6: #{_lambda_.36} parent=0 // pred_check
    _
  $region7: #{_lambda_.36} parent=0 // pred_check_branch
    %11 = sbr.rel (0) target = $region9
  $region8: #{_lambda_.36} parent=0 // pred_region
    _
  $region9: #{_lambda_.36} parent=0 // pred_fallthru
    _
  // Predicated region
  $region10: #{_lambda_.36} parent=0 // pred_check
    _
  $region11: #{_lambda_.36} parent=0 // pred_check_branch
    %13 = sbr.rel (0) target = $region13
  $region12: #{_lambda_.36} parent=0 // pred_region
    _
  $region13: #{_lambda_.36} parent=0 // pred_fallthru
    _
  %v15 = vld [vmem:[%s0] sm:$0xff]
  %v16 = vld [vmem:[%s0 + $0x8] sm:$0xff]
  %v17 = vld [vmem:[%s0 + $0x10] sm:$0xf]
  %v18 = vld [vmem:[%s0 + $0x14] sm:$0xff]
  %v19 = vld [vmem:[%s0 + $0x1c] sm:$0xff]
  %v20 = vld [vmem:[%s0 + $0x24] sm:$0xf]
  %v21 = vld [vmem:[%s0 + $0x28] sm:$0xff]
  %v22 = vld [vmem:[%s0 + $0x30] sm:$0xff]
  %v23 = vld [vmem:[%s0 + $0x38] sm:$0xf]
  %v24 = vld [vmem:[%s0 + $0x3c] sm:$0xff]
  %v25 = vld [vmem:[%s0 + $0x44] sm:$0xff]
  %v26 = vld [vmem:[%s0 + $0x4c] sm:$0xf]
  %v27 = vld [vmem:[%s0 + $0x50] sm:$0xff]
  %v28 = vld [vmem:[%s0 + $0x58] sm:$0xff]
  %v29 = vld [vmem:[%s0 + $0x60] sm:$0xf]
  %v30 = vld [vmem:[%s0 + $0x64] sm:$0xff]
  %v31 = vld [vmem:[%s0 + $0x6c] sm:$0xff]
  %v32 = vld [vmem:[%s0 + $0x74] sm:$0xf]
  %v33 = vld [vmem:[%s0 + $0x78] sm:$0xff]
  %v34 = vld [vmem:[%s0 + $0x80] sm:$0xff]
  %v35 = vld [vmem:[%s0 + $0x88] sm:$0xf]
  %v36 = vld [vmem:[%s0 + $0x8c] sm:$0xff]
  %v37 = vld [vmem:[%s0 + $0x94] sm:$0xff]
  %v38 = vld [vmem:[%s0 + $0x9c] sm:$0xf]
  %v39 = vld [vmem:[%s1] sm:$0xf]
  %v40 = vld [vmem:[%s1 + $0x4] sm:$0xf]
  %v41 = vld [vmem:[%s1 + $0x8] sm:$0xf]
  %v42 = vld [vmem:[%s1 + $0xc] sm:$0xf]
  %v43 = vld [vmem:[%s1 + $0x10] sm:$0xf]
  %v44 = vld [vmem:[%s1 + $0x14] sm:$0xf]
  %v45 = vld [vmem:[%s1 + $0x18] sm:$0xf]
  %v46 = vld [vmem:[%s1 + $0x1c] sm:$0xf]
  %v47 = vld [vmem:[%s1 + $0x20] sm:$0xf]
  %v48 = vld [vmem:[%s1 + $0x24] sm:$0xf]
  %v49 = vld [vmem:[%s1 + $0x28] sm:$0xf]
  %v50 = vld [vmem:[%s1 + $0x2c] sm:$0xf]
  %v51 = vld [vmem:[%s1 + $0x30] sm:$0xf]
  %v52 = vld [vmem:[%s1 + $0x34] sm:$0xf]
  %v53 = vld [vmem:[%s1 + $0x38] sm:$0xf]
  %v54 = vld [vmem:[%s1 + $0x3c] sm:$0xf]
  %v55 = vld [vmem:[%s1 + $0x40] sm:$0xf]
  %v56 = vld [vmem:[%s1 + $0x44] sm:$0xf]
  %v57 = vld [vmem:[%s1 + $0x48] sm:$0xf]
  %v58 = vld [vmem:[%s1 + $0x4c] sm:$0xf]
  %v59 = vld [vmem:[%s1 + $0x50] sm:$0xf]
  %v60 = vld [vmem:[%s1 + $0x54] sm:$0xf]
  %v61 = vld [vmem:[%s1 + $0x58] sm:$0xf]
  %v62 = vld [vmem:[%s1 + $0x5c] sm:$0xf]
  %v63 = vld [vmem:[%s1 + $0x60] sm:$0xf]
  %v64 = vld [vmem:[%s1 + $0x64] sm:$0xf]
  %v65 = vld [vmem:[%s1 + $0x68] sm:$0xf]
  %v66 = vld [vmem:[%s1 + $0x6c] sm:$0xf]
  %v67 = vld [vmem:[%s1 + $0x70] sm:$0xf]
  %v68 = vld [vmem:[%s1 + $0x74] sm:$0xf]
  %v69 = vld [vmem:[%s1 + $0x78] sm:$0xf]
  %v70 = vld [vmem:[%s1 + $0x7c] sm:$0xf]
  %v71 = vld [vmem:[%s1 + $0x80] sm:$0xf]
  %v72 = vld [vmem:[%s1 + $0x84] sm:$0xf]
  %v73 = vld [vmem:[%s1 + $0x88] sm:$0xf]
  %v74 = vld [vmem:[%s1 + $0x8c] sm:$0xf]
  %v75 = vld [vmem:[%s1 + $0x90] sm:$0xf]
  %v76 = vld [vmem:[%s1 + $0x94] sm:$0xf]
  %v77 = vld [vmem:[%s1 + $0x98] sm:$0xf]
  %v78 = vld [vmem:[%s1 + $0x9c] sm:$0xf]
  %v79 = vld [vmem:[%s1 + $0xa0] sm:$0xf]
  %v80 = vld [vmem:[%s1 + $0xa4] sm:$0xf]
  %v81 = vld [vmem:[%s1 + $0xa8] sm:$0xf]
  %v82 = vld [vmem:[%s1 + $0xac] sm:$0xf]
  %v83 = vld [vmem:[%s1 + $0xb0] sm:$0xf]
  %v84 = vld [vmem:[%s1 + $0xb4] sm:$0xf]
  %v85 = vld [vmem:[%s1 + $0xb8] sm:$0xf]
  %v86 = vld [vmem:[%s1 + $0xbc] sm:$0xf]
  %v87 = vld [vmem:[%s1 + $0xc0] sm:$0xf]
  %v88 = vld [vmem:[%s1 + $0xc4] sm:$0xf]
  %v89 = vld [vmem:[%s1 + $0xc8] sm:$0xf]
  %v90 = vld [vmem:[%s1 + $0xcc] sm:$0xf]
  %v91 = vld [vmem:[%s1 + $0xd0] sm:$0xf]
  %v92 = vld [vmem:[%s1 + $0xd4] sm:$0xf]
  %v93 = vld [vmem:[%s1 + $0xd8] sm:$0xf]
  %v94 = vld [vmem:[%s1 + $0xdc] sm:$0xf]
  %v95 = vld [vmem:[%s1 + $0xe0] sm:$0xf]
  %v96 = vld [vmem:[%s1 + $0xe4] sm:$0xf]
  %v97 = vld [vmem:[%s1 + $0xe8] sm:$0xf]
  %v98 = vld [vmem:[%s1 + $0xec] sm:$0xf]
  %v99 = vld [vmem:[%s1 + $0xf0] sm:$0xf]
  %v100 = vld [vmem:[%s1 + $0xf4] sm:$0xf]
  %v101 = vld [vmem:[%s1 + $0xf8] sm:$0xf]
  %v102 = vld [vmem:[%s1 + $0xfc] sm:$0xf]
  %v103 = vld [vmem:[%s1 + $0x100] sm:$0xf]
  %v104 = vld [vmem:[%s1 + $0x104] sm:$0xf]
  %v105 = vld [vmem:[%s1 + $0x108] sm:$0xf]
  %v106 = vld [vmem:[%s1 + $0x10c] sm:$0xf]
  %v107 = vld [vmem:[%s1 + $0x110] sm:$0xf]
  %v108 = vld [vmem:[%s1 + $0x114] sm:$0xf]
  %v109 = vld [vmem:[%s1 + $0x118] sm:$0xf]
  %v110 = vld [vmem:[%s1 + $0x11c] sm:$0xf]
  %v111 = vld [vmem:[%s2] sm:$0xff]
  %v112 = vld [vmem:[%s2 + $0x8] sm:$0xff]
  %v113 = vld [vmem:[%s2 + $0x10] sm:$0xff]
  %v114 = vld [vmem:[%s2 + $0x18] sm:$0xff]
  %v115 = vld [vmem:[%s2 + $0x20] sm:$0xff]
  %v116 = vld [vmem:[%s2 + $0x28] sm:$0xff]
  %v117 = vld [vmem:[%s2 + $0x30] sm:$0xff]
  %v118 = vld [vmem:[%s2 + $0x38] sm:$0xff]
  %120 = vset.pattern.permute.xlu0 0
  %121 = vperm.xlu0 %120, %v111
  %v122 = vpop.permute.xlu0 %121
  %125 = vset.pattern.permute.xlu0 0
  %126 = vperm.xlu0 %125, %v112
  %v127 = vpop.permute.xlu0 %126
  %130 = vset.pattern.permute.xlu0 0
  %131 = vperm.xlu0 %130, %v113
  %v132 = vpop.permute.xlu0 %131
  %135 = vset.pattern.permute.xlu0 0
  %136 = vperm.xlu0 %135, %v114
  %v137 = vpop.permute.xlu0 %136
  %140 = vset.pattern.permute.xlu0 0
  %141 = vperm.xlu0 %140, %v115
  %v142 = vpop.permute.xlu0 %141
  %145 = vset.pattern.permute.xlu0 0
  %146 = vperm.xlu0 %145, %v116
  %v147 = vpop.permute.xlu0 %146
  %150 = vset.pattern.permute.xlu0 0
  %151 = vperm.xlu0 %150, %v117
  %v152 = vpop.permute.xlu0 %151
  %155 = vset.pattern.permute.xlu0 0
  %156 = vperm.xlu0 %155, %v118
  %v157 = vpop.permute.xlu0 %156
  %v183 = vunpack.c.l.b16 %v15
  %v184 = vunpack.c.h.b16 %v15
  %v185 = vunpack.c.l.b16 %v16
  %v186 = vunpack.c.h.b16 %v16
  %v187 = vunpack.c.l.b16 %v17
  %v188 = vunpack.c.l.b16 %v18
  %v189 = vunpack.c.h.b16 %v18
  %v190 = vunpack.c.l.b16 %v19
  %v191 = vunpack.c.h.b16 %v19
  %v192 = vunpack.c.l.b16 %v20
  %v193 = vunpack.c.l.b16 %v21
  %v194 = vunpack.c.h.b16 %v21
  %v195 = vunpack.c.l.b16 %v22
  %v196 = vunpack.c.h.b16 %v22
  %v197 = vunpack.c.l.b16 %v23
  %v198 = vunpack.c.l.b16 %v24
  %v199 = vunpack.c.h.b16 %v24
  %v200 = vunpack.c.l.b16 %v25
  %v201 = vunpack.c.h.b16 %v25
  %v202 = vunpack.c.l.b16 %v26
  %v203 = vunpack.c.l.b16 %v27
  %v204 = vunpack.c.h.b16 %v27
  %v205 = vunpack.c.l.b16 %v28
  %v206 = vunpack.c.h.b16 %v28
  %v207 = vunpack.c.l.b16 %v29
  %v208 = vunpack.c.l.b16 %v30
  %v209 = vunpack.c.h.b16 %v30
  %v210 = vunpack.c.l.b16 %v31
  %v211 = vunpack.c.h.b16 %v31
  %v212 = vunpack.c.l.b16 %v32
  %v213 = vunpack.c.l.b16 %v33
  %v214 = vunpack.c.h.b16 %v33
  %v215 = vunpack.c.l.b16 %v34
  %v216 = vunpack.c.h.b16 %v34
  %v217 = vunpack.c.l.b16 %v35
  %v218 = vunpack.c.l.b16 %v36
  %v219 = vunpack.c.h.b16 %v36
  %v220 = vunpack.c.l.b16 %v37
  %v221 = vunpack.c.h.b16 %v37
  %v222 = vunpack.c.l.b16 %v38
  %v223 = vpack.c.b16 %v188, %v183
  %v224 = vpack.c.b16 %v189, %v184
  %v225 = vpack.c.b16 %v190, %v185
  %v226 = vpack.c.b16 %v191, %v186
  %v227 = vpack.c.b16 %v192, %v187
  %v228 = vpack.c.b16 %v198, %v193
  %v229 = vpack.c.b16 %v199, %v194
  %v230 = vpack.c.b16 %v200, %v195
  %v231 = vpack.c.b16 %v201, %v196
  %v232 = vpack.c.b16 %v202, %v197
  %v233 = vpack.c.b16 %v208, %v203
  %v234 = vpack.c.b16 %v209, %v204
  %v235 = vpack.c.b16 %v210, %v205
  %v236 = vpack.c.b16 %v211, %v206
  %v237 = vpack.c.b16 %v212, %v207
  %v238 = vpack.c.b16 %v218, %v213
  %v239 = vpack.c.b16 %v219, %v214
  %v240 = vpack.c.b16 %v220, %v215
  %v241 = vpack.c.b16 %v221, %v216
  %v242 = vpack.c.b16 %v222, %v217
  %v331 = vunpack.c.l.b16 %v39
  %v332 = vunpack.c.l.b16 %v40
  %v333 = vunpack.c.l.b16 %v41
  %v334 = vunpack.c.l.b16 %v42
  %v335 = vunpack.c.l.b16 %v43
  %v336 = vunpack.c.l.b16 %v44
  %v337 = vunpack.c.l.b16 %v45
  %v338 = vunpack.c.l.b16 %v46
  %v339 = vunpack.c.l.b16 %v47
  %v340 = vunpack.c.l.b16 %v48
  %v341 = vunpack.c.l.b16 %v49
  %v342 = vunpack.c.l.b16 %v50
  %v343 = vunpack.c.l.b16 %v51
  %v344 = vunpack.c.l.b16 %v52
  %v345 = vunpack.c.l.b16 %v53
  %v346 = vunpack.c.l.b16 %v54
  %v347 = vunpack.c.l.b16 %v55
  %v348 = vunpack.c.l.b16 %v56
  %v349 = vunpack.c.l.b16 %v57
  %v350 = vunpack.c.l.b16 %v58
  %v351 = vunpack.c.l.b16 %v59
  %v352 = vunpack.c.l.b16 %v60
  %v353 = vunpack.c.l.b16 %v61
  %v354 = vunpack.c.l.b16 %v62
  %v355 = vunpack.c.l.b16 %v63
  %v356 = vunpack.c.l.b16 %v64
  %v357 = vunpack.c.l.b16 %v65
  %v358 = vunpack.c.l.b16 %v66
  %v359 = vunpack.c.l.b16 %v67
  %v360 = vunpack.c.l.b16 %v68
  %v361 = vunpack.c.l.b16 %v69
  %v362 = vunpack.c.l.b16 %v70
  %v363 = vunpack.c.l.b16 %v71
  %v364 = vunpack.c.l.b16 %v72
  %v365 = vunpack.c.l.b16 %v73
  %v366 = vunpack.c.l.b16 %v74
  %v367 = vunpack.c.l.b16 %v75
  %v368 = vunpack.c.l.b16 %v76
  %v369 = vunpack.c.l.b16 %v77
  %v370 = vunpack.c.l.b16 %v78
  %v371 = vunpack.c.l.b16 %v79
  %v372 = vunpack.c.l.b16 %v80
  %v373 = vunpack.c.l.b16 %v81
  %v374 = vunpack.c.l.b16 %v82
  %v375 = vunpack.c.l.b16 %v83
  %v376 = vunpack.c.l.b16 %v84
  %v377 = vunpack.c.l.b16 %v85
  %v378 = vunpack.c.l.b16 %v86
  %v379 = vunpack.c.l.b16 %v87
  %v380 = vunpack.c.l.b16 %v88
  %v381 = vunpack.c.l.b16 %v89
  %v382 = vunpack.c.l.b16 %v90
  %v383 = vunpack.c.l.b16 %v91
  %v384 = vunpack.c.l.b16 %v92
  %v385 = vunpack.c.l.b16 %v93
  %v386 = vunpack.c.l.b16 %v94
  %v387 = vunpack.c.l.b16 %v95
  %v388 = vunpack.c.l.b16 %v96
  %v389 = vunpack.c.l.b16 %v97
  %v390 = vunpack.c.l.b16 %v98
  %v391 = vunpack.c.l.b16 %v99
  %v392 = vunpack.c.l.b16 %v100
  %v393 = vunpack.c.l.b16 %v101
  %v394 = vunpack.c.l.b16 %v102
  %v395 = vunpack.c.l.b16 %v103
  %v396 = vunpack.c.l.b16 %v104
  %v397 = vunpack.c.l.b16 %v105
  %v398 = vunpack.c.l.b16 %v106
  %v399 = vunpack.c.l.b16 %v107
  %v400 = vunpack.c.l.b16 %v108
  %v401 = vunpack.c.l.b16 %v109
  %v402 = vunpack.c.l.b16 %v110
  %v403 = vpack.c.b16 %v332, %v331
  %v404 = vpack.c.b16 %v334, %v333
  %v405 = vpack.c.b16 %v336, %v335
  %v406 = vpack.c.b16 %v338, %v337
  %v407 = vpack.c.b16 %v340, %v339
  %v408 = vpack.c.b16 %v342, %v341
  %v409 = vpack.c.b16 %v344, %v343
  %v410 = vpack.c.b16 %v346, %v345
  %v411 = vpack.c.b16 %v348, %v347
  %v412 = vpack.c.b16 %v350, %v349
  %v413 = vpack.c.b16 %v352, %v351
  %v414 = vpack.c.b16 %v354, %v353
  %v415 = vpack.c.b16 %v356, %v355
  %v416 = vpack.c.b16 %v358, %v357
  %v417 = vpack.c.b16 %v360, %v359
  %v418 = vpack.c.b16 %v362, %v361
  %v419 = vpack.c.b16 %v364, %v363
  %v420 = vpack.c.b16 %v366, %v365
  %v421 = vpack.c.b16 %v368, %v367
  %v422 = vpack.c.b16 %v370, %v369
  %v423 = vpack.c.b16 %v372, %v371
  %v424 = vpack.c.b16 %v374, %v373
  %v425 = vpack.c.b16 %v376, %v375
  %v426 = vpack.c.b16 %v378, %v377
  %v427 = vpack.c.b16 %v380, %v379
  %v428 = vpack.c.b16 %v382, %v381
  %v429 = vpack.c.b16 %v384, %v383
  %v430 = vpack.c.b16 %v386, %v385
  %v431 = vpack.c.b16 %v388, %v387
  %v432 = vpack.c.b16 %v390, %v389
  %v433 = vpack.c.b16 %v392, %v391
  %v434 = vpack.c.b16 %v394, %v393
  %v435 = vpack.c.b16 %v396, %v395
  %v436 = vpack.c.b16 %v398, %v397
  %v437 = vpack.c.b16 %v400, %v399
  %v438 = vpack.c.b16 %v402, %v401
  %vm475 = vcmask 523264
  %v477 = vsel %vm475, %v227, 0
  %v480 = vsel %vm475, %v232, 0
  %v483 = vsel %vm475, %v237, 0
  %v486 = vsel %vm475, %v242, 0
  %488 = vmatprep.subr.bf16.mxu0 0
  %489 = vmatpush1.bf16.msra.mxu0 %v410
  %490 = vmatprep.subr.bf16.mxu0 0
  %491 = vmatpush1.bf16.msra.mxu0 %v409
  %492 = vmatprep.subr.bf16.mxu0 0
  %493 = vmatpush1.bf16.msra.mxu0 %v408
  %494 = vmatprep.subr.bf16.mxu0 0
  %495 = vmatpush1.bf16.msra.mxu0 %v407
  %496 = vmatprep.subr.bf16.mxu0 0
  %497 = vmatpush1.bf16.msra.mxu0 %v406
  %498 = vmatprep.subr.bf16.mxu0 0
  %499 = vmatpush1.bf16.msra.mxu0 %v405
  %500 = vmatprep.subr.bf16.mxu0 0
  %501 = vmatpush1.bf16.msra.mxu0 %v404
  %502 = vmatprep.subr.bf16.mxu0 0
  %503 = vmatpush1.bf16.msra.mxu0 %v403
  %504 = vmatprep.subr.bf16.mxu0 0
  %505 = vmatpush2.bf16.msra.mxu0 %v418
  %506 = vmatprep.subr.bf16.mxu0 0
  %507 = vmatpush2.bf16.msra.mxu0 %v417
  %508 = vmatprep.subr.bf16.mxu0 0
  %509 = vmatpush2.bf16.msra.mxu0 %v416
  %510 = vmatprep.subr.bf16.mxu0 0
  %511 = vmatpush2.bf16.msra.mxu0 %v415
  %512 = vmatprep.subr.bf16.mxu0 0
  %513 = vmatpush2.bf16.msra.mxu0 %v414
  %514 = vmatprep.subr.bf16.mxu0 0
  %515 = vmatpush2.bf16.msra.mxu0 %v413
  %516 = vmatprep.subr.bf16.mxu0 0
  %517 = vmatpush2.bf16.msra.mxu0 %v412
  %518 = vmatprep.subr.bf16.mxu0 0
  %519 = vmatpush2.bf16.msra.mxu0 %v411
  %520 = vmatprep.mubr.bf16.mxu0 %v224
  %521 = vmatmul.mubr.bf16.gmra.mxu0 %v223
  %v522 = vpop.f32.mrf.mxu0
  %v523 = vadd.f32 %v122, %v522
  %v524 = vpop.f32.mrf.mxu0
  %v525 = vpop.f32.mrf.mxu0
  %v526 = vadd.f32 %v127, %v525
  %v527 = vpop.f32.mrf.mxu0
  %528 = vmatprep.mubr.bf16.mxu0 %v229
  %529 = vmatmul.mubr.bf16.gmra.mxu0 %v228
  %v530 = vpop.f32.mrf.mxu0
  %v531 = vadd.f32 %v132, %v530
  %v532 = vpop.f32.mrf.mxu0
  %v533 = vpop.f32.mrf.mxu0
  %v534 = vadd.f32 %v137, %v533
  %v535 = vpop.f32.mrf.mxu0
  %536 = vmatprep.mubr.bf16.mxu0 %v234
  %537 = vmatmul.mubr.bf16.gmra.mxu0 %v233
  %v538 = vpop.f32.mrf.mxu0
  %v539 = vadd.f32 %v142, %v538
  %v540 = vpop.f32.mrf.mxu0
  %v541 = vpop.f32.mrf.mxu0
  %v542 = vadd.f32 %v147, %v541
  %v543 = vpop.f32.mrf.mxu0
  %544 = vmatprep.mubr.bf16.mxu0 %v239
  %545 = vmatmul.mubr.bf16.gmra.mxu0 %v238
  %v546 = vpop.f32.mrf.mxu0
  %v547 = vadd.f32 %v152, %v546
  %v548 = vpop.f32.mrf.mxu0
  %v549 = vpop.f32.mrf.mxu0
  %v550 = vadd.f32 %v157, %v549
  %v551 = vpop.f32.mrf.mxu0
  %552 = vdwg.mxu0
  %553 = vmatprep.subr.bf16.mxu0 0
  %554 = vmatpush1.bf16.msra.mxu0 %v426
  %555 = vmatprep.subr.bf16.mxu0 0
  %556 = vmatpush1.bf16.msra.mxu0 %v425
  %557 = vmatprep.subr.bf16.mxu0 0
  %558 = vmatpush1.bf16.msra.mxu0 %v424
  %559 = vmatprep.subr.bf16.mxu0 0
  %560 = vmatpush1.bf16.msra.mxu0 %v423
  %561 = vmatprep.subr.bf16.mxu0 0
  %562 = vmatpush1.bf16.msra.mxu0 %v422
  %563 = vmatprep.subr.bf16.mxu0 0
  %564 = vmatpush1.bf16.msra.mxu0 %v421
  %565 = vmatprep.subr.bf16.mxu0 0
  %566 = vmatpush1.bf16.msra.mxu0 %v420
  %567 = vmatprep.subr.bf16.mxu0 0
  %568 = vmatpush1.bf16.msra.mxu0 %v419
  %569 = vmatprep.subr.bf16.mxu0 0
  %570 = vmatpush2.bf16.msra.mxu0 %v434
  %571 = vmatprep.subr.bf16.mxu0 0
  %572 = vmatpush2.bf16.msra.mxu0 %v433
  %573 = vmatprep.subr.bf16.mxu0 0
  %574 = vmatpush2.bf16.msra.mxu0 %v432
  %575 = vmatprep.subr.bf16.mxu0 0
  %576 = vmatpush2.bf16.msra.mxu0 %v431
  %577 = vmatprep.subr.bf16.mxu0 0
  %578 = vmatpush2.bf16.msra.mxu0 %v430
  %579 = vmatprep.subr.bf16.mxu0 0
  %580 = vmatpush2.bf16.msra.mxu0 %v429
  %581 = vmatprep.subr.bf16.mxu0 0
  %582 = vmatpush2.bf16.msra.mxu0 %v428
  %583 = vmatprep.subr.bf16.mxu0 0
  %584 = vmatpush2.bf16.msra.mxu0 %v427
  %585 = vmatprep.mubr.bf16.mxu0 %v226
  %586 = vmatmul.mubr.bf16.gmra.mxu0 %v225
  %v587 = vpop.f32.mrf.mxu0
  %v588 = vadd.f32 %v523, %v587
  %v589 = vpop.f32.mrf.mxu0
  %v590 = vpop.f32.mrf.mxu0
  %v591 = vadd.f32 %v526, %v590
  %v592 = vpop.f32.mrf.mxu0
  %593 = vmatprep.mubr.bf16.mxu0 %v231
  %594 = vmatmul.mubr.bf16.gmra.mxu0 %v230
  %v595 = vpop.f32.mrf.mxu0
  %v596 = vadd.f32 %v531, %v595
  %v597 = vpop.f32.mrf.mxu0
  %v598 = vpop.f32.mrf.mxu0
  %v599 = vadd.f32 %v534, %v598
  %v600 = vpop.f32.mrf.mxu0
  %601 = vmatprep.mubr.bf16.mxu0 %v236
  %602 = vmatmul.mubr.bf16.gmra.mxu0 %v235
  %v603 = vpop.f32.mrf.mxu0
  %v604 = vadd.f32 %v539, %v603
  %v605 = vpop.f32.mrf.mxu0
  %v606 = vpop.f32.mrf.mxu0
  %v607 = vadd.f32 %v542, %v606
  %v608 = vpop.f32.mrf.mxu0
  %609 = vmatprep.mubr.bf16.mxu0 %v241
  %610 = vmatmul.mubr.bf16.gmra.mxu0 %v240
  %v611 = vpop.f32.mrf.mxu0
  %v612 = vadd.f32 %v547, %v611
  %v613 = vpop.f32.mrf.mxu0
  %v614 = vpop.f32.mrf.mxu0
  %v615 = vadd.f32 %v550, %v614
  %v616 = vpop.f32.mrf.mxu0
  %617 = vdwg.mxu0
  %618 = vmatprep.subr.bf16.mxu0 0
  %619 = vmatpush1.bf16.msra.mxu0 0
  %620 = vmatprep.subr.bf16.mxu0 0
  %621 = vmatpush1.bf16.msra.mxu0 0
  %622 = vmatprep.subr.bf16.mxu0 0
  %623 = vmatpush1.bf16.msra.mxu0 0
  %624 = vmatprep.subr.bf16.mxu0 0
  %625 = vmatpush1.bf16.msra.mxu0 0
  %626 = vmatprep.subr.bf16.mxu0 0
  %627 = vmatpush1.bf16.msra.mxu0 %v438
  %628 = vmatprep.subr.bf16.mxu0 0
  %629 = vmatpush1.bf16.msra.mxu0 %v437
  %630 = vmatprep.subr.bf16.mxu0 0
  %631 = vmatpush1.bf16.msra.mxu0 %v436
  %632 = vmatprep.subr.bf16.mxu0 0
  %633 = vmatpush1.bf16.msra.mxu0 %v435
  %634 = vmatprep.subr.bf16.mxu0 0
  %635 = vmatpush2.bf16.msra.mxu0 0
  %636 = vmatprep.subr.bf16.mxu0 0
  %637 = vmatpush2.bf16.msra.mxu0 0
  %638 = vmatprep.subr.bf16.mxu0 0
  %639 = vmatpush2.bf16.msra.mxu0 0
  %640 = vmatprep.subr.bf16.mxu0 0
  %641 = vmatpush2.bf16.msra.mxu0 0
  %642 = vmatprep.subr.bf16.mxu0 0
  %643 = vmatpush2.bf16.msra.mxu0 0
  %644 = vmatprep.subr.bf16.mxu0 0
  %645 = vmatpush2.bf16.msra.mxu0 0
  %646 = vmatprep.subr.bf16.mxu0 0
  %647 = vmatpush2.bf16.msra.mxu0 0
  %648 = vmatprep.subr.bf16.mxu0 0
  %649 = vmatpush2.bf16.msra.mxu0 0
  %650 = vmatprep.mubr.bf16.mxu0 0
  %651 = vmatmul.mubr.bf16.gmra.mxu0 %v477
  %v652 = vpop.f32.mrf.mxu0
  %v653 = vadd.f32 %v588, %v652
  %v654 = vpop.f32.mrf.mxu0
  %v655 = vpop.f32.mrf.mxu0
  %v656 = vadd.f32 %v591, %v655
  %v657 = vpop.f32.mrf.mxu0
  %658 = vmatprep.mubr.bf16.mxu0 0
  %659 = vmatmul.mubr.bf16.gmra.mxu0 %v480
  %v660 = vpop.f32.mrf.mxu0
  %v661 = vadd.f32 %v596, %v660
  %v662 = vpop.f32.mrf.mxu0
  %v663 = vpop.f32.mrf.mxu0
  %v664 = vadd.f32 %v599, %v663
  %v665 = vpop.f32.mrf.mxu0
  %666 = vmatprep.mubr.bf16.mxu0 0
  %667 = vmatmul.mubr.bf16.gmra.mxu0 %v483
  %v668 = vpop.f32.mrf.mxu0
  %v669 = vadd.f32 %v604, %v668
  %v670 = vpop.f32.mrf.mxu0
  %v671 = vpop.f32.mrf.mxu0
  %v672 = vadd.f32 %v607, %v671
  %v673 = vpop.f32.mrf.mxu0
  %674 = vmatprep.mubr.bf16.mxu0 0
  %675 = vmatmul.mubr.bf16.gmra.mxu0 %v486
  %v676 = vpop.f32.mrf.mxu0
  %v677 = vadd.f32 %v612, %v676
  %v678 = vpop.f32.mrf.mxu0
  %v679 = vpop.f32.mrf.mxu0
  %v680 = vadd.f32 %v615, %v679
  %v681 = vpop.f32.mrf.mxu0
  %682 = vdwg.mxu0
  %v683 = vmax.f32 %v653, 0.0
  %v684 = vmax.f32 %v656, 0.0
  %v685 = vmax.f32 %v661, 0.0
  %v686 = vmax.f32 %v664, 0.0
  %v687 = vmax.f32 %v669, 0.0
  %v688 = vmax.f32 %v672, 0.0
  %v689 = vmax.f32 %v677, 0.0
  %v690 = vmax.f32 %v680, 0.0
  %v691 = vpack.c.bf16 %v684, %v683
  %v692 = vpack.c.bf16 %v686, %v685
  %v693 = vpack.c.bf16 %v688, %v687
  %v694 = vpack.c.bf16 %v690, %v689
  %v699 = vunpack.c.l.b16 %v691
  %v700 = vunpack.c.h.b16 %v691
  %v701 = vunpack.c.l.b16 %v692
  %v702 = vunpack.c.h.b16 %v692
  %v703 = vunpack.c.l.b16 %v693
  %v704 = vunpack.c.h.b16 %v693
  %v705 = vunpack.c.l.b16 %v694
  %v706 = vunpack.c.h.b16 %v694
  %v707 = vpack.c.b16 %v699, %v699
  %v708 = vpack.c.b16 %v700, %v700
  %v709 = vpack.c.b16 %v701, %v701
  %v710 = vpack.c.b16 %v702, %v702
  %v711 = vpack.c.b16 %v703, %v703
  %v712 = vpack.c.b16 %v704, %v704
  %v713 = vpack.c.b16 %v705, %v705
  %v714 = vpack.c.b16 %v706, %v706
  %vm723 = vcmask 60416
  %724 = vst.msk [vmem:[%s3] sm:$0xf] %vm723, %v707
  %725 = vst.msk [vmem:[%s3 + $0x4] sm:$0xf] %vm723, %v708
  %726 = vst.msk [vmem:[%s3 + $0x8] sm:$0xf] %vm723, %v709
  %727 = vst.msk [vmem:[%s3 + $0xc] sm:$0xf] %vm723, %v710
  %728 = vst.msk [vmem:[%s3 + $0x10] sm:$0xf] %vm723, %v711
  %729 = vst.msk [vmem:[%s3 + $0x14] sm:$0xf] %vm723, %v712
  %730 = vst.msk [vmem:[%s3 + $0x18] sm:$0xf] %vm723, %v713
  %731 = vst.msk [vmem:[%s3 + $0x1c] sm:$0xf] %vm723, %v714
  // Predicated region
  $region14: #{_lambda_.36} parent=0 // pred_check
    _
  $region15: #{_lambda_.36} parent=0 // pred_check_branch
    %733 = sbr.rel (0) target = $region17
  $region16: #{_lambda_.36} parent=0 // pred_region
    _
  $region17: #{_lambda_.36} parent=0 // pred_fallthru
    _
  // Predicated region
  $region18: #{_lambda_.36} parent=0 // pred_check
    _
  $region19: #{_lambda_.36} parent=0 // pred_check_branch
    %735 = sbr.rel (0) target = $region21
  $region20: #{_lambda_.36} parent=0 // pred_region
    _
  $region21: #{_lambda_.36} parent=0 // pred_fallthru
    _

// kernel: _lambda_.35
$region0: #{_lambda_.35}
  #allocation0 [shape = 'u32[]', space=smem, size = 0x4, offset = 0x4, fixed_abs, tag = 'smem constant byte address 0x4 - core index']
  #allocation1 [shape = 'u32[144,128]{1,0:T(1,128)}', space=vmem, size = 0x12000, scoped, tag = 'internal scratch']
  %s0 = inlined_call_operand.vmem [shape: bf16[64,576], index: 0, kind: input, shape index: {}]
  %s1 = inlined_call_operand.vmem [shape: bf16[576,8], index: 1, kind: input, shape index: {}]
  %s2 = inlined_call_operand.vmem [shape: f32[64,1], index: 2, kind: input, shape index: {}]
  %s3 = inlined_call_operand.vmem [shape: bf16[64,8], index: 3, kind: input, shape index: {}]
  %s4 = inlined_call_operand.vmem [shape: bf16[64,8], index: 4, kind: output, shape index: {}]
  %s5 = sld [smem:[#allocation0]]
  $region26: #{_lambda_.35} parent=0
    _
  %s7 = ssub.s32 1, %s5
  %s8 = scalar_select 0, %s7, %s5
  // Predicated region
  $region2: #{_lambda_.35} parent=0 // pred_check
    _
  $region3: #{_lambda_.35} parent=0 // pred_check_branch
    %10 = sbr.rel (0) target = $region5
  $region4: #{_lambda_.35} parent=0 // pred_region
    _
  $region5: #{_lambda_.35} parent=0 // pred_fallthru
    _
  // Predicated region
  $region6: #{_lambda_.35} parent=0 // pred_check
    _
  $region7: #{_lambda_.35} parent=0 // pred_check_branch
    %12 = sbr.rel (0) target = $region9
  $region8: #{_lambda_.35} parent=0 // pred_region
    _
  $region9: #{_lambda_.35} parent=0 // pred_fallthru
    _
  // Predicated region
  $region10: #{_lambda_.35} parent=0 // pred_check
    _
  $region11: #{_lambda_.35} parent=0 // pred_check_branch
    %14 = sbr.rel (0) target = $region13
  $region12: #{_lambda_.35} parent=0 // pred_region
    _
  $region13: #{_lambda_.35} parent=0 // pred_fallthru
    _
  // Predicated region
  $region14: #{_lambda_.35} parent=0 // pred_check
    _
  $region15: #{_lambda_.35} parent=0 // pred_check_branch
    %16 = sbr.rel (0) target = $region17
  $region16: #{_lambda_.35} parent=0 // pred_region
    _
  $region17: #{_lambda_.35} parent=0 // pred_fallthru
    _
  %v18 = vld [vmem:[%s0] sm:$0xff]
  %v19 = vld [vmem:[%s0 + $0x8] sm:$0xff]
  %v20 = vld [vmem:[%s0 + $0x10] sm:$0xf]
  %v21 = vld [vmem:[%s0 + $0x14] sm:$0xff]
  %v22 = vld [vmem:[%s0 + $0x1c] sm:$0xff]
  %v23 = vld [vmem:[%s0 + $0x24] sm:$0xf]
  %v24 = vld [vmem:[%s0 + $0x28] sm:$0xff]
  %v25 = vld [vmem:[%s0 + $0x30] sm:$0xff]
  %v26 = vld [vmem:[%s0 + $0x38] sm:$0xf]
  %v27 = vld [vmem:[%s0 + $0x3c] sm:$0xff]
  %v28 = vld [vmem:[%s0 + $0x44] sm:$0xff]
  %v29 = vld [vmem:[%s0 + $0x4c] sm:$0xf]
  %v30 = vld [vmem:[%s0 + $0x50] sm:$0xff]
  %v31 = vld [vmem:[%s0 + $0x58] sm:$0xff]
  %v32 = vld [vmem:[%s0 + $0x60] sm:$0xf]
  %v33 = vld [vmem:[%s0 + $0x64] sm:$0xff]
  %v34 = vld [vmem:[%s0 + $0x6c] sm:$0xff]
  %v35 = vld [vmem:[%s0 + $0x74] sm:$0xf]
  %v36 = vld [vmem:[%s0 + $0x78] sm:$0xff]
  %v37 = vld [vmem:[%s0 + $0x80] sm:$0xff]
  %v38 = vld [vmem:[%s0 + $0x88] sm:$0xf]
  %v39 = vld [vmem:[%s0 + $0x8c] sm:$0xff]
  %v40 = vld [vmem:[%s0 + $0x94] sm:$0xff]
  %v41 = vld [vmem:[%s0 + $0x9c] sm:$0xf]
  %v42 = vld [vmem:[%s1] sm:$0xf]
  %v43 = vld [vmem:[%s1 + $0x4] sm:$0xf]
  %v44 = vld [vmem:[%s1 + $0x8] sm:$0xf]
  %v45 = vld [vmem:[%s1 + $0xc] sm:$0xf]
  %v46 = vld [vmem:[%s1 + $0x10] sm:$0xf]
  %v47 = vld [vmem:[%s1 + $0x14] sm:$0xf]
  %v48 = vld [vmem:[%s1 + $0x18] sm:$0xf]
  %v49 = vld [vmem:[%s1 + $0x1c] sm:$0xf]
  %v50 = vld [vmem:[%s1 + $0x20] sm:$0xf]
  %v51 = vld [vmem:[%s1 + $0x24] sm:$0xf]
  %v52 = vld [vmem:[%s1 + $0x28] sm:$0xf]
  %v53 = vld [vmem:[%s1 + $0x2c] sm:$0xf]
  %v54 = vld [vmem:[%s1 + $0x30] sm:$0xf]
  %v55 = vld [vmem:[%s1 + $0x34] sm:$0xf]
  %v56 = vld [vmem:[%s1 + $0x38] sm:$0xf]
  %v57 = vld [vmem:[%s1 + $0x3c] sm:$0xf]
  %v58 = vld [vmem:[%s1 + $0x40] sm:$0xf]
  %v59 = vld [vmem:[%s1 + $0x44] sm:$0xf]
  %v60 = vld [vmem:[%s1 + $0x48] sm:$0xf]
  %v61 = vld [vmem:[%s1 + $0x4c] sm:$0xf]
  %v62 = vld [vmem:[%s1 + $0x50] sm:$0xf]
  %v63 = vld [vmem:[%s1 + $0x54] sm:$0xf]
  %v64 = vld [vmem:[%s1 + $0x58] sm:$0xf]
  %v65 = vld [vmem:[%s1 + $0x5c] sm:$0xf]
  %v66 = vld [vmem:[%s1 + $0x60] sm:$0xf]
  %v67 = vld [vmem:[%s1 + $0x64] sm:$0xf]
  %v68 = vld [vmem:[%s1 + $0x68] sm:$0xf]
  %v69 = vld [vmem:[%s1 + $0x6c] sm:$0xf]
  %v70 = vld [vmem:[%s1 + $0x70] sm:$0xf]
  %v71 = vld [vmem:[%s1 + $0x74] sm:$0xf]
  %v72 = vld [vmem:[%s1 + $0x78] sm:$0xf]
  %v73 = vld [vmem:[%s1 + $0x7c] sm:$0xf]
  %v74 = vld [vmem:[%s1 + $0x80] sm:$0xf]
  %v75 = vld [vmem:[%s1 + $0x84] sm:$0xf]
  %v76 = vld [vmem:[%s1 + $0x88] sm:$0xf]
  %v77 = vld [vmem:[%s1 + $0x8c] sm:$0xf]
  %v78 = vld [vmem:[%s1 + $0x90] sm:$0xf]
  %v79 = vld [vmem:[%s1 + $0x94] sm:$0xf]
  %v80 = vld [vmem:[%s1 + $0x98] sm:$0xf]
  %v81 = vld [vmem:[%s1 + $0x9c] sm:$0xf]
  %v82 = vld [vmem:[%s1 + $0xa0] sm:$0xf]
  %v83 = vld [vmem:[%s1 + $0xa4] sm:$0xf]
  %v84 = vld [vmem:[%s1 + $0xa8] sm:$0xf]
  %v85 = vld [vmem:[%s1 + $0xac] sm:$0xf]
  %v86 = vld [vmem:[%s1 + $0xb0] sm:$0xf]
  %v87 = vld [vmem:[%s1 + $0xb4] sm:$0xf]
  %v88 = vld [vmem:[%s1 + $0xb8] sm:$0xf]
  %v89 = vld [vmem:[%s1 + $0xbc] sm:$0xf]
  %v90 = vld [vmem:[%s1 + $0xc0] sm:$0xf]
  %v91 = vld [vmem:[%s1 + $0xc4] sm:$0xf]
  %v92 = vld [vmem:[%s1 + $0xc8] sm:$0xf]
  %v93 = vld [vmem:[%s1 + $0xcc] sm:$0xf]
  %v94 = vld [vmem:[%s1 + $0xd0] sm:$0xf]
  %v95 = vld [vmem:[%s1 + $0xd4] sm:$0xf]
  %v96 = vld [vmem:[%s1 + $0xd8] sm:$0xf]
  %v97 = vld [vmem:[%s1 + $0xdc] sm:$0xf]
  %v98 = vld [vmem:[%s1 + $0xe0] sm:$0xf]
  %v99 = vld [vmem:[%s1 + $0xe4] sm:$0xf]
  %v100 = vld [vmem:[%s1 + $0xe8] sm:$0xf]
  %v101 = vld [vmem:[%s1 + $0xec] sm:$0xf]
  %v102 = vld [vmem:[%s1 + $0xf0] sm:$0xf]
  %v103 = vld [vmem:[%s1 + $0xf4] sm:$0xf]
  %v104 = vld [vmem:[%s1 + $0xf8] sm:$0xf]
  %v105 = vld [vmem:[%s1 + $0xfc] sm:$0xf]
  %v106 = vld [vmem:[%s1 + $0x100] sm:$0xf]
  %v107 = vld [vmem:[%s1 + $0x104] sm:$0xf]
  %v108 = vld [vmem:[%s1 + $0x108] sm:$0xf]
  %v109 = vld [vmem:[%s1 + $0x10c] sm:$0xf]
  %v110 = vld [vmem:[%s1 + $0x110] sm:$0xf]
  %v111 = vld [vmem:[%s1 + $0x114] sm:$0xf]
  %v112 = vld [vmem:[%s1 + $0x118] sm:$0xf]
  %v113 = vld [vmem:[%s1 + $0x11c] sm:$0xf]
  %v114 = vld [vmem:[%s2] sm:$0xff]
  %v115 = vld [vmem:[%s2 + $0x8] sm:$0xff]
  %v116 = vld [vmem:[%s2 + $0x10] sm:$0xff]
  %v117 = vld [vmem:[%s2 + $0x18] sm:$0xff]
  %v118 = vld [vmem:[%s2 + $0x20] sm:$0xff]
  %v119 = vld [vmem:[%s2 + $0x28] sm:$0xff]
  %v120 = vld [vmem:[%s2 + $0x30] sm:$0xff]
  %v121 = vld [vmem:[%s2 + $0x38] sm:$0xff]
  %123 = vset.pattern.permute.xlu0 0
  %124 = vperm.xlu0 %123, %v114
  %v125 = vpop.permute.xlu0 %124
  %128 = vset.pattern.permute.xlu0 0
  %129 = vperm.xlu0 %128, %v115
  %v130 = vpop.permute.xlu0 %129
  %133 = vset.pattern.permute.xlu0 0
  %134 = vperm.xlu0 %133, %v116
  %v135 = vpop.permute.xlu0 %134
  %138 = vset.pattern.permute.xlu0 0
  %139 = vperm.xlu0 %138, %v117
  %v140 = vpop.permute.xlu0 %139
  %143 = vset.pattern.permute.xlu0 0
  %144 = vperm.xlu0 %143, %v118
  %v145 = vpop.permute.xlu0 %144
  %148 = vset.pattern.permute.xlu0 0
  %149 = vperm.xlu0 %148, %v119
  %v150 = vpop.permute.xlu0 %149
  %153 = vset.pattern.permute.xlu0 0
  %154 = vperm.xlu0 %153, %v120
  %v155 = vpop.permute.xlu0 %154
  %158 = vset.pattern.permute.xlu0 0
  %159 = vperm.xlu0 %158, %v121
  %v160 = vpop.permute.xlu0 %159
  %v186 = vunpack.c.l.b16 %v18
  %v187 = vunpack.c.h.b16 %v18
  %v188 = vunpack.c.l.b16 %v19
  %v189 = vunpack.c.h.b16 %v19
  %v190 = vunpack.c.l.b16 %v20
  %v191 = vunpack.c.l.b16 %v21
  %v192 = vunpack.c.h.b16 %v21
  %v193 = vunpack.c.l.b16 %v22
  %v194 = vunpack.c.h.b16 %v22
  %v195 = vunpack.c.l.b16 %v23
  %v196 = vunpack.c.l.b16 %v24
  %v197 = vunpack.c.h.b16 %v24
  %v198 = vunpack.c.l.b16 %v25
  %v199 = vunpack.c.h.b16 %v25
  %v200 = vunpack.c.l.b16 %v26
  %v201 = vunpack.c.l.b16 %v27
  %v202 = vunpack.c.h.b16 %v27
  %v203 = vunpack.c.l.b16 %v28
  %v204 = vunpack.c.h.b16 %v28
  %v205 = vunpack.c.l.b16 %v29
  %v206 = vunpack.c.l.b16 %v30
  %v207 = vunpack.c.h.b16 %v30
  %v208 = vunpack.c.l.b16 %v31
  %v209 = vunpack.c.h.b16 %v31
  %v210 = vunpack.c.l.b16 %v32
  %v211 = vunpack.c.l.b16 %v33
  %v212 = vunpack.c.h.b16 %v33
  %v213 = vunpack.c.l.b16 %v34
  %v214 = vunpack.c.h.b16 %v34
  %v215 = vunpack.c.l.b16 %v35
  %v216 = vunpack.c.l.b16 %v36
  %v217 = vunpack.c.h.b16 %v36
  %v218 = vunpack.c.l.b16 %v37
  %v219 = vunpack.c.h.b16 %v37
  %v220 = vunpack.c.l.b16 %v38
  %v221 = vunpack.c.l.b16 %v39
  %v222 = vunpack.c.h.b16 %v39
  %v223 = vunpack.c.l.b16 %v40
  %v224 = vunpack.c.h.b16 %v40
  %v225 = vunpack.c.l.b16 %v41
  %v226 = vpack.c.b16 %v191, %v186
  %v227 = vpack.c.b16 %v192, %v187
  %v228 = vpack.c.b16 %v193, %v188
  %v229 = vpack.c.b16 %v194, %v189
  %v230 = vpack.c.b16 %v195, %v190
  %v231 = vpack.c.b16 %v201, %v196
  %v232 = vpack.c.b16 %v202, %v197
  %v233 = vpack.c.b16 %v203, %v198
  %v234 = vpack.c.b16 %v204, %v199
  %v235 = vpack.c.b16 %v205, %v200
  %v236 = vpack.c.b16 %v211, %v206
  %v237 = vpack.c.b16 %v212, %v207
  %v238 = vpack.c.b16 %v213, %v208
  %v239 = vpack.c.b16 %v214, %v209
  %v240 = vpack.c.b16 %v215, %v210
  %v241 = vpack.c.b16 %v221, %v216
  %v242 = vpack.c.b16 %v222, %v217
  %v243 = vpack.c.b16 %v223, %v218
  %v244 = vpack.c.b16 %v224, %v219
  %v245 = vpack.c.b16 %v225, %v220
  %v334 = vunpack.c.l.b16 %v42
  %v335 = vunpack.c.l.b16 %v43
  %v336 = vunpack.c.l.b16 %v44
  %v337 = vunpack.c.l.b16 %v45
  %v338 = vunpack.c.l.b16 %v46
  %v339 = vunpack.c.l.b16 %v47
  %v340 = vunpack.c.l.b16 %v48
  %v341 = vunpack.c.l.b16 %v49
  %v342 = vunpack.c.l.b16 %v50
  %v343 = vunpack.c.l.b16 %v51
  %v344 = vunpack.c.l.b16 %v52
  %v345 = vunpack.c.l.b16 %v53
  %v346 = vunpack.c.l.b16 %v54
  %v347 = vunpack.c.l.b16 %v55
  %v348 = vunpack.c.l.b16 %v56
  %v349 = vunpack.c.l.b16 %v57
  %v350 = vunpack.c.l.b16 %v58
  %v351 = vunpack.c.l.b16 %v59
  %v352 = vunpack.c.l.b16 %v60
  %v353 = vunpack.c.l.b16 %v61
  %v354 = vunpack.c.l.b16 %v62
  %v355 = vunpack.c.l.b16 %v63
  %v356 = vunpack.c.l.b16 %v64
  %v357 = vunpack.c.l.b16 %v65
  %v358 = vunpack.c.l.b16 %v66
  %v359 = vunpack.c.l.b16 %v67
  %v360 = vunpack.c.l.b16 %v68
  %v361 = vunpack.c.l.b16 %v69
  %v362 = vunpack.c.l.b16 %v70
  %v363 = vunpack.c.l.b16 %v71
  %v364 = vunpack.c.l.b16 %v72
  %v365 = vunpack.c.l.b16 %v73
  %v366 = vunpack.c.l.b16 %v74
  %v367 = vunpack.c.l.b16 %v75
  %v368 = vunpack.c.l.b16 %v76
  %v369 = vunpack.c.l.b16 %v77
  %v370 = vunpack.c.l.b16 %v78
  %v371 = vunpack.c.l.b16 %v79
  %v372 = vunpack.c.l.b16 %v80
  %v373 = vunpack.c.l.b16 %v81
  %v374 = vunpack.c.l.b16 %v82
  %v375 = vunpack.c.l.b16 %v83
  %v376 = vunpack.c.l.b16 %v84
  %v377 = vunpack.c.l.b16 %v85
  %v378 = vunpack.c.l.b16 %v86
  %v379 = vunpack.c.l.b16 %v87
  %v380 = vunpack.c.l.b16 %v88
  %v381 = vunpack.c.l.b16 %v89
  %v382 = vunpack.c.l.b16 %v90
  %v383 = vunpack.c.l.b16 %v91
  %v384 = vunpack.c.l.b16 %v92
  %v385 = vunpack.c.l.b16 %v93
  %v386 = vunpack.c.l.b16 %v94
  %v387 = vunpack.c.l.b16 %v95
  %v388 = vunpack.c.l.b16 %v96
  %v389 = vunpack.c.l.b16 %v97
  %v390 = vunpack.c.l.b16 %v98
  %v391 = vunpack.c.l.b16 %v99
  %v392 = vunpack.c.l.b16 %v100
  %v393 = vunpack.c.l.b16 %v101
  %v394 = vunpack.c.l.b16 %v102
  %v395 = vunpack.c.l.b16 %v103
  %v396 = vunpack.c.l.b16 %v104
  %v397 = vunpack.c.l.b16 %v105
  %v398 = vunpack.c.l.b16 %v106
  %v399 = vunpack.c.l.b16 %v107
  %v400 = vunpack.c.l.b16 %v108
  %v401 = vunpack.c.l.b16 %v109
  %v402 = vunpack.c.l.b16 %v110
  %v403 = vunpack.c.l.b16 %v111
  %v404 = vunpack.c.l.b16 %v112
  %v405 = vunpack.c.l.b16 %v113
  %v406 = vpack.c.b16 %v335, %v334
  %v407 = vpack.c.b16 %v337, %v336
  %v408 = vpack.c.b16 %v339, %v338
  %v409 = vpack.c.b16 %v341, %v340
  %v410 = vpack.c.b16 %v343, %v342
  %v411 = vpack.c.b16 %v345, %v344
  %v412 = vpack.c.b16 %v347, %v346
  %v413 = vpack.c.b16 %v349, %v348
  %v414 = vpack.c.b16 %v351, %v350
  %v415 = vpack.c.b16 %v353, %v352
  %v416 = vpack.c.b16 %v355, %v354
  %v417 = vpack.c.b16 %v357, %v356
  %v418 = vpack.c.b16 %v359, %v358
  %v419 = vpack.c.b16 %v361, %v360
  %v420 = vpack.c.b16 %v363, %v362
  %v421 = vpack.c.b16 %v365, %v364
  %v422 = vpack.c.b16 %v367, %v366
  %v423 = vpack.c.b16 %v369, %v368
  %v424 = vpack.c.b16 %v371, %v370
  %v425 = vpack.c.b16 %v373, %v372
  %v426 = vpack.c.b16 %v375, %v374
  %v427 = vpack.c.b16 %v377, %v376
  %v428 = vpack.c.b16 %v379, %v378
  %v429 = vpack.c.b16 %v381, %v380
  %v430 = vpack.c.b16 %v383, %v382
  %v431 = vpack.c.b16 %v385, %v384
  %v432 = vpack.c.b16 %v387, %v386
  %v433 = vpack.c.b16 %v389, %v388
  %v434 = vpack.c.b16 %v391, %v390
  %v435 = vpack.c.b16 %v393, %v392
  %v436 = vpack.c.b16 %v395, %v394
  %v437 = vpack.c.b16 %v397, %v396
  %v438 = vpack.c.b16 %v399, %v398
  %v439 = vpack.c.b16 %v401, %v400
  %v440 = vpack.c.b16 %v403, %v402
  %v441 = vpack.c.b16 %v405, %v404
  %vm478 = vcmask 523264
  %v480 = vsel %vm478, %v230, 0
  %v483 = vsel %vm478, %v235, 0
  %v486 = vsel %vm478, %v240, 0
  %v489 = vsel %vm478, %v245, 0
  %491 = vmatprep.subr.bf16.mxu0 0
  %492 = vmatpush1.bf16.msra.mxu0 %v413
  %493 = vmatprep.subr.bf16.mxu0 0
  %494 = vmatpush1.bf16.msra.mxu0 %v412
  %495 = vmatprep.subr.bf16.mxu0 0
  %496 = vmatpush1.bf16.msra.mxu0 %v411
  %497 = vmatprep.subr.bf16.mxu0 0
  %498 = vmatpush1.bf16.msra.mxu0 %v410
  %499 = vmatprep.subr.bf16.mxu0 0
  %500 = vmatpush1.bf16.msra.mxu0 %v409
  %501 = vmatprep.subr.bf16.mxu0 0
  %502 = vmatpush1.bf16.msra.mxu0 %v408
  %503 = vmatprep.subr.bf16.mxu0 0
  %504 = vmatpush1.bf16.msra.mxu0 %v407
  %505 = vmatprep.subr.bf16.mxu0 0
  %506 = vmatpush1.bf16.msra.mxu0 %v406
  %507 = vmatprep.subr.bf16.mxu0 0
  %508 = vmatpush2.bf16.msra.mxu0 %v421
  %509 = vmatprep.subr.bf16.mxu0 0
  %510 = vmatpush2.bf16.msra.mxu0 %v420
  %511 = vmatprep.subr.bf16.mxu0 0
  %512 = vmatpush2.bf16.msra.mxu0 %v419
  %513 = vmatprep.subr.bf16.mxu0 0
  %514 = vmatpush2.bf16.msra.mxu0 %v418
  %515 = vmatprep.subr.bf16.mxu0 0
  %516 = vmatpush2.bf16.msra.mxu0 %v417
  %517 = vmatprep.subr.bf16.mxu0 0
  %518 = vmatpush2.bf16.msra.mxu0 %v416
  %519 = vmatprep.subr.bf16.mxu0 0
  %520 = vmatpush2.bf16.msra.mxu0 %v415
  %521 = vmatprep.subr.bf16.mxu0 0
  %522 = vmatpush2.bf16.msra.mxu0 %v414
  %523 = vmatprep.mubr.bf16.mxu0 %v227
  %524 = vmatmul.mubr.bf16.gmra.mxu0 %v226
  %v525 = vpop.f32.mrf.mxu0
  %v526 = vadd.f32 %v125, %v525
  %v527 = vpop.f32.mrf.mxu0
  %v528 = vpop.f32.mrf.mxu0
  %v529 = vadd.f32 %v130, %v528
  %v530 = vpop.f32.mrf.mxu0
  %531 = vmatprep.mubr.bf16.mxu0 %v232
  %532 = vmatmul.mubr.bf16.gmra.mxu0 %v231
  %v533 = vpop.f32.mrf.mxu0
  %v534 = vadd.f32 %v135, %v533
  %v535 = vpop.f32.mrf.mxu0
  %v536 = vpop.f32.mrf.mxu0
  %v537 = vadd.f32 %v140, %v536
  %v538 = vpop.f32.mrf.mxu0
  %539 = vmatprep.mubr.bf16.mxu0 %v237
  %540 = vmatmul.mubr.bf16.gmra.mxu0 %v236
  %v541 = vpop.f32.mrf.mxu0
  %v542 = vadd.f32 %v145, %v541
  %v543 = vpop.f32.mrf.mxu0
  %v544 = vpop.f32.mrf.mxu0
  %v545 = vadd.f32 %v150, %v544
  %v546 = vpop.f32.mrf.mxu0
  %547 = vmatprep.mubr.bf16.mxu0 %v242
  %548 = vmatmul.mubr.bf16.gmra.mxu0 %v241
  %v549 = vpop.f32.mrf.mxu0
  %v550 = vadd.f32 %v155, %v549
  %v551 = vpop.f32.mrf.mxu0
  %v552 = vpop.f32.mrf.mxu0
  %v553 = vadd.f32 %v160, %v552
  %v554 = vpop.f32.mrf.mxu0
  %555 = vdwg.mxu0
  %556 = vmatprep.subr.bf16.mxu0 0
  %557 = vmatpush1.bf16.msra.mxu0 %v429
  %558 = vmatprep.subr.bf16.mxu0 0
  %559 = vmatpush1.bf16.msra.mxu0 %v428
  %560 = vmatprep.subr.bf16.mxu0 0
  %561 = vmatpush1.bf16.msra.mxu0 %v427
  %562 = vmatprep.subr.bf16.mxu0 0
  %563 = vmatpush1.bf16.msra.mxu0 %v426
  %564 = vmatprep.subr.bf16.mxu0 0
  %565 = vmatpush1.bf16.msra.mxu0 %v425
  %566 = vmatprep.subr.bf16.mxu0 0
  %567 = vmatpush1.bf16.msra.mxu0 %v424
  %568 = vmatprep.subr.bf16.mxu0 0
  %569 = vmatpush1.bf16.msra.mxu0 %v423
  %570 = vmatprep.subr.bf16.mxu0 0
  %571 = vmatpush1.bf16.msra.mxu0 %v422
  %572 = vmatprep.subr.bf16.mxu0 0
  %573 = vmatpush2.bf16.msra.mxu0 %v437
  %574 = vmatprep.subr.bf16.mxu0 0
  %575 = vmatpush2.bf16.msra.mxu0 %v436
  %576 = vmatprep.subr.bf16.mxu0 0
  %577 = vmatpush2.bf16.msra.mxu0 %v435
  %578 = vmatprep.subr.bf16.mxu0 0
  %579 = vmatpush2.bf16.msra.mxu0 %v434
  %580 = vmatprep.subr.bf16.mxu0 0
  %581 = vmatpush2.bf16.msra.mxu0 %v433
  %582 = vmatprep.subr.bf16.mxu0 0
  %583 = vmatpush2.bf16.msra.mxu0 %v432
  %584 = vmatprep.subr.bf16.mxu0 0
  %585 = vmatpush2.bf16.msra.mxu0 %v431
  %586 = vmatprep.subr.bf16.mxu0 0
  %587 = vmatpush2.bf16.msra.mxu0 %v430
  %588 = vmatprep.mubr.bf16.mxu0 %v229
  %589 = vmatmul.mubr.bf16.gmra.mxu0 %v228
  %v590 = vpop.f32.mrf.mxu0
  %v591 = vadd.f32 %v526, %v590
  %v592 = vpop.f32.mrf.mxu0
  %v593 = vpop.f32.mrf.mxu0
  %v594 = vadd.f32 %v529, %v593
  %v595 = vpop.f32.mrf.mxu0
  %596 = vmatprep.mubr.bf16.mxu0 %v234
  %597 = vmatmul.mubr.bf16.gmra.mxu0 %v233
  %v598 = vpop.f32.mrf.mxu0
  %v599 = vadd.f32 %v534, %v598
  %v600 = vpop.f32.mrf.mxu0
  %v601 = vpop.f32.mrf.mxu0
  %v602 = vadd.f32 %v537, %v601
  %v603 = vpop.f32.mrf.mxu0
  %604 = vmatprep.mubr.bf16.mxu0 %v239
  %605 = vmatmul.mubr.bf16.gmra.mxu0 %v238
  %v606 = vpop.f32.mrf.mxu0
  %v607 = vadd.f32 %v542, %v606
  %v608 = vpop.f32.mrf.mxu0
  %v609 = vpop.f32.mrf.mxu0
  %v610 = vadd.f32 %v545, %v609
  %v611 = vpop.f32.mrf.mxu0
  %612 = vmatprep.mubr.bf16.mxu0 %v244
  %613 = vmatmul.mubr.bf16.gmra.mxu0 %v243
  %v614 = vpop.f32.mrf.mxu0
  %v615 = vadd.f32 %v550, %v614
  %v616 = vpop.f32.mrf.mxu0
  %v617 = vpop.f32.mrf.mxu0
  %v618 = vadd.f32 %v553, %v617
  %v619 = vpop.f32.mrf.mxu0
  %620 = vdwg.mxu0
  %621 = vmatprep.subr.bf16.mxu0 0
  %622 = vmatpush1.bf16.msra.mxu0 0
  %623 = vmatprep.subr.bf16.mxu0 0
  %624 = vmatpush1.bf16.msra.mxu0 0
  %625 = vmatprep.subr.bf16.mxu0 0
  %626 = vmatpush1.bf16.msra.mxu0 0
  %627 = vmatprep.subr.bf16.mxu0 0
  %628 = vmatpush1.bf16.msra.mxu0 0
  %629 = vmatprep.subr.bf16.mxu0 0
  %630 = vmatpush1.bf16.msra.mxu0 %v441
  %631 = vmatprep.subr.bf16.mxu0 0
  %632 = vmatpush1.bf16.msra.mxu0 %v440
  %633 = vmatprep.subr.bf16.mxu0 0
  %634 = vmatpush1.bf16.msra.mxu0 %v439
  %635 = vmatprep.subr.bf16.mxu0 0
  %636 = vmatpush1.bf16.msra.mxu0 %v438
  %637 = vmatprep.subr.bf16.mxu0 0
  %638 = vmatpush2.bf16.msra.mxu0 0
  %639 = vmatprep.subr.bf16.mxu0 0
  %640 = vmatpush2.bf16.msra.mxu0 0
  %641 = vmatprep.subr.bf16.mxu0 0
  %642 = vmatpush2.bf16.msra.mxu0 0
  %643 = vmatprep.subr.bf16.mxu0 0
  %644 = vmatpush2.bf16.msra.mxu0 0
  %645 = vmatprep.subr.bf16.mxu0 0
  %646 = vmatpush2.bf16.msra.mxu0 0
  %647 = vmatprep.subr.bf16.mxu0 0
  %648 = vmatpush2.bf16.msra.mxu0 0
  %649 = vmatprep.subr.bf16.mxu0 0
  %650 = vmatpush2.bf16.msra.mxu0 0
  %651 = vmatprep.subr.bf16.mxu0 0
  %652 = vmatpush2.bf16.msra.mxu0 0
  %653 = vmatprep.mubr.bf16.mxu0 0
  %654 = vmatmul.mubr.bf16.gmra.mxu0 %v480
  %v655 = vpop.f32.mrf.mxu0
  %v656 = vadd.f32 %v591, %v655
  %v657 = vpop.f32.mrf.mxu0
  %v658 = vpop.f32.mrf.mxu0
  %v659 = vadd.f32 %v594, %v658
  %v660 = vpop.f32.mrf.mxu0
  %661 = vmatprep.mubr.bf16.mxu0 0
  %662 = vmatmul.mubr.bf16.gmra.mxu0 %v483
  %v663 = vpop.f32.mrf.mxu0
  %v664 = vadd.f32 %v599, %v663
  %v665 = vpop.f32.mrf.mxu0
  %v666 = vpop.f32.mrf.mxu0
  %v667 = vadd.f32 %v602, %v666
  %v668 = vpop.f32.mrf.mxu0
  %669 = vmatprep.mubr.bf16.mxu0 0
  %670 = vmatmul.mubr.bf16.gmra.mxu0 %v486
  %v671 = vpop.f32.mrf.mxu0
  %v672 = vadd.f32 %v607, %v671
  %v673 = vpop.f32.mrf.mxu0
  %v674 = vpop.f32.mrf.mxu0
  %v675 = vadd.f32 %v610, %v674
  %v676 = vpop.f32.mrf.mxu0
  %677 = vmatprep.mubr.bf16.mxu0 0
  %678 = vmatmul.mubr.bf16.gmra.mxu0 %v489
  %v679 = vpop.f32.mrf.mxu0
  %v680 = vadd.f32 %v615, %v679
  %v681 = vpop.f32.mrf.mxu0
  %v682 = vpop.f32.mrf.mxu0
  %v683 = vadd.f32 %v618, %v682
  %v684 = vpop.f32.mrf.mxu0
  %685 = vdwg.mxu0
  %v686 = vld [vmem:[%s3] sm:$0xf]
  %v687 = vld [vmem:[%s3 + $0x4] sm:$0xf]
  %v688 = vld [vmem:[%s3 + $0x8] sm:$0xf]
  %v689 = vld [vmem:[%s3 + $0xc] sm:$0xf]
  %v690 = vld [vmem:[%s3 + $0x10] sm:$0xf]
  %v691 = vld [vmem:[%s3 + $0x14] sm:$0xf]
  %v692 = vld [vmem:[%s3 + $0x18] sm:$0xf]
  %v693 = vld [vmem:[%s3 + $0x1c] sm:$0xf]
  %v694 = vunpack.c.l.bf16 %v686
  %v695 = vunpack.c.l.bf16 %v687
  %v696 = vunpack.c.l.bf16 %v688
  %v697 = vunpack.c.l.bf16 %v689
  %v698 = vunpack.c.l.bf16 %v690
  %v699 = vunpack.c.l.bf16 %v691
  %v700 = vunpack.c.l.bf16 %v692
  %v701 = vunpack.c.l.bf16 %v693
  %v702 = vadd.f32 %v656, %v694
  %v703 = vadd.f32 %v659, %v695
  %v704 = vadd.f32 %v664, %v696
  %v705 = vadd.f32 %v667, %v697
  %v706 = vadd.f32 %v672, %v698
  %v707 = vadd.f32 %v675, %v699
  %v708 = vadd.f32 %v680, %v700
  %v709 = vadd.f32 %v683, %v701
  %v710 = vmax.f32 %v702, 0.0
  %v711 = vmax.f32 %v703, 0.0
  %v712 = vmax.f32 %v704, 0.0
  %v713 = vmax.f32 %v705, 0.0
  %v714 = vmax.f32 %v706, 0.0
  %v715 = vmax.f32 %v707, 0.0
  %v716 = vmax.f32 %v708, 0.0
  %v717 = vmax.f32 %v709, 0.0
  %v718 = vpack.c.bf16 %v711, %v710
  %v719 = vpack.c.bf16 %v713, %v712
  %v720 = vpack.c.bf16 %v715, %v714
  %v721 = vpack.c.bf16 %v717, %v716
  %v726 = vunpack.c.l.b16 %v718
  %v727 = vunpack.c.h.b16 %v718
  %v728 = vunpack.c.l.b16 %v719
  %v729 = vunpack.c.h.b16 %v719
  %v730 = vunpack.c.l.b16 %v720
  %v731 = vunpack.c.h.b16 %v720
  %v732 = vunpack.c.l.b16 %v721
  %v733 = vunpack.c.h.b16 %v721
  %v734 = vpack.c.b16 %v726, %v726
  %v735 = vpack.c.b16 %v727, %v727
  %v736 = vpack.c.b16 %v728, %v728
  %v737 = vpack.c.b16 %v729, %v729
  %v738 = vpack.c.b16 %v730, %v730
  %v739 = vpack.c.b16 %v731, %v731
  %v740 = vpack.c.b16 %v732, %v732
  %v741 = vpack.c.b16 %v733, %v733
  %vm750 = vcmask 60416
  %751 = vst.msk [vmem:[%s4] sm:$0xf] %vm750, %v734
  %752 = vst.msk [vmem:[%s4 + $0x4] sm:$0xf] %vm750, %v735
  %753 = vst.msk [vmem:[%s4 + $0x8] sm:$0xf] %vm750, %v736
  %754 = vst.msk [vmem:[%s4 + $0xc] sm:$0xf] %vm750, %v737
  %755 = vst.msk [vmem:[%s4 + $0x10] sm:$0xf] %vm750, %v738
  %756 = vst.msk [vmem:[%s4 + $0x14] sm:$0xf] %vm750, %v739
  %757 = vst.msk [vmem:[%s4 + $0x18] sm:$0xf] %vm750, %v740
  %758 = vst.msk [vmem:[%s4 + $0x1c] sm:$0xf] %vm750, %v741
  // Predicated region
  $region18: #{_lambda_.35} parent=0 // pred_check
    _
  $region19: #{_lambda_.35} parent=0 // pred_check_branch
    %760 = sbr.rel (0) target = $region21
  $region20: #{_lambda_.35} parent=0 // pred_region
    _
  $region21: #{_lambda_.35} parent=0 // pred_fallthru
    _
  // Predicated region
  $region22: #{_lambda_.35} parent=0 // pred_check
    _
  $region23: #{_lambda_.35} parent=0 // pred_check_branch
    %762 = sbr.rel (0) target = $region25
  $region24: #{_lambda_.35} parent=0 // pred_region
    _
  $region25: #{_lambda_.35} parent=0 // pred_fallthru
    _

// kernel: _lambda_.38
$region0: #{_lambda_.38}
  #allocation0 [shape = 'u32[]', space=smem, size = 0x4, offset = 0x4, fixed_abs, tag = 'smem constant byte address 0x4 - core index']
  #allocation1 [shape = 'u32[144,128]{1,0:T(1,128)}', space=vmem, size = 0x12000, scoped, tag = 'internal scratch']
  %s0 = inlined_call_operand.vmem [shape: bf16[128,64], index: 0, kind: input, shape index: {}]
  %s1 = inlined_call_operand.vmem [shape: bf16[64,2], index: 1, kind: input, shape index: {}]
  %s2 = inlined_call_operand.vmem [shape: f32[128,1], index: 2, kind: input, shape index: {}]
  %s3 = inlined_call_operand.vmem [shape: bf16[128,2], index: 3, kind: output, shape index: {}]
  %s4 = sld [smem:[#allocation0]]
  $region22: #{_lambda_.38} parent=0
    _
  %s6 = ssub.s32 1, %s4
  %s7 = scalar_select 0, %s6, %s4
  // Predicated region
  $region2: #{_lambda_.38} parent=0 // pred_check
    _
  $region3: #{_lambda_.38} parent=0 // pred_check_branch
    %9 = sbr.rel (0) target = $region5
  $region4: #{_lambda_.38} parent=0 // pred_region
    _
  $region5: #{_lambda_.38} parent=0 // pred_fallthru
    _
  // Predicated region
  $region6: #{_lambda_.38} parent=0 // pred_check
    _
  $region7: #{_lambda_.38} parent=0 // pred_check_branch
    %11 = sbr.rel (0) target = $region9
  $region8: #{_lambda_.38} parent=0 // pred_region
    _
  $region9: #{_lambda_.38} parent=0 // pred_fallthru
    _
  // Predicated region
  $region10: #{_lambda_.38} parent=0 // pred_check
    _
  $region11: #{_lambda_.38} parent=0 // pred_check_branch
    %13 = sbr.rel (0) target = $region13
  $region12: #{_lambda_.38} parent=0 // pred_region
    _
  $region13: #{_lambda_.38} parent=0 // pred_fallthru
    _
  %v15 = vld [vmem:[%s0] sm:$0xf]
  %v16 = vld [vmem:[%s0 + $0x4] sm:$0xf]
  %v17 = vld [vmem:[%s0 + $0x8] sm:$0xf]
  %v18 = vld [vmem:[%s0 + $0xc] sm:$0xf]
  %v19 = vld [vmem:[%s0 + $0x10] sm:$0xf]
  %v20 = vld [vmem:[%s0 + $0x14] sm:$0xf]
  %v21 = vld [vmem:[%s0 + $0x18] sm:$0xf]
  %v22 = vld [vmem:[%s0 + $0x1c] sm:$0xf]
  %v23 = vld [vmem:[%s0 + $0x20] sm:$0xf]
  %v24 = vld [vmem:[%s0 + $0x24] sm:$0xf]
  %v25 = vld [vmem:[%s0 + $0x28] sm:$0xf]
  %v26 = vld [vmem:[%s0 + $0x2c] sm:$0xf]
  %v27 = vld [vmem:[%s0 + $0x30] sm:$0xf]
  %v28 = vld [vmem:[%s0 + $0x34] sm:$0xf]
  %v29 = vld [vmem:[%s0 + $0x38] sm:$0xf]
  %v30 = vld [vmem:[%s0 + $0x3c] sm:$0xf]
  %v31 = vld [vmem:[%s1] sm:$0xf]
  %v32 = vld [vmem:[%s1 + $0x4] sm:$0xf]
  %v33 = vld [vmem:[%s1 + $0x8] sm:$0xf]
  %v34 = vld [vmem:[%s1 + $0xc] sm:$0xf]
  %v35 = vld [vmem:[%s1 + $0x10] sm:$0xf]
  %v36 = vld [vmem:[%s1 + $0x14] sm:$0xf]
  %v37 = vld [vmem:[%s1 + $0x18] sm:$0xf]
  %v38 = vld [vmem:[%s1 + $0x1c] sm:$0xf]
  %v39 = vld [vmem:[%s2] sm:$0xff]
  %v40 = vld [vmem:[%s2 + $0x8] sm:$0xff]
  %v41 = vld [vmem:[%s2 + $0x10] sm:$0xff]
  %v42 = vld [vmem:[%s2 + $0x18] sm:$0xff]
  %v43 = vld [vmem:[%s2 + $0x20] sm:$0xff]
  %v44 = vld [vmem:[%s2 + $0x28] sm:$0xff]
  %v45 = vld [vmem:[%s2 + $0x30] sm:$0xff]
  %v46 = vld [vmem:[%s2 + $0x38] sm:$0xff]
  %v47 = vld [vmem:[%s2 + $0x40] sm:$0xff]
  %v48 = vld [vmem:[%s2 + $0x48] sm:$0xff]
  %v49 = vld [vmem:[%s2 + $0x50] sm:$0xff]
  %v50 = vld [vmem:[%s2 + $0x58] sm:$0xff]
  %v51 = vld [vmem:[%s2 + $0x60] sm:$0xff]
  %v52 = vld [vmem:[%s2 + $0x68] sm:$0xff]
  %v53 = vld [vmem:[%s2 + $0x70] sm:$0xff]
  %v54 = vld [vmem:[%s2 + $0x78] sm:$0xff]
  %56 = vset.pattern.permute.xlu0 0
  %57 = vperm.xlu0 %56, %v39
  %v58 = vpop.permute.xlu0 %57
  %61 = vset.pattern.permute.xlu0 0
  %62 = vperm.xlu0 %61, %v40
  %v63 = vpop.permute.xlu0 %62
  %66 = vset.pattern.permute.xlu0 0
  %67 = vperm.xlu0 %66, %v41
  %v68 = vpop.permute.xlu0 %67
  %71 = vset.pattern.permute.xlu0 0
  %72 = vperm.xlu0 %71, %v42
  %v73 = vpop.permute.xlu0 %72
  %76 = vset.pattern.permute.xlu0 0
  %77 = vperm.xlu0 %76, %v43
  %v78 = vpop.permute.xlu0 %77
  %81 = vset.pattern.permute.xlu0 0
  %82 = vperm.xlu0 %81, %v44
  %v83 = vpop.permute.xlu0 %82
  %86 = vset.pattern.permute.xlu0 0
  %87 = vperm.xlu0 %86, %v45
  %v88 = vpop.permute.xlu0 %87
  %91 = vset.pattern.permute.xlu0 0
  %92 = vperm.xlu0 %91, %v46
  %v93 = vpop.permute.xlu0 %92
  %96 = vset.pattern.permute.xlu0 0
  %97 = vperm.xlu0 %96, %v47
  %v98 = vpop.permute.xlu0 %97
  %101 = vset.pattern.permute.xlu0 0
  %102 = vperm.xlu0 %101, %v48
  %v103 = vpop.permute.xlu0 %102
  %106 = vset.pattern.permute.xlu0 0
  %107 = vperm.xlu0 %106, %v49
  %v108 = vpop.permute.xlu0 %107
  %111 = vset.pattern.permute.xlu0 0
  %112 = vperm.xlu0 %111, %v50
  %v113 = vpop.permute.xlu0 %112
  %116 = vset.pattern.permute.xlu0 0
  %117 = vperm.xlu0 %116, %v51
  %v118 = vpop.permute.xlu0 %117
  %121 = vset.pattern.permute.xlu0 0
  %122 = vperm.xlu0 %121, %v52
  %v123 = vpop.permute.xlu0 %122
  %126 = vset.pattern.permute.xlu0 0
  %127 = vperm.xlu0 %126, %v53
  %v128 = vpop.permute.xlu0 %127
  %131 = vset.pattern.permute.xlu0 0
  %132 = vperm.xlu0 %131, %v54
  %v133 = vpop.permute.xlu0 %132
  %v151 = vunpack.c.l.b16 %v15
  %v152 = vunpack.c.l.b16 %v16
  %v153 = vunpack.c.l.b16 %v17
  %v154 = vunpack.c.l.b16 %v18
  %v155 = vunpack.c.l.b16 %v19
  %v156 = vunpack.c.l.b16 %v20
  %v157 = vunpack.c.l.b16 %v21
  %v158 = vunpack.c.l.b16 %v22
  %v159 = vunpack.c.l.b16 %v23
  %v160 = vunpack.c.l.b16 %v24
  %v161 = vunpack.c.l.b16 %v25
  %v162 = vunpack.c.l.b16 %v26
  %v163 = vunpack.c.l.b16 %v27
  %v164 = vunpack.c.l.b16 %v28
  %v165 = vunpack.c.l.b16 %v29
  %v166 = vunpack.c.l.b16 %v30
  %v167 = vpack.c.b16 %v152, %v151
  %v168 = vpack.c.b16 %v154, %v153
  %v169 = vpack.c.b16 %v156, %v155
  %v170 = vpack.c.b16 %v158, %v157
  %v171 = vpack.c.b16 %v160, %v159
  %v172 = vpack.c.b16 %v162, %v161
  %v173 = vpack.c.b16 %v164, %v163
  %v174 = vpack.c.b16 %v166, %v165
  %v183 = vunpack.c.l.b16 %v31
  %v184 = vunpack.c.l.b16 %v32
  %v185 = vunpack.c.l.b16 %v33
  %v186 = vunpack.c.l.b16 %v34
  %v187 = vunpack.c.l.b16 %v35
  %v188 = vunpack.c.l.b16 %v36
  %v189 = vunpack.c.l.b16 %v37
  %v190 = vunpack.c.l.b16 %v38
  %v191 = vpack.c.b16 %v184, %v183
  %v192 = vpack.c.b16 %v186, %v185
  %v193 = vpack.c.b16 %v188, %v187
  %v194 = vpack.c.b16 %v190, %v189
  %vm199 = vcmask 523264
  %v201 = vsel %vm199, %v167, 0
  %v204 = vsel %vm199, %v168, 0
  %v207 = vsel %vm199, %v169, 0
  %v210 = vsel %vm199, %v170, 0
  %v213 = vsel %vm199, %v171, 0
  %v216 = vsel %vm199, %v172, 0
  %v219 = vsel %vm199, %v173, 0
  %v222 = vsel %vm199, %v174, 0
  %224 = vmatprep.subr.bf16.mxu0 0
  %225 = vmatpush1.bf16.msra.mxu0 0
  %226 = vmatprep.subr.bf16.mxu0 0
  %227 = vmatpush1.bf16.msra.mxu0 0
  %228 = vmatprep.subr.bf16.mxu0 0
  %229 = vmatpush1.bf16.msra.mxu0 0
  %230 = vmatprep.subr.bf16.mxu0 0
  %231 = vmatpush1.bf16.msra.mxu0 0
  %232 = vmatprep.subr.bf16.mxu0 0
  %233 = vmatpush1.bf16.msra.mxu0 %v194
  %234 = vmatprep.subr.bf16.mxu0 0
  %235 = vmatpush1.bf16.msra.mxu0 %v193
  %236 = vmatprep.subr.bf16.mxu0 0
  %237 = vmatpush1.bf16.msra.mxu0 %v192
  %238 = vmatprep.subr.bf16.mxu0 0
  %239 = vmatpush1.bf16.msra.mxu0 %v191
  %240 = vmatprep.subr.bf16.mxu0 0
  %241 = vmatpush2.bf16.msra.mxu0 0
  %242 = vmatprep.subr.bf16.mxu0 0
  %243 = vmatpush2.bf16.msra.mxu0 0
  %244 = vmatprep.subr.bf16.mxu0 0
  %245 = vmatpush2.bf16.msra.mxu0 0
  %246 = vmatprep.subr.bf16.mxu0 0
  %247 = vmatpush2.bf16.msra.mxu0 0
  %248 = vmatprep.subr.bf16.mxu0 0
  %249 = vmatpush2.bf16.msra.mxu0 0
  %250 = vmatprep.subr.bf16.mxu0 0
  %251 = vmatpush2.bf16.msra.mxu0 0
  %252 = vmatprep.subr.bf16.mxu0 0
  %253 = vmatpush2.bf16.msra.mxu0 0
  %254 = vmatprep.subr.bf16.mxu0 0
  %255 = vmatpush2.bf16.msra.mxu0 0
  %256 = vmatprep.mubr.bf16.mxu0 0
  %257 = vmatmul.mubr.bf16.gmra.mxu0 %v201
  %v258 = vpop.f32.mrf.mxu0
  %v259 = vadd.f32 %v58, %v258
  %v260 = vpop.f32.mrf.mxu0
  %v261 = vpop.f32.mrf.mxu0
  %v262 = vadd.f32 %v63, %v261
  %v263 = vpop.f32.mrf.mxu0
  %264 = vmatprep.mubr.bf16.mxu0 0
  %265 = vmatmul.mubr.bf16.gmra.mxu0 %v204
  %v266 = vpop.f32.mrf.mxu0
  %v267 = vadd.f32 %v68, %v266
  %v268 = vpop.f32.mrf.mxu0
  %v269 = vpop.f32.mrf.mxu0
  %v270 = vadd.f32 %v73, %v269
  %v271 = vpop.f32.mrf.mxu0
  %272 = vmatprep.mubr.bf16.mxu0 0
  %273 = vmatmul.mubr.bf16.gmra.mxu0 %v207
  %v274 = vpop.f32.mrf.mxu0
  %v275 = vadd.f32 %v78, %v274
  %v276 = vpop.f32.mrf.mxu0
  %v277 = vpop.f32.mrf.mxu0
  %v278 = vadd.f32 %v83, %v277
  %v279 = vpop.f32.mrf.mxu0
  %280 = vmatprep.mubr.bf16.mxu0 0
  %281 = vmatmul.mubr.bf16.gmra.mxu0 %v210
  %v282 = vpop.f32.mrf.mxu0
  %v283 = vadd.f32 %v88, %v282
  %v284 = vpop.f32.mrf.mxu0
  %v285 = vpop.f32.mrf.mxu0
  %v286 = vadd.f32 %v93, %v285
  %v287 = vpop.f32.mrf.mxu0
  %288 = vmatprep.mubr.bf16.mxu0 0
  %289 = vmatmul.mubr.bf16.gmra.mxu0 %v213
  %v290 = vpop.f32.mrf.mxu0
  %v291 = vadd.f32 %v98, %v290
  %v292 = vpop.f32.mrf.mxu0
  %v293 = vpop.f32.mrf.mxu0
  %v294 = vadd.f32 %v103, %v293
  %v295 = vpop.f32.mrf.mxu0
  %296 = vmatprep.mubr.bf16.mxu0 0
  %297 = vmatmul.mubr.bf16.gmra.mxu0 %v216
  %v298 = vpop.f32.mrf.mxu0
  %v299 = vadd.f32 %v108, %v298
  %v300 = vpop.f32.mrf.mxu0
  %v301 = vpop.f32.mrf.mxu0
  %v302 = vadd.f32 %v113, %v301
  %v303 = vpop.f32.mrf.mxu0
  %304 = vmatprep.mubr.bf16.mxu0 0
  %305 = vmatmul.mubr.bf16.gmra.mxu0 %v219
  %v306 = vpop.f32.mrf.mxu0
  %v307 = vadd.f32 %v118, %v306
  %v308 = vpop.f32.mrf.mxu0
  %v309 = vpop.f32.mrf.mxu0
  %v310 = vadd.f32 %v123, %v309
  %v311 = vpop.f32.mrf.mxu0
  %312 = vmatprep.mubr.bf16.mxu0 0
  %313 = vmatmul.mubr.bf16.gmra.mxu0 %v222
  %v314 = vpop.f32.mrf.mxu0
  %v315 = vadd.f32 %v128, %v314
  %v316 = vpop.f32.mrf.mxu0
  %v317 = vpop.f32.mrf.mxu0
  %v318 = vadd.f32 %v133, %v317
  %v319 = vpop.f32.mrf.mxu0
  %320 = vdwg.mxu0
  %v321 = vpack.c.bf16 %v262, %v259
  %v322 = vpack.c.bf16 %v270, %v267
  %v323 = vpack.c.bf16 %v278, %v275
  %v324 = vpack.c.bf16 %v286, %v283
  %v325 = vpack.c.bf16 %v294, %v291
  %v326 = vpack.c.bf16 %v302, %v299
  %v327 = vpack.c.bf16 %v310, %v307
  %v328 = vpack.c.bf16 %v318, %v315
  %v337 = vunpack.c.l.b16 %v321
  %v338 = vunpack.c.h.b16 %v321
  %v339 = vunpack.c.l.b16 %v322
  %v340 = vunpack.c.h.b16 %v322
  %v341 = vunpack.c.l.b16 %v323
  %v342 = vunpack.c.h.b16 %v323
  %v343 = vunpack.c.l.b16 %v324
  %v344 = vunpack.c.h.b16 %v324
  %v345 = vunpack.c.l.b16 %v325
  %v346 = vunpack.c.h.b16 %v325
  %v347 = vunpack.c.l.b16 %v326
  %v348 = vunpack.c.h.b16 %v326
  %v349 = vunpack.c.l.b16 %v327
  %v350 = vunpack.c.h.b16 %v327
  %v351 = vunpack.c.l.b16 %v328
  %v352 = vunpack.c.h.b16 %v328
  %v353 = vpack.c.b16 %v337, %v337
  %v354 = vpack.c.b16 %v338, %v338
  %v355 = vpack.c.b16 %v339, %v339
  %v356 = vpack.c.b16 %v340, %v340
  %v357 = vpack.c.b16 %v341, %v341
  %v358 = vpack.c.b16 %v342, %v342
  %v359 = vpack.c.b16 %v343, %v343
  %v360 = vpack.c.b16 %v344, %v344
  %v361 = vpack.c.b16 %v345, %v345
  %v362 = vpack.c.b16 %v346, %v346
  %v363 = vpack.c.b16 %v347, %v347
  %v364 = vpack.c.b16 %v348, %v348
  %v365 = vpack.c.b16 %v349, %v349
  %v366 = vpack.c.b16 %v350, %v350
  %v367 = vpack.c.b16 %v351, %v351
  %v368 = vpack.c.b16 %v352, %v352
  %vm385 = vcmask 11264
  %386 = vst.msk [vmem:[%s3] sm:$0xf] %vm385, %v353
  %387 = vst.msk [vmem:[%s3 + $0x4] sm:$0xf] %vm385, %v354
  %388 = vst.msk [vmem:[%s3 + $0x8] sm:$0xf] %vm385, %v355
  %389 = vst.msk [vmem:[%s3 + $0xc] sm:$0xf] %vm385, %v356
  %390 = vst.msk [vmem:[%s3 + $0x10] sm:$0xf] %vm385, %v357
  %391 = vst.msk [vmem:[%s3 + $0x14] sm:$0xf] %vm385, %v358
  %392 = vst.msk [vmem:[%s3 + $0x18] sm:$0xf] %vm385, %v359
  %393 = vst.msk [vmem:[%s3 + $0x1c] sm:$0xf] %vm385, %v360
  %394 = vst.msk [vmem:[%s3 + $0x20] sm:$0xf] %vm385, %v361
  %395 = vst.msk [vmem:[%s3 + $0x24] sm:$0xf] %vm385, %v362
  %396 = vst.msk [vmem:[%s3 + $0x28] sm:$0xf] %vm385, %v363
  %397 = vst.msk [vmem:[%s3 + $0x2c] sm:$0xf] %vm385, %v364
  %398 = vst.msk [vmem:[%s3 + $0x30] sm:$0xf] %vm385, %v365
  %399 = vst.msk [vmem:[%s3 + $0x34] sm:$0xf] %vm385, %v366
  %400 = vst.msk [vmem:[%s3 + $0x38] sm:$0xf] %vm385, %v367
  %401 = vst.msk [vmem:[%s3 + $0x3c] sm:$0xf] %vm385, %v368
  // Predicated region
  $region14: #{_lambda_.38} parent=0 // pred_check
    _
  $region15: #{_lambda_.38} parent=0 // pred_check_branch
    %403 = sbr.rel (0) target = $region17
  $region16: #{_lambda_.38} parent=0 // pred_region
    _
  $region17: #{_lambda_.38} parent=0 // pred_fallthru
    _
  // Predicated region
  $region18: #{_lambda_.38} parent=0 // pred_check
    _
  $region19: #{_lambda_.38} parent=0 // pred_check_branch
    %405 = sbr.rel (0) target = $region21
  $region20: #{_lambda_.38} parent=0 // pred_region
    _
  $region21: #{_lambda_.38} parent=0 // pred_fallthru
    _

// kernel: _lambda_.42
$region0: #{_lambda_.42}
  #allocation0 [shape = 'u32[]', space=smem, size = 0x4, offset = 0x4, fixed_abs, tag = 'smem constant byte address 0x4 - core index']
  #allocation1 [shape = 'u32[144,128]{1,0:T(1,128)}', space=vmem, size = 0x12000, scoped, tag = 'internal scratch']
  %s0 = inlined_call_operand.vmem [shape: bf16[9,128,2,1,1], index: 0, kind: input, shape index: {}, may-alias: {0,4}]
  %s1 = inlined_call_operand.vmem [shape: bf16[128,576], index: 1, kind: input, shape index: {}]
  %s2 = inlined_call_operand.vmem [shape: bf16[576,2], index: 2, kind: input, shape index: {}]
  %s3 = inlined_call_operand.vmem [shape: f32[128,1], index: 3, kind: input, shape index: {}]
  %s4 = inlined_call_operand.vmem [shape: bf16[9,128,2,1,1], index: 4, kind: output, shape index: {}, may-alias: {0,4}]
  %s5 = scalar_lea.vmem %s4, 256
  %s6 = sld [smem:[#allocation0]]
  $region59: #{_lambda_.42} parent=0
    _
  %s8 = ssub.s32 1, %s6
  %s9 = scalar_select 0, %s8, %s6
  $region1: #{_lambda_.42} parent=0
    #allocation2 [shape = 'u8[32768]{0}', space=vmem, size = 0x8000, scoped, tag = 'output window, operand 0, single buffered']
    // Predicated region
    $region2: #{_lambda_.42} parent=1 // pred_check
      _
    $region3: #{_lambda_.42} parent=1 // pred_check_branch
      %11 = sbr.rel (0) target = $region5
    $region4: #{_lambda_.42} parent=1 // pred_region
      _
    $region5: #{_lambda_.42} parent=1 // pred_fallthru
      _
    // Predicated region
    $region6: #{_lambda_.42} parent=1 // pred_check
      _
    $region7: #{_lambda_.42} parent=1 // pred_check_branch
      %13 = sbr.rel (0) target = $region9
    $region8: #{_lambda_.42} parent=1 // pred_region
      _
    $region9: #{_lambda_.42} parent=1 // pred_fallthru
      _
    // Predicated region
    $region10: #{_lambda_.42} parent=1 // pred_check
      _
    $region11: #{_lambda_.42} parent=1 // pred_check_branch
      %15 = sbr.rel (0) target = $region13
    $region12: #{_lambda_.42} parent=1 // pred_region
      _
    $region13: #{_lambda_.42} parent=1 // pred_fallthru
      _
    %v17 = vld [vmem:[%s1] sm:$0xff]
    %v18 = vld [vmem:[%s1 + $0x8] sm:$0xff]
    %v19 = vld [vmem:[%s1 + $0x10] sm:$0xf]
    %v20 = vld [vmem:[%s1 + $0x14] sm:$0xff]
    %v21 = vld [vmem:[%s1 + $0x1c] sm:$0xff]
    %v22 = vld [vmem:[%s1 + $0x24] sm:$0xf]
    %v23 = vld [vmem:[%s1 + $0x28] sm:$0xff]
    %v24 = vld [vmem:[%s1 + $0x30] sm:$0xff]
    %v25 = vld [vmem:[%s1 + $0x38] sm:$0xf]
    %v26 = vld [vmem:[%s1 + $0x3c] sm:$0xff]
    %v27 = vld [vmem:[%s1 + $0x44] sm:$0xff]
    %v28 = vld [vmem:[%s1 + $0x4c] sm:$0xf]
    %v29 = vld [vmem:[%s1 + $0x50] sm:$0xff]
    %v30 = vld [vmem:[%s1 + $0x58] sm:$0xff]
    %v31 = vld [vmem:[%s1 + $0x60] sm:$0xf]
    %v32 = vld [vmem:[%s1 + $0x64] sm:$0xff]
    %v33 = vld [vmem:[%s1 + $0x6c] sm:$0xff]
    %v34 = vld [vmem:[%s1 + $0x74] sm:$0xf]
    %v35 = vld [vmem:[%s1 + $0x78] sm:$0xff]
    %v36 = vld [vmem:[%s1 + $0x80] sm:$0xff]
    %v37 = vld [vmem:[%s1 + $0x88] sm:$0xf]
    %v38 = vld [vmem:[%s1 + $0x8c] sm:$0xff]
    %v39 = vld [vmem:[%s1 + $0x94] sm:$0xff]
    %v40 = vld [vmem:[%s1 + $0x9c] sm:$0xf]
    %v41 = vld [vmem:[%s1 + $0xa0] sm:$0xff]
    %v42 = vld [vmem:[%s1 + $0xa8] sm:$0xff]
    %v43 = vld [vmem:[%s1 + $0xb0] sm:$0xf]
    %v44 = vld [vmem:[%s1 + $0xb4] sm:$0xff]
    %v45 = vld [vmem:[%s1 + $0xbc] sm:$0xff]
    %v46 = vld [vmem:[%s1 + $0xc4] sm:$0xf]
    %v47 = vld [vmem:[%s1 + $0xc8] sm:$0xff]
    %v48 = vld [vmem:[%s1 + $0xd0] sm:$0xff]
    %v49 = vld [vmem:[%s1 + $0xd8] sm:$0xf]
    %v50 = vld [vmem:[%s1 + $0xdc] sm:$0xff]
    %v51 = vld [vmem:[%s1 + $0xe4] sm:$0xff]
    %v52 = vld [vmem:[%s1 + $0xec] sm:$0xf]
    %v53 = vld [vmem:[%s1 + $0xf0] sm:$0xff]
    %v54 = vld [vmem:[%s1 + $0xf8] sm:$0xff]
    %v55 = vld [vmem:[%s1 + $0x100] sm:$0xf]
    %v56 = vld [vmem:[%s1 + $0x104] sm:$0xff]
    %v57 = vld [vmem:[%s1 + $0x10c] sm:$0xff]
    %v58 = vld [vmem:[%s1 + $0x114] sm:$0xf]
    %v59 = vld [vmem:[%s1 + $0x118] sm:$0xff]
    %v60 = vld [vmem:[%s1 + $0x120] sm:$0xff]
    %v61 = vld [vmem:[%s1 + $0x128] sm:$0xf]
    %v62 = vld [vmem:[%s1 + $0x12c] sm:$0xff]
    %v63 = vld [vmem:[%s1 + $0x134] sm:$0xff]
    %v64 = vld [vmem:[%s1 + $0x13c] sm:$0xf]
    %v65 = vld [vmem:[%s2] sm:$0xf]
    %v66 = vld [vmem:[%s2 + $0x4] sm:$0xf]
    %v67 = vld [vmem:[%s2 + $0x8] sm:$0xf]
    %v68 = vld [vmem:[%s2 + $0xc] sm:$0xf]
    %v69 = vld [vmem:[%s2 + $0x10] sm:$0xf]
    %v70 = vld [vmem:[%s2 + $0x14] sm:$0xf]
    %v71 = vld [vmem:[%s2 + $0x18] sm:$0xf]
    %v72 = vld [vmem:[%s2 + $0x1c] sm:$0xf]
    %v73 = vld [vmem:[%s2 + $0x20] sm:$0xf]
    %v74 = vld [vmem:[%s2 + $0x24] sm:$0xf]
    %v75 = vld [vmem:[%s2 + $0x28] sm:$0xf]
    %v76 = vld [vmem:[%s2 + $0x2c] sm:$0xf]
    %v77 = vld [vmem:[%s2 + $0x30] sm:$0xf]
    %v78 = vld [vmem:[%s2 + $0x34] sm:$0xf]
    %v79 = vld [vmem:[%s2 + $0x38] sm:$0xf]
    %v80 = vld [vmem:[%s2 + $0x3c] sm:$0xf]
    %v81 = vld [vmem:[%s2 + $0x40] sm:$0xf]
    %v82 = vld [vmem:[%s2 + $0x44] sm:$0xf]
    %v83 = vld [vmem:[%s2 + $0x48] sm:$0xf]
    %v84 = vld [vmem:[%s2 + $0x4c] sm:$0xf]
    %v85 = vld [vmem:[%s2 + $0x50] sm:$0xf]
    %v86 = vld [vmem:[%s2 + $0x54] sm:$0xf]
    %v87 = vld [vmem:[%s2 + $0x58] sm:$0xf]
    %v88 = vld [vmem:[%s2 + $0x5c] sm:$0xf]
    %v89 = vld [vmem:[%s2 + $0x60] sm:$0xf]
    %v90 = vld [vmem:[%s2 + $0x64] sm:$0xf]
    %v91 = vld [vmem:[%s2 + $0x68] sm:$0xf]
    %v92 = vld [vmem:[%s2 + $0x6c] sm:$0xf]
    %v93 = vld [vmem:[%s2 + $0x70] sm:$0xf]
    %v94 = vld [vmem:[%s2 + $0x74] sm:$0xf]
    %v95 = vld [vmem:[%s2 + $0x78] sm:$0xf]
    %v96 = vld [vmem:[%s2 + $0x7c] sm:$0xf]
    %v97 = vld [vmem:[%s2 + $0x80] sm:$0xf]
    %v98 = vld [vmem:[%s2 + $0x84] sm:$0xf]
    %v99 = vld [vmem:[%s2 + $0x88] sm:$0xf]
    %v100 = vld [vmem:[%s2 + $0x8c] sm:$0xf]
    %v101 = vld [vmem:[%s2 + $0x90] sm:$0xf]
    %v102 = vld [vmem:[%s2 + $0x94] sm:$0xf]
    %v103 = vld [vmem:[%s2 + $0x98] sm:$0xf]
    %v104 = vld [vmem:[%s2 + $0x9c] sm:$0xf]
    %v105 = vld [vmem:[%s2 + $0xa0] sm:$0xf]
    %v106 = vld [vmem:[%s2 + $0xa4] sm:$0xf]
    %v107 = vld [vmem:[%s2 + $0xa8] sm:$0xf]
    %v108 = vld [vmem:[%s2 + $0xac] sm:$0xf]
    %v109 = vld [vmem:[%s2 + $0xb0] sm:$0xf]
    %v110 = vld [vmem:[%s2 + $0xb4] sm:$0xf]
    %v111 = vld [vmem:[%s2 + $0xb8] sm:$0xf]
    %v112 = vld [vmem:[%s2 + $0xbc] sm:$0xf]
    %v113 = vld [vmem:[%s2 + $0xc0] sm:$0xf]
    %v114 = vld [vmem:[%s2 + $0xc4] sm:$0xf]
    %v115 = vld [vmem:[%s2 + $0xc8] sm:$0xf]
    %v116 = vld [vmem:[%s2 + $0xcc] sm:$0xf]
    %v117 = vld [vmem:[%s2 + $0xd0] sm:$0xf]
    %v118 = vld [vmem:[%s2 + $0xd4] sm:$0xf]
    %v119 = vld [vmem:[%s2 + $0xd8] sm:$0xf]
    %v120 = vld [vmem:[%s2 + $0xdc] sm:$0xf]
    %v121 = vld [vmem:[%s2 + $0xe0] sm:$0xf]
    %v122 = vld [vmem:[%s2 + $0xe4] sm:$0xf]
    %v123 = vld [vmem:[%s2 + $0xe8] sm:$0xf]
    %v124 = vld [vmem:[%s2 + $0xec] sm:$0xf]
    %v125 = vld [vmem:[%s2 + $0xf0] sm:$0xf]
    %v126 = vld [vmem:[%s2 + $0xf4] sm:$0xf]
    %v127 = vld [vmem:[%s2 + $0xf8] sm:$0xf]
    %v128 = vld [vmem:[%s2 + $0xfc] sm:$0xf]
    %v129 = vld [vmem:[%s2 + $0x100] sm:$0xf]
    %v130 = vld [vmem:[%s2 + $0x104] sm:$0xf]
    %v131 = vld [vmem:[%s2 + $0x108] sm:$0xf]
    %v132 = vld [vmem:[%s2 + $0x10c] sm:$0xf]
    %v133 = vld [vmem:[%s2 + $0x110] sm:$0xf]
    %v134 = vld [vmem:[%s2 + $0x114] sm:$0xf]
    %v135 = vld [vmem:[%s2 + $0x118] sm:$0xf]
    %v136 = vld [vmem:[%s2 + $0x11c] sm:$0xf]
    %v137 = vld [vmem:[%s3] sm:$0xff]
    %v138 = vld [vmem:[%s3 + $0x8] sm:$0xff]
    %v139 = vld [vmem:[%s3 + $0x10] sm:$0xff]
    %v140 = vld [vmem:[%s3 + $0x18] sm:$0xff]
    %v141 = vld [vmem:[%s3 + $0x20] sm:$0xff]
    %v142 = vld [vmem:[%s3 + $0x28] sm:$0xff]
    %v143 = vld [vmem:[%s3 + $0x30] sm:$0xff]
    %v144 = vld [vmem:[%s3 + $0x38] sm:$0xff]
    %v145 = vld [vmem:[%s3 + $0x40] sm:$0xff]
    %v146 = vld [vmem:[%s3 + $0x48] sm:$0xff]
    %v147 = vld [vmem:[%s3 + $0x50] sm:$0xff]
    %v148 = vld [vmem:[%s3 + $0x58] sm:$0xff]
    %v149 = vld [vmem:[%s3 + $0x60] sm:$0xff]
    %v150 = vld [vmem:[%s3 + $0x68] sm:$0xff]
    %v151 = vld [vmem:[%s3 + $0x70] sm:$0xff]
    %v152 = vld [vmem:[%s3 + $0x78] sm:$0xff]
    %154 = vset.pattern.permute.xlu0 0
    %155 = vperm.xlu0 %154, %v137
    %v156 = vpop.permute.xlu0 %155
    %159 = vset.pattern.permute.xlu0 0
    %160 = vperm.xlu0 %159, %v138
    %v161 = vpop.permute.xlu0 %160
    %164 = vset.pattern.permute.xlu0 0
    %165 = vperm.xlu0 %164, %v139
    %v166 = vpop.permute.xlu0 %165
    %169 = vset.pattern.permute.xlu0 0
    %170 = vperm.xlu0 %169, %v140
    %v171 = vpop.permute.xlu0 %170
    %174 = vset.pattern.permute.xlu0 0
    %175 = vperm.xlu0 %174, %v141
    %v176 = vpop.permute.xlu0 %175
    %179 = vset.pattern.permute.xlu0 0
    %180 = vperm.xlu0 %179, %v142
    %v181 = vpop.permute.xlu0 %180
    %184 = vset.pattern.permute.xlu0 0
    %185 = vperm.xlu0 %184, %v143
    %v186 = vpop.permute.xlu0 %185
    %189 = vset.pattern.permute.xlu0 0
    %190 = vperm.xlu0 %189, %v144
    %v191 = vpop.permute.xlu0 %190
    %194 = vset.pattern.permute.xlu0 0
    %195 = vperm.xlu0 %194, %v145
    %v196 = vpop.permute.xlu0 %195
    %199 = vset.pattern.permute.xlu0 0
    %200 = vperm.xlu0 %199, %v146
    %v201 = vpop.permute.xlu0 %200
    %204 = vset.pattern.permute.xlu0 0
    %205 = vperm.xlu0 %204, %v147
    %v206 = vpop.permute.xlu0 %205
    %209 = vset.pattern.permute.xlu0 0
    %210 = vperm.xlu0 %209, %v148
    %v211 = vpop.permute.xlu0 %210
    %214 = vset.pattern.permute.xlu0 0
    %215 = vperm.xlu0 %214, %v149
    %v216 = vpop.permute.xlu0 %215
    %219 = vset.pattern.permute.xlu0 0
    %220 = vperm.xlu0 %219, %v150
    %v221 = vpop.permute.xlu0 %220
    %224 = vset.pattern.permute.xlu0 0
    %225 = vperm.xlu0 %224, %v151
    %v226 = vpop.permute.xlu0 %225
    %229 = vset.pattern.permute.xlu0 0
    %230 = vperm.xlu0 %229, %v152
    %v231 = vpop.permute.xlu0 %230
    %v281 = vunpack.c.l.b16 %v17
    %v282 = vunpack.c.h.b16 %v17
    %v283 = vunpack.c.l.b16 %v18
    %v284 = vunpack.c.h.b16 %v18
    %v285 = vunpack.c.l.b16 %v19
    %v286 = vunpack.c.l.b16 %v20
    %v287 = vunpack.c.h.b16 %v20
    %v288 = vunpack.c.l.b16 %v21
    %v289 = vunpack.c.h.b16 %v21
    %v290 = vunpack.c.l.b16 %v22
    %v291 = vunpack.c.l.b16 %v23
    %v292 = vunpack.c.h.b16 %v23
    %v293 = vunpack.c.l.b16 %v24
    %v294 = vunpack.c.h.b16 %v24
    %v295 = vunpack.c.l.b16 %v25
    %v296 = vunpack.c.l.b16 %v26
    %v297 = vunpack.c.h.b16 %v26
    %v298 = vunpack.c.l.b16 %v27
    %v299 = vunpack.c.h.b16 %v27
    %v300 = vunpack.c.l.b16 %v28
    %v301 = vunpack.c.l.b16 %v29
    %v302 = vunpack.c.h.b16 %v29
    %v303 = vunpack.c.l.b16 %v30
    %v304 = vunpack.c.h.b16 %v30
    %v305 = vunpack.c.l.b16 %v31
    %v306 = vunpack.c.l.b16 %v32
    %v307 = vunpack.c.h.b16 %v32
    %v308 = vunpack.c.l.b16 %v33
    %v309 = vunpack.c.h.b16 %v33
    %v310 = vunpack.c.l.b16 %v34
    %v311 = vunpack.c.l.b16 %v35
    %v312 = vunpack.c.h.b16 %v35
    %v313 = vunpack.c.l.b16 %v36
    %v314 = vunpack.c.h.b16 %v36
    %v315 = vunpack.c.l.b16 %v37
    %v316 = vunpack.c.l.b16 %v38
    %v317 = vunpack.c.h.b16 %v38
    %v318 = vunpack.c.l.b16 %v39
    %v319 = vunpack.c.h.b16 %v39
    %v320 = vunpack.c.l.b16 %v40
    %v321 = vunpack.c.l.b16 %v41
    %v322 = vunpack.c.h.b16 %v41
    %v323 = vunpack.c.l.b16 %v42
    %v324 = vunpack.c.h.b16 %v42
    %v325 = vunpack.c.l.b16 %v43
    %v326 = vunpack.c.l.b16 %v44
    %v327 = vunpack.c.h.b16 %v44
    %v328 = vunpack.c.l.b16 %v45
    %v329 = vunpack.c.h.b16 %v45
    %v330 = vunpack.c.l.b16 %v46
    %v331 = vunpack.c.l.b16 %v47
    %v332 = vunpack.c.h.b16 %v47
    %v333 = vunpack.c.l.b16 %v48
    %v334 = vunpack.c.h.b16 %v48
    %v335 = vunpack.c.l.b16 %v49
    %v336 = vunpack.c.l.b16 %v50
    %v337 = vunpack.c.h.b16 %v50
    %v338 = vunpack.c.l.b16 %v51
    %v339 = vunpack.c.h.b16 %v51
    %v340 = vunpack.c.l.b16 %v52
    %v341 = vunpack.c.l.b16 %v53
    %v342 = vunpack.c.h.b16 %v53
    %v343 = vunpack.c.l.b16 %v54
    %v344 = vunpack.c.h.b16 %v54
    %v345 = vunpack.c.l.b16 %v55
    %v346 = vunpack.c.l.b16 %v56
    %v347 = vunpack.c.h.b16 %v56
    %v348 = vunpack.c.l.b16 %v57
    %v349 = vunpack.c.h.b16 %v57
    %v350 = vunpack.c.l.b16 %v58
    %v351 = vunpack.c.l.b16 %v59
    %v352 = vunpack.c.h.b16 %v59
    %v353 = vunpack.c.l.b16 %v60
    %v354 = vunpack.c.h.b16 %v60
    %v355 = vunpack.c.l.b16 %v61
    %v356 = vunpack.c.l.b16 %v62
    %v357 = vunpack.c.h.b16 %v62
    %v358 = vunpack.c.l.b16 %v63
    %v359 = vunpack.c.h.b16 %v63
    %v360 = vunpack.c.l.b16 %v64
    %v361 = vpack.c.b16 %v286, %v281
    %v362 = vpack.c.b16 %v287, %v282
    %v363 = vpack.c.b16 %v288, %v283
    %v364 = vpack.c.b16 %v289, %v284
    %v365 = vpack.c.b16 %v290, %v285
    %v366 = vpack.c.b16 %v296, %v291
    %v367 = vpack.c.b16 %v297, %v292
    %v368 = vpack.c.b16 %v298, %v293
    %v369 = vpack.c.b16 %v299, %v294
    %v370 = vpack.c.b16 %v300, %v295
    %v371 = vpack.c.b16 %v306, %v301
    %v372 = vpack.c.b16 %v307, %v302
    %v373 = vpack.c.b16 %v308, %v303
    %v374 = vpack.c.b16 %v309, %v304
    %v375 = vpack.c.b16 %v310, %v305
    %v376 = vpack.c.b16 %v316, %v311
    %v377 = vpack.c.b16 %v317, %v312
    %v378 = vpack.c.b16 %v318, %v313
    %v379 = vpack.c.b16 %v319, %v314
    %v380 = vpack.c.b16 %v320, %v315
    %v381 = vpack.c.b16 %v326, %v321
    %v382 = vpack.c.b16 %v327, %v322
    %v383 = vpack.c.b16 %v328, %v323
    %v384 = vpack.c.b16 %v329, %v324
    %v385 = vpack.c.b16 %v330, %v325
    %v386 = vpack.c.b16 %v336, %v331
    %v387 = vpack.c.b16 %v337, %v332
    %v388 = vpack.c.b16 %v338, %v333
    %v389 = vpack.c.b16 %v339, %v334
    %v390 = vpack.c.b16 %v340, %v335
    %v391 = vpack.c.b16 %v346, %v341
    %v392 = vpack.c.b16 %v347, %v342
    %v393 = vpack.c.b16 %v348, %v343
    %v394 = vpack.c.b16 %v349, %v344
    %v395 = vpack.c.b16 %v350, %v345
    %v396 = vpack.c.b16 %v356, %v351
    %v397 = vpack.c.b16 %v357, %v352
    %v398 = vpack.c.b16 %v358, %v353
    %v399 = vpack.c.b16 %v359, %v354
    %v400 = vpack.c.b16 %v360, %v355
    %v505 = vunpack.c.l.b16 %v65
    %v506 = vunpack.c.l.b16 %v66
    %v507 = vunpack.c.l.b16 %v67
    %v508 = vunpack.c.l.b16 %v68
    %v509 = vunpack.c.l.b16 %v69
    %v510 = vunpack.c.l.b16 %v70
    %v511 = vunpack.c.l.b16 %v71
    %v512 = vunpack.c.l.b16 %v72
    %v513 = vunpack.c.l.b16 %v73
    %v514 = vunpack.c.l.b16 %v74
    %v515 = vunpack.c.l.b16 %v75
    %v516 = vunpack.c.l.b16 %v76
    %v517 = vunpack.c.l.b16 %v77
    %v518 = vunpack.c.l.b16 %v78
    %v519 = vunpack.c.l.b16 %v79
    %v520 = vunpack.c.l.b16 %v80
    %v521 = vunpack.c.l.b16 %v81
    %v522 = vunpack.c.l.b16 %v82
    %v523 = vunpack.c.l.b16 %v83
    %v524 = vunpack.c.l.b16 %v84
    %v525 = vunpack.c.l.b16 %v85
    %v526 = vunpack.c.l.b16 %v86
    %v527 = vunpack.c.l.b16 %v87
    %v528 = vunpack.c.l.b16 %v88
    %v529 = vunpack.c.l.b16 %v89
    %v530 = vunpack.c.l.b16 %v90
    %v531 = vunpack.c.l.b16 %v91
    %v532 = vunpack.c.l.b16 %v92
    %v533 = vunpack.c.l.b16 %v93
    %v534 = vunpack.c.l.b16 %v94
    %v535 = vunpack.c.l.b16 %v95
    %v536 = vunpack.c.l.b16 %v96
    %v537 = vunpack.c.l.b16 %v97
    %v538 = vunpack.c.l.b16 %v98
    %v539 = vunpack.c.l.b16 %v99
    %v540 = vunpack.c.l.b16 %v100
    %v541 = vunpack.c.l.b16 %v101
    %v542 = vunpack.c.l.b16 %v102
    %v543 = vunpack.c.l.b16 %v103
    %v544 = vunpack.c.l.b16 %v104
    %v545 = vunpack.c.l.b16 %v105
    %v546 = vunpack.c.l.b16 %v106
    %v547 = vunpack.c.l.b16 %v107
    %v548 = vunpack.c.l.b16 %v108
    %v549 = vunpack.c.l.b16 %v109
    %v550 = vunpack.c.l.b16 %v110
    %v551 = vunpack.c.l.b16 %v111
    %v552 = vunpack.c.l.b16 %v112
    %v553 = vunpack.c.l.b16 %v113
    %v554 = vunpack.c.l.b16 %v114
    %v555 = vunpack.c.l.b16 %v115
    %v556 = vunpack.c.l.b16 %v116
    %v557 = vunpack.c.l.b16 %v117
    %v558 = vunpack.c.l.b16 %v118
    %v559 = vunpack.c.l.b16 %v119
    %v560 = vunpack.c.l.b16 %v120
    %v561 = vunpack.c.l.b16 %v121
    %v562 = vunpack.c.l.b16 %v122
    %v563 = vunpack.c.l.b16 %v123
    %v564 = vunpack.c.l.b16 %v124
    %v565 = vunpack.c.l.b16 %v125
    %v566 = vunpack.c.l.b16 %v126
    %v567 = vunpack.c.l.b16 %v127
    %v568 = vunpack.c.l.b16 %v128
    %v569 = vunpack.c.l.b16 %v129
    %v570 = vunpack.c.l.b16 %v130
    %v571 = vunpack.c.l.b16 %v131
    %v572 = vunpack.c.l.b16 %v132
    %v573 = vunpack.c.l.b16 %v133
    %v574 = vunpack.c.l.b16 %v134
    %v575 = vunpack.c.l.b16 %v135
    %v576 = vunpack.c.l.b16 %v136
    %v577 = vpack.c.b16 %v506, %v505
    %v578 = vpack.c.b16 %v508, %v507
    %v579 = vpack.c.b16 %v510, %v509
    %v580 = vpack.c.b16 %v512, %v511
    %v581 = vpack.c.b16 %v514, %v513
    %v582 = vpack.c.b16 %v516, %v515
    %v583 = vpack.c.b16 %v518, %v517
    %v584 = vpack.c.b16 %v520, %v519
    %v585 = vpack.c.b16 %v522, %v521
    %v586 = vpack.c.b16 %v524, %v523
    %v587 = vpack.c.b16 %v526, %v525
    %v588 = vpack.c.b16 %v528, %v527
    %v589 = vpack.c.b16 %v530, %v529
    %v590 = vpack.c.b16 %v532, %v531
    %v591 = vpack.c.b16 %v534, %v533
    %v592 = vpack.c.b16 %v536, %v535
    %v593 = vpack.c.b16 %v538, %v537
    %v594 = vpack.c.b16 %v540, %v539
    %v595 = vpack.c.b16 %v542, %v541
    %v596 = vpack.c.b16 %v544, %v543
    %v597 = vpack.c.b16 %v546, %v545
    %v598 = vpack.c.b16 %v548, %v547
    %v599 = vpack.c.b16 %v550, %v549
    %v600 = vpack.c.b16 %v552, %v551
    %v601 = vpack.c.b16 %v554, %v553
    %v602 = vpack.c.b16 %v556, %v555
    %v603 = vpack.c.b16 %v558, %v557
    %v604 = vpack.c.b16 %v560, %v559
    %v605 = vpack.c.b16 %v562, %v561
    %v606 = vpack.c.b16 %v564, %v563
    %v607 = vpack.c.b16 %v566, %v565
    %v608 = vpack.c.b16 %v568, %v567
    %v609 = vpack.c.b16 %v570, %v569
    %v610 = vpack.c.b16 %v572, %v571
    %v611 = vpack.c.b16 %v574, %v573
    %v612 = vpack.c.b16 %v576, %v575
    %vm649 = vcmask 523264
    %v651 = vsel %vm649, %v365, 0
    %v654 = vsel %vm649, %v370, 0
    %v657 = vsel %vm649, %v375, 0
    %v660 = vsel %vm649, %v380, 0
    %v663 = vsel %vm649, %v385, 0
    %v666 = vsel %vm649, %v390, 0
    %v669 = vsel %vm649, %v395, 0
    %v672 = vsel %vm649, %v400, 0
    %674 = vmatprep.subr.bf16.mxu0 0
    %675 = vmatpush1.bf16.msra.mxu0 %v584
    %676 = vmatprep.subr.bf16.mxu0 0
    %677 = vmatpush1.bf16.msra.mxu0 %v583
    %678 = vmatprep.subr.bf16.mxu0 0
    %679 = vmatpush1.bf16.msra.mxu0 %v582
    %680 = vmatprep.subr.bf16.mxu0 0
    %681 = vmatpush1.bf16.msra.mxu0 %v581
    %682 = vmatprep.subr.bf16.mxu0 0
    %683 = vmatpush1.bf16.msra.mxu0 %v580
    %684 = vmatprep.subr.bf16.mxu0 0
    %685 = vmatpush1.bf16.msra.mxu0 %v579
    %686 = vmatprep.subr.bf16.mxu0 0
    %687 = vmatpush1.bf16.msra.mxu0 %v578
    %688 = vmatprep.subr.bf16.mxu0 0
    %689 = vmatpush1.bf16.msra.mxu0 %v577
    %690 = vmatprep.subr.bf16.mxu0 0
    %691 = vmatpush2.bf16.msra.mxu0 %v592
    %692 = vmatprep.subr.bf16.mxu0 0
    %693 = vmatpush2.bf16.msra.mxu0 %v591
    %694 = vmatprep.subr.bf16.mxu0 0
    %695 = vmatpush2.bf16.msra.mxu0 %v590
    %696 = vmatprep.subr.bf16.mxu0 0
    %697 = vmatpush2.bf16.msra.mxu0 %v589
    %698 = vmatprep.subr.bf16.mxu0 0
    %699 = vmatpush2.bf16.msra.mxu0 %v588
    %700 = vmatprep.subr.bf16.mxu0 0
    %701 = vmatpush2.bf16.msra.mxu0 %v587
    %702 = vmatprep.subr.bf16.mxu0 0
    %703 = vmatpush2.bf16.msra.mxu0 %v586
    %704 = vmatprep.subr.bf16.mxu0 0
    %705 = vmatpush2.bf16.msra.mxu0 %v585
    %706 = vmatprep.mubr.bf16.mxu0 %v362
    %707 = vmatmul.mubr.bf16.gmra.mxu0 %v361
    %v708 = vpop.f32.mrf.mxu0
    %v709 = vadd.f32 %v156, %v708
    %v710 = vpop.f32.mrf.mxu0
    %v711 = vpop.f32.mrf.mxu0
    %v712 = vadd.f32 %v161, %v711
    %v713 = vpop.f32.mrf.mxu0
    %714 = vmatprep.mubr.bf16.mxu0 %v367
    %715 = vmatmul.mubr.bf16.gmra.mxu0 %v366
    %v716 = vpop.f32.mrf.mxu0
    %v717 = vadd.f32 %v166, %v716
    %v718 = vpop.f32.mrf.mxu0
    %v719 = vpop.f32.mrf.mxu0
    %v720 = vadd.f32 %v171, %v719
    %v721 = vpop.f32.mrf.mxu0
    %722 = vmatprep.mubr.bf16.mxu0 %v372
    %723 = vmatmul.mubr.bf16.gmra.mxu0 %v371
    %v724 = vpop.f32.mrf.mxu0
    %v725 = vadd.f32 %v176, %v724
    %v726 = vpop.f32.mrf.mxu0
    %v727 = vpop.f32.mrf.mxu0
    %v728 = vadd.f32 %v181, %v727
    %v729 = vpop.f32.mrf.mxu0
    %730 = vmatprep.mubr.bf16.mxu0 %v377
    %731 = vmatmul.mubr.bf16.gmra.mxu0 %v376
    %v732 = vpop.f32.mrf.mxu0
    %v733 = vadd.f32 %v186, %v732
    %v734 = vpop.f32.mrf.mxu0
    %v735 = vpop.f32.mrf.mxu0
    %v736 = vadd.f32 %v191, %v735
    %v737 = vpop.f32.mrf.mxu0
    %738 = vmatprep.mubr.bf16.mxu0 %v382
    %739 = vmatmul.mubr.bf16.gmra.mxu0 %v381
    %v740 = vpop.f32.mrf.mxu0
    %v741 = vadd.f32 %v196, %v740
    %v742 = vpop.f32.mrf.mxu0
    %v743 = vpop.f32.mrf.mxu0
    %v744 = vadd.f32 %v201, %v743
    %v745 = vpop.f32.mrf.mxu0
    %746 = vmatprep.mubr.bf16.mxu0 %v387
    %747 = vmatmul.mubr.bf16.gmra.mxu0 %v386
    %v748 = vpop.f32.mrf.mxu0
    %v749 = vadd.f32 %v206, %v748
    %v750 = vpop.f32.mrf.mxu0
    %v751 = vpop.f32.mrf.mxu0
    %v752 = vadd.f32 %v211, %v751
    %v753 = vpop.f32.mrf.mxu0
    %754 = vmatprep.mubr.bf16.mxu0 %v392
    %755 = vmatmul.mubr.bf16.gmra.mxu0 %v391
    %v756 = vpop.f32.mrf.mxu0
    %v757 = vadd.f32 %v216, %v756
    %v758 = vpop.f32.mrf.mxu0
    %v759 = vpop.f32.mrf.mxu0
    %v760 = vadd.f32 %v221, %v759
    %v761 = vpop.f32.mrf.mxu0
    %762 = vmatprep.mubr.bf16.mxu0 %v397
    %763 = vmatmul.mubr.bf16.gmra.mxu0 %v396
    %v764 = vpop.f32.mrf.mxu0
    %v765 = vadd.f32 %v226, %v764
    %v766 = vpop.f32.mrf.mxu0
    %v767 = vpop.f32.mrf.mxu0
    %v768 = vadd.f32 %v231, %v767
    %v769 = vpop.f32.mrf.mxu0
    %770 = vdwg.mxu0
    %771 = vmatprep.subr.bf16.mxu0 0
    %772 = vmatpush1.bf16.msra.mxu0 %v600
    %773 = vmatprep.subr.bf16.mxu0 0
    %774 = vmatpush1.bf16.msra.mxu0 %v599
    %775 = vmatprep.subr.bf16.mxu0 0
    %776 = vmatpush1.bf16.msra.mxu0 %v598
    %777 = vmatprep.subr.bf16.mxu0 0
    %778 = vmatpush1.bf16.msra.mxu0 %v597
    %779 = vmatprep.subr.bf16.mxu0 0
    %780 = vmatpush1.bf16.msra.mxu0 %v596
    %781 = vmatprep.subr.bf16.mxu0 0
    %782 = vmatpush1.bf16.msra.mxu0 %v595
    %783 = vmatprep.subr.bf16.mxu0 0
    %784 = vmatpush1.bf16.msra.mxu0 %v594
    %785 = vmatprep.subr.bf16.mxu0 0
    %786 = vmatpush1.bf16.msra.mxu0 %v593
    %787 = vmatprep.subr.bf16.mxu0 0
    %788 = vmatpush2.bf16.msra.mxu0 %v608
    %789 = vmatprep.subr.bf16.mxu0 0
    %790 = vmatpush2.bf16.msra.mxu0 %v607
    %791 = vmatprep.subr.bf16.mxu0 0
    %792 = vmatpush2.bf16.msra.mxu0 %v606
    %793 = vmatprep.subr.bf16.mxu0 0
    %794 = vmatpush2.bf16.msra.mxu0 %v605
    %795 = vmatprep.subr.bf16.mxu0 0
    %796 = vmatpush2.bf16.msra.mxu0 %v604
    %797 = vmatprep.subr.bf16.mxu0 0
    %798 = vmatpush2.bf16.msra.mxu0 %v603
    %799 = vmatprep.subr.bf16.mxu0 0
    %800 = vmatpush2.bf16.msra.mxu0 %v602
    %801 = vmatprep.subr.bf16.mxu0 0
    %802 = vmatpush2.bf16.msra.mxu0 %v601
    %803 = vmatprep.mubr.bf16.mxu0 %v364
    %804 = vmatmul.mubr.bf16.gmra.mxu0 %v363
    %v805 = vpop.f32.mrf.mxu0
    %v806 = vadd.f32 %v709, %v805
    %v807 = vpop.f32.mrf.mxu0
    %v808 = vpop.f32.mrf.mxu0
    %v809 = vadd.f32 %v712, %v808
    %v810 = vpop.f32.mrf.mxu0
    %811 = vmatprep.mubr.bf16.mxu0 %v369
    %812 = vmatmul.mubr.bf16.gmra.mxu0 %v368
    %v813 = vpop.f32.mrf.mxu0
    %v814 = vadd.f32 %v717, %v813
    %v815 = vpop.f32.mrf.mxu0
    %v816 = vpop.f32.mrf.mxu0
    %v817 = vadd.f32 %v720, %v816
    %v818 = vpop.f32.mrf.mxu0
    %819 = vmatprep.mubr.bf16.mxu0 %v374
    %820 = vmatmul.mubr.bf16.gmra.mxu0 %v373
    %v821 = vpop.f32.mrf.mxu0
    %v822 = vadd.f32 %v725, %v821
    %v823 = vpop.f32.mrf.mxu0
    %v824 = vpop.f32.mrf.mxu0
    %v825 = vadd.f32 %v728, %v824
    %v826 = vpop.f32.mrf.mxu0
    %827 = vmatprep.mubr.bf16.mxu0 %v379
    %828 = vmatmul.mubr.bf16.gmra.mxu0 %v378
    %v829 = vpop.f32.mrf.mxu0
    %v830 = vadd.f32 %v733, %v829
    %v831 = vpop.f32.mrf.mxu0
    %v832 = vpop.f32.mrf.mxu0
    %v833 = vadd.f32 %v736, %v832
    %v834 = vpop.f32.mrf.mxu0
    %835 = vmatprep.mubr.bf16.mxu0 %v384
    %836 = vmatmul.mubr.bf16.gmra.mxu0 %v383
    %v837 = vpop.f32.mrf.mxu0
    %v838 = vadd.f32 %v741, %v837
    %v839 = vpop.f32.mrf.mxu0
    %v840 = vpop.f32.mrf.mxu0
    %v841 = vadd.f32 %v744, %v840
    %v842 = vpop.f32.mrf.mxu0
    %843 = vmatprep.mubr.bf16.mxu0 %v389
    %844 = vmatmul.mubr.bf16.gmra.mxu0 %v388
    %v845 = vpop.f32.mrf.mxu0
    %v846 = vadd.f32 %v749, %v845
    %v847 = vpop.f32.mrf.mxu0
    %v848 = vpop.f32.mrf.mxu0
    %v849 = vadd.f32 %v752, %v848
    %v850 = vpop.f32.mrf.mxu0
    %851 = vmatprep.mubr.bf16.mxu0 %v394
    %852 = vmatmul.mubr.bf16.gmra.mxu0 %v393
    %v853 = vpop.f32.mrf.mxu0
    %v854 = vadd.f32 %v757, %v853
    %v855 = vpop.f32.mrf.mxu0
    %v856 = vpop.f32.mrf.mxu0
    %v857 = vadd.f32 %v760, %v856
    %v858 = vpop.f32.mrf.mxu0
    %859 = vmatprep.mubr.bf16.mxu0 %v399
    %860 = vmatmul.mubr.bf16.gmra.mxu0 %v398
    %v861 = vpop.f32.mrf.mxu0
    %v862 = vadd.f32 %v765, %v861
    %v863 = vpop.f32.mrf.mxu0
    %v864 = vpop.f32.mrf.mxu0
    %v865 = vadd.f32 %v768, %v864
    %v866 = vpop.f32.mrf.mxu0
    %867 = vdwg.mxu0
    %868 = vmatprep.subr.bf16.mxu0 0
    %869 = vmatpush1.bf16.msra.mxu0 0
    %870 = vmatprep.subr.bf16.mxu0 0
    %871 = vmatpush1.bf16.msra.mxu0 0
    %872 = vmatprep.subr.bf16.mxu0 0
    %873 = vmatpush1.bf16.msra.mxu0 0
    %874 = vmatprep.subr.bf16.mxu0 0
    %875 = vmatpush1.bf16.msra.mxu0 0
    %876 = vmatprep.subr.bf16.mxu0 0
    %877 = vmatpush1.bf16.msra.mxu0 %v612
    %878 = vmatprep.subr.bf16.mxu0 0
    %879 = vmatpush1.bf16.msra.mxu0 %v611
    %880 = vmatprep.subr.bf16.mxu0 0
    %881 = vmatpush1.bf16.msra.mxu0 %v610
    %882 = vmatprep.subr.bf16.mxu0 0
    %883 = vmatpush1.bf16.msra.mxu0 %v609
    %884 = vmatprep.subr.bf16.mxu0 0
    %885 = vmatpush2.bf16.msra.mxu0 0
    %886 = vmatprep.subr.bf16.mxu0 0
    %887 = vmatpush2.bf16.msra.mxu0 0
    %888 = vmatprep.subr.bf16.mxu0 0
    %889 = vmatpush2.bf16.msra.mxu0 0
    %890 = vmatprep.subr.bf16.mxu0 0
    %891 = vmatpush2.bf16.msra.mxu0 0
    %892 = vmatprep.subr.bf16.mxu0 0
    %893 = vmatpush2.bf16.msra.mxu0 0
    %894 = vmatprep.subr.bf16.mxu0 0
    %895 = vmatpush2.bf16.msra.mxu0 0
    %896 = vmatprep.subr.bf16.mxu0 0
    %897 = vmatpush2.bf16.msra.mxu0 0
    %898 = vmatprep.subr.bf16.mxu0 0
    %899 = vmatpush2.bf16.msra.mxu0 0
    %900 = vmatprep.mubr.bf16.mxu0 0
    %901 = vmatmul.mubr.bf16.gmra.mxu0 %v651
    %v902 = vpop.f32.mrf.mxu0
    %v903 = vadd.f32 %v806, %v902
    %v904 = vpop.f32.mrf.mxu0
    %v905 = vpop.f32.mrf.mxu0
    %v906 = vadd.f32 %v809, %v905
    %v907 = vpop.f32.mrf.mxu0
    %908 = vmatprep.mubr.bf16.mxu0 0
    %909 = vmatmul.mubr.bf16.gmra.mxu0 %v654
    %v910 = vpop.f32.mrf.mxu0
    %v911 = vadd.f32 %v814, %v910
    %v912 = vpop.f32.mrf.mxu0
    %v913 = vpop.f32.mrf.mxu0
    %v914 = vadd.f32 %v817, %v913
    %v915 = vpop.f32.mrf.mxu0
    %916 = vmatprep.mubr.bf16.mxu0 0
    %917 = vmatmul.mubr.bf16.gmra.mxu0 %v657
    %v918 = vpop.f32.mrf.mxu0
    %v919 = vadd.f32 %v822, %v918
    %v920 = vpop.f32.mrf.mxu0
    %v921 = vpop.f32.mrf.mxu0
    %v922 = vadd.f32 %v825, %v921
    %v923 = vpop.f32.mrf.mxu0
    %924 = vmatprep.mubr.bf16.mxu0 0
    %925 = vmatmul.mubr.bf16.gmra.mxu0 %v660
    %v926 = vpop.f32.mrf.mxu0
    %v927 = vadd.f32 %v830, %v926
    %v928 = vpop.f32.mrf.mxu0
    %v929 = vpop.f32.mrf.mxu0
    %v930 = vadd.f32 %v833, %v929
    %v931 = vpop.f32.mrf.mxu0
    %932 = vmatprep.mubr.bf16.mxu0 0
    %933 = vmatmul.mubr.bf16.gmra.mxu0 %v663
    %v934 = vpop.f32.mrf.mxu0
    %v935 = vadd.f32 %v838, %v934
    %v936 = vpop.f32.mrf.mxu0
    %v937 = vpop.f32.mrf.mxu0
    %v938 = vadd.f32 %v841, %v937
    %v939 = vpop.f32.mrf.mxu0
    %940 = vmatprep.mubr.bf16.mxu0 0
    %941 = vmatmul.mubr.bf16.gmra.mxu0 %v666
    %v942 = vpop.f32.mrf.mxu0
    %v943 = vadd.f32 %v846, %v942
    %v944 = vpop.f32.mrf.mxu0
    %v945 = vpop.f32.mrf.mxu0
    %v946 = vadd.f32 %v849, %v945
    %v947 = vpop.f32.mrf.mxu0
    %948 = vmatprep.mubr.bf16.mxu0 0
    %949 = vmatmul.mubr.bf16.gmra.mxu0 %v669
    %v950 = vpop.f32.mrf.mxu0
    %v951 = vadd.f32 %v854, %v950
    %v952 = vpop.f32.mrf.mxu0
    %v953 = vpop.f32.mrf.mxu0
    %v954 = vadd.f32 %v857, %v953
    %v955 = vpop.f32.mrf.mxu0
    %956 = vmatprep.mubr.bf16.mxu0 0
    %957 = vmatmul.mubr.bf16.gmra.mxu0 %v672
    %v958 = vpop.f32.mrf.mxu0
    %v959 = vadd.f32 %v862, %v958
    %v960 = vpop.f32.mrf.mxu0
    %v961 = vpop.f32.mrf.mxu0
    %v962 = vadd.f32 %v865, %v961
    %v963 = vpop.f32.mrf.mxu0
    %964 = vdwg.mxu0
    %v965 = vmax.f32 %v903, 0.0
    %v966 = vmax.f32 %v906, 0.0
    %v967 = vmax.f32 %v911, 0.0
    %v968 = vmax.f32 %v914, 0.0
    %v969 = vmax.f32 %v919, 0.0
    %v970 = vmax.f32 %v922, 0.0
    %v971 = vmax.f32 %v927, 0.0
    %v972 = vmax.f32 %v930, 0.0
    %v973 = vmax.f32 %v935, 0.0
    %v974 = vmax.f32 %v938, 0.0
    %v975 = vmax.f32 %v943, 0.0
    %v976 = vmax.f32 %v946, 0.0
    %v977 = vmax.f32 %v951, 0.0
    %v978 = vmax.f32 %v954, 0.0
    %v979 = vmax.f32 %v959, 0.0
    %v980 = vmax.f32 %v962, 0.0
    %v981 = vpack.c.bf16 %v966, %v965
    %v982 = vpack.c.bf16 %v968, %v967
    %v983 = vpack.c.bf16 %v970, %v969
    %v984 = vpack.c.bf16 %v972, %v971
    %v985 = vpack.c.bf16 %v974, %v973
    %v986 = vpack.c.bf16 %v976, %v975
    %v987 = vpack.c.bf16 %v978, %v977
    %v988 = vpack.c.bf16 %v980, %v979
    %v997 = vunpack.c.l.b16 %v981
    %v998 = vunpack.c.h.b16 %v981
    %v999 = vunpack.c.l.b16 %v982
    %v1000 = vunpack.c.h.b16 %v982
    %v1001 = vunpack.c.l.b16 %v983
    %v1002 = vunpack.c.h.b16 %v983
    %v1003 = vunpack.c.l.b16 %v984
    %v1004 = vunpack.c.h.b16 %v984
    %v1005 = vunpack.c.l.b16 %v985
    %v1006 = vunpack.c.h.b16 %v985
    %v1007 = vunpack.c.l.b16 %v986
    %v1008 = vunpack.c.h.b16 %v986
    %v1009 = vunpack.c.l.b16 %v987
    %v1010 = vunpack.c.h.b16 %v987
    %v1011 = vunpack.c.l.b16 %v988
    %v1012 = vunpack.c.h.b16 %v988
    %v1013 = vpack.c.b16 %v997, %v997
    %v1014 = vpack.c.b16 %v998, %v998
    %v1015 = vpack.c.b16 %v999, %v999
    %v1016 = vpack.c.b16 %v1000, %v1000
    %v1017 = vpack.c.b16 %v1001, %v1001
    %v1018 = vpack.c.b16 %v1002, %v1002
    %v1019 = vpack.c.b16 %v1003, %v1003
    %v1020 = vpack.c.b16 %v1004, %v1004
    %v1021 = vpack.c.b16 %v1005, %v1005
    %v1022 = vpack.c.b16 %v1006, %v1006
    %v1023 = vpack.c.b16 %v1007, %v1007
    %v1024 = vpack.c.b16 %v1008, %v1008
    %v1025 = vpack.c.b16 %v1009, %v1009
    %v1026 = vpack.c.b16 %v1010, %v1010
    %v1027 = vpack.c.b16 %v1011, %v1011
    %v1028 = vpack.c.b16 %v1012, %v1012
    %vm1045 = vcmask 11264
    %1046 = vst.msk [vmem:[#allocation2] sm:$0xf] %vm1045, %v1013
    %1047 = vst.msk [vmem:[#allocation2 + $0x4] sm:$0xf] %vm1045, %v1014
    %1048 = vst.msk [vmem:[#allocation2 + $0x8] sm:$0xf] %vm1045, %v1015
    %1049 = vst.msk [vmem:[#allocation2 + $0xc] sm:$0xf] %vm1045, %v1016
    %1050 = vst.msk [vmem:[#allocation2 + $0x10] sm:$0xf] %vm1045, %v1017
    %1051 = vst.msk [vmem:[#allocation2 + $0x14] sm:$0xf] %vm1045, %v1018
    %1052 = vst.msk [vmem:[#allocation2 + $0x18] sm:$0xf] %vm1045, %v1019
    %1053 = vst.msk [vmem:[#allocation2 + $0x1c] sm:$0xf] %vm1045, %v1020
    %1054 = vst.msk [vmem:[#allocation2 + $0x20] sm:$0xf] %vm1045, %v1021
    %1055 = vst.msk [vmem:[#allocation2 + $0x24] sm:$0xf] %vm1045, %v1022
    %1056 = vst.msk [vmem:[#allocation2 + $0x28] sm:$0xf] %vm1045, %v1023
    %1057 = vst.msk [vmem:[#allocation2 + $0x2c] sm:$0xf] %vm1045, %v1024
    %1058 = vst.msk [vmem:[#allocation2 + $0x30] sm:$0xf] %vm1045, %v1025
    %1059 = vst.msk [vmem:[#allocation2 + $0x34] sm:$0xf] %vm1045, %v1026
    %1060 = vst.msk [vmem:[#allocation2 + $0x38] sm:$0xf] %vm1045, %v1027
    %1061 = vst.msk [vmem:[#allocation2 + $0x3c] sm:$0xf] %vm1045, %v1028
    // Predicated region
    $region14: #{_lambda_.42} parent=1 // pred_check
      _
    $region15: #{_lambda_.42} parent=1 // pred_check_branch
      %1063 = sbr.rel (0) target = $region17
    $region16: #{_lambda_.42} parent=1 // pred_region
      // Predicated region
      $region18: #{_lambda_.42} parent=16 // pred_check
        _
      $region19: #{_lambda_.42} parent=16 // pred_check_branch
        %1065 = sbr.rel (0) target = $region21
      $region20: #{_lambda_.42} parent=16 // pred_region
        // Predicated region
        $region22: #{_lambda_.42} parent=20 // pred_check
          _
        $region23: #{_lambda_.42} parent=20 // pred_check_branch
          %1067 = sbr.rel target = $region25
        $region24: #{_lambda_.42} parent=20 // pred_region
          // Predicated region
          $region37: #{_lambda_.42} parent=24 // pred_check
            _
          $region38: #{_lambda_.42} parent=24 // pred_check_branch
            %1113 = sbr.rel (0) target = $region40
          $region39: #{_lambda_.42} parent=24 // pred_region
            loop: start=0, step=1, limit=1
            $region41: #{_lambda_.42} parent=39 // loop_pre_header
              _
            $region42: #{_lambda_.42} parent=39 // loop_header
              %s1115 = sphi 0, %s1119
              %p1116 = scmp.ge.s32.totalorder %s1115, 1
              %s1120 = sphi [#allocation2], [#allocation2]
              %s1121 = sphi %s5, %s5
            $region43: #{_lambda_.42} parent=39 // loop_header_branch
              %1118 = sbr.rel (%p1116) target = $region47
            $region44: #{_lambda_.42} parent=39 // loop_body
              _
            $region45: #{_lambda_.42} parent=39 // loop_footer
              %s1119 = sadd.s32 1, %s1115
            $region46: #{_lambda_.42} parent=39 // loop_footer_branch
              %1114 = sbr.rel target = $region42
            $region47: #{_lambda_.42} parent=39 // loop_exit
              _
            %s1123 = ssub.s32 16, 1
            loop: start=0, step=1, limit=1
            $region48: #{_lambda_.42} parent=39 // loop_pre_header
              _
            $region49: #{_lambda_.42} parent=39 // loop_header
              %s1125 = sphi 0, %s1129
              %p1126 = scmp.ge.s32.totalorder %s1125, 1
              %s1130 = sphi [#allocation2], [#allocation2]
              %s1131 = sphi %s5, %s5
            $region50: #{_lambda_.42} parent=39 // loop_header_branch
              %1128 = sbr.rel (%p1126) target = $region54
            $region51: #{_lambda_.42} parent=39 // loop_body
              %v1132 = vld [vmem:[%s1130] sm:%s1123]
              %1133 = vst [vmem:[%s1131] sm:%s1123] %v1132
              %v1134 = vld [vmem:[%s1130 + $0x4] sm:%s1123]
              %1135 = vst [vmem:[%s1131 + $0x4] sm:%s1123] %v1134
              %v1136 = vld [vmem:[%s1130 + $0x8] sm:%s1123]
              %1137 = vst [vmem:[%s1131 + $0x8] sm:%s1123] %v1136
              %v1138 = vld [vmem:[%s1130 + $0xc] sm:%s1123]
              %1139 = vst [vmem:[%s1131 + $0xc] sm:%s1123] %v1138
              %v1140 = vld [vmem:[%s1130 + $0x10] sm:%s1123]
              %1141 = vst [vmem:[%s1131 + $0x10] sm:%s1123] %v1140
              %v1142 = vld [vmem:[%s1130 + $0x14] sm:%s1123]
              %1143 = vst [vmem:[%s1131 + $0x14] sm:%s1123] %v1142
              %v1144 = vld [vmem:[%s1130 + $0x18] sm:%s1123]
              %1145 = vst [vmem:[%s1131 + $0x18] sm:%s1123] %v1144
              %v1146 = vld [vmem:[%s1130 + $0x1c] sm:%s1123]
              %1147 = vst [vmem:[%s1131 + $0x1c] sm:%s1123] %v1146
              %v1148 = vld [vmem:[%s1130 + $0x20] sm:%s1123]
              %1149 = vst [vmem:[%s1131 + $0x20] sm:%s1123] %v1148
              %v1150 = vld [vmem:[%s1130 + $0x24] sm:%s1123]
              %1151 = vst [vmem:[%s1131 + $0x24] sm:%s1123] %v1150
              %v1152 = vld [vmem:[%s1130 + $0x28] sm:%s1123]
              %1153 = vst [vmem:[%s1131 + $0x28] sm:%s1123] %v1152
              %v1154 = vld [vmem:[%s1130 + $0x2c] sm:%s1123]
              %1155 = vst [vmem:[%s1131 + $0x2c] sm:%s1123] %v1154
              %v1156 = vld [vmem:[%s1130 + $0x30] sm:%s1123]
              %1157 = vst [vmem:[%s1131 + $0x30] sm:%s1123] %v1156
              %v1158 = vld [vmem:[%s1130 + $0x34] sm:%s1123]
              %1159 = vst [vmem:[%s1131 + $0x34] sm:%s1123] %v1158
              %v1160 = vld [vmem:[%s1130 + $0x38] sm:%s1123]
              %1161 = vst [vmem:[%s1131 + $0x38] sm:%s1123] %v1160
              %v1162 = vld [vmem:[%s1130 + $0x3c] sm:%s1123]
              %1163 = vst [vmem:[%s1131 + $0x3c] sm:%s1123] %v1162
            $region52: #{_lambda_.42} parent=39 // loop_footer
              %s1129 = sadd.s32 1, %s1125
            $region53: #{_lambda_.42} parent=39 // loop_footer_branch
              %1124 = sbr.rel target = $region49
            $region54: #{_lambda_.42} parent=39 // loop_exit
              _
          $region40: #{_lambda_.42} parent=24 // pred_fallthru
            _
        $region25: #{_lambda_.42} parent=20 // pred_fallthru
          _
        // Predicated region
        $region26: #{_lambda_.42} parent=20 // pred_check
          _
        $region27: #{_lambda_.42} parent=20 // pred_check_branch
          %1069 = sbr.rel (0) target = $region29
        $region28: #{_lambda_.42} parent=20 // pred_region
          %s1071 = ssub.s32 16, 1
          loop: start=0, step=1, limit=1
          $region30: #{_lambda_.42} parent=28 // loop_pre_header
            _
          $region31: #{_lambda_.42} parent=28 // loop_header
            %s1073 = sphi 0, %s1077
            %p1074 = scmp.ge.s32.totalorder %s1073, 1
            %s1078 = sphi [#allocation2], [#allocation2]
            %s1079 = sphi %s5, %s5
          $region32: #{_lambda_.42} parent=28 // loop_header_branch
            %1076 = sbr.rel (%p1074) target = $region36
          $region33: #{_lambda_.42} parent=28 // loop_body
            %v1080 = vld [vmem:[%s1078] sm:%s1071]
            %1081 = vst [vmem:[%s1079] sm:%s1071] %v1080
            %v1082 = vld [vmem:[%s1078 + $0x4] sm:%s1071]
            %1083 = vst [vmem:[%s1079 + $0x4] sm:%s1071] %v1082
            %v1084 = vld [vmem:[%s1078 + $0x8] sm:%s1071]
            %1085 = vst [vmem:[%s1079 + $0x8] sm:%s1071] %v1084
            %v1086 = vld [vmem:[%s1078 + $0xc] sm:%s1071]
            %1087 = vst [vmem:[%s1079 + $0xc] sm:%s1071] %v1086
            %v1088 = vld [vmem:[%s1078 + $0x10] sm:%s1071]
            %1089 = vst [vmem:[%s1079 + $0x10] sm:%s1071] %v1088
            %v1090 = vld [vmem:[%s1078 + $0x14] sm:%s1071]
            %1091 = vst [vmem:[%s1079 + $0x14] sm:%s1071] %v1090
            %v1092 = vld [vmem:[%s1078 + $0x18] sm:%s1071]
            %1093 = vst [vmem:[%s1079 + $0x18] sm:%s1071] %v1092
            %v1094 = vld [vmem:[%s1078 + $0x1c] sm:%s1071]
            %1095 = vst [vmem:[%s1079 + $0x1c] sm:%s1071] %v1094
            %v1096 = vld [vmem:[%s1078 + $0x20] sm:%s1071]
            %1097 = vst [vmem:[%s1079 + $0x20] sm:%s1071] %v1096
            %v1098 = vld [vmem:[%s1078 + $0x24] sm:%s1071]
            %1099 = vst [vmem:[%s1079 + $0x24] sm:%s1071] %v1098
            %v1100 = vld [vmem:[%s1078 + $0x28] sm:%s1071]
            %1101 = vst [vmem:[%s1079 + $0x28] sm:%s1071] %v1100
            %v1102 = vld [vmem:[%s1078 + $0x2c] sm:%s1071]
            %1103 = vst [vmem:[%s1079 + $0x2c] sm:%s1071] %v1102
            %v1104 = vld [vmem:[%s1078 + $0x30] sm:%s1071]
            %1105 = vst [vmem:[%s1079 + $0x30] sm:%s1071] %v1104
            %v1106 = vld [vmem:[%s1078 + $0x34] sm:%s1071]
            %1107 = vst [vmem:[%s1079 + $0x34] sm:%s1071] %v1106
            %v1108 = vld [vmem:[%s1078 + $0x38] sm:%s1071]
            %1109 = vst [vmem:[%s1079 + $0x38] sm:%s1071] %v1108
            %v1110 = vld [vmem:[%s1078 + $0x3c] sm:%s1071]
            %1111 = vst [vmem:[%s1079 + $0x3c] sm:%s1071] %v1110
          $region34: #{_lambda_.42} parent=28 // loop_footer
            %s1077 = sadd.s32 1, %s1073
          $region35: #{_lambda_.42} parent=28 // loop_footer_branch
            %1072 = sbr.rel target = $region31
          $region36: #{_lambda_.42} parent=28 // loop_exit
            _
        $region29: #{_lambda_.42} parent=20 // pred_fallthru
          _
      $region21: #{_lambda_.42} parent=16 // pred_fallthru
        _
      %1164 = vnop
    $region17: #{_lambda_.42} parent=1 // pred_fallthru
      _
    // Predicated region
    $region55: #{_lambda_.42} parent=1 // pred_check
      _
    $region56: #{_lambda_.42} parent=1 // pred_check_branch
      %1166 = sbr.rel (0) target = $region58
    $region57: #{_lambda_.42} parent=1 // pred_region
      _
    $region58: #{_lambda_.42} parent=1 // pred_fallthru
      _

// kernel: _lambda_.39
$region0: #{_lambda_.39}
  #allocation0 [shape = 'u32[]', space=smem, size = 0x4, offset = 0x4, fixed_abs, tag = 'smem constant byte address 0x4 - core index']
  #allocation1 [shape = 'u32[144,128]{1,0:T(1,128)}', space=vmem, size = 0x12000, scoped, tag = 'internal scratch']
  %s0 = inlined_call_operand.vmem [shape: bf16[128,1152], index: 0, kind: input, shape index: {}]
  %s1 = inlined_call_operand.vmem [shape: bf16[1152,2], index: 1, kind: input, shape index: {}]
  %s2 = inlined_call_operand.vmem [shape: f32[128,1], index: 2, kind: input, shape index: {}]
  %s3 = inlined_call_operand.vmem [shape: bf16[128,2], index: 3, kind: input, shape index: {}]
  %s4 = inlined_call_operand.vmem [shape: bf16[128,2], index: 4, kind: output, shape index: {}]
  %s5 = sld [smem:[#allocation0]]
  $region26: #{_lambda_.39} parent=0
    _
  %s7 = ssub.s32 1, %s5
  %s8 = scalar_select 0, %s7, %s5
  // Predicated region
  $region2: #{_lambda_.39} parent=0 // pred_check
    _
  $region3: #{_lambda_.39} parent=0 // pred_check_branch
    %10 = sbr.rel (0) target = $region5
  $region4: #{_lambda_.39} parent=0 // pred_region
    _
  $region5: #{_lambda_.39} parent=0 // pred_fallthru
    _
  // Predicated region
  $region6: #{_lambda_.39} parent=0 // pred_check
    _
  $region7: #{_lambda_.39} parent=0 // pred_check_branch
    %12 = sbr.rel (0) target = $region9
  $region8: #{_lambda_.39} parent=0 // pred_region
    _
  $region9: #{_lambda_.39} parent=0 // pred_fallthru
    _
  // Predicated region
  $region10: #{_lambda_.39} parent=0 // pred_check
    _
  $region11: #{_lambda_.39} parent=0 // pred_check_branch
    %14 = sbr.rel (0) target = $region13
  $region12: #{_lambda_.39} parent=0 // pred_region
    _
  $region13: #{_lambda_.39} parent=0 // pred_fallthru
    _
  // Predicated region
  $region14: #{_lambda_.39} parent=0 // pred_check
    _
  $region15: #{_lambda_.39} parent=0 // pred_check_branch
    %16 = sbr.rel (0) target = $region17
  $region16: #{_lambda_.39} parent=0 // pred_region
    _
  $region17: #{_lambda_.39} parent=0 // pred_fallthru
    _
  %v18 = vld [vmem:[%s0] sm:$0xff]
  %v19 = vld [vmem:[%s0 + $0x8] sm:$0xff]
  %v20 = vld [vmem:[%s0 + $0x10] sm:$0xff]
  %v21 = vld [vmem:[%s0 + $0x18] sm:$0xff]
  %v22 = vld [vmem:[%s0 + $0x20] sm:$0xf]
  %v23 = vld [vmem:[%s0 + $0x24] sm:$0xff]
  %v24 = vld [vmem:[%s0 + $0x2c] sm:$0xff]
  %v25 = vld [vmem:[%s0 + $0x34] sm:$0xff]
  %v26 = vld [vmem:[%s0 + $0x3c] sm:$0xff]
  %v27 = vld [vmem:[%s0 + $0x44] sm:$0xf]
  %v28 = vld [vmem:[%s0 + $0x48] sm:$0xff]
  %v29 = vld [vmem:[%s0 + $0x50] sm:$0xff]
  %v30 = vld [vmem:[%s0 + $0x58] sm:$0xff]
  %v31 = vld [vmem:[%s0 + $0x60] sm:$0xff]
  %v32 = vld [vmem:[%s0 + $0x68] sm:$0xf]
  %v33 = vld [vmem:[%s0 + $0x6c] sm:$0xff]
  %v34 = vld [vmem:[%s0 + $0x74] sm:$0xff]
  %v35 = vld [vmem:[%s0 + $0x7c] sm:$0xff]
  %v36 = vld [vmem:[%s0 + $0x84] sm:$0xff]
  %v37 = vld [vmem:[%s0 + $0x8c] sm:$0xf]
  %v38 = vld [vmem:[%s0 + $0x90] sm:$0xff]
  %v39 = vld [vmem:[%s0 + $0x98] sm:$0xff]
  %v40 = vld [vmem:[%s0 + $0xa0] sm:$0xff]
  %v41 = vld [vmem:[%s0 + $0xa8] sm:$0xff]
  %v42 = vld [vmem:[%s0 + $0xb0] sm:$0xf]
  %v43 = vld [vmem:[%s0 + $0xb4] sm:$0xff]
  %v44 = vld [vmem:[%s0 + $0xbc] sm:$0xff]
  %v45 = vld [vmem:[%s0 + $0xc4] sm:$0xff]
  %v46 = vld [vmem:[%s0 + $0xcc] sm:$0xff]
  %v47 = vld [vmem:[%s0 + $0xd4] sm:$0xf]
  %v48 = vld [vmem:[%s0 + $0xd8] sm:$0xff]
  %v49 = vld [vmem:[%s0 + $0xe0] sm:$0xff]
  %v50 = vld [vmem:[%s0 + $0xe8] sm:$0xff]
  %v51 = vld [vmem:[%s0 + $0xf0] sm:$0xff]
  %v52 = vld [vmem:[%s0 + $0xf8] sm:$0xf]
  %v53 = vld [vmem:[%s0 + $0xfc] sm:$0xff]
  %v54 = vld [vmem:[%s0 + $0x104] sm:$0xff]
  %v55 = vld [vmem:[%s0 + $0x10c] sm:$0xff]
  %v56 = vld [vmem:[%s0 + $0x114] sm:$0xff]
  %v57 = vld [vmem:[%s0 + $0x11c] sm:$0xf]
  %v58 = vld [vmem:[%s0 + $0x120] sm:$0xff]
  %v59 = vld [vmem:[%s0 + $0x128] sm:$0xff]
  %v60 = vld [vmem:[%s0 + $0x130] sm:$0xff]
  %v61 = vld [vmem:[%s0 + $0x138] sm:$0xff]
  %v62 = vld [vmem:[%s0 + $0x140] sm:$0xf]
  %v63 = vld [vmem:[%s0 + $0x144] sm:$0xff]
  %v64 = vld [vmem:[%s0 + $0x14c] sm:$0xff]
  %v65 = vld [vmem:[%s0 + $0x154] sm:$0xff]
  %v66 = vld [vmem:[%s0 + $0x15c] sm:$0xff]
  %v67 = vld [vmem:[%s0 + $0x164] sm:$0xf]
  %v68 = vld [vmem:[%s0 + $0x168] sm:$0xff]
  %v69 = vld [vmem:[%s0 + $0x170] sm:$0xff]
  %v70 = vld [vmem:[%s0 + $0x178] sm:$0xff]
  %v71 = vld [vmem:[%s0 + $0x180] sm:$0xff]
  %v72 = vld [vmem:[%s0 + $0x188] sm:$0xf]
  %v73 = vld [vmem:[%s0 + $0x18c] sm:$0xff]
  %v74 = vld [vmem:[%s0 + $0x194] sm:$0xff]
  %v75 = vld [vmem:[%s0 + $0x19c] sm:$0xff]
  %v76 = vld [vmem:[%s0 + $0x1a4] sm:$0xff]
  %v77 = vld [vmem:[%s0 + $0x1ac] sm:$0xf]
  %v78 = vld [vmem:[%s0 + $0x1b0] sm:$0xff]
  %v79 = vld [vmem:[%s0 + $0x1b8] sm:$0xff]
  %v80 = vld [vmem:[%s0 + $0x1c0] sm:$0xff]
  %v81 = vld [vmem:[%s0 + $0x1c8] sm:$0xff]
  %v82 = vld [vmem:[%s0 + $0x1d0] sm:$0xf]
  %v83 = vld [vmem:[%s0 + $0x1d4] sm:$0xff]
  %v84 = vld [vmem:[%s0 + $0x1dc] sm:$0xff]
  %v85 = vld [vmem:[%s0 + $0x1e4] sm:$0xff]
  %v86 = vld [vmem:[%s0 + $0x1ec] sm:$0xff]
  %v87 = vld [vmem:[%s0 + $0x1f4] sm:$0xf]
  %v88 = vld [vmem:[%s0 + $0x1f8] sm:$0xff]
  %v89 = vld [vmem:[%s0 + $0x200] sm:$0xff]
  %v90 = vld [vmem:[%s0 + $0x208] sm:$0xff]
  %v91 = vld [vmem:[%s0 + $0x210] sm:$0xff]
  %v92 = vld [vmem:[%s0 + $0x218] sm:$0xf]
  %v93 = vld [vmem:[%s0 + $0x21c] sm:$0xff]
  %v94 = vld [vmem:[%s0 + $0x224] sm:$0xff]
  %v95 = vld [vmem:[%s0 + $0x22c] sm:$0xff]
  %v96 = vld [vmem:[%s0 + $0x234] sm:$0xff]
  %v97 = vld [vmem:[%s0 + $0x23c] sm:$0xf]
  %v98 = vld [vmem:[%s1] sm:$0xf]
  %v99 = vld [vmem:[%s1 + $0x4] sm:$0xf]
  %v100 = vld [vmem:[%s1 + $0x8] sm:$0xf]
  %v101 = vld [vmem:[%s1 + $0xc] sm:$0xf]
  %v102 = vld [vmem:[%s1 + $0x10] sm:$0xf]
  %v103 = vld [vmem:[%s1 + $0x14] sm:$0xf]
  %v104 = vld [vmem:[%s1 + $0x18] sm:$0xf]
  %v105 = vld [vmem:[%s1 + $0x1c] sm:$0xf]
  %v106 = vld [vmem:[%s1 + $0x20] sm:$0xf]
  %v107 = vld [vmem:[%s1 + $0x24] sm:$0xf]
  %v108 = vld [vmem:[%s1 + $0x28] sm:$0xf]
  %v109 = vld [vmem:[%s1 + $0x2c] sm:$0xf]
  %v110 = vld [vmem:[%s1 + $0x30] sm:$0xf]
  %v111 = vld [vmem:[%s1 + $0x34] sm:$0xf]
  %v112 = vld [vmem:[%s1 + $0x38] sm:$0xf]
  %v113 = vld [vmem:[%s1 + $0x3c] sm:$0xf]
  %v114 = vld [vmem:[%s1 + $0x40] sm:$0xf]
  %v115 = vld [vmem:[%s1 + $0x44] sm:$0xf]
  %v116 = vld [vmem:[%s1 + $0x48] sm:$0xf]
  %v117 = vld [vmem:[%s1 + $0x4c] sm:$0xf]
  %v118 = vld [vmem:[%s1 + $0x50] sm:$0xf]
  %v119 = vld [vmem:[%s1 + $0x54] sm:$0xf]
  %v120 = vld [vmem:[%s1 + $0x58] sm:$0xf]
  %v121 = vld [vmem:[%s1 + $0x5c] sm:$0xf]
  %v122 = vld [vmem:[%s1 + $0x60] sm:$0xf]
  %v123 = vld [vmem:[%s1 + $0x64] sm:$0xf]
  %v124 = vld [vmem:[%s1 + $0x68] sm:$0xf]
  %v125 = vld [vmem:[%s1 + $0x6c] sm:$0xf]
  %v126 = vld [vmem:[%s1 + $0x70] sm:$0xf]
  %v127 = vld [vmem:[%s1 + $0x74] sm:$0xf]
  %v128 = vld [vmem:[%s1 + $0x78] sm:$0xf]
  %v129 = vld [vmem:[%s1 + $0x7c] sm:$0xf]
  %v130 = vld [vmem:[%s1 + $0x80] sm:$0xf]
  %v131 = vld [vmem:[%s1 + $0x84] sm:$0xf]
  %v132 = vld [vmem:[%s1 + $0x88] sm:$0xf]
  %v133 = vld [vmem:[%s1 + $0x8c] sm:$0xf]
  %v134 = vld [vmem:[%s1 + $0x90] sm:$0xf]
  %v135 = vld [vmem:[%s1 + $0x94] sm:$0xf]
  %v136 = vld [vmem:[%s1 + $0x98] sm:$0xf]
  %v137 = vld [vmem:[%s1 + $0x9c] sm:$0xf]
  %v138 = vld [vmem:[%s1 + $0xa0] sm:$0xf]
  %v139 = vld [vmem:[%s1 + $0xa4] sm:$0xf]
  %v140 = vld [vmem:[%s1 + $0xa8] sm:$0xf]
  %v141 = vld [vmem:[%s1 + $0xac] sm:$0xf]
  %v142 = vld [vmem:[%s1 + $0xb0] sm:$0xf]
  %v143 = vld [vmem:[%s1 + $0xb4] sm:$0xf]
  %v144 = vld [vmem:[%s1 + $0xb8] sm:$0xf]
  %v145 = vld [vmem:[%s1 + $0xbc] sm:$0xf]
  %v146 = vld [vmem:[%s1 + $0xc0] sm:$0xf]
  %v147 = vld [vmem:[%s1 + $0xc4] sm:$0xf]
  %v148 = vld [vmem:[%s1 + $0xc8] sm:$0xf]
  %v149 = vld [vmem:[%s1 + $0xcc] sm:$0xf]
  %v150 = vld [vmem:[%s1 + $0xd0] sm:$0xf]
  %v151 = vld [vmem:[%s1 + $0xd4] sm:$0xf]
  %v152 = vld [vmem:[%s1 + $0xd8] sm:$0xf]
  %v153 = vld [vmem:[%s1 + $0xdc] sm:$0xf]
  %v154 = vld [vmem:[%s1 + $0xe0] sm:$0xf]
  %v155 = vld [vmem:[%s1 + $0xe4] sm:$0xf]
  %v156 = vld [vmem:[%s1 + $0xe8] sm:$0xf]
  %v157 = vld [vmem:[%s1 + $0xec] sm:$0xf]
  %v158 = vld [vmem:[%s1 + $0xf0] sm:$0xf]
  %v159 = vld [vmem:[%s1 + $0xf4] sm:$0xf]
  %v160 = vld [vmem:[%s1 + $0xf8] sm:$0xf]
  %v161 = vld [vmem:[%s1 + $0xfc] sm:$0xf]
  %v162 = vld [vmem:[%s1 + $0x100] sm:$0xf]
  %v163 = vld [vmem:[%s1 + $0x104] sm:$0xf]
  %v164 = vld [vmem:[%s1 + $0x108] sm:$0xf]
  %v165 = vld [vmem:[%s1 + $0x10c] sm:$0xf]
  %v166 = vld [vmem:[%s1 + $0x110] sm:$0xf]
  %v167 = vld [vmem:[%s1 + $0x114] sm:$0xf]
  %v168 = vld [vmem:[%s1 + $0x118] sm:$0xf]
  %v169 = vld [vmem:[%s1 + $0x11c] sm:$0xf]
  %v170 = vld [vmem:[%s1 + $0x120] sm:$0xf]
  %v171 = vld [vmem:[%s1 + $0x124] sm:$0xf]
  %v172 = vld [vmem:[%s1 + $0x128] sm:$0xf]
  %v173 = vld [vmem:[%s1 + $0x12c] sm:$0xf]
  %v174 = vld [vmem:[%s1 + $0x130] sm:$0xf]
  %v175 = vld [vmem:[%s1 + $0x134] sm:$0xf]
  %v176 = vld [vmem:[%s1 + $0x138] sm:$0xf]
  %v177 = vld [vmem:[%s1 + $0x13c] sm:$0xf]
  %v178 = vld [vmem:[%s1 + $0x140] sm:$0xf]
  %v179 = vld [vmem:[%s1 + $0x144] sm:$0xf]
  %v180 = vld [vmem:[%s1 + $0x148] sm:$0xf]
  %v181 = vld [vmem:[%s1 + $0x14c] sm:$0xf]
  %v182 = vld [vmem:[%s1 + $0x150] sm:$0xf]
  %v183 = vld [vmem:[%s1 + $0x154] sm:$0xf]
  %v184 = vld [vmem:[%s1 + $0x158] sm:$0xf]
  %v185 = vld [vmem:[%s1 + $0x15c] sm:$0xf]
  %v186 = vld [vmem:[%s1 + $0x160] sm:$0xf]
  %v187 = vld [vmem:[%s1 + $0x164] sm:$0xf]
  %v188 = vld [vmem:[%s1 + $0x168] sm:$0xf]
  %v189 = vld [vmem:[%s1 + $0x16c] sm:$0xf]
  %v190 = vld [vmem:[%s1 + $0x170] sm:$0xf]
  %v191 = vld [vmem:[%s1 + $0x174] sm:$0xf]
  %v192 = vld [vmem:[%s1 + $0x178] sm:$0xf]
  %v193 = vld [vmem:[%s1 + $0x17c] sm:$0xf]
  %v194 = vld [vmem:[%s1 + $0x180] sm:$0xf]
  %v195 = vld [vmem:[%s1 + $0x184] sm:$0xf]
  %v196 = vld [vmem:[%s1 + $0x188] sm:$0xf]
  %v197 = vld [vmem:[%s1 + $0x18c] sm:$0xf]
  %v198 = vld [vmem:[%s1 + $0x190] sm:$0xf]
  %v199 = vld [vmem:[%s1 + $0x194] sm:$0xf]
  %v200 = vld [vmem:[%s1 + $0x198] sm:$0xf]
  %v201 = vld [vmem:[%s1 + $0x19c] sm:$0xf]
  %v202 = vld [vmem:[%s1 + $0x1a0] sm:$0xf]
  %v203 = vld [vmem:[%s1 + $0x1a4] sm:$0xf]
  %v204 = vld [vmem:[%s1 + $0x1a8] sm:$0xf]
  %v205 = vld [vmem:[%s1 + $0x1ac] sm:$0xf]
  %v206 = vld [vmem:[%s1 + $0x1b0] sm:$0xf]
  %v207 = vld [vmem:[%s1 + $0x1b4] sm:$0xf]
  %v208 = vld [vmem:[%s1 + $0x1b8] sm:$0xf]
  %v209 = vld [vmem:[%s1 + $0x1bc] sm:$0xf]
  %v210 = vld [vmem:[%s1 + $0x1c0] sm:$0xf]
  %v211 = vld [vmem:[%s1 + $0x1c4] sm:$0xf]
  %v212 = vld [vmem:[%s1 + $0x1c8] sm:$0xf]
  %v213 = vld [vmem:[%s1 + $0x1cc] sm:$0xf]
  %v214 = vld [vmem:[%s1 + $0x1d0] sm:$0xf]
  %v215 = vld [vmem:[%s1 + $0x1d4] sm:$0xf]
  %v216 = vld [vmem:[%s1 + $0x1d8] sm:$0xf]
  %v217 = vld [vmem:[%s1 + $0x1dc] sm:$0xf]
  %v218 = vld [vmem:[%s1 + $0x1e0] sm:$0xf]
  %v219 = vld [vmem:[%s1 + $0x1e4] sm:$0xf]
  %v220 = vld [vmem:[%s1 + $0x1e8] sm:$0xf]
  %v221 = vld [vmem:[%s1 + $0x1ec] sm:$0xf]
  %v222 = vld [vmem:[%s1 + $0x1f0] sm:$0xf]
  %v223 = vld [vmem:[%s1 + $0x1f4] sm:$0xf]
  %v224 = vld [vmem:[%s1 + $0x1f8] sm:$0xf]
  %v225 = vld [vmem:[%s1 + $0x1fc] sm:$0xf]
  %v226 = vld [vmem:[%s1 + $0x200] sm:$0xf]
  %v227 = vld [vmem:[%s1 + $0x204] sm:$0xf]
  %v228 = vld [vmem:[%s1 + $0x208] sm:$0xf]
  %v229 = vld [vmem:[%s1 + $0x20c] sm:$0xf]
  %v230 = vld [vmem:[%s1 + $0x210] sm:$0xf]
  %v231 = vld [vmem:[%s1 + $0x214] sm:$0xf]
  %v232 = vld [vmem:[%s1 + $0x218] sm:$0xf]
  %v233 = vld [vmem:[%s1 + $0x21c] sm:$0xf]
  %v234 = vld [vmem:[%s1 + $0x220] sm:$0xf]
  %v235 = vld [vmem:[%s1 + $0x224] sm:$0xf]
  %v236 = vld [vmem:[%s1 + $0x228] sm:$0xf]
  %v237 = vld [vmem:[%s1 + $0x22c] sm:$0xf]
  %v238 = vld [vmem:[%s1 + $0x230] sm:$0xf]
  %v239 = vld [vmem:[%s1 + $0x234] sm:$0xf]
  %v240 = vld [vmem:[%s1 + $0x238] sm:$0xf]
  %v241 = vld [vmem:[%s1 + $0x23c] sm:$0xf]
  %v242 = vld [vmem:[%s2] sm:$0xff]
  %v243 = vld [vmem:[%s2 + $0x8] sm:$0xff]
  %v244 = vld [vmem:[%s2 + $0x10] sm:$0xff]
  %v245 = vld [vmem:[%s2 + $0x18] sm:$0xff]
  %v246 = vld [vmem:[%s2 + $0x20] sm:$0xff]
  %v247 = vld [vmem:[%s2 + $0x28] sm:$0xff]
  %v248 = vld [vmem:[%s2 + $0x30] sm:$0xff]
  %v249 = vld [vmem:[%s2 + $0x38] sm:$0xff]
  %v250 = vld [vmem:[%s2 + $0x40] sm:$0xff]
  %v251 = vld [vmem:[%s2 + $0x48] sm:$0xff]
  %v252 = vld [vmem:[%s2 + $0x50] sm:$0xff]
  %v253 = vld [vmem:[%s2 + $0x58] sm:$0xff]
  %v254 = vld [vmem:[%s2 + $0x60] sm:$0xff]
  %v255 = vld [vmem:[%s2 + $0x68] sm:$0xff]
  %v256 = vld [vmem:[%s2 + $0x70] sm:$0xff]
  %v257 = vld [vmem:[%s2 + $0x78] sm:$0xff]
  %259 = vset.pattern.permute.xlu0 0
  %260 = vperm.xlu0 %259, %v242
  %v261 = vpop.permute.xlu0 %260
  %264 = vset.pattern.permute.xlu0 0
  %265 = vperm.xlu0 %264, %v243
  %v266 = vpop.permute.xlu0 %265
  %269 = vset.pattern.permute.xlu0 0
  %270 = vperm.xlu0 %269, %v244
  %v271 = vpop.permute.xlu0 %270
  %274 = vset.pattern.permute.xlu0 0
  %275 = vperm.xlu0 %274, %v245
  %v276 = vpop.permute.xlu0 %275
  %279 = vset.pattern.permute.xlu0 0
  %280 = vperm.xlu0 %279, %v246
  %v281 = vpop.permute.xlu0 %280
  %284 = vset.pattern.permute.xlu0 0
  %285 = vperm.xlu0 %284, %v247
  %v286 = vpop.permute.xlu0 %285
  %289 = vset.pattern.permute.xlu0 0
  %290 = vperm.xlu0 %289, %v248
  %v291 = vpop.permute.xlu0 %290
  %294 = vset.pattern.permute.xlu0 0
  %295 = vperm.xlu0 %294, %v249
  %v296 = vpop.permute.xlu0 %295
  %299 = vset.pattern.permute.xlu0 0
  %300 = vperm.xlu0 %299, %v250
  %v301 = vpop.permute.xlu0 %300
  %304 = vset.pattern.permute.xlu0 0
  %305 = vperm.xlu0 %304, %v251
  %v306 = vpop.permute.xlu0 %305
  %309 = vset.pattern.permute.xlu0 0
  %310 = vperm.xlu0 %309, %v252
  %v311 = vpop.permute.xlu0 %310
  %314 = vset.pattern.permute.xlu0 0
  %315 = vperm.xlu0 %314, %v253
  %v316 = vpop.permute.xlu0 %315
  %319 = vset.pattern.permute.xlu0 0
  %320 = vperm.xlu0 %319, %v254
  %v321 = vpop.permute.xlu0 %320
  %324 = vset.pattern.permute.xlu0 0
  %325 = vperm.xlu0 %324, %v255
  %v326 = vpop.permute.xlu0 %325
  %329 = vset.pattern.permute.xlu0 0
  %330 = vperm.xlu0 %329, %v256
  %v331 = vpop.permute.xlu0 %330
  %334 = vset.pattern.permute.xlu0 0
  %335 = vperm.xlu0 %334, %v257
  %v336 = vpop.permute.xlu0 %335
  %v418 = vunpack.c.l.b16 %v18
  %v419 = vunpack.c.h.b16 %v18
  %v420 = vunpack.c.l.b16 %v19
  %v421 = vunpack.c.h.b16 %v19
  %v422 = vunpack.c.l.b16 %v20
  %v423 = vunpack.c.h.b16 %v20
  %v424 = vunpack.c.l.b16 %v21
  %v425 = vunpack.c.h.b16 %v21
  %v426 = vunpack.c.l.b16 %v22
  %v427 = vunpack.c.l.b16 %v23
  %v428 = vunpack.c.h.b16 %v23
  %v429 = vunpack.c.l.b16 %v24
  %v430 = vunpack.c.h.b16 %v24
  %v431 = vunpack.c.l.b16 %v25
  %v432 = vunpack.c.h.b16 %v25
  %v433 = vunpack.c.l.b16 %v26
  %v434 = vunpack.c.h.b16 %v26
  %v435 = vunpack.c.l.b16 %v27
  %v436 = vunpack.c.l.b16 %v28
  %v437 = vunpack.c.h.b16 %v28
  %v438 = vunpack.c.l.b16 %v29
  %v439 = vunpack.c.h.b16 %v29
  %v440 = vunpack.c.l.b16 %v30
  %v441 = vunpack.c.h.b16 %v30
  %v442 = vunpack.c.l.b16 %v31
  %v443 = vunpack.c.h.b16 %v31
  %v444 = vunpack.c.l.b16 %v32
  %v445 = vunpack.c.l.b16 %v33
  %v446 = vunpack.c.h.b16 %v33
  %v447 = vunpack.c.l.b16 %v34
  %v448 = vunpack.c.h.b16 %v34
  %v449 = vunpack.c.l.b16 %v35
  %v450 = vunpack.c.h.b16 %v35
  %v451 = vunpack.c.l.b16 %v36
  %v452 = vunpack.c.h.b16 %v36
  %v453 = vunpack.c.l.b16 %v37
  %v454 = vunpack.c.l.b16 %v38
  %v455 = vunpack.c.h.b16 %v38
  %v456 = vunpack.c.l.b16 %v39
  %v457 = vunpack.c.h.b16 %v39
  %v458 = vunpack.c.l.b16 %v40
  %v459 = vunpack.c.h.b16 %v40
  %v460 = vunpack.c.l.b16 %v41
  %v461 = vunpack.c.h.b16 %v41
  %v462 = vunpack.c.l.b16 %v42
  %v463 = vunpack.c.l.b16 %v43
  %v464 = vunpack.c.h.b16 %v43
  %v465 = vunpack.c.l.b16 %v44
  %v466 = vunpack.c.h.b16 %v44
  %v467 = vunpack.c.l.b16 %v45
  %v468 = vunpack.c.h.b16 %v45
  %v469 = vunpack.c.l.b16 %v46
  %v470 = vunpack.c.h.b16 %v46
  %v471 = vunpack.c.l.b16 %v47
  %v472 = vunpack.c.l.b16 %v48
  %v473 = vunpack.c.h.b16 %v48
  %v474 = vunpack.c.l.b16 %v49
  %v475 = vunpack.c.h.b16 %v49
  %v476 = vunpack.c.l.b16 %v50
  %v477 = vunpack.c.h.b16 %v50
  %v478 = vunpack.c.l.b16 %v51
  %v479 = vunpack.c.h.b16 %v51
  %v480 = vunpack.c.l.b16 %v52
  %v481 = vunpack.c.l.b16 %v53
  %v482 = vunpack.c.h.b16 %v53
  %v483 = vunpack.c.l.b16 %v54
  %v484 = vunpack.c.h.b16 %v54
  %v485 = vunpack.c.l.b16 %v55
  %v486 = vunpack.c.h.b16 %v55
  %v487 = vunpack.c.l.b16 %v56
  %v488 = vunpack.c.h.b16 %v56
  %v489 = vunpack.c.l.b16 %v57
  %v490 = vunpack.c.l.b16 %v58
  %v491 = vunpack.c.h.b16 %v58
  %v492 = vunpack.c.l.b16 %v59
  %v493 = vunpack.c.h.b16 %v59
  %v494 = vunpack.c.l.b16 %v60
  %v495 = vunpack.c.h.b16 %v60
  %v496 = vunpack.c.l.b16 %v61
  %v497 = vunpack.c.h.b16 %v61
  %v498 = vunpack.c.l.b16 %v62
  %v499 = vunpack.c.l.b16 %v63
  %v500 = vunpack.c.h.b16 %v63
  %v501 = vunpack.c.l.b16 %v64
  %v502 = vunpack.c.h.b16 %v64
  %v503 = vunpack.c.l.b16 %v65
  %v504 = vunpack.c.h.b16 %v65
  %v505 = vunpack.c.l.b16 %v66
  %v506 = vunpack.c.h.b16 %v66
  %v507 = vunpack.c.l.b16 %v67
  %v508 = vunpack.c.l.b16 %v68
  %v509 = vunpack.c.h.b16 %v68
  %v510 = vunpack.c.l.b16 %v69
  %v511 = vunpack.c.h.b16 %v69
  %v512 = vunpack.c.l.b16 %v70
  %v513 = vunpack.c.h.b16 %v70
  %v514 = vunpack.c.l.b16 %v71
  %v515 = vunpack.c.h.b16 %v71
  %v516 = vunpack.c.l.b16 %v72
  %v517 = vunpack.c.l.b16 %v73
  %v518 = vunpack.c.h.b16 %v73
  %v519 = vunpack.c.l.b16 %v74
  %v520 = vunpack.c.h.b16 %v74
  %v521 = vunpack.c.l.b16 %v75
  %v522 = vunpack.c.h.b16 %v75
  %v523 = vunpack.c.l.b16 %v76
  %v524 = vunpack.c.h.b16 %v76
  %v525 = vunpack.c.l.b16 %v77
  %v526 = vunpack.c.l.b16 %v78
  %v527 = vunpack.c.h.b16 %v78
  %v528 = vunpack.c.l.b16 %v79
  %v529 = vunpack.c.h.b16 %v79
  %v530 = vunpack.c.l.b16 %v80
  %v531 = vunpack.c.h.b16 %v80
  %v532 = vunpack.c.l.b16 %v81
  %v533 = vunpack.c.h.b16 %v81
  %v534 = vunpack.c.l.b16 %v82
  %v535 = vunpack.c.l.b16 %v83
  %v536 = vunpack.c.h.b16 %v83
  %v537 = vunpack.c.l.b16 %v84
  %v538 = vunpack.c.h.b16 %v84
  %v539 = vunpack.c.l.b16 %v85
  %v540 = vunpack.c.h.b16 %v85
  %v541 = vunpack.c.l.b16 %v86
  %v542 = vunpack.c.h.b16 %v86
  %v543 = vunpack.c.l.b16 %v87
  %v544 = vunpack.c.l.b16 %v88
  %v545 = vunpack.c.h.b16 %v88
  %v546 = vunpack.c.l.b16 %v89
  %v547 = vunpack.c.h.b16 %v89
  %v548 = vunpack.c.l.b16 %v90
  %v549 = vunpack.c.h.b16 %v90
  %v550 = vunpack.c.l.b16 %v91
  %v551 = vunpack.c.h.b16 %v91
  %v552 = vunpack.c.l.b16 %v92
  %v553 = vunpack.c.l.b16 %v93
  %v554 = vunpack.c.h.b16 %v93
  %v555 = vunpack.c.l.b16 %v94
  %v556 = vunpack.c.h.b16 %v94
  %v557 = vunpack.c.l.b16 %v95
  %v558 = vunpack.c.h.b16 %v95
  %v559 = vunpack.c.l.b16 %v96
  %v560 = vunpack.c.h.b16 %v96
  %v561 = vunpack.c.l.b16 %v97
  %v562 = vpack.c.b16 %v427, %v418
  %v563 = vpack.c.b16 %v428, %v419
  %v564 = vpack.c.b16 %v429, %v420
  %v565 = vpack.c.b16 %v430, %v421
  %v566 = vpack.c.b16 %v431, %v422
  %v567 = vpack.c.b16 %v432, %v423
  %v568 = vpack.c.b16 %v433, %v424
  %v569 = vpack.c.b16 %v434, %v425
  %v570 = vpack.c.b16 %v435, %v426
  %v571 = vpack.c.b16 %v445, %v436
  %v572 = vpack.c.b16 %v446, %v437
  %v573 = vpack.c.b16 %v447, %v438
  %v574 = vpack.c.b16 %v448, %v439
  %v575 = vpack.c.b16 %v449, %v440
  %v576 = vpack.c.b16 %v450, %v441
  %v577 = vpack.c.b16 %v451, %v442
  %v578 = vpack.c.b16 %v452, %v443
  %v579 = vpack.c.b16 %v453, %v444
  %v580 = vpack.c.b16 %v463, %v454
  %v581 = vpack.c.b16 %v464, %v455
  %v582 = vpack.c.b16 %v465, %v456
  %v583 = vpack.c.b16 %v466, %v457
  %v584 = vpack.c.b16 %v467, %v458
  %v585 = vpack.c.b16 %v468, %v459
  %v586 = vpack.c.b16 %v469, %v460
  %v587 = vpack.c.b16 %v470, %v461
  %v588 = vpack.c.b16 %v471, %v462
  %v589 = vpack.c.b16 %v481, %v472
  %v590 = vpack.c.b16 %v482, %v473
  %v591 = vpack.c.b16 %v483, %v474
  %v592 = vpack.c.b16 %v484, %v475
  %v593 = vpack.c.b16 %v485, %v476
  %v594 = vpack.c.b16 %v486, %v477
  %v595 = vpack.c.b16 %v487, %v478
  %v596 = vpack.c.b16 %v488, %v479
  %v597 = vpack.c.b16 %v489, %v480
  %v598 = vpack.c.b16 %v499, %v490
  %v599 = vpack.c.b16 %v500, %v491
  %v600 = vpack.c.b16 %v501, %v492
  %v601 = vpack.c.b16 %v502, %v493
  %v602 = vpack.c.b16 %v503, %v494
  %v603 = vpack.c.b16 %v504, %v495
  %v604 = vpack.c.b16 %v505, %v496
  %v605 = vpack.c.b16 %v506, %v497
  %v606 = vpack.c.b16 %v507, %v498
  %v607 = vpack.c.b16 %v517, %v508
  %v608 = vpack.c.b16 %v518, %v509
  %v609 = vpack.c.b16 %v519, %v510
  %v610 = vpack.c.b16 %v520, %v511
  %v611 = vpack.c.b16 %v521, %v512
  %v612 = vpack.c.b16 %v522, %v513
  %v613 = vpack.c.b16 %v523, %v514
  %v614 = vpack.c.b16 %v524, %v515
  %v615 = vpack.c.b16 %v525, %v516
  %v616 = vpack.c.b16 %v535, %v526
  %v617 = vpack.c.b16 %v536, %v527
  %v618 = vpack.c.b16 %v537, %v528
  %v619 = vpack.c.b16 %v538, %v529
  %v620 = vpack.c.b16 %v539, %v530
  %v621 = vpack.c.b16 %v540, %v531
  %v622 = vpack.c.b16 %v541, %v532
  %v623 = vpack.c.b16 %v542, %v533
  %v624 = vpack.c.b16 %v543, %v534
  %v625 = vpack.c.b16 %v553, %v544
  %v626 = vpack.c.b16 %v554, %v545
  %v627 = vpack.c.b16 %v555, %v546
  %v628 = vpack.c.b16 %v556, %v547
  %v629 = vpack.c.b16 %v557, %v548
  %v630 = vpack.c.b16 %v558, %v549
  %v631 = vpack.c.b16 %v559, %v550
  %v632 = vpack.c.b16 %v560, %v551
  %v633 = vpack.c.b16 %v561, %v552
  %v850 = vunpack.c.l.b16 %v98
  %v851 = vunpack.c.l.b16 %v99
  %v852 = vunpack.c.l.b16 %v100
  %v853 = vunpack.c.l.b16 %v101
  %v854 = vunpack.c.l.b16 %v102
  %v855 = vunpack.c.l.b16 %v103
  %v856 = vunpack.c.l.b16 %v104
  %v857 = vunpack.c.l.b16 %v105
  %v858 = vunpack.c.l.b16 %v106
  %v859 = vunpack.c.l.b16 %v107
  %v860 = vunpack.c.l.b16 %v108
  %v861 = vunpack.c.l.b16 %v109
  %v862 = vunpack.c.l.b16 %v110
  %v863 = vunpack.c.l.b16 %v111
  %v864 = vunpack.c.l.b16 %v112
  %v865 = vunpack.c.l.b16 %v113
  %v866 = vunpack.c.l.b16 %v114
  %v867 = vunpack.c.l.b16 %v115
  %v868 = vunpack.c.l.b16 %v116
  %v869 = vunpack.c.l.b16 %v117
  %v870 = vunpack.c.l.b16 %v118
  %v871 = vunpack.c.l.b16 %v119
  %v872 = vunpack.c.l.b16 %v120
  %v873 = vunpack.c.l.b16 %v121
  %v874 = vunpack.c.l.b16 %v122
  %v875 = vunpack.c.l.b16 %v123
  %v876 = vunpack.c.l.b16 %v124
  %v877 = vunpack.c.l.b16 %v125
  %v878 = vunpack.c.l.b16 %v126
  %v879 = vunpack.c.l.b16 %v127
  %v880 = vunpack.c.l.b16 %v128
  %v881 = vunpack.c.l.b16 %v129
  %v882 = vunpack.c.l.b16 %v130
  %v883 = vunpack.c.l.b16 %v131
  %v884 = vunpack.c.l.b16 %v132
  %v885 = vunpack.c.l.b16 %v133
  %v886 = vunpack.c.l.b16 %v134
  %v887 = vunpack.c.l.b16 %v135
  %v888 = vunpack.c.l.b16 %v136
  %v889 = vunpack.c.l.b16 %v137
  %v890 = vunpack.c.l.b16 %v138
  %v891 = vunpack.c.l.b16 %v139
  %v892 = vunpack.c.l.b16 %v140
  %v893 = vunpack.c.l.b16 %v141
  %v894 = vunpack.c.l.b16 %v142
  %v895 = vunpack.c.l.b16 %v143
  %v896 = vunpack.c.l.b16 %v144
  %v897 = vunpack.c.l.b16 %v145
  %v898 = vunpack.c.l.b16 %v146
  %v899 = vunpack.c.l.b16 %v147
  %v900 = vunpack.c.l.b16 %v148
  %v901 = vunpack.c.l.b16 %v149
  %v902 = vunpack.c.l.b16 %v150
  %v903 = vunpack.c.l.b16 %v151
  %v904 = vunpack.c.l.b16 %v152
  %v905 = vunpack.c.l.b16 %v153
  %v906 = vunpack.c.l.b16 %v154
  %v907 = vunpack.c.l.b16 %v155
  %v908 = vunpack.c.l.b16 %v156
  %v909 = vunpack.c.l.b16 %v157
  %v910 = vunpack.c.l.b16 %v158
  %v911 = vunpack.c.l.b16 %v159
  %v912 = vunpack.c.l.b16 %v160
  %v913 = vunpack.c.l.b16 %v161
  %v914 = vunpack.c.l.b16 %v162
  %v915 = vunpack.c.l.b16 %v163
  %v916 = vunpack.c.l.b16 %v164
  %v917 = vunpack.c.l.b16 %v165
  %v918 = vunpack.c.l.b16 %v166
  %v919 = vunpack.c.l.b16 %v167
  %v920 = vunpack.c.l.b16 %v168
  %v921 = vunpack.c.l.b16 %v169
  %v922 = vunpack.c.l.b16 %v170
  %v923 = vunpack.c.l.b16 %v171
  %v924 = vunpack.c.l.b16 %v172
  %v925 = vunpack.c.l.b16 %v173
  %v926 = vunpack.c.l.b16 %v174
  %v927 = vunpack.c.l.b16 %v175
  %v928 = vunpack.c.l.b16 %v176
  %v929 = vunpack.c.l.b16 %v177
  %v930 = vunpack.c.l.b16 %v178
  %v931 = vunpack.c.l.b16 %v179
  %v932 = vunpack.c.l.b16 %v180
  %v933 = vunpack.c.l.b16 %v181
  %v934 = vunpack.c.l.b16 %v182
  %v935 = vunpack.c.l.b16 %v183
  %v936 = vunpack.c.l.b16 %v184
  %v937 = vunpack.c.l.b16 %v185
  %v938 = vunpack.c.l.b16 %v186
  %v939 = vunpack.c.l.b16 %v187
  %v940 = vunpack.c.l.b16 %v188
  %v941 = vunpack.c.l.b16 %v189
  %v942 = vunpack.c.l.b16 %v190
  %v943 = vunpack.c.l.b16 %v191
  %v944 = vunpack.c.l.b16 %v192
  %v945 = vunpack.c.l.b16 %v193
  %v946 = vunpack.c.l.b16 %v194
  %v947 = vunpack.c.l.b16 %v195
  %v948 = vunpack.c.l.b16 %v196
  %v949 = vunpack.c.l.b16 %v197
  %v950 = vunpack.c.l.b16 %v198
  %v951 = vunpack.c.l.b16 %v199
  %v952 = vunpack.c.l.b16 %v200
  %v953 = vunpack.c.l.b16 %v201
  %v954 = vunpack.c.l.b16 %v202
  %v955 = vunpack.c.l.b16 %v203
  %v956 = vunpack.c.l.b16 %v204
  %v957 = vunpack.c.l.b16 %v205
  %v958 = vunpack.c.l.b16 %v206
  %v959 = vunpack.c.l.b16 %v207
  %v960 = vunpack.c.l.b16 %v208
  %v961 = vunpack.c.l.b16 %v209
  %v962 = vunpack.c.l.b16 %v210
  %v963 = vunpack.c.l.b16 %v211
  %v964 = vunpack.c.l.b16 %v212
  %v965 = vunpack.c.l.b16 %v213
  %v966 = vunpack.c.l.b16 %v214
  %v967 = vunpack.c.l.b16 %v215
  %v968 = vunpack.c.l.b16 %v216
  %v969 = vunpack.c.l.b16 %v217
  %v970 = vunpack.c.l.b16 %v218
  %v971 = vunpack.c.l.b16 %v219
  %v972 = vunpack.c.l.b16 %v220
  %v973 = vunpack.c.l.b16 %v221
  %v974 = vunpack.c.l.b16 %v222
  %v975 = vunpack.c.l.b16 %v223
  %v976 = vunpack.c.l.b16 %v224
  %v977 = vunpack.c.l.b16 %v225
  %v978 = vunpack.c.l.b16 %v226
  %v979 = vunpack.c.l.b16 %v227
  %v980 = vunpack.c.l.b16 %v228
  %v981 = vunpack.c.l.b16 %v229
  %v982 = vunpack.c.l.b16 %v230
  %v983 = vunpack.c.l.b16 %v231
  %v984 = vunpack.c.l.b16 %v232
  %v985 = vunpack.c.l.b16 %v233
  %v986 = vunpack.c.l.b16 %v234
  %v987 = vunpack.c.l.b16 %v235
  %v988 = vunpack.c.l.b16 %v236
  %v989 = vunpack.c.l.b16 %v237
  %v990 = vunpack.c.l.b16 %v238
  %v991 = vunpack.c.l.b16 %v239
  %v992 = vunpack.c.l.b16 %v240
  %v993 = vunpack.c.l.b16 %v241
  %v994 = vpack.c.b16 %v851, %v850
  %v995 = vpack.c.b16 %v853, %v852
  %v996 = vpack.c.b16 %v855, %v854
  %v997 = vpack.c.b16 %v857, %v856
  %v998 = vpack.c.b16 %v859, %v858
  %v999 = vpack.c.b16 %v861, %v860
  %v1000 = vpack.c.b16 %v863, %v862
  %v1001 = vpack.c.b16 %v865, %v864
  %v1002 = vpack.c.b16 %v867, %v866
  %v1003 = vpack.c.b16 %v869, %v868
  %v1004 = vpack.c.b16 %v871, %v870
  %v1005 = vpack.c.b16 %v873, %v872
  %v1006 = vpack.c.b16 %v875, %v874
  %v1007 = vpack.c.b16 %v877, %v876
  %v1008 = vpack.c.b16 %v879, %v878
  %v1009 = vpack.c.b16 %v881, %v880
  %v1010 = vpack.c.b16 %v883, %v882
  %v1011 = vpack.c.b16 %v885, %v884
  %v1012 = vpack.c.b16 %v887, %v886
  %v1013 = vpack.c.b16 %v889, %v888
  %v1014 = vpack.c.b16 %v891, %v890
  %v1015 = vpack.c.b16 %v893, %v892
  %v1016 = vpack.c.b16 %v895, %v894
  %v1017 = vpack.c.b16 %v897, %v896
  %v1018 = vpack.c.b16 %v899, %v898
  %v1019 = vpack.c.b16 %v901, %v900
  %v1020 = vpack.c.b16 %v903, %v902
  %v1021 = vpack.c.b16 %v905, %v904
  %v1022 = vpack.c.b16 %v907, %v906
  %v1023 = vpack.c.b16 %v909, %v908
  %v1024 = vpack.c.b16 %v911, %v910
  %v1025 = vpack.c.b16 %v913, %v912
  %v1026 = vpack.c.b16 %v915, %v914
  %v1027 = vpack.c.b16 %v917, %v916
  %v1028 = vpack.c.b16 %v919, %v918
  %v1029 = vpack.c.b16 %v921, %v920
  %v1030 = vpack.c.b16 %v923, %v922
  %v1031 = vpack.c.b16 %v925, %v924
  %v1032 = vpack.c.b16 %v927, %v926
  %v1033 = vpack.c.b16 %v929, %v928
  %v1034 = vpack.c.b16 %v931, %v930
  %v1035 = vpack.c.b16 %v933, %v932
  %v1036 = vpack.c.b16 %v935, %v934
  %v1037 = vpack.c.b16 %v937, %v936
  %v1038 = vpack.c.b16 %v939, %v938
  %v1039 = vpack.c.b16 %v941, %v940
  %v1040 = vpack.c.b16 %v943, %v942
  %v1041 = vpack.c.b16 %v945, %v944
  %v1042 = vpack.c.b16 %v947, %v946
  %v1043 = vpack.c.b16 %v949, %v948
  %v1044 = vpack.c.b16 %v951, %v950
  %v1045 = vpack.c.b16 %v953, %v952
  %v1046 = vpack.c.b16 %v955, %v954
  %v1047 = vpack.c.b16 %v957, %v956
  %v1048 = vpack.c.b16 %v959, %v958
  %v1049 = vpack.c.b16 %v961, %v960
  %v1050 = vpack.c.b16 %v963, %v962
  %v1051 = vpack.c.b16 %v965, %v964
  %v1052 = vpack.c.b16 %v967, %v966
  %v1053 = vpack.c.b16 %v969, %v968
  %v1054 = vpack.c.b16 %v971, %v970
  %v1055 = vpack.c.b16 %v973, %v972
  %v1056 = vpack.c.b16 %v975, %v974
  %v1057 = vpack.c.b16 %v977, %v976
  %v1058 = vpack.c.b16 %v979, %v978
  %v1059 = vpack.c.b16 %v981, %v980
  %v1060 = vpack.c.b16 %v983, %v982
  %v1061 = vpack.c.b16 %v985, %v984
  %v1062 = vpack.c.b16 %v987, %v986
  %v1063 = vpack.c.b16 %v989, %v988
  %v1064 = vpack.c.b16 %v991, %v990
  %v1065 = vpack.c.b16 %v993, %v992
  %1138 = vmatprep.subr.bf16.mxu0 0
  %1139 = vmatpush1.bf16.msra.mxu0 %v1001
  %1140 = vmatprep.subr.bf16.mxu0 0
  %1141 = vmatpush1.bf16.msra.mxu0 %v1000
  %1142 = vmatprep.subr.bf16.mxu0 0
  %1143 = vmatpush1.bf16.msra.mxu0 %v999
  %1144 = vmatprep.subr.bf16.mxu0 0
  %1145 = vmatpush1.bf16.msra.mxu0 %v998
  %1146 = vmatprep.subr.bf16.mxu0 0
  %1147 = vmatpush1.bf16.msra.mxu0 %v997
  %1148 = vmatprep.subr.bf16.mxu0 0
  %1149 = vmatpush1.bf16.msra.mxu0 %v996
  %1150 = vmatprep.subr.bf16.mxu0 0
  %1151 = vmatpush1.bf16.msra.mxu0 %v995
  %1152 = vmatprep.subr.bf16.mxu0 0
  %1153 = vmatpush1.bf16.msra.mxu0 %v994
  %1154 = vmatprep.subr.bf16.mxu0 0
  %1155 = vmatpush2.bf16.msra.mxu0 %v1009
  %1156 = vmatprep.subr.bf16.mxu0 0
  %1157 = vmatpush2.bf16.msra.mxu0 %v1008
  %1158 = vmatprep.subr.bf16.mxu0 0
  %1159 = vmatpush2.bf16.msra.mxu0 %v1007
  %1160 = vmatprep.subr.bf16.mxu0 0
  %1161 = vmatpush2.bf16.msra.mxu0 %v1006
  %1162 = vmatprep.subr.bf16.mxu0 0
  %1163 = vmatpush2.bf16.msra.mxu0 %v1005
  %1164 = vmatprep.subr.bf16.mxu0 0
  %1165 = vmatpush2.bf16.msra.mxu0 %v1004
  %1166 = vmatprep.subr.bf16.mxu0 0
  %1167 = vmatpush2.bf16.msra.mxu0 %v1003
  %1168 = vmatprep.subr.bf16.mxu0 0
  %1169 = vmatpush2.bf16.msra.mxu0 %v1002
  %1170 = vmatprep.mubr.bf16.mxu0 %v563
  %1171 = vmatmul.mubr.bf16.gmra.mxu0 %v562
  %v1172 = vpop.f32.mrf.mxu0
  %v1173 = vadd.f32 %v261, %v1172
  %v1174 = vpop.f32.mrf.mxu0
  %v1175 = vpop.f32.mrf.mxu0
  %v1176 = vadd.f32 %v266, %v1175
  %v1177 = vpop.f32.mrf.mxu0
  %1178 = vmatprep.mubr.bf16.mxu0 %v572
  %1179 = vmatmul.mubr.bf16.gmra.mxu0 %v571
  %v1180 = vpop.f32.mrf.mxu0
  %v1181 = vadd.f32 %v271, %v1180
  %v1182 = vpop.f32.mrf.mxu0
  %v1183 = vpop.f32.mrf.mxu0
  %v1184 = vadd.f32 %v276, %v1183
  %v1185 = vpop.f32.mrf.mxu0
  %1186 = vmatprep.mubr.bf16.mxu0 %v581
  %1187 = vmatmul.mubr.bf16.gmra.mxu0 %v580
  %v1188 = vpop.f32.mrf.mxu0
  %v1189 = vadd.f32 %v281, %v1188
  %v1190 = vpop.f32.mrf.mxu0
  %v1191 = vpop.f32.mrf.mxu0
  %v1192 = vadd.f32 %v286, %v1191
  %v1193 = vpop.f32.mrf.mxu0
  %1194 = vmatprep.mubr.bf16.mxu0 %v590
  %1195 = vmatmul.mubr.bf16.gmra.mxu0 %v589
  %v1196 = vpop.f32.mrf.mxu0
  %v1197 = vadd.f32 %v291, %v1196
  %v1198 = vpop.f32.mrf.mxu0
  %v1199 = vpop.f32.mrf.mxu0
  %v1200 = vadd.f32 %v296, %v1199
  %v1201 = vpop.f32.mrf.mxu0
  %1202 = vmatprep.mubr.bf16.mxu0 %v599
  %1203 = vmatmul.mubr.bf16.gmra.mxu0 %v598
  %v1204 = vpop.f32.mrf.mxu0
  %v1205 = vadd.f32 %v301, %v1204
  %v1206 = vpop.f32.mrf.mxu0
  %v1207 = vpop.f32.mrf.mxu0
  %v1208 = vadd.f32 %v306, %v1207
  %v1209 = vpop.f32.mrf.mxu0
  %1210 = vmatprep.mubr.bf16.mxu0 %v608
  %1211 = vmatmul.mubr.bf16.gmra.mxu0 %v607
  %v1212 = vpop.f32.mrf.mxu0
  %v1213 = vadd.f32 %v311, %v1212
  %v1214 = vpop.f32.mrf.mxu0
  %v1215 = vpop.f32.mrf.mxu0
  %v1216 = vadd.f32 %v316, %v1215
  %v1217 = vpop.f32.mrf.mxu0
  %1218 = vmatprep.mubr.bf16.mxu0 %v617
  %1219 = vmatmul.mubr.bf16.gmra.mxu0 %v616
  %v1220 = vpop.f32.mrf.mxu0
  %v1221 = vadd.f32 %v321, %v1220
  %v1222 = vpop.f32.mrf.mxu0
  %v1223 = vpop.f32.mrf.mxu0
  %v1224 = vadd.f32 %v326, %v1223
  %v1225 = vpop.f32.mrf.mxu0
  %1226 = vmatprep.mubr.bf16.mxu0 %v626
  %1227 = vmatmul.mubr.bf16.gmra.mxu0 %v625
  %v1228 = vpop.f32.mrf.mxu0
  %v1229 = vadd.f32 %v331, %v1228
  %v1230 = vpop.f32.mrf.mxu0
  %v1231 = vpop.f32.mrf.mxu0
  %v1232 = vadd.f32 %v336, %v1231
  %v1233 = vpop.f32.mrf.mxu0
  %1234 = vdwg.mxu0
  %1235 = vmatprep.subr.bf16.mxu0 0
  %1236 = vmatpush1.bf16.msra.mxu0 %v1017
  %1237 = vmatprep.subr.bf16.mxu0 0
  %1238 = vmatpush1.bf16.msra.mxu0 %v1016
  %1239 = vmatprep.subr.bf16.mxu0 0
  %1240 = vmatpush1.bf16.msra.mxu0 %v1015
  %1241 = vmatprep.subr.bf16.mxu0 0
  %1242 = vmatpush1.bf16.msra.mxu0 %v1014
  %1243 = vmatprep.subr.bf16.mxu0 0
  %1244 = vmatpush1.bf16.msra.mxu0 %v1013
  %1245 = vmatprep.subr.bf16.mxu0 0
  %1246 = vmatpush1.bf16.msra.mxu0 %v1012
  %1247 = vmatprep.subr.bf16.mxu0 0
  %1248 = vmatpush1.bf16.msra.mxu0 %v1011
  %1249 = vmatprep.subr.bf16.mxu0 0
  %1250 = vmatpush1.bf16.msra.mxu0 %v1010
  %1251 = vmatprep.subr.bf16.mxu0 0
  %1252 = vmatpush2.bf16.msra.mxu0 %v1025
  %1253 = vmatprep.subr.bf16.mxu0 0
  %1254 = vmatpush2.bf16.msra.mxu0 %v1024
  %1255 = vmatprep.subr.bf16.mxu0 0
  %1256 = vmatpush2.bf16.msra.mxu0 %v1023
  %1257 = vmatprep.subr.bf16.mxu0 0
  %1258 = vmatpush2.bf16.msra.mxu0 %v1022
  %1259 = vmatprep.subr.bf16.mxu0 0
  %1260 = vmatpush2.bf16.msra.mxu0 %v1021
  %1261 = vmatprep.subr.bf16.mxu0 0
  %1262 = vmatpush2.bf16.msra.mxu0 %v1020
  %1263 = vmatprep.subr.bf16.mxu0 0
  %1264 = vmatpush2.bf16.msra.mxu0 %v1019
  %1265 = vmatprep.subr.bf16.mxu0 0
  %1266 = vmatpush2.bf16.msra.mxu0 %v1018
  %1267 = vmatprep.mubr.bf16.mxu0 %v565
  %1268 = vmatmul.mubr.bf16.gmra.mxu0 %v564
  %v1269 = vpop.f32.mrf.mxu0
  %v1270 = vadd.f32 %v1173, %v1269
  %v1271 = vpop.f32.mrf.mxu0
  %v1272 = vpop.f32.mrf.mxu0
  %v1273 = vadd.f32 %v1176, %v1272
  %v1274 = vpop.f32.mrf.mxu0
  %1275 = vmatprep.mubr.bf16.mxu0 %v574
  %1276 = vmatmul.mubr.bf16.gmra.mxu0 %v573
  %v1277 = vpop.f32.mrf.mxu0
  %v1278 = vadd.f32 %v1181, %v1277
  %v1279 = vpop.f32.mrf.mxu0
  %v1280 = vpop.f32.mrf.mxu0
  %v1281 = vadd.f32 %v1184, %v1280
  %v1282 = vpop.f32.mrf.mxu0
  %1283 = vmatprep.mubr.bf16.mxu0 %v583
  %1284 = vmatmul.mubr.bf16.gmra.mxu0 %v582
  %v1285 = vpop.f32.mrf.mxu0
  %v1286 = vadd.f32 %v1189, %v1285
  %v1287 = vpop.f32.mrf.mxu0
  %v1288 = vpop.f32.mrf.mxu0
  %v1289 = vadd.f32 %v1192, %v1288
  %v1290 = vpop.f32.mrf.mxu0
  %1291 = vmatprep.mubr.bf16.mxu0 %v592
  %1292 = vmatmul.mubr.bf16.gmra.mxu0 %v591
  %v1293 = vpop.f32.mrf.mxu0
  %v1294 = vadd.f32 %v1197, %v1293
  %v1295 = vpop.f32.mrf.mxu0
  %v1296 = vpop.f32.mrf.mxu0
  %v1297 = vadd.f32 %v1200, %v1296
  %v1298 = vpop.f32.mrf.mxu0
  %1299 = vmatprep.mubr.bf16.mxu0 %v601
  %1300 = vmatmul.mubr.bf16.gmra.mxu0 %v600
  %v1301 = vpop.f32.mrf.mxu0
  %v1302 = vadd.f32 %v1205, %v1301
  %v1303 = vpop.f32.mrf.mxu0
  %v1304 = vpop.f32.mrf.mxu0
  %v1305 = vadd.f32 %v1208, %v1304
  %v1306 = vpop.f32.mrf.mxu0
  %1307 = vmatprep.mubr.bf16.mxu0 %v610
  %1308 = vmatmul.mubr.bf16.gmra.mxu0 %v609
  %v1309 = vpop.f32.mrf.mxu0
  %v1310 = vadd.f32 %v1213, %v1309
  %v1311 = vpop.f32.mrf.mxu0
  %v1312 = vpop.f32.mrf.mxu0
  %v1313 = vadd.f32 %v1216, %v1312
  %v1314 = vpop.f32.mrf.mxu0
  %1315 = vmatprep.mubr.bf16.mxu0 %v619
  %1316 = vmatmul.mubr.bf16.gmra.mxu0 %v618
  %v1317 = vpop.f32.mrf.mxu0
  %v1318 = vadd.f32 %v1221, %v1317
  %v1319 = vpop.f32.mrf.mxu0
  %v1320 = vpop.f32.mrf.mxu0
  %v1321 = vadd.f32 %v1224, %v1320
  %v1322 = vpop.f32.mrf.mxu0
  %1323 = vmatprep.mubr.bf16.mxu0 %v628
  %1324 = vmatmul.mubr.bf16.gmra.mxu0 %v627
  %v1325 = vpop.f32.mrf.mxu0
  %v1326 = vadd.f32 %v1229, %v1325
  %v1327 = vpop.f32.mrf.mxu0
  %v1328 = vpop.f32.mrf.mxu0
  %v1329 = vadd.f32 %v1232, %v1328
  %v1330 = vpop.f32.mrf.mxu0
  %1331 = vdwg.mxu0
  %1332 = vmatprep.subr.bf16.mxu0 0
  %1333 = vmatpush1.bf16.msra.mxu0 %v1033
  %1334 = vmatprep.subr.bf16.mxu0 0
  %1335 = vmatpush1.bf16.msra.mxu0 %v1032
  %1336 = vmatprep.subr.bf16.mxu0 0
  %1337 = vmatpush1.bf16.msra.mxu0 %v1031
  %1338 = vmatprep.subr.bf16.mxu0 0
  %1339 = vmatpush1.bf16.msra.mxu0 %v1030
  %1340 = vmatprep.subr.bf16.mxu0 0
  %1341 = vmatpush1.bf16.msra.mxu0 %v1029
  %1342 = vmatprep.subr.bf16.mxu0 0
  %1343 = vmatpush1.bf16.msra.mxu0 %v1028
  %1344 = vmatprep.subr.bf16.mxu0 0
  %1345 = vmatpush1.bf16.msra.mxu0 %v1027
  %1346 = vmatprep.subr.bf16.mxu0 0
  %1347 = vmatpush1.bf16.msra.mxu0 %v1026
  %1348 = vmatprep.subr.bf16.mxu0 0
  %1349 = vmatpush2.bf16.msra.mxu0 %v1041
  %1350 = vmatprep.subr.bf16.mxu0 0
  %1351 = vmatpush2.bf16.msra.mxu0 %v1040
  %1352 = vmatprep.subr.bf16.mxu0 0
  %1353 = vmatpush2.bf16.msra.mxu0 %v1039
  %1354 = vmatprep.subr.bf16.mxu0 0
  %1355 = vmatpush2.bf16.msra.mxu0 %v1038
  %1356 = vmatprep.subr.bf16.mxu0 0
  %1357 = vmatpush2.bf16.msra.mxu0 %v1037
  %1358 = vmatprep.subr.bf16.mxu0 0
  %1359 = vmatpush2.bf16.msra.mxu0 %v1036
  %1360 = vmatprep.subr.bf16.mxu0 0
  %1361 = vmatpush2.bf16.msra.mxu0 %v1035
  %1362 = vmatprep.subr.bf16.mxu0 0
  %1363 = vmatpush2.bf16.msra.mxu0 %v1034
  %1364 = vmatprep.mubr.bf16.mxu0 %v567
  %1365 = vmatmul.mubr.bf16.gmra.mxu0 %v566
  %v1366 = vpop.f32.mrf.mxu0
  %v1367 = vadd.f32 %v1270, %v1366
  %v1368 = vpop.f32.mrf.mxu0
  %v1369 = vpop.f32.mrf.mxu0
  %v1370 = vadd.f32 %v1273, %v1369
  %v1371 = vpop.f32.mrf.mxu0
  %1372 = vmatprep.mubr.bf16.mxu0 %v576
  %1373 = vmatmul.mubr.bf16.gmra.mxu0 %v575
  %v1374 = vpop.f32.mrf.mxu0
  %v1375 = vadd.f32 %v1278, %v1374
  %v1376 = vpop.f32.mrf.mxu0
  %v1377 = vpop.f32.mrf.mxu0
  %v1378 = vadd.f32 %v1281, %v1377
  %v1379 = vpop.f32.mrf.mxu0
  %1380 = vmatprep.mubr.bf16.mxu0 %v585
  %1381 = vmatmul.mubr.bf16.gmra.mxu0 %v584
  %v1382 = vpop.f32.mrf.mxu0
  %v1383 = vadd.f32 %v1286, %v1382
  %v1384 = vpop.f32.mrf.mxu0
  %v1385 = vpop.f32.mrf.mxu0
  %v1386 = vadd.f32 %v1289, %v1385
  %v1387 = vpop.f32.mrf.mxu0
  %1388 = vmatprep.mubr.bf16.mxu0 %v594
  %1389 = vmatmul.mubr.bf16.gmra.mxu0 %v593
  %v1390 = vpop.f32.mrf.mxu0
  %v1391 = vadd.f32 %v1294, %v1390
  %v1392 = vpop.f32.mrf.mxu0
  %v1393 = vpop.f32.mrf.mxu0
  %v1394 = vadd.f32 %v1297, %v1393
  %v1395 = vpop.f32.mrf.mxu0
  %1396 = vmatprep.mubr.bf16.mxu0 %v603
  %1397 = vmatmul.mubr.bf16.gmra.mxu0 %v602
  %v1398 = vpop.f32.mrf.mxu0
  %v1399 = vadd.f32 %v1302, %v1398
  %v1400 = vpop.f32.mrf.mxu0
  %v1401 = vpop.f32.mrf.mxu0
  %v1402 = vadd.f32 %v1305, %v1401
  %v1403 = vpop.f32.mrf.mxu0
  %1404 = vmatprep.mubr.bf16.mxu0 %v612
  %1405 = vmatmul.mubr.bf16.gmra.mxu0 %v611
  %v1406 = vpop.f32.mrf.mxu0
  %v1407 = vadd.f32 %v1310, %v1406
  %v1408 = vpop.f32.mrf.mxu0
  %v1409 = vpop.f32.mrf.mxu0
  %v1410 = vadd.f32 %v1313, %v1409
  %v1411 = vpop.f32.mrf.mxu0
  %1412 = vmatprep.mubr.bf16.mxu0 %v621
  %1413 = vmatmul.mubr.bf16.gmra.mxu0 %v620
  %v1414 = vpop.f32.mrf.mxu0
  %v1415 = vadd.f32 %v1318, %v1414
  %v1416 = vpop.f32.mrf.mxu0
  %v1417 = vpop.f32.mrf.mxu0
  %v1418 = vadd.f32 %v1321, %v1417
  %v1419 = vpop.f32.mrf.mxu0
  %1420 = vmatprep.mubr.bf16.mxu0 %v630
  %1421 = vmatmul.mubr.bf16.gmra.mxu0 %v629
  %v1422 = vpop.f32.mrf.mxu0
  %v1423 = vadd.f32 %v1326, %v1422
  %v1424 = vpop.f32.mrf.mxu0
  %v1425 = vpop.f32.mrf.mxu0
  %v1426 = vadd.f32 %v1329, %v1425
  %v1427 = vpop.f32.mrf.mxu0
  %1428 = vdwg.mxu0
  %1429 = vmatprep.subr.bf16.mxu0 0
  %1430 = vmatpush1.bf16.msra.mxu0 %v1049
  %1431 = vmatprep.subr.bf16.mxu0 0
  %1432 = vmatpush1.bf16.msra.mxu0 %v1048
  %1433 = vmatprep.subr.bf16.mxu0 0
  %1434 = vmatpush1.bf16.msra.mxu0 %v1047
  %1435 = vmatprep.subr.bf16.mxu0 0
  %1436 = vmatpush1.bf16.msra.mxu0 %v1046
  %1437 = vmatprep.subr.bf16.mxu0 0
  %1438 = vmatpush1.bf16.msra.mxu0 %v1045
  %1439 = vmatprep.subr.bf16.mxu0 0
  %1440 = vmatpush1.bf16.msra.mxu0 %v1044
  %1441 = vmatprep.subr.bf16.mxu0 0
  %1442 = vmatpush1.bf16.msra.mxu0 %v1043
  %1443 = vmatprep.subr.bf16.mxu0 0
  %1444 = vmatpush1.bf16.msra.mxu0 %v1042
  %1445 = vmatprep.subr.bf16.mxu0 0
  %1446 = vmatpush2.bf16.msra.mxu0 %v1057
  %1447 = vmatprep.subr.bf16.mxu0 0
  %1448 = vmatpush2.bf16.msra.mxu0 %v1056
  %1449 = vmatprep.subr.bf16.mxu0 0
  %1450 = vmatpush2.bf16.msra.mxu0 %v1055
  %1451 = vmatprep.subr.bf16.mxu0 0
  %1452 = vmatpush2.bf16.msra.mxu0 %v1054
  %1453 = vmatprep.subr.bf16.mxu0 0
  %1454 = vmatpush2.bf16.msra.mxu0 %v1053
  %1455 = vmatprep.subr.bf16.mxu0 0
  %1456 = vmatpush2.bf16.msra.mxu0 %v1052
  %1457 = vmatprep.subr.bf16.mxu0 0
  %1458 = vmatpush2.bf16.msra.mxu0 %v1051
  %1459 = vmatprep.subr.bf16.mxu0 0
  %1460 = vmatpush2.bf16.msra.mxu0 %v1050
  %1461 = vmatprep.mubr.bf16.mxu0 %v569
  %1462 = vmatmul.mubr.bf16.gmra.mxu0 %v568
  %v1463 = vpop.f32.mrf.mxu0
  %v1464 = vadd.f32 %v1367, %v1463
  %v1465 = vpop.f32.mrf.mxu0
  %v1466 = vpop.f32.mrf.mxu0
  %v1467 = vadd.f32 %v1370, %v1466
  %v1468 = vpop.f32.mrf.mxu0
  %1469 = vmatprep.mubr.bf16.mxu0 %v578
  %1470 = vmatmul.mubr.bf16.gmra.mxu0 %v577
  %v1471 = vpop.f32.mrf.mxu0
  %v1472 = vadd.f32 %v1375, %v1471
  %v1473 = vpop.f32.mrf.mxu0
  %v1474 = vpop.f32.mrf.mxu0
  %v1475 = vadd.f32 %v1378, %v1474
  %v1476 = vpop.f32.mrf.mxu0
  %1477 = vmatprep.mubr.bf16.mxu0 %v587
  %1478 = vmatmul.mubr.bf16.gmra.mxu0 %v586
  %v1479 = vpop.f32.mrf.mxu0
  %v1480 = vadd.f32 %v1383, %v1479
  %v1481 = vpop.f32.mrf.mxu0
  %v1482 = vpop.f32.mrf.mxu0
  %v1483 = vadd.f32 %v1386, %v1482
  %v1484 = vpop.f32.mrf.mxu0
  %1485 = vmatprep.mubr.bf16.mxu0 %v596
  %1486 = vmatmul.mubr.bf16.gmra.mxu0 %v595
  %v1487 = vpop.f32.mrf.mxu0
  %v1488 = vadd.f32 %v1391, %v1487
  %v1489 = vpop.f32.mrf.mxu0
  %v1490 = vpop.f32.mrf.mxu0
  %v1491 = vadd.f32 %v1394, %v1490
  %v1492 = vpop.f32.mrf.mxu0
  %1493 = vmatprep.mubr.bf16.mxu0 %v605
  %1494 = vmatmul.mubr.bf16.gmra.mxu0 %v604
  %v1495 = vpop.f32.mrf.mxu0
  %v1496 = vadd.f32 %v1399, %v1495
  %v1497 = vpop.f32.mrf.mxu0
  %v1498 = vpop.f32.mrf.mxu0
  %v1499 = vadd.f32 %v1402, %v1498
  %v1500 = vpop.f32.mrf.mxu0
  %1501 = vmatprep.mubr.bf16.mxu0 %v614
  %1502 = vmatmul.mubr.bf16.gmra.mxu0 %v613
  %v1503 = vpop.f32.mrf.mxu0
  %v1504 = vadd.f32 %v1407, %v1503
  %v1505 = vpop.f32.mrf.mxu0
  %v1506 = vpop.f32.mrf.mxu0
  %v1507 = vadd.f32 %v1410, %v1506
  %v1508 = vpop.f32.mrf.mxu0
  %1509 = vmatprep.mubr.bf16.mxu0 %v623
  %1510 = vmatmul.mubr.bf16.gmra.mxu0 %v622
  %v1511 = vpop.f32.mrf.mxu0
  %v1512 = vadd.f32 %v1415, %v1511
  %v1513 = vpop.f32.mrf.mxu0
  %v1514 = vpop.f32.mrf.mxu0
  %v1515 = vadd.f32 %v1418, %v1514
  %v1516 = vpop.f32.mrf.mxu0
  %1517 = vmatprep.mubr.bf16.mxu0 %v632
  %1518 = vmatmul.mubr.bf16.gmra.mxu0 %v631
  %v1519 = vpop.f32.mrf.mxu0
  %v1520 = vadd.f32 %v1423, %v1519
  %v1521 = vpop.f32.mrf.mxu0
  %v1522 = vpop.f32.mrf.mxu0
  %v1523 = vadd.f32 %v1426, %v1522
  %v1524 = vpop.f32.mrf.mxu0
  %1525 = vdwg.mxu0
  %1526 = vmatprep.subr.bf16.mxu0 0
  %1527 = vmatpush1.bf16.msra.mxu0 %v1065
  %1528 = vmatprep.subr.bf16.mxu0 0
  %1529 = vmatpush1.bf16.msra.mxu0 %v1064
  %1530 = vmatprep.subr.bf16.mxu0 0
  %1531 = vmatpush1.bf16.msra.mxu0 %v1063
  %1532 = vmatprep.subr.bf16.mxu0 0
  %1533 = vmatpush1.bf16.msra.mxu0 %v1062
  %1534 = vmatprep.subr.bf16.mxu0 0
  %1535 = vmatpush1.bf16.msra.mxu0 %v1061
  %1536 = vmatprep.subr.bf16.mxu0 0
  %1537 = vmatpush1.bf16.msra.mxu0 %v1060
  %1538 = vmatprep.subr.bf16.mxu0 0
  %1539 = vmatpush1.bf16.msra.mxu0 %v1059
  %1540 = vmatprep.subr.bf16.mxu0 0
  %1541 = vmatpush1.bf16.msra.mxu0 %v1058
  %1542 = vmatprep.subr.bf16.mxu0 0
  %1543 = vmatpush2.bf16.msra.mxu0 0
  %1544 = vmatprep.subr.bf16.mxu0 0
  %1545 = vmatpush2.bf16.msra.mxu0 0
  %1546 = vmatprep.subr.bf16.mxu0 0
  %1547 = vmatpush2.bf16.msra.mxu0 0
  %1548 = vmatprep.subr.bf16.mxu0 0
  %1549 = vmatpush2.bf16.msra.mxu0 0
  %1550 = vmatprep.subr.bf16.mxu0 0
  %1551 = vmatpush2.bf16.msra.mxu0 0
  %1552 = vmatprep.subr.bf16.mxu0 0
  %1553 = vmatpush2.bf16.msra.mxu0 0
  %1554 = vmatprep.subr.bf16.mxu0 0
  %1555 = vmatpush2.bf16.msra.mxu0 0
  %1556 = vmatprep.subr.bf16.mxu0 0
  %1557 = vmatpush2.bf16.msra.mxu0 0
  %1558 = vmatprep.mubr.bf16.mxu0 0
  %1559 = vmatmul.mubr.bf16.gmra.mxu0 %v570
  %v1560 = vpop.f32.mrf.mxu0
  %v1561 = vadd.f32 %v1464, %v1560
  %v1562 = vpop.f32.mrf.mxu0
  %v1563 = vpop.f32.mrf.mxu0
  %v1564 = vadd.f32 %v1467, %v1563
  %v1565 = vpop.f32.mrf.mxu0
  %1566 = vmatprep.mubr.bf16.mxu0 0
  %1567 = vmatmul.mubr.bf16.gmra.mxu0 %v579
  %v1568 = vpop.f32.mrf.mxu0
  %v1569 = vadd.f32 %v1472, %v1568
  %v1570 = vpop.f32.mrf.mxu0
  %v1571 = vpop.f32.mrf.mxu0
  %v1572 = vadd.f32 %v1475, %v1571
  %v1573 = vpop.f32.mrf.mxu0
  %1574 = vmatprep.mubr.bf16.mxu0 0
  %1575 = vmatmul.mubr.bf16.gmra.mxu0 %v588
  %v1576 = vpop.f32.mrf.mxu0
  %v1577 = vadd.f32 %v1480, %v1576
  %v1578 = vpop.f32.mrf.mxu0
  %v1579 = vpop.f32.mrf.mxu0
  %v1580 = vadd.f32 %v1483, %v1579
  %v1581 = vpop.f32.mrf.mxu0
  %1582 = vmatprep.mubr.bf16.mxu0 0
  %1583 = vmatmul.mubr.bf16.gmra.mxu0 %v597
  %v1584 = vpop.f32.mrf.mxu0
  %v1585 = vadd.f32 %v1488, %v1584
  %v1586 = vpop.f32.mrf.mxu0
  %v1587 = vpop.f32.mrf.mxu0
  %v1588 = vadd.f32 %v1491, %v1587
  %v1589 = vpop.f32.mrf.mxu0
  %1590 = vmatprep.mubr.bf16.mxu0 0
  %1591 = vmatmul.mubr.bf16.gmra.mxu0 %v606
  %v1592 = vpop.f32.mrf.mxu0
  %v1593 = vadd.f32 %v1496, %v1592
  %v1594 = vpop.f32.mrf.mxu0
  %v1595 = vpop.f32.mrf.mxu0
  %v1596 = vadd.f32 %v1499, %v1595
  %v1597 = vpop.f32.mrf.mxu0
  %1598 = vmatprep.mubr.bf16.mxu0 0
  %1599 = vmatmul.mubr.bf16.gmra.mxu0 %v615
  %v1600 = vpop.f32.mrf.mxu0
  %v1601 = vadd.f32 %v1504, %v1600
  %v1602 = vpop.f32.mrf.mxu0
  %v1603 = vpop.f32.mrf.mxu0
  %v1604 = vadd.f32 %v1507, %v1603
  %v1605 = vpop.f32.mrf.mxu0
  %1606 = vmatprep.mubr.bf16.mxu0 0
  %1607 = vmatmul.mubr.bf16.gmra.mxu0 %v624
  %v1608 = vpop.f32.mrf.mxu0
  %v1609 = vadd.f32 %v1512, %v1608
  %v1610 = vpop.f32.mrf.mxu0
  %v1611 = vpop.f32.mrf.mxu0
  %v1612 = vadd.f32 %v1515, %v1611
  %v1613 = vpop.f32.mrf.mxu0
  %1614 = vmatprep.mubr.bf16.mxu0 0
  %1615 = vmatmul.mubr.bf16.gmra.mxu0 %v633
  %v1616 = vpop.f32.mrf.mxu0
  %v1617 = vadd.f32 %v1520, %v1616
  %v1618 = vpop.f32.mrf.mxu0
  %v1619 = vpop.f32.mrf.mxu0
  %v1620 = vadd.f32 %v1523, %v1619
  %v1621 = vpop.f32.mrf.mxu0
  %1622 = vdwg.mxu0
  %v1623 = vld [vmem:[%s3] sm:$0xf]
  %v1624 = vld [vmem:[%s3 + $0x4] sm:$0xf]
  %v1625 = vld [vmem:[%s3 + $0x8] sm:$0xf]
  %v1626 = vld [vmem:[%s3 + $0xc] sm:$0xf]
  %v1627 = vld [vmem:[%s3 + $0x10] sm:$0xf]
  %v1628 = vld [vmem:[%s3 + $0x14] sm:$0xf]
  %v1629 = vld [vmem:[%s3 + $0x18] sm:$0xf]
  %v1630 = vld [vmem:[%s3 + $0x1c] sm:$0xf]
  %v1631 = vld [vmem:[%s3 + $0x20] sm:$0xf]
  %v1632 = vld [vmem:[%s3 + $0x24] sm:$0xf]
  %v1633 = vld [vmem:[%s3 + $0x28] sm:$0xf]
  %v1634 = vld [vmem:[%s3 + $0x2c] sm:$0xf]
  %v1635 = vld [vmem:[%s3 + $0x30] sm:$0xf]
  %v1636 = vld [vmem:[%s3 + $0x34] sm:$0xf]
  %v1637 = vld [vmem:[%s3 + $0x38] sm:$0xf]
  %v1638 = vld [vmem:[%s3 + $0x3c] sm:$0xf]
  %v1639 = vunpack.c.l.bf16 %v1623
  %v1640 = vunpack.c.l.bf16 %v1624
  %v1641 = vunpack.c.l.bf16 %v1625
  %v1642 = vunpack.c.l.bf16 %v1626
  %v1643 = vunpack.c.l.bf16 %v1627
  %v1644 = vunpack.c.l.bf16 %v1628
  %v1645 = vunpack.c.l.bf16 %v1629
  %v1646 = vunpack.c.l.bf16 %v1630
  %v1647 = vunpack.c.l.bf16 %v1631
  %v1648 = vunpack.c.l.bf16 %v1632
  %v1649 = vunpack.c.l.bf16 %v1633
  %v1650 = vunpack.c.l.bf16 %v1634
  %v1651 = vunpack.c.l.bf16 %v1635
  %v1652 = vunpack.c.l.bf16 %v1636
  %v1653 = vunpack.c.l.bf16 %v1637
  %v1654 = vunpack.c.l.bf16 %v1638
  %v1655 = vadd.f32 %v1561, %v1639
  %v1656 = vadd.f32 %v1564, %v1640
  %v1657 = vadd.f32 %v1569, %v1641
  %v1658 = vadd.f32 %v1572, %v1642
  %v1659 = vadd.f32 %v1577, %v1643
  %v1660 = vadd.f32 %v1580, %v1644
  %v1661 = vadd.f32 %v1585, %v1645
  %v1662 = vadd.f32 %v1588, %v1646
  %v1663 = vadd.f32 %v1593, %v1647
  %v1664 = vadd.f32 %v1596, %v1648
  %v1665 = vadd.f32 %v1601, %v1649
  %v1666 = vadd.f32 %v1604, %v1650
  %v1667 = vadd.f32 %v1609, %v1651
  %v1668 = vadd.f32 %v1612, %v1652
  %v1669 = vadd.f32 %v1617, %v1653
  %v1670 = vadd.f32 %v1620, %v1654
  %v1671 = vmax.f32 %v1655, 0.0
  %v1672 = vmax.f32 %v1656, 0.0
  %v1673 = vmax.f32 %v1657, 0.0
  %v1674 = vmax.f32 %v1658, 0.0
  %v1675 = vmax.f32 %v1659, 0.0
  %v1676 = vmax.f32 %v1660, 0.0
  %v1677 = vmax.f32 %v1661, 0.0
  %v1678 = vmax.f32 %v1662, 0.0
  %v1679 = vmax.f32 %v1663, 0.0
  %v1680 = vmax.f32 %v1664, 0.0
  %v1681 = vmax.f32 %v1665, 0.0
  %v1682 = vmax.f32 %v1666, 0.0
  %v1683 = vmax.f32 %v1667, 0.0
  %v1684 = vmax.f32 %v1668, 0.0
  %v1685 = vmax.f32 %v1669, 0.0
  %v1686 = vmax.f32 %v1670, 0.0
  %v1687 = vpack.c.bf16 %v1672, %v1671
  %v1688 = vpack.c.bf16 %v1674, %v1673
  %v1689 = vpack.c.bf16 %v1676, %v1675
  %v1690 = vpack.c.bf16 %v1678, %v1677
  %v1691 = vpack.c.bf16 %v1680, %v1679
  %v1692 = vpack.c.bf16 %v1682, %v1681
  %v1693 = vpack.c.bf16 %v1684, %v1683
  %v1694 = vpack.c.bf16 %v1686, %v1685
  %v1703 = vunpack.c.l.b16 %v1687
  %v1704 = vunpack.c.h.b16 %v1687
  %v1705 = vunpack.c.l.b16 %v1688
  %v1706 = vunpack.c.h.b16 %v1688
  %v1707 = vunpack.c.l.b16 %v1689
  %v1708 = vunpack.c.h.b16 %v1689
  %v1709 = vunpack.c.l.b16 %v1690
  %v1710 = vunpack.c.h.b16 %v1690
  %v1711 = vunpack.c.l.b16 %v1691
  %v1712 = vunpack.c.h.b16 %v1691
  %v1713 = vunpack.c.l.b16 %v1692
  %v1714 = vunpack.c.h.b16 %v1692
  %v1715 = vunpack.c.l.b16 %v1693
  %v1716 = vunpack.c.h.b16 %v1693
  %v1717 = vunpack.c.l.b16 %v1694
  %v1718 = vunpack.c.h.b16 %v1694
  %v1719 = vpack.c.b16 %v1703, %v1703
  %v1720 = vpack.c.b16 %v1704, %v1704
  %v1721 = vpack.c.b16 %v1705, %v1705
  %v1722 = vpack.c.b16 %v1706, %v1706
  %v1723 = vpack.c.b16 %v1707, %v1707
  %v1724 = vpack.c.b16 %v1708, %v1708
  %v1725 = vpack.c.b16 %v1709, %v1709
  %v1726 = vpack.c.b16 %v1710, %v1710
  %v1727 = vpack.c.b16 %v1711, %v1711
  %v1728 = vpack.c.b16 %v1712, %v1712
  %v1729 = vpack.c.b16 %v1713, %v1713
  %v1730 = vpack.c.b16 %v1714, %v1714
  %v1731 = vpack.c.b16 %v1715, %v1715
  %v1732 = vpack.c.b16 %v1716, %v1716
  %v1733 = vpack.c.b16 %v1717, %v1717
  %v1734 = vpack.c.b16 %v1718, %v1718
  %vm1751 = vcmask 11264
  %1752 = vst.msk [vmem:[%s4] sm:$0xf] %vm1751, %v1719
  %1753 = vst.msk [vmem:[%s4 + $0x4] sm:$0xf] %vm1751, %v1720
  %1754 = vst.msk [vmem:[%s4 + $0x8] sm:$0xf] %vm1751, %v1721
  %1755 = vst.msk [vmem:[%s4 + $0xc] sm:$0xf] %vm1751, %v1722
  %1756 = vst.msk [vmem:[%s4 + $0x10] sm:$0xf] %vm1751, %v1723
  %1757 = vst.msk [vmem:[%s4 + $0x14] sm:$0xf] %vm1751, %v1724
  %1758 = vst.msk [vmem:[%s4 + $0x18] sm:$0xf] %vm1751, %v1725
  %1759 = vst.msk [vmem:[%s4 + $0x1c] sm:$0xf] %vm1751, %v1726
  %1760 = vst.msk [vmem:[%s4 + $0x20] sm:$0xf] %vm1751, %v1727
  %1761 = vst.msk [vmem:[%s4 + $0x24] sm:$0xf] %vm1751, %v1728
  %1762 = vst.msk [vmem:[%s4 + $0x28] sm:$0xf] %vm1751, %v1729
  %1763 = vst.msk [vmem:[%s4 + $0x2c] sm:$0xf] %vm1751, %v1730
  %1764 = vst.msk [vmem:[%s4 + $0x30] sm:$0xf] %vm1751, %v1731
  %1765 = vst.msk [vmem:[%s4 + $0x34] sm:$0xf] %vm1751, %v1732
  %1766 = vst.msk [vmem:[%s4 + $0x38] sm:$0xf] %vm1751, %v1733
  %1767 = vst.msk [vmem:[%s4 + $0x3c] sm:$0xf] %vm1751, %v1734
  // Predicated region
  $region18: #{_lambda_.39} parent=0 // pred_check
    _
  $region19: #{_lambda_.39} parent=0 // pred_check_branch
    %1769 = sbr.rel (0) target = $region21
  $region20: #{_lambda_.39} parent=0 // pred_region
    _
  $region21: #{_lambda_.39} parent=0 // pred_fallthru
    _
  // Predicated region
  $region22: #{_lambda_.39} parent=0 // pred_check
    _
  $region23: #{_lambda_.39} parent=0 // pred_check_branch
    %1771 = sbr.rel (0) target = $region25
  $region24: #{_lambda_.39} parent=0 // pred_region
    _
  $region25: #{_lambda_.39} parent=0 // pred_fallthru
    _

// kernel: _lambda_.43
$region0: #{_lambda_.43}
  #allocation0 [shape = 'u32[]', space=smem, size = 0x4, offset = 0x4, fixed_abs, tag = 'smem constant byte address 0x4 - core index']
  #allocation1 [shape = 'u32[144,128]{1,0:T(1,128)}', space=vmem, size = 0x12000, scoped, tag = 'internal scratch']
  %s0 = inlined_call_operand.vmem [shape: bf16[9,128,2,1,1], index: 0, kind: input, shape index: {}, may-alias: {0,4}]
  %s1 = inlined_call_operand.vmem [shape: bf16[128,1152], index: 1, kind: input, shape index: {}]
  %s2 = inlined_call_operand.vmem [shape: bf16[1152,2], index: 2, kind: input, shape index: {}]
  %s3 = inlined_call_operand.vmem [shape: f32[128,1], index: 3, kind: input, shape index: {}]
  %s4 = inlined_call_operand.vmem [shape: bf16[9,128,2,1,1], index: 4, kind: output, shape index: {}, may-alias: {0,4}]
  %s5 = scalar_lea.vmem %s4, 256
  %s6 = sld [smem:[#allocation0]]
  $region59: #{_lambda_.43} parent=0
    _
  %s8 = ssub.s32 1, %s6
  %s9 = scalar_select 0, %s8, %s6
  $region1: #{_lambda_.43} parent=0
    #allocation2 [shape = 'u8[32768]{0}', space=vmem, size = 0x8000, scoped, tag = 'output window, operand 0, single buffered']
    // Predicated region
    $region2: #{_lambda_.43} parent=1 // pred_check
      _
    $region3: #{_lambda_.43} parent=1 // pred_check_branch
      %11 = sbr.rel (0) target = $region5
    $region4: #{_lambda_.43} parent=1 // pred_region
      _
    $region5: #{_lambda_.43} parent=1 // pred_fallthru
      _
    // Predicated region
    $region6: #{_lambda_.43} parent=1 // pred_check
      _
    $region7: #{_lambda_.43} parent=1 // pred_check_branch
      %13 = sbr.rel (0) target = $region9
    $region8: #{_lambda_.43} parent=1 // pred_region
      _
    $region9: #{_lambda_.43} parent=1 // pred_fallthru
      _
    // Predicated region
    $region10: #{_lambda_.43} parent=1 // pred_check
      _
    $region11: #{_lambda_.43} parent=1 // pred_check_branch
      %15 = sbr.rel (0) target = $region13
    $region12: #{_lambda_.43} parent=1 // pred_region
      _
    $region13: #{_lambda_.43} parent=1 // pred_fallthru
      _
    %v17 = vld [vmem:[%s1] sm:$0xff]
    %v18 = vld [vmem:[%s1 + $0x8] sm:$0xff]
    %v19 = vld [vmem:[%s1 + $0x10] sm:$0xff]
    %v20 = vld [vmem:[%s1 + $0x18] sm:$0xff]
    %v21 = vld [vmem:[%s1 + $0x20] sm:$0xf]
    %v22 = vld [vmem:[%s1 + $0x24] sm:$0xff]
    %v23 = vld [vmem:[%s1 + $0x2c] sm:$0xff]
    %v24 = vld [vmem:[%s1 + $0x34] sm:$0xff]
    %v25 = vld [vmem:[%s1 + $0x3c] sm:$0xff]
    %v26 = vld [vmem:[%s1 + $0x44] sm:$0xf]
    %v27 = vld [vmem:[%s1 + $0x48] sm:$0xff]
    %v28 = vld [vmem:[%s1 + $0x50] sm:$0xff]
    %v29 = vld [vmem:[%s1 + $0x58] sm:$0xff]
    %v30 = vld [vmem:[%s1 + $0x60] sm:$0xff]
    %v31 = vld [vmem:[%s1 + $0x68] sm:$0xf]
    %v32 = vld [vmem:[%s1 + $0x6c] sm:$0xff]
    %v33 = vld [vmem:[%s1 + $0x74] sm:$0xff]
    %v34 = vld [vmem:[%s1 + $0x7c] sm:$0xff]
    %v35 = vld [vmem:[%s1 + $0x84] sm:$0xff]
    %v36 = vld [vmem:[%s1 + $0x8c] sm:$0xf]
    %v37 = vld [vmem:[%s1 + $0x90] sm:$0xff]
    %v38 = vld [vmem:[%s1 + $0x98] sm:$0xff]
    %v39 = vld [vmem:[%s1 + $0xa0] sm:$0xff]
    %v40 = vld [vmem:[%s1 + $0xa8] sm:$0xff]
    %v41 = vld [vmem:[%s1 + $0xb0] sm:$0xf]
    %v42 = vld [vmem:[%s1 + $0xb4] sm:$0xff]
    %v43 = vld [vmem:[%s1 + $0xbc] sm:$0xff]
    %v44 = vld [vmem:[%s1 + $0xc4] sm:$0xff]
    %v45 = vld [vmem:[%s1 + $0xcc] sm:$0xff]
    %v46 = vld [vmem:[%s1 + $0xd4] sm:$0xf]
    %v47 = vld [vmem:[%s1 + $0xd8] sm:$0xff]
    %v48 = vld [vmem:[%s1 + $0xe0] sm:$0xff]
    %v49 = vld [vmem:[%s1 + $0xe8] sm:$0xff]
    %v50 = vld [vmem:[%s1 + $0xf0] sm:$0xff]
    %v51 = vld [vmem:[%s1 + $0xf8] sm:$0xf]
    %v52 = vld [vmem:[%s1 + $0xfc] sm:$0xff]
    %v53 = vld [vmem:[%s1 + $0x104] sm:$0xff]
    %v54 = vld [vmem:[%s1 + $0x10c] sm:$0xff]
    %v55 = vld [vmem:[%s1 + $0x114] sm:$0xff]
    %v56 = vld [vmem:[%s1 + $0x11c] sm:$0xf]
    %v57 = vld [vmem:[%s1 + $0x120] sm:$0xff]
    %v58 = vld [vmem:[%s1 + $0x128] sm:$0xff]
    %v59 = vld [vmem:[%s1 + $0x130] sm:$0xff]
    %v60 = vld [vmem:[%s1 + $0x138] sm:$0xff]
    %v61 = vld [vmem:[%s1 + $0x140] sm:$0xf]
    %v62 = vld [vmem:[%s1 + $0x144] sm:$0xff]
    %v63 = vld [vmem:[%s1 + $0x14c] sm:$0xff]
    %v64 = vld [vmem:[%s1 + $0x154] sm:$0xff]
    %v65 = vld [vmem:[%s1 + $0x15c] sm:$0xff]
    %v66 = vld [vmem:[%s1 + $0x164] sm:$0xf]
    %v67 = vld [vmem:[%s1 + $0x168] sm:$0xff]
    %v68 = vld [vmem:[%s1 + $0x170] sm:$0xff]
    %v69 = vld [vmem:[%s1 + $0x178] sm:$0xff]
    %v70 = vld [vmem:[%s1 + $0x180] sm:$0xff]
    %v71 = vld [vmem:[%s1 + $0x188] sm:$0xf]
    %v72 = vld [vmem:[%s1 + $0x18c] sm:$0xff]
    %v73 = vld [vmem:[%s1 + $0x194] sm:$0xff]
    %v74 = vld [vmem:[%s1 + $0x19c] sm:$0xff]
    %v75 = vld [vmem:[%s1 + $0x1a4] sm:$0xff]
    %v76 = vld [vmem:[%s1 + $0x1ac] sm:$0xf]
    %v77 = vld [vmem:[%s1 + $0x1b0] sm:$0xff]
    %v78 = vld [vmem:[%s1 + $0x1b8] sm:$0xff]
    %v79 = vld [vmem:[%s1 + $0x1c0] sm:$0xff]
    %v80 = vld [vmem:[%s1 + $0x1c8] sm:$0xff]
    %v81 = vld [vmem:[%s1 + $0x1d0] sm:$0xf]
    %v82 = vld [vmem:[%s1 + $0x1d4] sm:$0xff]
    %v83 = vld [vmem:[%s1 + $0x1dc] sm:$0xff]
    %v84 = vld [vmem:[%s1 + $0x1e4] sm:$0xff]
    %v85 = vld [vmem:[%s1 + $0x1ec] sm:$0xff]
    %v86 = vld [vmem:[%s1 + $0x1f4] sm:$0xf]
    %v87 = vld [vmem:[%s1 + $0x1f8] sm:$0xff]
    %v88 = vld [vmem:[%s1 + $0x200] sm:$0xff]
    %v89 = vld [vmem:[%s1 + $0x208] sm:$0xff]
    %v90 = vld [vmem:[%s1 + $0x210] sm:$0xff]
    %v91 = vld [vmem:[%s1 + $0x218] sm:$0xf]
    %v92 = vld [vmem:[%s1 + $0x21c] sm:$0xff]
    %v93 = vld [vmem:[%s1 + $0x224] sm:$0xff]
    %v94 = vld [vmem:[%s1 + $0x22c] sm:$0xff]
    %v95 = vld [vmem:[%s1 + $0x234] sm:$0xff]
    %v96 = vld [vmem:[%s1 + $0x23c] sm:$0xf]
    %v97 = vld [vmem:[%s2] sm:$0xf]
    %v98 = vld [vmem:[%s2 + $0x4] sm:$0xf]
    %v99 = vld [vmem:[%s2 + $0x8] sm:$0xf]
    %v100 = vld [vmem:[%s2 + $0xc] sm:$0xf]
    %v101 = vld [vmem:[%s2 + $0x10] sm:$0xf]
    %v102 = vld [vmem:[%s2 + $0x14] sm:$0xf]
    %v103 = vld [vmem:[%s2 + $0x18] sm:$0xf]
    %v104 = vld [vmem:[%s2 + $0x1c] sm:$0xf]
    %v105 = vld [vmem:[%s2 + $0x20] sm:$0xf]
    %v106 = vld [vmem:[%s2 + $0x24] sm:$0xf]
    %v107 = vld [vmem:[%s2 + $0x28] sm:$0xf]
    %v108 = vld [vmem:[%s2 + $0x2c] sm:$0xf]
    %v109 = vld [vmem:[%s2 + $0x30] sm:$0xf]
    %v110 = vld [vmem:[%s2 + $0x34] sm:$0xf]
    %v111 = vld [vmem:[%s2 + $0x38] sm:$0xf]
    %v112 = vld [vmem:[%s2 + $0x3c] sm:$0xf]
    %v113 = vld [vmem:[%s2 + $0x40] sm:$0xf]
    %v114 = vld [vmem:[%s2 + $0x44] sm:$0xf]
    %v115 = vld [vmem:[%s2 + $0x48] sm:$0xf]
    %v116 = vld [vmem:[%s2 + $0x4c] sm:$0xf]
    %v117 = vld [vmem:[%s2 + $0x50] sm:$0xf]
    %v118 = vld [vmem:[%s2 + $0x54] sm:$0xf]
    %v119 = vld [vmem:[%s2 + $0x58] sm:$0xf]
    %v120 = vld [vmem:[%s2 + $0x5c] sm:$0xf]
    %v121 = vld [vmem:[%s2 + $0x60] sm:$0xf]
    %v122 = vld [vmem:[%s2 + $0x64] sm:$0xf]
    %v123 = vld [vmem:[%s2 + $0x68] sm:$0xf]
    %v124 = vld [vmem:[%s2 + $0x6c] sm:$0xf]
    %v125 = vld [vmem:[%s2 + $0x70] sm:$0xf]
    %v126 = vld [vmem:[%s2 + $0x74] sm:$0xf]
    %v127 = vld [vmem:[%s2 + $0x78] sm:$0xf]
    %v128 = vld [vmem:[%s2 + $0x7c] sm:$0xf]
    %v129 = vld [vmem:[%s2 + $0x80] sm:$0xf]
    %v130 = vld [vmem:[%s2 + $0x84] sm:$0xf]
    %v131 = vld [vmem:[%s2 + $0x88] sm:$0xf]
    %v132 = vld [vmem:[%s2 + $0x8c] sm:$0xf]
    %v133 = vld [vmem:[%s2 + $0x90] sm:$0xf]
    %v134 = vld [vmem:[%s2 + $0x94] sm:$0xf]
    %v135 = vld [vmem:[%s2 + $0x98] sm:$0xf]
    %v136 = vld [vmem:[%s2 + $0x9c] sm:$0xf]
    %v137 = vld [vmem:[%s2 + $0xa0] sm:$0xf]
    %v138 = vld [vmem:[%s2 + $0xa4] sm:$0xf]
    %v139 = vld [vmem:[%s2 + $0xa8] sm:$0xf]
    %v140 = vld [vmem:[%s2 + $0xac] sm:$0xf]
    %v141 = vld [vmem:[%s2 + $0xb0] sm:$0xf]
    %v142 = vld [vmem:[%s2 + $0xb4] sm:$0xf]
    %v143 = vld [vmem:[%s2 + $0xb8] sm:$0xf]
    %v144 = vld [vmem:[%s2 + $0xbc] sm:$0xf]
    %v145 = vld [vmem:[%s2 + $0xc0] sm:$0xf]
    %v146 = vld [vmem:[%s2 + $0xc4] sm:$0xf]
    %v147 = vld [vmem:[%s2 + $0xc8] sm:$0xf]
    %v148 = vld [vmem:[%s2 + $0xcc] sm:$0xf]
    %v149 = vld [vmem:[%s2 + $0xd0] sm:$0xf]
    %v150 = vld [vmem:[%s2 + $0xd4] sm:$0xf]
    %v151 = vld [vmem:[%s2 + $0xd8] sm:$0xf]
    %v152 = vld [vmem:[%s2 + $0xdc] sm:$0xf]
    %v153 = vld [vmem:[%s2 + $0xe0] sm:$0xf]
    %v154 = vld [vmem:[%s2 + $0xe4] sm:$0xf]
    %v155 = vld [vmem:[%s2 + $0xe8] sm:$0xf]
    %v156 = vld [vmem:[%s2 + $0xec] sm:$0xf]
    %v157 = vld [vmem:[%s2 + $0xf0] sm:$0xf]
    %v158 = vld [vmem:[%s2 + $0xf4] sm:$0xf]
    %v159 = vld [vmem:[%s2 + $0xf8] sm:$0xf]
    %v160 = vld [vmem:[%s2 + $0xfc] sm:$0xf]
    %v161 = vld [vmem:[%s2 + $0x100] sm:$0xf]
    %v162 = vld [vmem:[%s2 + $0x104] sm:$0xf]
    %v163 = vld [vmem:[%s2 + $0x108] sm:$0xf]
    %v164 = vld [vmem:[%s2 + $0x10c] sm:$0xf]
    %v165 = vld [vmem:[%s2 + $0x110] sm:$0xf]
    %v166 = vld [vmem:[%s2 + $0x114] sm:$0xf]
    %v167 = vld [vmem:[%s2 + $0x118] sm:$0xf]
    %v168 = vld [vmem:[%s2 + $0x11c] sm:$0xf]
    %v169 = vld [vmem:[%s2 + $0x120] sm:$0xf]
    %v170 = vld [vmem:[%s2 + $0x124] sm:$0xf]
    %v171 = vld [vmem:[%s2 + $0x128] sm:$0xf]
    %v172 = vld [vmem:[%s2 + $0x12c] sm:$0xf]
    %v173 = vld [vmem:[%s2 + $0x130] sm:$0xf]
    %v174 = vld [vmem:[%s2 + $0x134] sm:$0xf]
    %v175 = vld [vmem:[%s2 + $0x138] sm:$0xf]
    %v176 = vld [vmem:[%s2 + $0x13c] sm:$0xf]
    %v177 = vld [vmem:[%s2 + $0x140] sm:$0xf]
    %v178 = vld [vmem:[%s2 + $0x144] sm:$0xf]
    %v179 = vld [vmem:[%s2 + $0x148] sm:$0xf]
    %v180 = vld [vmem:[%s2 + $0x14c] sm:$0xf]
    %v181 = vld [vmem:[%s2 + $0x150] sm:$0xf]
    %v182 = vld [vmem:[%s2 + $0x154] sm:$0xf]
    %v183 = vld [vmem:[%s2 + $0x158] sm:$0xf]
    %v184 = vld [vmem:[%s2 + $0x15c] sm:$0xf]
    %v185 = vld [vmem:[%s2 + $0x160] sm:$0xf]
    %v186 = vld [vmem:[%s2 + $0x164] sm:$0xf]
    %v187 = vld [vmem:[%s2 + $0x168] sm:$0xf]
    %v188 = vld [vmem:[%s2 + $0x16c] sm:$0xf]
    %v189 = vld [vmem:[%s2 + $0x170] sm:$0xf]
    %v190 = vld [vmem:[%s2 + $0x174] sm:$0xf]
    %v191 = vld [vmem:[%s2 + $0x178] sm:$0xf]
    %v192 = vld [vmem:[%s2 + $0x17c] sm:$0xf]
    %v193 = vld [vmem:[%s2 + $0x180] sm:$0xf]
    %v194 = vld [vmem:[%s2 + $0x184] sm:$0xf]
    %v195 = vld [vmem:[%s2 + $0x188] sm:$0xf]
    %v196 = vld [vmem:[%s2 + $0x18c] sm:$0xf]
    %v197 = vld [vmem:[%s2 + $0x190] sm:$0xf]
    %v198 = vld [vmem:[%s2 + $0x194] sm:$0xf]
    %v199 = vld [vmem:[%s2 + $0x198] sm:$0xf]
    %v200 = vld [vmem:[%s2 + $0x19c] sm:$0xf]
    %v201 = vld [vmem:[%s2 + $0x1a0] sm:$0xf]
    %v202 = vld [vmem:[%s2 + $0x1a4] sm:$0xf]
    %v203 = vld [vmem:[%s2 + $0x1a8] sm:$0xf]
    %v204 = vld [vmem:[%s2 + $0x1ac] sm:$0xf]
    %v205 = vld [vmem:[%s2 + $0x1b0] sm:$0xf]
    %v206 = vld [vmem:[%s2 + $0x1b4] sm:$0xf]
    %v207 = vld [vmem:[%s2 + $0x1b8] sm:$0xf]
    %v208 = vld [vmem:[%s2 + $0x1bc] sm:$0xf]
    %v209 = vld [vmem:[%s2 + $0x1c0] sm:$0xf]
    %v210 = vld [vmem:[%s2 + $0x1c4] sm:$0xf]
    %v211 = vld [vmem:[%s2 + $0x1c8] sm:$0xf]
    %v212 = vld [vmem:[%s2 + $0x1cc] sm:$0xf]
    %v213 = vld [vmem:[%s2 + $0x1d0] sm:$0xf]
    %v214 = vld [vmem:[%s2 + $0x1d4] sm:$0xf]
    %v215 = vld [vmem:[%s2 + $0x1d8] sm:$0xf]
    %v216 = vld [vmem:[%s2 + $0x1dc] sm:$0xf]
    %v217 = vld [vmem:[%s2 + $0x1e0] sm:$0xf]
    %v218 = vld [vmem:[%s2 + $0x1e4] sm:$0xf]
    %v219 = vld [vmem:[%s2 + $0x1e8] sm:$0xf]
    %v220 = vld [vmem:[%s2 + $0x1ec] sm:$0xf]
    %v221 = vld [vmem:[%s2 + $0x1f0] sm:$0xf]
    %v222 = vld [vmem:[%s2 + $0x1f4] sm:$0xf]
    %v223 = vld [vmem:[%s2 + $0x1f8] sm:$0xf]
    %v224 = vld [vmem:[%s2 + $0x1fc] sm:$0xf]
    %v225 = vld [vmem:[%s2 + $0x200] sm:$0xf]
    %v226 = vld [vmem:[%s2 + $0x204] sm:$0xf]
    %v227 = vld [vmem:[%s2 + $0x208] sm:$0xf]
    %v228 = vld [vmem:[%s2 + $0x20c] sm:$0xf]
    %v229 = vld [vmem:[%s2 + $0x210] sm:$0xf]
    %v230 = vld [vmem:[%s2 + $0x214] sm:$0xf]
    %v231 = vld [vmem:[%s2 + $0x218] sm:$0xf]
    %v232 = vld [vmem:[%s2 + $0x21c] sm:$0xf]
    %v233 = vld [vmem:[%s2 + $0x220] sm:$0xf]
    %v234 = vld [vmem:[%s2 + $0x224] sm:$0xf]
    %v235 = vld [vmem:[%s2 + $0x228] sm:$0xf]
    %v236 = vld [vmem:[%s2 + $0x22c] sm:$0xf]
    %v237 = vld [vmem:[%s2 + $0x230] sm:$0xf]
    %v238 = vld [vmem:[%s2 + $0x234] sm:$0xf]
    %v239 = vld [vmem:[%s2 + $0x238] sm:$0xf]
    %v240 = vld [vmem:[%s2 + $0x23c] sm:$0xf]
    %v241 = vld [vmem:[%s3] sm:$0xff]
    %v242 = vld [vmem:[%s3 + $0x8] sm:$0xff]
    %v243 = vld [vmem:[%s3 + $0x10] sm:$0xff]
    %v244 = vld [vmem:[%s3 + $0x18] sm:$0xff]
    %v245 = vld [vmem:[%s3 + $0x20] sm:$0xff]
    %v246 = vld [vmem:[%s3 + $0x28] sm:$0xff]
    %v247 = vld [vmem:[%s3 + $0x30] sm:$0xff]
    %v248 = vld [vmem:[%s3 + $0x38] sm:$0xff]
    %v249 = vld [vmem:[%s3 + $0x40] sm:$0xff]
    %v250 = vld [vmem:[%s3 + $0x48] sm:$0xff]
    %v251 = vld [vmem:[%s3 + $0x50] sm:$0xff]
    %v252 = vld [vmem:[%s3 + $0x58] sm:$0xff]
    %v253 = vld [vmem:[%s3 + $0x60] sm:$0xff]
    %v254 = vld [vmem:[%s3 + $0x68] sm:$0xff]
    %v255 = vld [vmem:[%s3 + $0x70] sm:$0xff]
    %v256 = vld [vmem:[%s3 + $0x78] sm:$0xff]
    %258 = vset.pattern.permute.xlu0 0
    %259 = vperm.xlu0 %258, %v241
    %v260 = vpop.permute.xlu0 %259
    %263 = vset.pattern.permute.xlu0 0
    %264 = vperm.xlu0 %263, %v242
    %v265 = vpop.permute.xlu0 %264
    %268 = vset.pattern.permute.xlu0 0
    %269 = vperm.xlu0 %268, %v243
    %v270 = vpop.permute.xlu0 %269
    %273 = vset.pattern.permute.xlu0 0
    %274 = vperm.xlu0 %273, %v244
    %v275 = vpop.permute.xlu0 %274
    %278 = vset.pattern.permute.xlu0 0
    %279 = vperm.xlu0 %278, %v245
    %v280 = vpop.permute.xlu0 %279
    %283 = vset.pattern.permute.xlu0 0
    %284 = vperm.xlu0 %283, %v246
    %v285 = vpop.permute.xlu0 %284
    %288 = vset.pattern.permute.xlu0 0
    %289 = vperm.xlu0 %288, %v247
    %v290 = vpop.permute.xlu0 %289
    %293 = vset.pattern.permute.xlu0 0
    %294 = vperm.xlu0 %293, %v248
    %v295 = vpop.permute.xlu0 %294
    %298 = vset.pattern.permute.xlu0 0
    %299 = vperm.xlu0 %298, %v249
    %v300 = vpop.permute.xlu0 %299
    %303 = vset.pattern.permute.xlu0 0
    %304 = vperm.xlu0 %303, %v250
    %v305 = vpop.permute.xlu0 %304
    %308 = vset.pattern.permute.xlu0 0
    %309 = vperm.xlu0 %308, %v251
    %v310 = vpop.permute.xlu0 %309
    %313 = vset.pattern.permute.xlu0 0
    %314 = vperm.xlu0 %313, %v252
    %v315 = vpop.permute.xlu0 %314
    %318 = vset.pattern.permute.xlu0 0
    %319 = vperm.xlu0 %318, %v253
    %v320 = vpop.permute.xlu0 %319
    %323 = vset.pattern.permute.xlu0 0
    %324 = vperm.xlu0 %323, %v254
    %v325 = vpop.permute.xlu0 %324
    %328 = vset.pattern.permute.xlu0 0
    %329 = vperm.xlu0 %328, %v255
    %v330 = vpop.permute.xlu0 %329
    %333 = vset.pattern.permute.xlu0 0
    %334 = vperm.xlu0 %333, %v256
    %v335 = vpop.permute.xlu0 %334
    %v417 = vunpack.c.l.b16 %v17
    %v418 = vunpack.c.h.b16 %v17
    %v419 = vunpack.c.l.b16 %v18
    %v420 = vunpack.c.h.b16 %v18
    %v421 = vunpack.c.l.b16 %v19
    %v422 = vunpack.c.h.b16 %v19
    %v423 = vunpack.c.l.b16 %v20
    %v424 = vunpack.c.h.b16 %v20
    %v425 = vunpack.c.l.b16 %v21
    %v426 = vunpack.c.l.b16 %v22
    %v427 = vunpack.c.h.b16 %v22
    %v428 = vunpack.c.l.b16 %v23
    %v429 = vunpack.c.h.b16 %v23
    %v430 = vunpack.c.l.b16 %v24
    %v431 = vunpack.c.h.b16 %v24
    %v432 = vunpack.c.l.b16 %v25
    %v433 = vunpack.c.h.b16 %v25
    %v434 = vunpack.c.l.b16 %v26
    %v435 = vunpack.c.l.b16 %v27
    %v436 = vunpack.c.h.b16 %v27
    %v437 = vunpack.c.l.b16 %v28
    %v438 = vunpack.c.h.b16 %v28
    %v439 = vunpack.c.l.b16 %v29
    %v440 = vunpack.c.h.b16 %v29
    %v441 = vunpack.c.l.b16 %v30
    %v442 = vunpack.c.h.b16 %v30
    %v443 = vunpack.c.l.b16 %v31
    %v444 = vunpack.c.l.b16 %v32
    %v445 = vunpack.c.h.b16 %v32
    %v446 = vunpack.c.l.b16 %v33
    %v447 = vunpack.c.h.b16 %v33
    %v448 = vunpack.c.l.b16 %v34
    %v449 = vunpack.c.h.b16 %v34
    %v450 = vunpack.c.l.b16 %v35
    %v451 = vunpack.c.h.b16 %v35
    %v452 = vunpack.c.l.b16 %v36
    %v453 = vunpack.c.l.b16 %v37
    %v454 = vunpack.c.h.b16 %v37
    %v455 = vunpack.c.l.b16 %v38
    %v456 = vunpack.c.h.b16 %v38
    %v457 = vunpack.c.l.b16 %v39
    %v458 = vunpack.c.h.b16 %v39
    %v459 = vunpack.c.l.b16 %v40
    %v460 = vunpack.c.h.b16 %v40
    %v461 = vunpack.c.l.b16 %v41
    %v462 = vunpack.c.l.b16 %v42
    %v463 = vunpack.c.h.b16 %v42
    %v464 = vunpack.c.l.b16 %v43
    %v465 = vunpack.c.h.b16 %v43
    %v466 = vunpack.c.l.b16 %v44
    %v467 = vunpack.c.h.b16 %v44
    %v468 = vunpack.c.l.b16 %v45
    %v469 = vunpack.c.h.b16 %v45
    %v470 = vunpack.c.l.b16 %v46
    %v471 = vunpack.c.l.b16 %v47
    %v472 = vunpack.c.h.b16 %v47
    %v473 = vunpack.c.l.b16 %v48
    %v474 = vunpack.c.h.b16 %v48
    %v475 = vunpack.c.l.b16 %v49
    %v476 = vunpack.c.h.b16 %v49
    %v477 = vunpack.c.l.b16 %v50
    %v478 = vunpack.c.h.b16 %v50
    %v479 = vunpack.c.l.b16 %v51
    %v480 = vunpack.c.l.b16 %v52
    %v481 = vunpack.c.h.b16 %v52
    %v482 = vunpack.c.l.b16 %v53
    %v483 = vunpack.c.h.b16 %v53
    %v484 = vunpack.c.l.b16 %v54
    %v485 = vunpack.c.h.b16 %v54
    %v486 = vunpack.c.l.b16 %v55
    %v487 = vunpack.c.h.b16 %v55
    %v488 = vunpack.c.l.b16 %v56
    %v489 = vunpack.c.l.b16 %v57
    %v490 = vunpack.c.h.b16 %v57
    %v491 = vunpack.c.l.b16 %v58
    %v492 = vunpack.c.h.b16 %v58
    %v493 = vunpack.c.l.b16 %v59
    %v494 = vunpack.c.h.b16 %v59
    %v495 = vunpack.c.l.b16 %v60
    %v496 = vunpack.c.h.b16 %v60
    %v497 = vunpack.c.l.b16 %v61
    %v498 = vunpack.c.l.b16 %v62
    %v499 = vunpack.c.h.b16 %v62
    %v500 = vunpack.c.l.b16 %v63
    %v501 = vunpack.c.h.b16 %v63
    %v502 = vunpack.c.l.b16 %v64
    %v503 = vunpack.c.h.b16 %v64
    %v504 = vunpack.c.l.b16 %v65
    %v505 = vunpack.c.h.b16 %v65
    %v506 = vunpack.c.l.b16 %v66
    %v507 = vunpack.c.l.b16 %v67
    %v508 = vunpack.c.h.b16 %v67
    %v509 = vunpack.c.l.b16 %v68
    %v510 = vunpack.c.h.b16 %v68
    %v511 = vunpack.c.l.b16 %v69
    %v512 = vunpack.c.h.b16 %v69
    %v513 = vunpack.c.l.b16 %v70
    %v514 = vunpack.c.h.b16 %v70
    %v515 = vunpack.c.l.b16 %v71
    %v516 = vunpack.c.l.b16 %v72
    %v517 = vunpack.c.h.b16 %v72
    %v518 = vunpack.c.l.b16 %v73
    %v519 = vunpack.c.h.b16 %v73
    %v520 = vunpack.c.l.b16 %v74
    %v521 = vunpack.c.h.b16 %v74
    %v522 = vunpack.c.l.b16 %v75
    %v523 = vunpack.c.h.b16 %v75
    %v524 = vunpack.c.l.b16 %v76
    %v525 = vunpack.c.l.b16 %v77
    %v526 = vunpack.c.h.b16 %v77
    %v527 = vunpack.c.l.b16 %v78
    %v528 = vunpack.c.h.b16 %v78
    %v529 = vunpack.c.l.b16 %v79
    %v530 = vunpack.c.h.b16 %v79
    %v531 = vunpack.c.l.b16 %v80
    %v532 = vunpack.c.h.b16 %v80
    %v533 = vunpack.c.l.b16 %v81
    %v534 = vunpack.c.l.b16 %v82
    %v535 = vunpack.c.h.b16 %v82
    %v536 = vunpack.c.l.b16 %v83
    %v537 = vunpack.c.h.b16 %v83
    %v538 = vunpack.c.l.b16 %v84
    %v539 = vunpack.c.h.b16 %v84
    %v540 = vunpack.c.l.b16 %v85
    %v541 = vunpack.c.h.b16 %v85
    %v542 = vunpack.c.l.b16 %v86
    %v543 = vunpack.c.l.b16 %v87
    %v544 = vunpack.c.h.b16 %v87
    %v545 = vunpack.c.l.b16 %v88
    %v546 = vunpack.c.h.b16 %v88
    %v547 = vunpack.c.l.b16 %v89
    %v548 = vunpack.c.h.b16 %v89
    %v549 = vunpack.c.l.b16 %v90
    %v550 = vunpack.c.h.b16 %v90
    %v551 = vunpack.c.l.b16 %v91
    %v552 = vunpack.c.l.b16 %v92
    %v553 = vunpack.c.h.b16 %v92
    %v554 = vunpack.c.l.b16 %v93
    %v555 = vunpack.c.h.b16 %v93
    %v556 = vunpack.c.l.b16 %v94
    %v557 = vunpack.c.h.b16 %v94
    %v558 = vunpack.c.l.b16 %v95
    %v559 = vunpack.c.h.b16 %v95
    %v560 = vunpack.c.l.b16 %v96
    %v561 = vpack.c.b16 %v426, %v417
    %v562 = vpack.c.b16 %v427, %v418
    %v563 = vpack.c.b16 %v428, %v419
    %v564 = vpack.c.b16 %v429, %v420
    %v565 = vpack.c.b16 %v430, %v421
    %v566 = vpack.c.b16 %v431, %v422
    %v567 = vpack.c.b16 %v432, %v423
    %v568 = vpack.c.b16 %v433, %v424
    %v569 = vpack.c.b16 %v434, %v425
    %v570 = vpack.c.b16 %v444, %v435
    %v571 = vpack.c.b16 %v445, %v436
    %v572 = vpack.c.b16 %v446, %v437
    %v573 = vpack.c.b16 %v447, %v438
    %v574 = vpack.c.b16 %v448, %v439
    %v575 = vpack.c.b16 %v449, %v440
    %v576 = vpack.c.b16 %v450, %v441
    %v577 = vpack.c.b16 %v451, %v442
    %v578 = vpack.c.b16 %v452, %v443
    %v579 = vpack.c.b16 %v462, %v453
    %v580 = vpack.c.b16 %v463, %v454
    %v581 = vpack.c.b16 %v464, %v455
    %v582 = vpack.c.b16 %v465, %v456
    %v583 = vpack.c.b16 %v466, %v457
    %v584 = vpack.c.b16 %v467, %v458
    %v585 = vpack.c.b16 %v468, %v459
    %v586 = vpack.c.b16 %v469, %v460
    %v587 = vpack.c.b16 %v470, %v461
    %v588 = vpack.c.b16 %v480, %v471
    %v589 = vpack.c.b16 %v481, %v472
    %v590 = vpack.c.b16 %v482, %v473
    %v591 = vpack.c.b16 %v483, %v474
    %v592 = vpack.c.b16 %v484, %v475
    %v593 = vpack.c.b16 %v485, %v476
    %v594 = vpack.c.b16 %v486, %v477
    %v595 = vpack.c.b16 %v487, %v478
    %v596 = vpack.c.b16 %v488, %v479
    %v597 = vpack.c.b16 %v498, %v489
    %v598 = vpack.c.b16 %v499, %v490
    %v599 = vpack.c.b16 %v500, %v491
    %v600 = vpack.c.b16 %v501, %v492
    %v601 = vpack.c.b16 %v502, %v493
    %v602 = vpack.c.b16 %v503, %v494
    %v603 = vpack.c.b16 %v504, %v495
    %v604 = vpack.c.b16 %v505, %v496
    %v605 = vpack.c.b16 %v506, %v497
    %v606 = vpack.c.b16 %v516, %v507
    %v607 = vpack.c.b16 %v517, %v508
    %v608 = vpack.c.b16 %v518, %v509
    %v609 = vpack.c.b16 %v519, %v510
    %v610 = vpack.c.b16 %v520, %v511
    %v611 = vpack.c.b16 %v521, %v512
    %v612 = vpack.c.b16 %v522, %v513
    %v613 = vpack.c.b16 %v523, %v514
    %v614 = vpack.c.b16 %v524, %v515
    %v615 = vpack.c.b16 %v534, %v525
    %v616 = vpack.c.b16 %v535, %v526
    %v617 = vpack.c.b16 %v536, %v527
    %v618 = vpack.c.b16 %v537, %v528
    %v619 = vpack.c.b16 %v538, %v529
    %v620 = vpack.c.b16 %v539, %v530
    %v621 = vpack.c.b16 %v540, %v531
    %v622 = vpack.c.b16 %v541, %v532
    %v623 = vpack.c.b16 %v542, %v533
    %v624 = vpack.c.b16 %v552, %v543
    %v625 = vpack.c.b16 %v553, %v544
    %v626 = vpack.c.b16 %v554, %v545
    %v627 = vpack.c.b16 %v555, %v546
    %v628 = vpack.c.b16 %v556, %v547
    %v629 = vpack.c.b16 %v557, %v548
    %v630 = vpack.c.b16 %v558, %v549
    %v631 = vpack.c.b16 %v559, %v550
    %v632 = vpack.c.b16 %v560, %v551
    %v849 = vunpack.c.l.b16 %v97
    %v850 = vunpack.c.l.b16 %v98
    %v851 = vunpack.c.l.b16 %v99
    %v852 = vunpack.c.l.b16 %v100
    %v853 = vunpack.c.l.b16 %v101
    %v854 = vunpack.c.l.b16 %v102
    %v855 = vunpack.c.l.b16 %v103
    %v856 = vunpack.c.l.b16 %v104
    %v857 = vunpack.c.l.b16 %v105
    %v858 = vunpack.c.l.b16 %v106
    %v859 = vunpack.c.l.b16 %v107
    %v860 = vunpack.c.l.b16 %v108
    %v861 = vunpack.c.l.b16 %v109
    %v862 = vunpack.c.l.b16 %v110
    %v863 = vunpack.c.l.b16 %v111
    %v864 = vunpack.c.l.b16 %v112
    %v865 = vunpack.c.l.b16 %v113
    %v866 = vunpack.c.l.b16 %v114
    %v867 = vunpack.c.l.b16 %v115
    %v868 = vunpack.c.l.b16 %v116
    %v869 = vunpack.c.l.b16 %v117
    %v870 = vunpack.c.l.b16 %v118
    %v871 = vunpack.c.l.b16 %v119
    %v872 = vunpack.c.l.b16 %v120
    %v873 = vunpack.c.l.b16 %v121
    %v874 = vunpack.c.l.b16 %v122
    %v875 = vunpack.c.l.b16 %v123
    %v876 = vunpack.c.l.b16 %v124
    %v877 = vunpack.c.l.b16 %v125
    %v878 = vunpack.c.l.b16 %v126
    %v879 = vunpack.c.l.b16 %v127
    %v880 = vunpack.c.l.b16 %v128
    %v881 = vunpack.c.l.b16 %v129
    %v882 = vunpack.c.l.b16 %v130
    %v883 = vunpack.c.l.b16 %v131
    %v884 = vunpack.c.l.b16 %v132
    %v885 = vunpack.c.l.b16 %v133
    %v886 = vunpack.c.l.b16 %v134
    %v887 = vunpack.c.l.b16 %v135
    %v888 = vunpack.c.l.b16 %v136
    %v889 = vunpack.c.l.b16 %v137
    %v890 = vunpack.c.l.b16 %v138
    %v891 = vunpack.c.l.b16 %v139
    %v892 = vunpack.c.l.b16 %v140
    %v893 = vunpack.c.l.b16 %v141
    %v894 = vunpack.c.l.b16 %v142
    %v895 = vunpack.c.l.b16 %v143
    %v896 = vunpack.c.l.b16 %v144
    %v897 = vunpack.c.l.b16 %v145
    %v898 = vunpack.c.l.b16 %v146
    %v899 = vunpack.c.l.b16 %v147
    %v900 = vunpack.c.l.b16 %v148
    %v901 = vunpack.c.l.b16 %v149
    %v902 = vunpack.c.l.b16 %v150
    %v903 = vunpack.c.l.b16 %v151
    %v904 = vunpack.c.l.b16 %v152
    %v905 = vunpack.c.l.b16 %v153
    %v906 = vunpack.c.l.b16 %v154
    %v907 = vunpack.c.l.b16 %v155
    %v908 = vunpack.c.l.b16 %v156
    %v909 = vunpack.c.l.b16 %v157
    %v910 = vunpack.c.l.b16 %v158
    %v911 = vunpack.c.l.b16 %v159
    %v912 = vunpack.c.l.b16 %v160
    %v913 = vunpack.c.l.b16 %v161
    %v914 = vunpack.c.l.b16 %v162
    %v915 = vunpack.c.l.b16 %v163
    %v916 = vunpack.c.l.b16 %v164
    %v917 = vunpack.c.l.b16 %v165
    %v918 = vunpack.c.l.b16 %v166
    %v919 = vunpack.c.l.b16 %v167
    %v920 = vunpack.c.l.b16 %v168
    %v921 = vunpack.c.l.b16 %v169
    %v922 = vunpack.c.l.b16 %v170
    %v923 = vunpack.c.l.b16 %v171
    %v924 = vunpack.c.l.b16 %v172
    %v925 = vunpack.c.l.b16 %v173
    %v926 = vunpack.c.l.b16 %v174
    %v927 = vunpack.c.l.b16 %v175
    %v928 = vunpack.c.l.b16 %v176
    %v929 = vunpack.c.l.b16 %v177
    %v930 = vunpack.c.l.b16 %v178
    %v931 = vunpack.c.l.b16 %v179
    %v932 = vunpack.c.l.b16 %v180
    %v933 = vunpack.c.l.b16 %v181
    %v934 = vunpack.c.l.b16 %v182
    %v935 = vunpack.c.l.b16 %v183
    %v936 = vunpack.c.l.b16 %v184
    %v937 = vunpack.c.l.b16 %v185
    %v938 = vunpack.c.l.b16 %v186
    %v939 = vunpack.c.l.b16 %v187
    %v940 = vunpack.c.l.b16 %v188
    %v941 = vunpack.c.l.b16 %v189
    %v942 = vunpack.c.l.b16 %v190
    %v943 = vunpack.c.l.b16 %v191
    %v944 = vunpack.c.l.b16 %v192
    %v945 = vunpack.c.l.b16 %v193
    %v946 = vunpack.c.l.b16 %v194
    %v947 = vunpack.c.l.b16 %v195
    %v948 = vunpack.c.l.b16 %v196
    %v949 = vunpack.c.l.b16 %v197
    %v950 = vunpack.c.l.b16 %v198
    %v951 = vunpack.c.l.b16 %v199
    %v952 = vunpack.c.l.b16 %v200
    %v953 = vunpack.c.l.b16 %v201
    %v954 = vunpack.c.l.b16 %v202
    %v955 = vunpack.c.l.b16 %v203
    %v956 = vunpack.c.l.b16 %v204
    %v957 = vunpack.c.l.b16 %v205
    %v958 = vunpack.c.l.b16 %v206
    %v959 = vunpack.c.l.b16 %v207
    %v960 = vunpack.c.l.b16 %v208
    %v961 = vunpack.c.l.b16 %v209
    %v962 = vunpack.c.l.b16 %v210
    %v963 = vunpack.c.l.b16 %v211
    %v964 = vunpack.c.l.b16 %v212
    %v965 = vunpack.c.l.b16 %v213
    %v966 = vunpack.c.l.b16 %v214
    %v967 = vunpack.c.l.b16 %v215
    %v968 = vunpack.c.l.b16 %v216
    %v969 = vunpack.c.l.b16 %v217
    %v970 = vunpack.c.l.b16 %v218
    %v971 = vunpack.c.l.b16 %v219
    %v972 = vunpack.c.l.b16 %v220
    %v973 = vunpack.c.l.b16 %v221
    %v974 = vunpack.c.l.b16 %v222
    %v975 = vunpack.c.l.b16 %v223
    %v976 = vunpack.c.l.b16 %v224
    %v977 = vunpack.c.l.b16 %v225
    %v978 = vunpack.c.l.b16 %v226
    %v979 = vunpack.c.l.b16 %v227
    %v980 = vunpack.c.l.b16 %v228
    %v981 = vunpack.c.l.b16 %v229
    %v982 = vunpack.c.l.b16 %v230
    %v983 = vunpack.c.l.b16 %v231
    %v984 = vunpack.c.l.b16 %v232
    %v985 = vunpack.c.l.b16 %v233
    %v986 = vunpack.c.l.b16 %v234
    %v987 = vunpack.c.l.b16 %v235
    %v988 = vunpack.c.l.b16 %v236
    %v989 = vunpack.c.l.b16 %v237
    %v990 = vunpack.c.l.b16 %v238
    %v991 = vunpack.c.l.b16 %v239
    %v992 = vunpack.c.l.b16 %v240
    %v993 = vpack.c.b16 %v850, %v849
    %v994 = vpack.c.b16 %v852, %v851
    %v995 = vpack.c.b16 %v854, %v853
    %v996 = vpack.c.b16 %v856, %v855
    %v997 = vpack.c.b16 %v858, %v857
    %v998 = vpack.c.b16 %v860, %v859
    %v999 = vpack.c.b16 %v862, %v861
    %v1000 = vpack.c.b16 %v864, %v863
    %v1001 = vpack.c.b16 %v866, %v865
    %v1002 = vpack.c.b16 %v868, %v867
    %v1003 = vpack.c.b16 %v870, %v869
    %v1004 = vpack.c.b16 %v872, %v871
    %v1005 = vpack.c.b16 %v874, %v873
    %v1006 = vpack.c.b16 %v876, %v875
    %v1007 = vpack.c.b16 %v878, %v877
    %v1008 = vpack.c.b16 %v880, %v879
    %v1009 = vpack.c.b16 %v882, %v881
    %v1010 = vpack.c.b16 %v884, %v883
    %v1011 = vpack.c.b16 %v886, %v885
    %v1012 = vpack.c.b16 %v888, %v887
    %v1013 = vpack.c.b16 %v890, %v889
    %v1014 = vpack.c.b16 %v892, %v891
    %v1015 = vpack.c.b16 %v894, %v893
    %v1016 = vpack.c.b16 %v896, %v895
    %v1017 = vpack.c.b16 %v898, %v897
    %v1018 = vpack.c.b16 %v900, %v899
    %v1019 = vpack.c.b16 %v902, %v901
    %v1020 = vpack.c.b16 %v904, %v903
    %v1021 = vpack.c.b16 %v906, %v905
    %v1022 = vpack.c.b16 %v908, %v907
    %v1023 = vpack.c.b16 %v910, %v909
    %v1024 = vpack.c.b16 %v912, %v911
    %v1025 = vpack.c.b16 %v914, %v913
    %v1026 = vpack.c.b16 %v916, %v915
    %v1027 = vpack.c.b16 %v918, %v917
    %v1028 = vpack.c.b16 %v920, %v919
    %v1029 = vpack.c.b16 %v922, %v921
    %v1030 = vpack.c.b16 %v924, %v923
    %v1031 = vpack.c.b16 %v926, %v925
    %v1032 = vpack.c.b16 %v928, %v927
    %v1033 = vpack.c.b16 %v930, %v929
    %v1034 = vpack.c.b16 %v932, %v931
    %v1035 = vpack.c.b16 %v934, %v933
    %v1036 = vpack.c.b16 %v936, %v935
    %v1037 = vpack.c.b16 %v938, %v937
    %v1038 = vpack.c.b16 %v940, %v939
    %v1039 = vpack.c.b16 %v942, %v941
    %v1040 = vpack.c.b16 %v944, %v943
    %v1041 = vpack.c.b16 %v946, %v945
    %v1042 = vpack.c.b16 %v948, %v947
    %v1043 = vpack.c.b16 %v950, %v949
    %v1044 = vpack.c.b16 %v952, %v951
    %v1045 = vpack.c.b16 %v954, %v953
    %v1046 = vpack.c.b16 %v956, %v955
    %v1047 = vpack.c.b16 %v958, %v957
    %v1048 = vpack.c.b16 %v960, %v959
    %v1049 = vpack.c.b16 %v962, %v961
    %v1050 = vpack.c.b16 %v964, %v963
    %v1051 = vpack.c.b16 %v966, %v965
    %v1052 = vpack.c.b16 %v968, %v967
    %v1053 = vpack.c.b16 %v970, %v969
    %v1054 = vpack.c.b16 %v972, %v971
    %v1055 = vpack.c.b16 %v974, %v973
    %v1056 = vpack.c.b16 %v976, %v975
    %v1057 = vpack.c.b16 %v978, %v977
    %v1058 = vpack.c.b16 %v980, %v979
    %v1059 = vpack.c.b16 %v982, %v981
    %v1060 = vpack.c.b16 %v984, %v983
    %v1061 = vpack.c.b16 %v986, %v985
    %v1062 = vpack.c.b16 %v988, %v987
    %v1063 = vpack.c.b16 %v990, %v989
    %v1064 = vpack.c.b16 %v992, %v991
    %1137 = vmatprep.subr.bf16.mxu0 0
    %1138 = vmatpush1.bf16.msra.mxu0 %v1000
    %1139 = vmatprep.subr.bf16.mxu0 0
    %1140 = vmatpush1.bf16.msra.mxu0 %v999
    %1141 = vmatprep.subr.bf16.mxu0 0
    %1142 = vmatpush1.bf16.msra.mxu0 %v998
    %1143 = vmatprep.subr.bf16.mxu0 0
    %1144 = vmatpush1.bf16.msra.mxu0 %v997
    %1145 = vmatprep.subr.bf16.mxu0 0
    %1146 = vmatpush1.bf16.msra.mxu0 %v996
    %1147 = vmatprep.subr.bf16.mxu0 0
    %1148 = vmatpush1.bf16.msra.mxu0 %v995
    %1149 = vmatprep.subr.bf16.mxu0 0
    %1150 = vmatpush1.bf16.msra.mxu0 %v994
    %1151 = vmatprep.subr.bf16.mxu0 0
    %1152 = vmatpush1.bf16.msra.mxu0 %v993
    %1153 = vmatprep.subr.bf16.mxu0 0
    %1154 = vmatpush2.bf16.msra.mxu0 %v1008
    %1155 = vmatprep.subr.bf16.mxu0 0
    %1156 = vmatpush2.bf16.msra.mxu0 %v1007
    %1157 = vmatprep.subr.bf16.mxu0 0
    %1158 = vmatpush2.bf16.msra.mxu0 %v1006
    %1159 = vmatprep.subr.bf16.mxu0 0
    %1160 = vmatpush2.bf16.msra.mxu0 %v1005
    %1161 = vmatprep.subr.bf16.mxu0 0
    %1162 = vmatpush2.bf16.msra.mxu0 %v1004
    %1163 = vmatprep.subr.bf16.mxu0 0
    %1164 = vmatpush2.bf16.msra.mxu0 %v1003
    %1165 = vmatprep.subr.bf16.mxu0 0
    %1166 = vmatpush2.bf16.msra.mxu0 %v1002
    %1167 = vmatprep.subr.bf16.mxu0 0
    %1168 = vmatpush2.bf16.msra.mxu0 %v1001
    %1169 = vmatprep.mubr.bf16.mxu0 %v562
    %1170 = vmatmul.mubr.bf16.gmra.mxu0 %v561
    %v1171 = vpop.f32.mrf.mxu0
    %v1172 = vadd.f32 %v260, %v1171
    %v1173 = vpop.f32.mrf.mxu0
    %v1174 = vpop.f32.mrf.mxu0
    %v1175 = vadd.f32 %v265, %v1174
    %v1176 = vpop.f32.mrf.mxu0
    %1177 = vmatprep.mubr.bf16.mxu0 %v571
    %1178 = vmatmul.mubr.bf16.gmra.mxu0 %v570
    %v1179 = vpop.f32.mrf.mxu0
    %v1180 = vadd.f32 %v270, %v1179
    %v1181 = vpop.f32.mrf.mxu0
    %v1182 = vpop.f32.mrf.mxu0
    %v1183 = vadd.f32 %v275, %v1182
    %v1184 = vpop.f32.mrf.mxu0
    %1185 = vmatprep.mubr.bf16.mxu0 %v580
    %1186 = vmatmul.mubr.bf16.gmra.mxu0 %v579
    %v1187 = vpop.f32.mrf.mxu0
    %v1188 = vadd.f32 %v280, %v1187
    %v1189 = vpop.f32.mrf.mxu0
    %v1190 = vpop.f32.mrf.mxu0
    %v1191 = vadd.f32 %v285, %v1190
    %v1192 = vpop.f32.mrf.mxu0
    %1193 = vmatprep.mubr.bf16.mxu0 %v589
    %1194 = vmatmul.mubr.bf16.gmra.mxu0 %v588
    %v1195 = vpop.f32.mrf.mxu0
    %v1196 = vadd.f32 %v290, %v1195
    %v1197 = vpop.f32.mrf.mxu0
    %v1198 = vpop.f32.mrf.mxu0
    %v1199 = vadd.f32 %v295, %v1198
    %v1200 = vpop.f32.mrf.mxu0
    %1201 = vmatprep.mubr.bf16.mxu0 %v598
    %1202 = vmatmul.mubr.bf16.gmra.mxu0 %v597
    %v1203 = vpop.f32.mrf.mxu0
    %v1204 = vadd.f32 %v300, %v1203
    %v1205 = vpop.f32.mrf.mxu0
    %v1206 = vpop.f32.mrf.mxu0
    %v1207 = vadd.f32 %v305, %v1206
    %v1208 = vpop.f32.mrf.mxu0
    %1209 = vmatprep.mubr.bf16.mxu0 %v607
    %1210 = vmatmul.mubr.bf16.gmra.mxu0 %v606
    %v1211 = vpop.f32.mrf.mxu0
    %v1212 = vadd.f32 %v310, %v1211
    %v1213 = vpop.f32.mrf.mxu0
    %v1214 = vpop.f32.mrf.mxu0
    %v1215 = vadd.f32 %v315, %v1214
    %v1216 = vpop.f32.mrf.mxu0
    %1217 = vmatprep.mubr.bf16.mxu0 %v616
    %1218 = vmatmul.mubr.bf16.gmra.mxu0 %v615
    %v1219 = vpop.f32.mrf.mxu0
    %v1220 = vadd.f32 %v320, %v1219
    %v1221 = vpop.f32.mrf.mxu0
    %v1222 = vpop.f32.mrf.mxu0
    %v1223 = vadd.f32 %v325, %v1222
    %v1224 = vpop.f32.mrf.mxu0
    %1225 = vmatprep.mubr.bf16.mxu0 %v625
    %1226 = vmatmul.mubr.bf16.gmra.mxu0 %v624
    %v1227 = vpop.f32.mrf.mxu0
    %v1228 = vadd.f32 %v330, %v1227
    %v1229 = vpop.f32.mrf.mxu0
    %v1230 = vpop.f32.mrf.mxu0
    %v1231 = vadd.f32 %v335, %v1230
    %v1232 = vpop.f32.mrf.mxu0
    %1233 = vdwg.mxu0
    %1234 = vmatprep.subr.bf16.mxu0 0
    %1235 = vmatpush1.bf16.msra.mxu0 %v1016
    %1236 = vmatprep.subr.bf16.mxu0 0
    %1237 = vmatpush1.bf16.msra.mxu0 %v1015
    %1238 = vmatprep.subr.bf16.mxu0 0
    %1239 = vmatpush1.bf16.msra.mxu0 %v1014
    %1240 = vmatprep.subr.bf16.mxu0 0
    %1241 = vmatpush1.bf16.msra.mxu0 %v1013
    %1242 = vmatprep.subr.bf16.mxu0 0
    %1243 = vmatpush1.bf16.msra.mxu0 %v1012
    %1244 = vmatprep.subr.bf16.mxu0 0
    %1245 = vmatpush1.bf16.msra.mxu0 %v1011
    %1246 = vmatprep.subr.bf16.mxu0 0
    %1247 = vmatpush1.bf16.msra.mxu0 %v1010
    %1248 = vmatprep.subr.bf16.mxu0 0
    %1249 = vmatpush1.bf16.msra.mxu0 %v1009
    %1250 = vmatprep.subr.bf16.mxu0 0
    %1251 = vmatpush2.bf16.msra.mxu0 %v1024
    %1252 = vmatprep.subr.bf16.mxu0 0
    %1253 = vmatpush2.bf16.msra.mxu0 %v1023
    %1254 = vmatprep.subr.bf16.mxu0 0
    %1255 = vmatpush2.bf16.msra.mxu0 %v1022
    %1256 = vmatprep.subr.bf16.mxu0 0
    %1257 = vmatpush2.bf16.msra.mxu0 %v1021
    %1258 = vmatprep.subr.bf16.mxu0 0
    %1259 = vmatpush2.bf16.msra.mxu0 %v1020
    %1260 = vmatprep.subr.bf16.mxu0 0
    %1261 = vmatpush2.bf16.msra.mxu0 %v1019
    %1262 = vmatprep.subr.bf16.mxu0 0
    %1263 = vmatpush2.bf16.msra.mxu0 %v1018
    %1264 = vmatprep.subr.bf16.mxu0 0
    %1265 = vmatpush2.bf16.msra.mxu0 %v1017
    %1266 = vmatprep.mubr.bf16.mxu0 %v564
    %1267 = vmatmul.mubr.bf16.gmra.mxu0 %v563
    %v1268 = vpop.f32.mrf.mxu0
    %v1269 = vadd.f32 %v1172, %v1268
    %v1270 = vpop.f32.mrf.mxu0
    %v1271 = vpop.f32.mrf.mxu0
    %v1272 = vadd.f32 %v1175, %v1271
    %v1273 = vpop.f32.mrf.mxu0
    %1274 = vmatprep.mubr.bf16.mxu0 %v573
    %1275 = vmatmul.mubr.bf16.gmra.mxu0 %v572
    %v1276 = vpop.f32.mrf.mxu0
    %v1277 = vadd.f32 %v1180, %v1276
    %v1278 = vpop.f32.mrf.mxu0
    %v1279 = vpop.f32.mrf.mxu0
    %v1280 = vadd.f32 %v1183, %v1279
    %v1281 = vpop.f32.mrf.mxu0
    %1282 = vmatprep.mubr.bf16.mxu0 %v582
    %1283 = vmatmul.mubr.bf16.gmra.mxu0 %v581
    %v1284 = vpop.f32.mrf.mxu0
    %v1285 = vadd.f32 %v1188, %v1284
    %v1286 = vpop.f32.mrf.mxu0
    %v1287 = vpop.f32.mrf.mxu0
    %v1288 = vadd.f32 %v1191, %v1287
    %v1289 = vpop.f32.mrf.mxu0
    %1290 = vmatprep.mubr.bf16.mxu0 %v591
    %1291 = vmatmul.mubr.bf16.gmra.mxu0 %v590
    %v1292 = vpop.f32.mrf.mxu0
    %v1293 = vadd.f32 %v1196, %v1292
    %v1294 = vpop.f32.mrf.mxu0
    %v1295 = vpop.f32.mrf.mxu0
    %v1296 = vadd.f32 %v1199, %v1295
    %v1297 = vpop.f32.mrf.mxu0
    %1298 = vmatprep.mubr.bf16.mxu0 %v600
    %1299 = vmatmul.mubr.bf16.gmra.mxu0 %v599
    %v1300 = vpop.f32.mrf.mxu0
    %v1301 = vadd.f32 %v1204, %v1300
    %v1302 = vpop.f32.mrf.mxu0
    %v1303 = vpop.f32.mrf.mxu0
    %v1304 = vadd.f32 %v1207, %v1303
    %v1305 = vpop.f32.mrf.mxu0
    %1306 = vmatprep.mubr.bf16.mxu0 %v609
    %1307 = vmatmul.mubr.bf16.gmra.mxu0 %v608
    %v1308 = vpop.f32.mrf.mxu0
    %v1309 = vadd.f32 %v1212, %v1308
    %v1310 = vpop.f32.mrf.mxu0
    %v1311 = vpop.f32.mrf.mxu0
    %v1312 = vadd.f32 %v1215, %v1311
    %v1313 = vpop.f32.mrf.mxu0
    %1314 = vmatprep.mubr.bf16.mxu0 %v618
    %1315 = vmatmul.mubr.bf16.gmra.mxu0 %v617
    %v1316 = vpop.f32.mrf.mxu0
    %v1317 = vadd.f32 %v1220, %v1316
    %v1318 = vpop.f32.mrf.mxu0
    %v1319 = vpop.f32.mrf.mxu0
    %v1320 = vadd.f32 %v1223, %v1319
    %v1321 = vpop.f32.mrf.mxu0
    %1322 = vmatprep.mubr.bf16.mxu0 %v627
    %1323 = vmatmul.mubr.bf16.gmra.mxu0 %v626
    %v1324 = vpop.f32.mrf.mxu0
    %v1325 = vadd.f32 %v1228, %v1324
    %v1326 = vpop.f32.mrf.mxu0
    %v1327 = vpop.f32.mrf.mxu0
    %v1328 = vadd.f32 %v1231, %v1327
    %v1329 = vpop.f32.mrf.mxu0
    %1330 = vdwg.mxu0
    %1331 = vmatprep.subr.bf16.mxu0 0
    %1332 = vmatpush1.bf16.msra.mxu0 %v1032
    %1333 = vmatprep.subr.bf16.mxu0 0
    %1334 = vmatpush1.bf16.msra.mxu0 %v1031
    %1335 = vmatprep.subr.bf16.mxu0 0
    %1336 = vmatpush1.bf16.msra.mxu0 %v1030
    %1337 = vmatprep.subr.bf16.mxu0 0
    %1338 = vmatpush1.bf16.msra.mxu0 %v1029
    %1339 = vmatprep.subr.bf16.mxu0 0
    %1340 = vmatpush1.bf16.msra.mxu0 %v1028
    %1341 = vmatprep.subr.bf16.mxu0 0
    %1342 = vmatpush1.bf16.msra.mxu0 %v1027
    %1343 = vmatprep.subr.bf16.mxu0 0
    %1344 = vmatpush1.bf16.msra.mxu0 %v1026
    %1345 = vmatprep.subr.bf16.mxu0 0
    %1346 = vmatpush1.bf16.msra.mxu0 %v1025
    %1347 = vmatprep.subr.bf16.mxu0 0
    %1348 = vmatpush2.bf16.msra.mxu0 %v1040
    %1349 = vmatprep.subr.bf16.mxu0 0
    %1350 = vmatpush2.bf16.msra.mxu0 %v1039
    %1351 = vmatprep.subr.bf16.mxu0 0
    %1352 = vmatpush2.bf16.msra.mxu0 %v1038
    %1353 = vmatprep.subr.bf16.mxu0 0
    %1354 = vmatpush2.bf16.msra.mxu0 %v1037
    %1355 = vmatprep.subr.bf16.mxu0 0
    %1356 = vmatpush2.bf16.msra.mxu0 %v1036
    %1357 = vmatprep.subr.bf16.mxu0 0
    %1358 = vmatpush2.bf16.msra.mxu0 %v1035
    %1359 = vmatprep.subr.bf16.mxu0 0
    %1360 = vmatpush2.bf16.msra.mxu0 %v1034
    %1361 = vmatprep.subr.bf16.mxu0 0
    %1362 = vmatpush2.bf16.msra.mxu0 %v1033
    %1363 = vmatprep.mubr.bf16.mxu0 %v566
    %1364 = vmatmul.mubr.bf16.gmra.mxu0 %v565
    %v1365 = vpop.f32.mrf.mxu0
    %v1366 = vadd.f32 %v1269, %v1365
    %v1367 = vpop.f32.mrf.mxu0
    %v1368 = vpop.f32.mrf.mxu0
    %v1369 = vadd.f32 %v1272, %v1368
    %v1370 = vpop.f32.mrf.mxu0
    %1371 = vmatprep.mubr.bf16.mxu0 %v575
    %1372 = vmatmul.mubr.bf16.gmra.mxu0 %v574
    %v1373 = vpop.f32.mrf.mxu0
    %v1374 = vadd.f32 %v1277, %v1373
    %v1375 = vpop.f32.mrf.mxu0
    %v1376 = vpop.f32.mrf.mxu0
    %v1377 = vadd.f32 %v1280, %v1376
    %v1378 = vpop.f32.mrf.mxu0
    %1379 = vmatprep.mubr.bf16.mxu0 %v584
    %1380 = vmatmul.mubr.bf16.gmra.mxu0 %v583
    %v1381 = vpop.f32.mrf.mxu0
    %v1382 = vadd.f32 %v1285, %v1381
    %v1383 = vpop.f32.mrf.mxu0
    %v1384 = vpop.f32.mrf.mxu0
    %v1385 = vadd.f32 %v1288, %v1384
    %v1386 = vpop.f32.mrf.mxu0
    %1387 = vmatprep.mubr.bf16.mxu0 %v593
    %1388 = vmatmul.mubr.bf16.gmra.mxu0 %v592
    %v1389 = vpop.f32.mrf.mxu0
    %v1390 = vadd.f32 %v1293, %v1389
    %v1391 = vpop.f32.mrf.mxu0
    %v1392 = vpop.f32.mrf.mxu0
    %v1393 = vadd.f32 %v1296, %v1392
    %v1394 = vpop.f32.mrf.mxu0
    %1395 = vmatprep.mubr.bf16.mxu0 %v602
    %1396 = vmatmul.mubr.bf16.gmra.mxu0 %v601
    %v1397 = vpop.f32.mrf.mxu0
    %v1398 = vadd.f32 %v1301, %v1397
    %v1399 = vpop.f32.mrf.mxu0
    %v1400 = vpop.f32.mrf.mxu0
    %v1401 = vadd.f32 %v1304, %v1400
    %v1402 = vpop.f32.mrf.mxu0
    %1403 = vmatprep.mubr.bf16.mxu0 %v611
    %1404 = vmatmul.mubr.bf16.gmra.mxu0 %v610
    %v1405 = vpop.f32.mrf.mxu0
    %v1406 = vadd.f32 %v1309, %v1405
    %v1407 = vpop.f32.mrf.mxu0
    %v1408 = vpop.f32.mrf.mxu0
    %v1409 = vadd.f32 %v1312, %v1408
    %v1410 = vpop.f32.mrf.mxu0
    %1411 = vmatprep.mubr.bf16.mxu0 %v620
    %1412 = vmatmul.mubr.bf16.gmra.mxu0 %v619
    %v1413 = vpop.f32.mrf.mxu0
    %v1414 = vadd.f32 %v1317, %v1413
    %v1415 = vpop.f32.mrf.mxu0
    %v1416 = vpop.f32.mrf.mxu0
    %v1417 = vadd.f32 %v1320, %v1416
    %v1418 = vpop.f32.mrf.mxu0
    %1419 = vmatprep.mubr.bf16.mxu0 %v629
    %1420 = vmatmul.mubr.bf16.gmra.mxu0 %v628
    %v1421 = vpop.f32.mrf.mxu0
    %v1422 = vadd.f32 %v1325, %v1421
    %v1423 = vpop.f32.mrf.mxu0
    %v1424 = vpop.f32.mrf.mxu0
    %v1425 = vadd.f32 %v1328, %v1424
    %v1426 = vpop.f32.mrf.mxu0
    %1427 = vdwg.mxu0
    %1428 = vmatprep.subr.bf16.mxu0 0
    %1429 = vmatpush1.bf16.msra.mxu0 %v1048
    %1430 = vmatprep.subr.bf16.mxu0 0
    %1431 = vmatpush1.bf16.msra.mxu0 %v1047
    %1432 = vmatprep.subr.bf16.mxu0 0
    %1433 = vmatpush1.bf16.msra.mxu0 %v1046
    %1434 = vmatprep.subr.bf16.mxu0 0
    %1435 = vmatpush1.bf16.msra.mxu0 %v1045
    %1436 = vmatprep.subr.bf16.mxu0 0
    %1437 = vmatpush1.bf16.msra.mxu0 %v1044
    %1438 = vmatprep.subr.bf16.mxu0 0
    %1439 = vmatpush1.bf16.msra.mxu0 %v1043
    %1440 = vmatprep.subr.bf16.mxu0 0
    %1441 = vmatpush1.bf16.msra.mxu0 %v1042
    %1442 = vmatprep.subr.bf16.mxu0 0
    %1443 = vmatpush1.bf16.msra.mxu0 %v1041
    %1444 = vmatprep.subr.bf16.mxu0 0
    %1445 = vmatpush2.bf16.msra.mxu0 %v1056
    %1446 = vmatprep.subr.bf16.mxu0 0
    %1447 = vmatpush2.bf16.msra.mxu0 %v1055
    %1448 = vmatprep.subr.bf16.mxu0 0
    %1449 = vmatpush2.bf16.msra.mxu0 %v1054
    %1450 = vmatprep.subr.bf16.mxu0 0
    %1451 = vmatpush2.bf16.msra.mxu0 %v1053
    %1452 = vmatprep.subr.bf16.mxu0 0
    %1453 = vmatpush2.bf16.msra.mxu0 %v1052
    %1454 = vmatprep.subr.bf16.mxu0 0
    %1455 = vmatpush2.bf16.msra.mxu0 %v1051
    %1456 = vmatprep.subr.bf16.mxu0 0
    %1457 = vmatpush2.bf16.msra.mxu0 %v1050
    %1458 = vmatprep.subr.bf16.mxu0 0
    %1459 = vmatpush2.bf16.msra.mxu0 %v1049
    %1460 = vmatprep.mubr.bf16.mxu0 %v568
    %1461 = vmatmul.mubr.bf16.gmra.mxu0 %v567
    %v1462 = vpop.f32.mrf.mxu0
    %v1463 = vadd.f32 %v1366, %v1462
    %v1464 = vpop.f32.mrf.mxu0
    %v1465 = vpop.f32.mrf.mxu0
    %v1466 = vadd.f32 %v1369, %v1465
    %v1467 = vpop.f32.mrf.mxu0
    %1468 = vmatprep.mubr.bf16.mxu0 %v577
    %1469 = vmatmul.mubr.bf16.gmra.mxu0 %v576
    %v1470 = vpop.f32.mrf.mxu0
    %v1471 = vadd.f32 %v1374, %v1470
    %v1472 = vpop.f32.mrf.mxu0
    %v1473 = vpop.f32.mrf.mxu0
    %v1474 = vadd.f32 %v1377, %v1473
    %v1475 = vpop.f32.mrf.mxu0
    %1476 = vmatprep.mubr.bf16.mxu0 %v586
    %1477 = vmatmul.mubr.bf16.gmra.mxu0 %v585
    %v1478 = vpop.f32.mrf.mxu0
    %v1479 = vadd.f32 %v1382, %v1478
    %v1480 = vpop.f32.mrf.mxu0
    %v1481 = vpop.f32.mrf.mxu0
    %v1482 = vadd.f32 %v1385, %v1481
    %v1483 = vpop.f32.mrf.mxu0
    %1484 = vmatprep.mubr.bf16.mxu0 %v595
    %1485 = vmatmul.mubr.bf16.gmra.mxu0 %v594
    %v1486 = vpop.f32.mrf.mxu0
    %v1487 = vadd.f32 %v1390, %v1486
    %v1488 = vpop.f32.mrf.mxu0
    %v1489 = vpop.f32.mrf.mxu0
    %v1490 = vadd.f32 %v1393, %v1489
    %v1491 = vpop.f32.mrf.mxu0
    %1492 = vmatprep.mubr.bf16.mxu0 %v604
    %1493 = vmatmul.mubr.bf16.gmra.mxu0 %v603
    %v1494 = vpop.f32.mrf.mxu0
    %v1495 = vadd.f32 %v1398, %v1494
    %v1496 = vpop.f32.mrf.mxu0
    %v1497 = vpop.f32.mrf.mxu0
    %v1498 = vadd.f32 %v1401, %v1497
    %v1499 = vpop.f32.mrf.mxu0
    %1500 = vmatprep.mubr.bf16.mxu0 %v613
    %1501 = vmatmul.mubr.bf16.gmra.mxu0 %v612
    %v1502 = vpop.f32.mrf.mxu0
    %v1503 = vadd.f32 %v1406, %v1502
    %v1504 = vpop.f32.mrf.mxu0
    %v1505 = vpop.f32.mrf.mxu0
    %v1506 = vadd.f32 %v1409, %v1505
    %v1507 = vpop.f32.mrf.mxu0
    %1508 = vmatprep.mubr.bf16.mxu0 %v622
    %1509 = vmatmul.mubr.bf16.gmra.mxu0 %v621
    %v1510 = vpop.f32.mrf.mxu0
    %v1511 = vadd.f32 %v1414, %v1510
    %v1512 = vpop.f32.mrf.mxu0
    %v1513 = vpop.f32.mrf.mxu0
    %v1514 = vadd.f32 %v1417, %v1513
    %v1515 = vpop.f32.mrf.mxu0
    %1516 = vmatprep.mubr.bf16.mxu0 %v631
    %1517 = vmatmul.mubr.bf16.gmra.mxu0 %v630
    %v1518 = vpop.f32.mrf.mxu0
    %v1519 = vadd.f32 %v1422, %v1518
    %v1520 = vpop.f32.mrf.mxu0
    %v1521 = vpop.f32.mrf.mxu0
    %v1522 = vadd.f32 %v1425, %v1521
    %v1523 = vpop.f32.mrf.mxu0
    %1524 = vdwg.mxu0
    %1525 = vmatprep.subr.bf16.mxu0 0
    %1526 = vmatpush1.bf16.msra.mxu0 %v1064
    %1527 = vmatprep.subr.bf16.mxu0 0
    %1528 = vmatpush1.bf16.msra.mxu0 %v1063
    %1529 = vmatprep.subr.bf16.mxu0 0
    %1530 = vmatpush1.bf16.msra.mxu0 %v1062
    %1531 = vmatprep.subr.bf16.mxu0 0
    %1532 = vmatpush1.bf16.msra.mxu0 %v1061
    %1533 = vmatprep.subr.bf16.mxu0 0
    %1534 = vmatpush1.bf16.msra.mxu0 %v1060
    %1535 = vmatprep.subr.bf16.mxu0 0
    %1536 = vmatpush1.bf16.msra.mxu0 %v1059
    %1537 = vmatprep.subr.bf16.mxu0 0
    %1538 = vmatpush1.bf16.msra.mxu0 %v1058
    %1539 = vmatprep.subr.bf16.mxu0 0
    %1540 = vmatpush1.bf16.msra.mxu0 %v1057
    %1541 = vmatprep.subr.bf16.mxu0 0
    %1542 = vmatpush2.bf16.msra.mxu0 0
    %1543 = vmatprep.subr.bf16.mxu0 0
    %1544 = vmatpush2.bf16.msra.mxu0 0
    %1545 = vmatprep.subr.bf16.mxu0 0
    %1546 = vmatpush2.bf16.msra.mxu0 0
    %1547 = vmatprep.subr.bf16.mxu0 0
    %1548 = vmatpush2.bf16.msra.mxu0 0
    %1549 = vmatprep.subr.bf16.mxu0 0
    %1550 = vmatpush2.bf16.msra.mxu0 0
    %1551 = vmatprep.subr.bf16.mxu0 0
    %1552 = vmatpush2.bf16.msra.mxu0 0
    %1553 = vmatprep.subr.bf16.mxu0 0
    %1554 = vmatpush2.bf16.msra.mxu0 0
    %1555 = vmatprep.subr.bf16.mxu0 0
    %1556 = vmatpush2.bf16.msra.mxu0 0
    %1557 = vmatprep.mubr.bf16.mxu0 0
    %1558 = vmatmul.mubr.bf16.gmra.mxu0 %v569
    %v1559 = vpop.f32.mrf.mxu0
    %v1560 = vadd.f32 %v1463, %v1559
    %v1561 = vpop.f32.mrf.mxu0
    %v1562 = vpop.f32.mrf.mxu0
    %v1563 = vadd.f32 %v1466, %v1562
    %v1564 = vpop.f32.mrf.mxu0
    %1565 = vmatprep.mubr.bf16.mxu0 0
    %1566 = vmatmul.mubr.bf16.gmra.mxu0 %v578
    %v1567 = vpop.f32.mrf.mxu0
    %v1568 = vadd.f32 %v1471, %v1567
    %v1569 = vpop.f32.mrf.mxu0
    %v1570 = vpop.f32.mrf.mxu0
    %v1571 = vadd.f32 %v1474, %v1570
    %v1572 = vpop.f32.mrf.mxu0
    %1573 = vmatprep.mubr.bf16.mxu0 0
    %1574 = vmatmul.mubr.bf16.gmra.mxu0 %v587
    %v1575 = vpop.f32.mrf.mxu0
    %v1576 = vadd.f32 %v1479, %v1575
    %v1577 = vpop.f32.mrf.mxu0
    %v1578 = vpop.f32.mrf.mxu0
    %v1579 = vadd.f32 %v1482, %v1578
    %v1580 = vpop.f32.mrf.mxu0
    %1581 = vmatprep.mubr.bf16.mxu0 0
    %1582 = vmatmul.mubr.bf16.gmra.mxu0 %v596
    %v1583 = vpop.f32.mrf.mxu0
    %v1584 = vadd.f32 %v1487, %v1583
    %v1585 = vpop.f32.mrf.mxu0
    %v1586 = vpop.f32.mrf.mxu0
    %v1587 = vadd.f32 %v1490, %v1586
    %v1588 = vpop.f32.mrf.mxu0
    %1589 = vmatprep.mubr.bf16.mxu0 0
    %1590 = vmatmul.mubr.bf16.gmra.mxu0 %v605
    %v1591 = vpop.f32.mrf.mxu0
    %v1592 = vadd.f32 %v1495, %v1591
    %v1593 = vpop.f32.mrf.mxu0
    %v1594 = vpop.f32.mrf.mxu0
    %v1595 = vadd.f32 %v1498, %v1594
    %v1596 = vpop.f32.mrf.mxu0
    %1597 = vmatprep.mubr.bf16.mxu0 0
    %1598 = vmatmul.mubr.bf16.gmra.mxu0 %v614
    %v1599 = vpop.f32.mrf.mxu0
    %v1600 = vadd.f32 %v1503, %v1599
    %v1601 = vpop.f32.mrf.mxu0
    %v1602 = vpop.f32.mrf.mxu0
    %v1603 = vadd.f32 %v1506, %v1602
    %v1604 = vpop.f32.mrf.mxu0
    %1605 = vmatprep.mubr.bf16.mxu0 0
    %1606 = vmatmul.mubr.bf16.gmra.mxu0 %v623
    %v1607 = vpop.f32.mrf.mxu0
    %v1608 = vadd.f32 %v1511, %v1607
    %v1609 = vpop.f32.mrf.mxu0
    %v1610 = vpop.f32.mrf.mxu0
    %v1611 = vadd.f32 %v1514, %v1610
    %v1612 = vpop.f32.mrf.mxu0
    %1613 = vmatprep.mubr.bf16.mxu0 0
    %1614 = vmatmul.mubr.bf16.gmra.mxu0 %v632
    %v1615 = vpop.f32.mrf.mxu0
    %v1616 = vadd.f32 %v1519, %v1615
    %v1617 = vpop.f32.mrf.mxu0
    %v1618 = vpop.f32.mrf.mxu0
    %v1619 = vadd.f32 %v1522, %v1618
    %v1620 = vpop.f32.mrf.mxu0
    %1621 = vdwg.mxu0
    %v1622 = vmax.f32 %v1560, 0.0
    %v1623 = vmax.f32 %v1563, 0.0
    %v1624 = vmax.f32 %v1568, 0.0
    %v1625 = vmax.f32 %v1571, 0.0
    %v1626 = vmax.f32 %v1576, 0.0
    %v1627 = vmax.f32 %v1579, 0.0
    %v1628 = vmax.f32 %v1584, 0.0
    %v1629 = vmax.f32 %v1587, 0.0
    %v1630 = vmax.f32 %v1592, 0.0
    %v1631 = vmax.f32 %v1595, 0.0
    %v1632 = vmax.f32 %v1600, 0.0
    %v1633 = vmax.f32 %v1603, 0.0
    %v1634 = vmax.f32 %v1608, 0.0
    %v1635 = vmax.f32 %v1611, 0.0
    %v1636 = vmax.f32 %v1616, 0.0
    %v1637 = vmax.f32 %v1619, 0.0
    %v1638 = vpack.c.bf16 %v1623, %v1622
    %v1639 = vpack.c.bf16 %v1625, %v1624
    %v1640 = vpack.c.bf16 %v1627, %v1626
    %v1641 = vpack.c.bf16 %v1629, %v1628
    %v1642 = vpack.c.bf16 %v1631, %v1630
    %v1643 = vpack.c.bf16 %v1633, %v1632
    %v1644 = vpack.c.bf16 %v1635, %v1634
    %v1645 = vpack.c.bf16 %v1637, %v1636
    %v1654 = vunpack.c.l.b16 %v1638
    %v1655 = vunpack.c.h.b16 %v1638
    %v1656 = vunpack.c.l.b16 %v1639
    %v1657 = vunpack.c.h.b16 %v1639
    %v1658 = vunpack.c.l.b16 %v1640
    %v1659 = vunpack.c.h.b16 %v1640
    %v1660 = vunpack.c.l.b16 %v1641
    %v1661 = vunpack.c.h.b16 %v1641
    %v1662 = vunpack.c.l.b16 %v1642
    %v1663 = vunpack.c.h.b16 %v1642
    %v1664 = vunpack.c.l.b16 %v1643
    %v1665 = vunpack.c.h.b16 %v1643
    %v1666 = vunpack.c.l.b16 %v1644
    %v1667 = vunpack.c.h.b16 %v1644
    %v1668 = vunpack.c.l.b16 %v1645
    %v1669 = vunpack.c.h.b16 %v1645
    %v1670 = vpack.c.b16 %v1654, %v1654
    %v1671 = vpack.c.b16 %v1655, %v1655
    %v1672 = vpack.c.b16 %v1656, %v1656
    %v1673 = vpack.c.b16 %v1657, %v1657
    %v1674 = vpack.c.b16 %v1658, %v1658
    %v1675 = vpack.c.b16 %v1659, %v1659
    %v1676 = vpack.c.b16 %v1660, %v1660
    %v1677 = vpack.c.b16 %v1661, %v1661
    %v1678 = vpack.c.b16 %v1662, %v1662
    %v1679 = vpack.c.b16 %v1663, %v1663
    %v1680 = vpack.c.b16 %v1664, %v1664
    %v1681 = vpack.c.b16 %v1665, %v1665
    %v1682 = vpack.c.b16 %v1666, %v1666
    %v1683 = vpack.c.b16 %v1667, %v1667
    %v1684 = vpack.c.b16 %v1668, %v1668
    %v1685 = vpack.c.b16 %v1669, %v1669
    %vm1702 = vcmask 11264
    %1703 = vst.msk [vmem:[#allocation2] sm:$0xf] %vm1702, %v1670
    %1704 = vst.msk [vmem:[#allocation2 + $0x4] sm:$0xf] %vm1702, %v1671
    %1705 = vst.msk [vmem:[#allocation2 + $0x8] sm:$0xf] %vm1702, %v1672
    %1706 = vst.msk [vmem:[#allocation2 + $0xc] sm:$0xf] %vm1702, %v1673
    %1707 = vst.msk [vmem:[#allocation2 + $0x10] sm:$0xf] %vm1702, %v1674
    %1708 = vst.msk [vmem:[#allocation2 + $0x14] sm:$0xf] %vm1702, %v1675
    %1709 = vst.msk [vmem:[#allocation2 + $0x18] sm:$0xf] %vm1702, %v1676
    %1710 = vst.msk [vmem:[#allocation2 + $0x1c] sm:$0xf] %vm1702, %v1677
    %1711 = vst.msk [vmem:[#allocation2 + $0x20] sm:$0xf] %vm1702, %v1678
    %1712 = vst.msk [vmem:[#allocation2 + $0x24] sm:$0xf] %vm1702, %v1679
    %1713 = vst.msk [vmem:[#allocation2 + $0x28] sm:$0xf] %vm1702, %v1680
    %1714 = vst.msk [vmem:[#allocation2 + $0x2c] sm:$0xf] %vm1702, %v1681
    %1715 = vst.msk [vmem:[#allocation2 + $0x30] sm:$0xf] %vm1702, %v1682
    %1716 = vst.msk [vmem:[#allocation2 + $0x34] sm:$0xf] %vm1702, %v1683
    %1717 = vst.msk [vmem:[#allocation2 + $0x38] sm:$0xf] %vm1702, %v1684
    %1718 = vst.msk [vmem:[#allocation2 + $0x3c] sm:$0xf] %vm1702, %v1685
    // Predicated region
    $region14: #{_lambda_.43} parent=1 // pred_check
      _
    $region15: #{_lambda_.43} parent=1 // pred_check_branch
      %1720 = sbr.rel (0) target = $region17
    $region16: #{_lambda_.43} parent=1 // pred_region
      // Predicated region
      $region18: #{_lambda_.43} parent=16 // pred_check
        _
      $region19: #{_lambda_.43} parent=16 // pred_check_branch
        %1722 = sbr.rel (0) target = $region21
      $region20: #{_lambda_.43} parent=16 // pred_region
        // Predicated region
        $region22: #{_lambda_.43} parent=20 // pred_check
          _
        $region23: #{_lambda_.43} parent=20 // pred_check_branch
          %1724 = sbr.rel target = $region25
        $region24: #{_lambda_.43} parent=20 // pred_region
          // Predicated region
          $region37: #{_lambda_.43} parent=24 // pred_check
            _
          $region38: #{_lambda_.43} parent=24 // pred_check_branch
            %1770 = sbr.rel (0) target = $region40
          $region39: #{_lambda_.43} parent=24 // pred_region
            loop: start=0, step=1, limit=1
            $region41: #{_lambda_.43} parent=39 // loop_pre_header
              _
            $region42: #{_lambda_.43} parent=39 // loop_header
              %s1772 = sphi 0, %s1776
              %p1773 = scmp.ge.s32.totalorder %s1772, 1
              %s1777 = sphi [#allocation2], [#allocation2]
              %s1778 = sphi %s5, %s5
            $region43: #{_lambda_.43} parent=39 // loop_header_branch
              %1775 = sbr.rel (%p1773) target = $region47
            $region44: #{_lambda_.43} parent=39 // loop_body
              _
            $region45: #{_lambda_.43} parent=39 // loop_footer
              %s1776 = sadd.s32 1, %s1772
            $region46: #{_lambda_.43} parent=39 // loop_footer_branch
              %1771 = sbr.rel target = $region42
            $region47: #{_lambda_.43} parent=39 // loop_exit
              _
            %s1780 = ssub.s32 16, 1
            loop: start=0, step=1, limit=1
            $region48: #{_lambda_.43} parent=39 // loop_pre_header
              _
            $region49: #{_lambda_.43} parent=39 // loop_header
              %s1782 = sphi 0, %s1786
              %p1783 = scmp.ge.s32.totalorder %s1782, 1
              %s1787 = sphi [#allocation2], [#allocation2]
              %s1788 = sphi %s5, %s5
            $region50: #{_lambda_.43} parent=39 // loop_header_branch
              %1785 = sbr.rel (%p1783) target = $region54
            $region51: #{_lambda_.43} parent=39 // loop_body
              %v1789 = vld [vmem:[%s1787] sm:%s1780]
              %1790 = vst [vmem:[%s1788] sm:%s1780] %v1789
              %v1791 = vld [vmem:[%s1787 + $0x4] sm:%s1780]
              %1792 = vst [vmem:[%s1788 + $0x4] sm:%s1780] %v1791
              %v1793 = vld [vmem:[%s1787 + $0x8] sm:%s1780]
              %1794 = vst [vmem:[%s1788 + $0x8] sm:%s1780] %v1793
              %v1795 = vld [vmem:[%s1787 + $0xc] sm:%s1780]
              %1796 = vst [vmem:[%s1788 + $0xc] sm:%s1780] %v1795
              %v1797 = vld [vmem:[%s1787 + $0x10] sm:%s1780]
              %1798 = vst [vmem:[%s1788 + $0x10] sm:%s1780] %v1797
              %v1799 = vld [vmem:[%s1787 + $0x14] sm:%s1780]
              %1800 = vst [vmem:[%s1788 + $0x14] sm:%s1780] %v1799
              %v1801 = vld [vmem:[%s1787 + $0x18] sm:%s1780]
              %1802 = vst [vmem:[%s1788 + $0x18] sm:%s1780] %v1801
              %v1803 = vld [vmem:[%s1787 + $0x1c] sm:%s1780]
              %1804 = vst [vmem:[%s1788 + $0x1c] sm:%s1780] %v1803
              %v1805 = vld [vmem:[%s1787 + $0x20] sm:%s1780]
              %1806 = vst [vmem:[%s1788 + $0x20] sm:%s1780] %v1805
              %v1807 = vld [vmem:[%s1787 + $0x24] sm:%s1780]
              %1808 = vst [vmem:[%s1788 + $0x24] sm:%s1780] %v1807
              %v1809 = vld [vmem:[%s1787 + $0x28] sm:%s1780]
              %1810 = vst [vmem:[%s1788 + $0x28] sm:%s1780] %v1809
              %v1811 = vld [vmem:[%s1787 + $0x2c] sm:%s1780]
              %1812 = vst [vmem:[%s1788 + $0x2c] sm:%s1780] %v1811
              %v1813 = vld [vmem:[%s1787 + $0x30] sm:%s1780]
              %1814 = vst [vmem:[%s1788 + $0x30] sm:%s1780] %v1813
              %v1815 = vld [vmem:[%s1787 + $0x34] sm:%s1780]
              %1816 = vst [vmem:[%s1788 + $0x34] sm:%s1780] %v1815
              %v1817 = vld [vmem:[%s1787 + $0x38] sm:%s1780]
              %1818 = vst [vmem:[%s1788 + $0x38] sm:%s1780] %v1817
              %v1819 = vld [vmem:[%s1787 + $0x3c] sm:%s1780]
              %1820 = vst [vmem:[%s1788 + $0x3c] sm:%s1780] %v1819
            $region52: #{_lambda_.43} parent=39 // loop_footer
              %s1786 = sadd.s32 1, %s1782
            $region53: #{_lambda_.43} parent=39 // loop_footer_branch
              %1781 = sbr.rel target = $region49
            $region54: #{_lambda_.43} parent=39 // loop_exit
              _
          $region40: #{_lambda_.43} parent=24 // pred_fallthru
            _
        $region25: #{_lambda_.43} parent=20 // pred_fallthru
          _
        // Predicated region
        $region26: #{_lambda_.43} parent=20 // pred_check
          _
        $region27: #{_lambda_.43} parent=20 // pred_check_branch
          %1726 = sbr.rel (0) target = $region29
        $region28: #{_lambda_.43} parent=20 // pred_region
          %s1728 = ssub.s32 16, 1
          loop: start=0, step=1, limit=1
          $region30: #{_lambda_.43} parent=28 // loop_pre_header
            _
          $region31: #{_lambda_.43} parent=28 // loop_header
            %s1730 = sphi 0, %s1734
            %p1731 = scmp.ge.s32.totalorder %s1730, 1
            %s1735 = sphi [#allocation2], [#allocation2]
            %s1736 = sphi %s5, %s5
          $region32: #{_lambda_.43} parent=28 // loop_header_branch
            %1733 = sbr.rel (%p1731) target = $region36
          $region33: #{_lambda_.43} parent=28 // loop_body
            %v1737 = vld [vmem:[%s1735] sm:%s1728]
            %1738 = vst [vmem:[%s1736] sm:%s1728] %v1737
            %v1739 = vld [vmem:[%s1735 + $0x4] sm:%s1728]
            %1740 = vst [vmem:[%s1736 + $0x4] sm:%s1728] %v1739
            %v1741 = vld [vmem:[%s1735 + $0x8] sm:%s1728]
            %1742 = vst [vmem:[%s1736 + $0x8] sm:%s1728] %v1741
            %v1743 = vld [vmem:[%s1735 + $0xc] sm:%s1728]
            %1744 = vst [vmem:[%s1736 + $0xc] sm:%s1728] %v1743
            %v1745 = vld [vmem:[%s1735 + $0x10] sm:%s1728]
            %1746 = vst [vmem:[%s1736 + $0x10] sm:%s1728] %v1745
            %v1747 = vld [vmem:[%s1735 + $0x14] sm:%s1728]
            %1748 = vst [vmem:[%s1736 + $0x14] sm:%s1728] %v1747
            %v1749 = vld [vmem:[%s1735 + $0x18] sm:%s1728]
            %1750 = vst [vmem:[%s1736 + $0x18] sm:%s1728] %v1749
            %v1751 = vld [vmem:[%s1735 + $0x1c] sm:%s1728]
            %1752 = vst [vmem:[%s1736 + $0x1c] sm:%s1728] %v1751
            %v1753 = vld [vmem:[%s1735 + $0x20] sm:%s1728]
            %1754 = vst [vmem:[%s1736 + $0x20] sm:%s1728] %v1753
            %v1755 = vld [vmem:[%s1735 + $0x24] sm:%s1728]
            %1756 = vst [vmem:[%s1736 + $0x24] sm:%s1728] %v1755
            %v1757 = vld [vmem:[%s1735 + $0x28] sm:%s1728]
            %1758 = vst [vmem:[%s1736 + $0x28] sm:%s1728] %v1757
            %v1759 = vld [vmem:[%s1735 + $0x2c] sm:%s1728]
            %1760 = vst [vmem:[%s1736 + $0x2c] sm:%s1728] %v1759
            %v1761 = vld [vmem:[%s1735 + $0x30] sm:%s1728]
            %1762 = vst [vmem:[%s1736 + $0x30] sm:%s1728] %v1761
            %v1763 = vld [vmem:[%s1735 + $0x34] sm:%s1728]
            %1764 = vst [vmem:[%s1736 + $0x34] sm:%s1728] %v1763
            %v1765 = vld [vmem:[%s1735 + $0x38] sm:%s1728]
            %1766 = vst [vmem:[%s1736 + $0x38] sm:%s1728] %v1765
            %v1767 = vld [vmem:[%s1735 + $0x3c] sm:%s1728]
            %1768 = vst [vmem:[%s1736 + $0x3c] sm:%s1728] %v1767
          $region34: #{_lambda_.43} parent=28 // loop_footer
            %s1734 = sadd.s32 1, %s1730
          $region35: #{_lambda_.43} parent=28 // loop_footer_branch
            %1729 = sbr.rel target = $region31
          $region36: #{_lambda_.43} parent=28 // loop_exit
            _
        $region29: #{_lambda_.43} parent=20 // pred_fallthru
          _
      $region21: #{_lambda_.43} parent=16 // pred_fallthru
        _
      %1821 = vnop
    $region17: #{_lambda_.43} parent=1 // pred_fallthru
      _
    // Predicated region
    $region55: #{_lambda_.43} parent=1 // pred_check
      _
    $region56: #{_lambda_.43} parent=1 // pred_check_branch
      %1823 = sbr.rel (0) target = $region58
    $region57: #{_lambda_.43} parent=1 // pred_region
      _
    $region58: #{_lambda_.43} parent=1 // pred_fallthru
      _

// kernel: _lambda_.41
$region0: #{_lambda_.41}
  #allocation0 [shape = 'u32[]', space=smem, size = 0x4, offset = 0x4, fixed_abs, tag = 'smem constant byte address 0x4 - core index']
  #allocation1 [shape = 'u32[144,128]{1,0:T(1,128)}', space=vmem, size = 0x12000, scoped, tag = 'internal scratch']
  %s0 = inlined_call_operand.vmem [shape: bf16[128,2,1], index: 0, kind: input, shape index: {}]
  %s1 = inlined_call_operand.vmem [shape: f32[10,128], index: 1, kind: input, shape index: {}]
  %s2 = inlined_call_operand.vmem [shape: f32[10,1], index: 2, kind: input, shape index: {}]
  %s3 = inlined_call_operand.vmem [shape: f32[10,2], index: 3, kind: output, shape index: {}]
  %s4 = sld [smem:[#allocation0]]
  $region22: #{_lambda_.41} parent=0
    _
  %s6 = ssub.s32 1, %s4
  %s7 = scalar_select 0, %s6, %s4
  // Predicated region
  $region2: #{_lambda_.41} parent=0 // pred_check
    _
  $region3: #{_lambda_.41} parent=0 // pred_check_branch
    %9 = sbr.rel (0) target = $region5
  $region4: #{_lambda_.41} parent=0 // pred_region
    _
  $region5: #{_lambda_.41} parent=0 // pred_fallthru
    _
  // Predicated region
  $region6: #{_lambda_.41} parent=0 // pred_check
    _
  $region7: #{_lambda_.41} parent=0 // pred_check_branch
    %11 = sbr.rel (0) target = $region9
  $region8: #{_lambda_.41} parent=0 // pred_region
    _
  $region9: #{_lambda_.41} parent=0 // pred_fallthru
    _
  // Predicated region
  $region10: #{_lambda_.41} parent=0 // pred_check
    _
  $region11: #{_lambda_.41} parent=0 // pred_check_branch
    %13 = sbr.rel (0) target = $region13
  $region12: #{_lambda_.41} parent=0 // pred_region
    _
  $region13: #{_lambda_.41} parent=0 // pred_fallthru
    _
  %v14 = vld [vmem:[%s0] sm:$0x1]
  %v15 = vld [vmem:[%s0 + $0x1] sm:$0x1]
  %v16 = vld [vmem:[%s0 + $0x2] sm:$0x1]
  %v17 = vld [vmem:[%s0 + $0x3] sm:$0x1]
  %v18 = vld [vmem:[%s0 + $0x4] sm:$0x1]
  %v19 = vld [vmem:[%s0 + $0x5] sm:$0x1]
  %v20 = vld [vmem:[%s0 + $0x6] sm:$0x1]
  %v21 = vld [vmem:[%s0 + $0x7] sm:$0x1]
  %v22 = vld [vmem:[%s0 + $0x8] sm:$0x1]
  %v23 = vld [vmem:[%s0 + $0x9] sm:$0x1]
  %v24 = vld [vmem:[%s0 + $0xa] sm:$0x1]
  %v25 = vld [vmem:[%s0 + $0xb] sm:$0x1]
  %v26 = vld [vmem:[%s0 + $0xc] sm:$0x1]
  %v27 = vld [vmem:[%s0 + $0xd] sm:$0x1]
  %v28 = vld [vmem:[%s0 + $0xe] sm:$0x1]
  %v29 = vld [vmem:[%s0 + $0xf] sm:$0x1]
  %v30 = vld [vmem:[%s0 + $0x10] sm:$0x1]
  %v31 = vld [vmem:[%s0 + $0x11] sm:$0x1]
  %v32 = vld [vmem:[%s0 + $0x12] sm:$0x1]
  %v33 = vld [vmem:[%s0 + $0x13] sm:$0x1]
  %v34 = vld [vmem:[%s0 + $0x14] sm:$0x1]
  %v35 = vld [vmem:[%s0 + $0x15] sm:$0x1]
  %v36 = vld [vmem:[%s0 + $0x16] sm:$0x1]
  %v37 = vld [vmem:[%s0 + $0x17] sm:$0x1]
  %v38 = vld [vmem:[%s0 + $0x18] sm:$0x1]
  %v39 = vld [vmem:[%s0 + $0x19] sm:$0x1]
  %v40 = vld [vmem:[%s0 + $0x1a] sm:$0x1]
  %v41 = vld [vmem:[%s0 + $0x1b] sm:$0x1]
  %v42 = vld [vmem:[%s0 + $0x1c] sm:$0x1]
  %v43 = vld [vmem:[%s0 + $0x1d] sm:$0x1]
  %v44 = vld [vmem:[%s0 + $0x1e] sm:$0x1]
  %v45 = vld [vmem:[%s0 + $0x1f] sm:$0x1]
  %v46 = vld [vmem:[%s0 + $0x20] sm:$0x1]
  %v47 = vld [vmem:[%s0 + $0x21] sm:$0x1]
  %v48 = vld [vmem:[%s0 + $0x22] sm:$0x1]
  %v49 = vld [vmem:[%s0 + $0x23] sm:$0x1]
  %v50 = vld [vmem:[%s0 + $0x24] sm:$0x1]
  %v51 = vld [vmem:[%s0 + $0x25] sm:$0x1]
  %v52 = vld [vmem:[%s0 + $0x26] sm:$0x1]
  %v53 = vld [vmem:[%s0 + $0x27] sm:$0x1]
  %v54 = vld [vmem:[%s0 + $0x28] sm:$0x1]
  %v55 = vld [vmem:[%s0 + $0x29] sm:$0x1]
  %v56 = vld [vmem:[%s0 + $0x2a] sm:$0x1]
  %v57 = vld [vmem:[%s0 + $0x2b] sm:$0x1]
  %v58 = vld [vmem:[%s0 + $0x2c] sm:$0x1]
  %v59 = vld [vmem:[%s0 + $0x2d] sm:$0x1]
  %v60 = vld [vmem:[%s0 + $0x2e] sm:$0x1]
  %v61 = vld [vmem:[%s0 + $0x2f] sm:$0x1]
  %v62 = vld [vmem:[%s0 + $0x30] sm:$0x1]
  %v63 = vld [vmem:[%s0 + $0x31] sm:$0x1]
  %v64 = vld [vmem:[%s0 + $0x32] sm:$0x1]
  %v65 = vld [vmem:[%s0 + $0x33] sm:$0x1]
  %v66 = vld [vmem:[%s0 + $0x34] sm:$0x1]
  %v67 = vld [vmem:[%s0 + $0x35] sm:$0x1]
  %v68 = vld [vmem:[%s0 + $0x36] sm:$0x1]
  %v69 = vld [vmem:[%s0 + $0x37] sm:$0x1]
  %v70 = vld [vmem:[%s0 + $0x38] sm:$0x1]
  %v71 = vld [vmem:[%s0 + $0x39] sm:$0x1]
  %v72 = vld [vmem:[%s0 + $0x3a] sm:$0x1]
  %v73 = vld [vmem:[%s0 + $0x3b] sm:$0x1]
  %v74 = vld [vmem:[%s0 + $0x3c] sm:$0x1]
  %v75 = vld [vmem:[%s0 + $0x3d] sm:$0x1]
  %v76 = vld [vmem:[%s0 + $0x3e] sm:$0x1]
  %v77 = vld [vmem:[%s0 + $0x3f] sm:$0x1]
  %v78 = vld [vmem:[%s0 + $0x40] sm:$0x1]
  %v79 = vld [vmem:[%s0 + $0x41] sm:$0x1]
  %v80 = vld [vmem:[%s0 + $0x42] sm:$0x1]
  %v81 = vld [vmem:[%s0 + $0x43] sm:$0x1]
  %v82 = vld [vmem:[%s0 + $0x44] sm:$0x1]
  %v83 = vld [vmem:[%s0 + $0x45] sm:$0x1]
  %v84 = vld [vmem:[%s0 + $0x46] sm:$0x1]
  %v85 = vld [vmem:[%s0 + $0x47] sm:$0x1]
  %v86 = vld [vmem:[%s0 + $0x48] sm:$0x1]
  %v87 = vld [vmem:[%s0 + $0x49] sm:$0x1]
  %v88 = vld [vmem:[%s0 + $0x4a] sm:$0x1]
  %v89 = vld [vmem:[%s0 + $0x4b] sm:$0x1]
  %v90 = vld [vmem:[%s0 + $0x4c] sm:$0x1]
  %v91 = vld [vmem:[%s0 + $0x4d] sm:$0x1]
  %v92 = vld [vmem:[%s0 + $0x4e] sm:$0x1]
  %v93 = vld [vmem:[%s0 + $0x4f] sm:$0x1]
  %v94 = vld [vmem:[%s0 + $0x50] sm:$0x1]
  %v95 = vld [vmem:[%s0 + $0x51] sm:$0x1]
  %v96 = vld [vmem:[%s0 + $0x52] sm:$0x1]
  %v97 = vld [vmem:[%s0 + $0x53] sm:$0x1]
  %v98 = vld [vmem:[%s0 + $0x54] sm:$0x1]
  %v99 = vld [vmem:[%s0 + $0x55] sm:$0x1]
  %v100 = vld [vmem:[%s0 + $0x56] sm:$0x1]
  %v101 = vld [vmem:[%s0 + $0x57] sm:$0x1]
  %v102 = vld [vmem:[%s0 + $0x58] sm:$0x1]
  %v103 = vld [vmem:[%s0 + $0x59] sm:$0x1]
  %v104 = vld [vmem:[%s0 + $0x5a] sm:$0x1]
  %v105 = vld [vmem:[%s0 + $0x5b] sm:$0x1]
  %v106 = vld [vmem:[%s0 + $0x5c] sm:$0x1]
  %v107 = vld [vmem:[%s0 + $0x5d] sm:$0x1]
  %v108 = vld [vmem:[%s0 + $0x5e] sm:$0x1]
  %v109 = vld [vmem:[%s0 + $0x5f] sm:$0x1]
  %v110 = vld [vmem:[%s0 + $0x60] sm:$0x1]
  %v111 = vld [vmem:[%s0 + $0x61] sm:$0x1]
  %v112 = vld [vmem:[%s0 + $0x62] sm:$0x1]
  %v113 = vld [vmem:[%s0 + $0x63] sm:$0x1]
  %v114 = vld [vmem:[%s0 + $0x64] sm:$0x1]
  %v115 = vld [vmem:[%s0 + $0x65] sm:$0x1]
  %v116 = vld [vmem:[%s0 + $0x66] sm:$0x1]
  %v117 = vld [vmem:[%s0 + $0x67] sm:$0x1]
  %v118 = vld [vmem:[%s0 + $0x68] sm:$0x1]
  %v119 = vld [vmem:[%s0 + $0x69] sm:$0x1]
  %v120 = vld [vmem:[%s0 + $0x6a] sm:$0x1]
  %v121 = vld [vmem:[%s0 + $0x6b] sm:$0x1]
  %v122 = vld [vmem:[%s0 + $0x6c] sm:$0x1]
  %v123 = vld [vmem:[%s0 + $0x6d] sm:$0x1]
  %v124 = vld [vmem:[%s0 + $0x6e] sm:$0x1]
  %v125 = vld [vmem:[%s0 + $0x6f] sm:$0x1]
  %v126 = vld [vmem:[%s0 + $0x70] sm:$0x1]
  %v127 = vld [vmem:[%s0 + $0x71] sm:$0x1]
  %v128 = vld [vmem:[%s0 + $0x72] sm:$0x1]
  %v129 = vld [vmem:[%s0 + $0x73] sm:$0x1]
  %v130 = vld [vmem:[%s0 + $0x74] sm:$0x1]
  %v131 = vld [vmem:[%s0 + $0x75] sm:$0x1]
  %v132 = vld [vmem:[%s0 + $0x76] sm:$0x1]
  %v133 = vld [vmem:[%s0 + $0x77] sm:$0x1]
  %v134 = vld [vmem:[%s0 + $0x78] sm:$0x1]
  %v135 = vld [vmem:[%s0 + $0x79] sm:$0x1]
  %v136 = vld [vmem:[%s0 + $0x7a] sm:$0x1]
  %v137 = vld [vmem:[%s0 + $0x7b] sm:$0x1]
  %v138 = vld [vmem:[%s0 + $0x7c] sm:$0x1]
  %v139 = vld [vmem:[%s0 + $0x7d] sm:$0x1]
  %v140 = vld [vmem:[%s0 + $0x7e] sm:$0x1]
  %v141 = vld [vmem:[%s0 + $0x7f] sm:$0x1]
  %v142 = vunpack.c.l.bf16 %v14
  %v143 = vunpack.c.l.bf16 %v15
  %v144 = vunpack.c.l.bf16 %v16
  %v145 = vunpack.c.l.bf16 %v17
  %v146 = vunpack.c.l.bf16 %v18
  %v147 = vunpack.c.l.bf16 %v19
  %v148 = vunpack.c.l.bf16 %v20
  %v149 = vunpack.c.l.bf16 %v21
  %v150 = vunpack.c.l.bf16 %v22
  %v151 = vunpack.c.l.bf16 %v23
  %v152 = vunpack.c.l.bf16 %v24
  %v153 = vunpack.c.l.bf16 %v25
  %v154 = vunpack.c.l.bf16 %v26
  %v155 = vunpack.c.l.bf16 %v27
  %v156 = vunpack.c.l.bf16 %v28
  %v157 = vunpack.c.l.bf16 %v29
  %v158 = vunpack.c.l.bf16 %v30
  %v159 = vunpack.c.l.bf16 %v31
  %v160 = vunpack.c.l.bf16 %v32
  %v161 = vunpack.c.l.bf16 %v33
  %v162 = vunpack.c.l.bf16 %v34
  %v163 = vunpack.c.l.bf16 %v35
  %v164 = vunpack.c.l.bf16 %v36
  %v165 = vunpack.c.l.bf16 %v37
  %v166 = vunpack.c.l.bf16 %v38
  %v167 = vunpack.c.l.bf16 %v39
  %v168 = vunpack.c.l.bf16 %v40
  %v169 = vunpack.c.l.bf16 %v41
  %v170 = vunpack.c.l.bf16 %v42
  %v171 = vunpack.c.l.bf16 %v43
  %v172 = vunpack.c.l.bf16 %v44
  %v173 = vunpack.c.l.bf16 %v45
  %v174 = vunpack.c.l.bf16 %v46
  %v175 = vunpack.c.l.bf16 %v47
  %v176 = vunpack.c.l.bf16 %v48
  %v177 = vunpack.c.l.bf16 %v49
  %v178 = vunpack.c.l.bf16 %v50
  %v179 = vunpack.c.l.bf16 %v51
  %v180 = vunpack.c.l.bf16 %v52
  %v181 = vunpack.c.l.bf16 %v53
  %v182 = vunpack.c.l.bf16 %v54
  %v183 = vunpack.c.l.bf16 %v55
  %v184 = vunpack.c.l.bf16 %v56
  %v185 = vunpack.c.l.bf16 %v57
  %v186 = vunpack.c.l.bf16 %v58
  %v187 = vunpack.c.l.bf16 %v59
  %v188 = vunpack.c.l.bf16 %v60
  %v189 = vunpack.c.l.bf16 %v61
  %v190 = vunpack.c.l.bf16 %v62
  %v191 = vunpack.c.l.bf16 %v63
  %v192 = vunpack.c.l.bf16 %v64
  %v193 = vunpack.c.l.bf16 %v65
  %v194 = vunpack.c.l.bf16 %v66
  %v195 = vunpack.c.l.bf16 %v67
  %v196 = vunpack.c.l.bf16 %v68
  %v197 = vunpack.c.l.bf16 %v69
  %v198 = vunpack.c.l.bf16 %v70
  %v199 = vunpack.c.l.bf16 %v71
  %v200 = vunpack.c.l.bf16 %v72
  %v201 = vunpack.c.l.bf16 %v73
  %v202 = vunpack.c.l.bf16 %v74
  %v203 = vunpack.c.l.bf16 %v75
  %v204 = vunpack.c.l.bf16 %v76
  %v205 = vunpack.c.l.bf16 %v77
  %v206 = vunpack.c.l.bf16 %v78
  %v207 = vunpack.c.l.bf16 %v79
  %v208 = vunpack.c.l.bf16 %v80
  %v209 = vunpack.c.l.bf16 %v81
  %v210 = vunpack.c.l.bf16 %v82
  %v211 = vunpack.c.l.bf16 %v83
  %v212 = vunpack.c.l.bf16 %v84
  %v213 = vunpack.c.l.bf16 %v85
  %v214 = vunpack.c.l.bf16 %v86
  %v215 = vunpack.c.l.bf16 %v87
  %v216 = vunpack.c.l.bf16 %v88
  %v217 = vunpack.c.l.bf16 %v89
  %v218 = vunpack.c.l.bf16 %v90
  %v219 = vunpack.c.l.bf16 %v91
  %v220 = vunpack.c.l.bf16 %v92
  %v221 = vunpack.c.l.bf16 %v93
  %v222 = vunpack.c.l.bf16 %v94
  %v223 = vunpack.c.l.bf16 %v95
  %v224 = vunpack.c.l.bf16 %v96
  %v225 = vunpack.c.l.bf16 %v97
  %v226 = vunpack.c.l.bf16 %v98
  %v227 = vunpack.c.l.bf16 %v99
  %v228 = vunpack.c.l.bf16 %v100
  %v229 = vunpack.c.l.bf16 %v101
  %v230 = vunpack.c.l.bf16 %v102
  %v231 = vunpack.c.l.bf16 %v103
  %v232 = vunpack.c.l.bf16 %v104
  %v233 = vunpack.c.l.bf16 %v105
  %v234 = vunpack.c.l.bf16 %v106
  %v235 = vunpack.c.l.bf16 %v107
  %v236 = vunpack.c.l.bf16 %v108
  %v237 = vunpack.c.l.bf16 %v109
  %v238 = vunpack.c.l.bf16 %v110
  %v239 = vunpack.c.l.bf16 %v111
  %v240 = vunpack.c.l.bf16 %v112
  %v241 = vunpack.c.l.bf16 %v113
  %v242 = vunpack.c.l.bf16 %v114
  %v243 = vunpack.c.l.bf16 %v115
  %v244 = vunpack.c.l.bf16 %v116
  %v245 = vunpack.c.l.bf16 %v117
  %v246 = vunpack.c.l.bf16 %v118
  %v247 = vunpack.c.l.bf16 %v119
  %v248 = vunpack.c.l.bf16 %v120
  %v249 = vunpack.c.l.bf16 %v121
  %v250 = vunpack.c.l.bf16 %v122
  %v251 = vunpack.c.l.bf16 %v123
  %v252 = vunpack.c.l.bf16 %v124
  %v253 = vunpack.c.l.bf16 %v125
  %v254 = vunpack.c.l.bf16 %v126
  %v255 = vunpack.c.l.bf16 %v127
  %v256 = vunpack.c.l.bf16 %v128
  %v257 = vunpack.c.l.bf16 %v129
  %v258 = vunpack.c.l.bf16 %v130
  %v259 = vunpack.c.l.bf16 %v131
  %v260 = vunpack.c.l.bf16 %v132
  %v261 = vunpack.c.l.bf16 %v133
  %v262 = vunpack.c.l.bf16 %v134
  %v263 = vunpack.c.l.bf16 %v135
  %v264 = vunpack.c.l.bf16 %v136
  %v265 = vunpack.c.l.bf16 %v137
  %v266 = vunpack.c.l.bf16 %v138
  %v267 = vunpack.c.l.bf16 %v139
  %v268 = vunpack.c.l.bf16 %v140
  %v269 = vunpack.c.l.bf16 %v141
  %v270 = vadd.f32 %v142, 0.0
  %v271 = vadd.f32 %v143, 0.0
  %v272 = vadd.f32 %v144, 0.0
  %v273 = vadd.f32 %v145, 0.0
  %v274 = vadd.f32 %v146, 0.0
  %v275 = vadd.f32 %v147, 0.0
  %v276 = vadd.f32 %v148, 0.0
  %v277 = vadd.f32 %v149, 0.0
  %v278 = vadd.f32 %v150, 0.0
  %v279 = vadd.f32 %v151, 0.0
  %v280 = vadd.f32 %v152, 0.0
  %v281 = vadd.f32 %v153, 0.0
  %v282 = vadd.f32 %v154, 0.0
  %v283 = vadd.f32 %v155, 0.0
  %v284 = vadd.f32 %v156, 0.0
  %v285 = vadd.f32 %v157, 0.0
  %v286 = vadd.f32 %v158, 0.0
  %v287 = vadd.f32 %v159, 0.0
  %v288 = vadd.f32 %v160, 0.0
  %v289 = vadd.f32 %v161, 0.0
  %v290 = vadd.f32 %v162, 0.0
  %v291 = vadd.f32 %v163, 0.0
  %v292 = vadd.f32 %v164, 0.0
  %v293 = vadd.f32 %v165, 0.0
  %v294 = vadd.f32 %v166, 0.0
  %v295 = vadd.f32 %v167, 0.0
  %v296 = vadd.f32 %v168, 0.0
  %v297 = vadd.f32 %v169, 0.0
  %v298 = vadd.f32 %v170, 0.0
  %v299 = vadd.f32 %v171, 0.0
  %v300 = vadd.f32 %v172, 0.0
  %v301 = vadd.f32 %v173, 0.0
  %v302 = vadd.f32 %v174, 0.0
  %v303 = vadd.f32 %v175, 0.0
  %v304 = vadd.f32 %v176, 0.0
  %v305 = vadd.f32 %v177, 0.0
  %v306 = vadd.f32 %v178, 0.0
  %v307 = vadd.f32 %v179, 0.0
  %v308 = vadd.f32 %v180, 0.0
  %v309 = vadd.f32 %v181, 0.0
  %v310 = vadd.f32 %v182, 0.0
  %v311 = vadd.f32 %v183, 0.0
  %v312 = vadd.f32 %v184, 0.0
  %v313 = vadd.f32 %v185, 0.0
  %v314 = vadd.f32 %v186, 0.0
  %v315 = vadd.f32 %v187, 0.0
  %v316 = vadd.f32 %v188, 0.0
  %v317 = vadd.f32 %v189, 0.0
  %v318 = vadd.f32 %v190, 0.0
  %v319 = vadd.f32 %v191, 0.0
  %v320 = vadd.f32 %v192, 0.0
  %v321 = vadd.f32 %v193, 0.0
  %v322 = vadd.f32 %v194, 0.0
  %v323 = vadd.f32 %v195, 0.0
  %v324 = vadd.f32 %v196, 0.0
  %v325 = vadd.f32 %v197, 0.0
  %v326 = vadd.f32 %v198, 0.0
  %v327 = vadd.f32 %v199, 0.0
  %v328 = vadd.f32 %v200, 0.0
  %v329 = vadd.f32 %v201, 0.0
  %v330 = vadd.f32 %v202, 0.0
  %v331 = vadd.f32 %v203, 0.0
  %v332 = vadd.f32 %v204, 0.0
  %v333 = vadd.f32 %v205, 0.0
  %v334 = vadd.f32 %v206, 0.0
  %v335 = vadd.f32 %v207, 0.0
  %v336 = vadd.f32 %v208, 0.0
  %v337 = vadd.f32 %v209, 0.0
  %v338 = vadd.f32 %v210, 0.0
  %v339 = vadd.f32 %v211, 0.0
  %v340 = vadd.f32 %v212, 0.0
  %v341 = vadd.f32 %v213, 0.0
  %v342 = vadd.f32 %v214, 0.0
  %v343 = vadd.f32 %v215, 0.0
  %v344 = vadd.f32 %v216, 0.0
  %v345 = vadd.f32 %v217, 0.0
  %v346 = vadd.f32 %v218, 0.0
  %v347 = vadd.f32 %v219, 0.0
  %v348 = vadd.f32 %v220, 0.0
  %v349 = vadd.f32 %v221, 0.0
  %v350 = vadd.f32 %v222, 0.0
  %v351 = vadd.f32 %v223, 0.0
  %v352 = vadd.f32 %v224, 0.0
  %v353 = vadd.f32 %v225, 0.0
  %v354 = vadd.f32 %v226, 0.0
  %v355 = vadd.f32 %v227, 0.0
  %v356 = vadd.f32 %v228, 0.0
  %v357 = vadd.f32 %v229, 0.0
  %v358 = vadd.f32 %v230, 0.0
  %v359 = vadd.f32 %v231, 0.0
  %v360 = vadd.f32 %v232, 0.0
  %v361 = vadd.f32 %v233, 0.0
  %v362 = vadd.f32 %v234, 0.0
  %v363 = vadd.f32 %v235, 0.0
  %v364 = vadd.f32 %v236, 0.0
  %v365 = vadd.f32 %v237, 0.0
  %v366 = vadd.f32 %v238, 0.0
  %v367 = vadd.f32 %v239, 0.0
  %v368 = vadd.f32 %v240, 0.0
  %v369 = vadd.f32 %v241, 0.0
  %v370 = vadd.f32 %v242, 0.0
  %v371 = vadd.f32 %v243, 0.0
  %v372 = vadd.f32 %v244, 0.0
  %v373 = vadd.f32 %v245, 0.0
  %v374 = vadd.f32 %v246, 0.0
  %v375 = vadd.f32 %v247, 0.0
  %v376 = vadd.f32 %v248, 0.0
  %v377 = vadd.f32 %v249, 0.0
  %v378 = vadd.f32 %v250, 0.0
  %v379 = vadd.f32 %v251, 0.0
  %v380 = vadd.f32 %v252, 0.0
  %v381 = vadd.f32 %v253, 0.0
  %v382 = vadd.f32 %v254, 0.0
  %v383 = vadd.f32 %v255, 0.0
  %v384 = vadd.f32 %v256, 0.0
  %v385 = vadd.f32 %v257, 0.0
  %v386 = vadd.f32 %v258, 0.0
  %v387 = vadd.f32 %v259, 0.0
  %v388 = vadd.f32 %v260, 0.0
  %v389 = vadd.f32 %v261, 0.0
  %v390 = vadd.f32 %v262, 0.0
  %v391 = vadd.f32 %v263, 0.0
  %v392 = vadd.f32 %v264, 0.0
  %v393 = vadd.f32 %v265, 0.0
  %v394 = vadd.f32 %v266, 0.0
  %v395 = vadd.f32 %v267, 0.0
  %v396 = vadd.f32 %v268, 0.0
  %v397 = vadd.f32 %v269, 0.0
  %v398 = vld [vmem:[%s1] sm:$0xff]
  %v399 = vld [vmem:[%s1 + $0x8] sm:$0x3]
  %v400 = vld [vmem:[%s2] sm:$0xff]
  %v401 = vld [vmem:[%s2 + $0x8] sm:$0x3]
  %403 = vset.pattern.permute.xlu0 0
  %404 = vperm.xlu0 %403, %v400
  %v405 = vpop.permute.xlu0 %404
  %408 = vset.pattern.permute.xlu0 0
  %409 = vperm.xlu0 %408, %v401
  %v410 = vpop.permute.xlu0 %409
  %v541 = vunpack.c.l.s4 1983009808
  %v542 = vunpack.c.0.s8 %v541
  %v543 = vlaneseq
  %v544 = vshrl.u32 %v543, 7
  %v545 = vsub.s32 %v542, %v544
  %v546 = vrot.slane %v270, %v545
  %v548 = vunpack.c.l.s4 1983009808
  %v549 = vunpack.c.0.s8 %v548
  %v550 = vlaneseq
  %v551 = vshrl.u32 %v550, 7
  %v552 = vsub.s32 %v549, %v551
  %v553 = vrot.slane %v271, %v552
  %v555 = vunpack.c.l.s4 1983009808
  %v556 = vunpack.c.0.s8 %v555
  %v557 = vlaneseq
  %v558 = vshrl.u32 %v557, 7
  %v559 = vsub.s32 %v556, %v558
  %v560 = vrot.slane %v272, %v559
  %v562 = vunpack.c.l.s4 1983009808
  %v563 = vunpack.c.0.s8 %v562
  %v564 = vlaneseq
  %v565 = vshrl.u32 %v564, 7
  %v566 = vsub.s32 %v563, %v565
  %v567 = vrot.slane %v273, %v566
  %v569 = vunpack.c.l.s4 1983009808
  %v570 = vunpack.c.0.s8 %v569
  %v571 = vlaneseq
  %v572 = vshrl.u32 %v571, 7
  %v573 = vsub.s32 %v570, %v572
  %v574 = vrot.slane %v274, %v573
  %v576 = vunpack.c.l.s4 1983009808
  %v577 = vunpack.c.0.s8 %v576
  %v578 = vlaneseq
  %v579 = vshrl.u32 %v578, 7
  %v580 = vsub.s32 %v577, %v579
  %v581 = vrot.slane %v275, %v580
  %v583 = vunpack.c.l.s4 1983009808
  %v584 = vunpack.c.0.s8 %v583
  %v585 = vlaneseq
  %v586 = vshrl.u32 %v585, 7
  %v587 = vsub.s32 %v584, %v586
  %v588 = vrot.slane %v276, %v587
  %v590 = vunpack.c.l.s4 1983009808
  %v591 = vunpack.c.0.s8 %v590
  %v592 = vlaneseq
  %v593 = vshrl.u32 %v592, 7
  %v594 = vsub.s32 %v591, %v593
  %v595 = vrot.slane %v277, %v594
  %v597 = vunpack.c.l.s4 1983009808
  %v598 = vunpack.c.0.s8 %v597
  %v599 = vlaneseq
  %v600 = vshrl.u32 %v599, 7
  %v601 = vsub.s32 %v598, %v600
  %v602 = vrot.slane %v278, %v601
  %v604 = vunpack.c.l.s4 1983009808
  %v605 = vunpack.c.0.s8 %v604
  %v606 = vlaneseq
  %v607 = vshrl.u32 %v606, 7
  %v608 = vsub.s32 %v605, %v607
  %v609 = vrot.slane %v279, %v608
  %v611 = vunpack.c.l.s4 1983009808
  %v612 = vunpack.c.0.s8 %v611
  %v613 = vlaneseq
  %v614 = vshrl.u32 %v613, 7
  %v615 = vsub.s32 %v612, %v614
  %v616 = vrot.slane %v280, %v615
  %v618 = vunpack.c.l.s4 1983009808
  %v619 = vunpack.c.0.s8 %v618
  %v620 = vlaneseq
  %v621 = vshrl.u32 %v620, 7
  %v622 = vsub.s32 %v619, %v621
  %v623 = vrot.slane %v281, %v622
  %v625 = vunpack.c.l.s4 1983009808
  %v626 = vunpack.c.0.s8 %v625
  %v627 = vlaneseq
  %v628 = vshrl.u32 %v627, 7
  %v629 = vsub.s32 %v626, %v628
  %v630 = vrot.slane %v282, %v629
  %v632 = vunpack.c.l.s4 1983009808
  %v633 = vunpack.c.0.s8 %v632
  %v634 = vlaneseq
  %v635 = vshrl.u32 %v634, 7
  %v636 = vsub.s32 %v633, %v635
  %v637 = vrot.slane %v283, %v636
  %v639 = vunpack.c.l.s4 1983009808
  %v640 = vunpack.c.0.s8 %v639
  %v641 = vlaneseq
  %v642 = vshrl.u32 %v641, 7
  %v643 = vsub.s32 %v640, %v642
  %v644 = vrot.slane %v284, %v643
  %v646 = vunpack.c.l.s4 1983009808
  %v647 = vunpack.c.0.s8 %v646
  %v648 = vlaneseq
  %v649 = vshrl.u32 %v648, 7
  %v650 = vsub.s32 %v647, %v649
  %v651 = vrot.slane %v285, %v650
  %v653 = vunpack.c.l.s4 1983009808
  %v654 = vunpack.c.0.s8 %v653
  %v655 = vlaneseq
  %v656 = vshrl.u32 %v655, 7
  %v657 = vsub.s32 %v654, %v656
  %v658 = vrot.slane %v286, %v657
  %v660 = vunpack.c.l.s4 1983009808
  %v661 = vunpack.c.0.s8 %v660
  %v662 = vlaneseq
  %v663 = vshrl.u32 %v662, 7
  %v664 = vsub.s32 %v661, %v663
  %v665 = vrot.slane %v287, %v664
  %v667 = vunpack.c.l.s4 1983009808
  %v668 = vunpack.c.0.s8 %v667
  %v669 = vlaneseq
  %v670 = vshrl.u32 %v669, 7
  %v671 = vsub.s32 %v668, %v670
  %v672 = vrot.slane %v288, %v671
  %v674 = vunpack.c.l.s4 1983009808
  %v675 = vunpack.c.0.s8 %v674
  %v676 = vlaneseq
  %v677 = vshrl.u32 %v676, 7
  %v678 = vsub.s32 %v675, %v677
  %v679 = vrot.slane %v289, %v678
  %v681 = vunpack.c.l.s4 1983009808
  %v682 = vunpack.c.0.s8 %v681
  %v683 = vlaneseq
  %v684 = vshrl.u32 %v683, 7
  %v685 = vsub.s32 %v682, %v684
  %v686 = vrot.slane %v290, %v685
  %v688 = vunpack.c.l.s4 1983009808
  %v689 = vunpack.c.0.s8 %v688
  %v690 = vlaneseq
  %v691 = vshrl.u32 %v690, 7
  %v692 = vsub.s32 %v689, %v691
  %v693 = vrot.slane %v291, %v692
  %v695 = vunpack.c.l.s4 1983009808
  %v696 = vunpack.c.0.s8 %v695
  %v697 = vlaneseq
  %v698 = vshrl.u32 %v697, 7
  %v699 = vsub.s32 %v696, %v698
  %v700 = vrot.slane %v292, %v699
  %v702 = vunpack.c.l.s4 1983009808
  %v703 = vunpack.c.0.s8 %v702
  %v704 = vlaneseq
  %v705 = vshrl.u32 %v704, 7
  %v706 = vsub.s32 %v703, %v705
  %v707 = vrot.slane %v293, %v706
  %v709 = vunpack.c.l.s4 1983009808
  %v710 = vunpack.c.0.s8 %v709
  %v711 = vlaneseq
  %v712 = vshrl.u32 %v711, 7
  %v713 = vsub.s32 %v710, %v712
  %v714 = vrot.slane %v294, %v713
  %v716 = vunpack.c.l.s4 1983009808
  %v717 = vunpack.c.0.s8 %v716
  %v718 = vlaneseq
  %v719 = vshrl.u32 %v718, 7
  %v720 = vsub.s32 %v717, %v719
  %v721 = vrot.slane %v295, %v720
  %v723 = vunpack.c.l.s4 1983009808
  %v724 = vunpack.c.0.s8 %v723
  %v725 = vlaneseq
  %v726 = vshrl.u32 %v725, 7
  %v727 = vsub.s32 %v724, %v726
  %v728 = vrot.slane %v296, %v727
  %v730 = vunpack.c.l.s4 1983009808
  %v731 = vunpack.c.0.s8 %v730
  %v732 = vlaneseq
  %v733 = vshrl.u32 %v732, 7
  %v734 = vsub.s32 %v731, %v733
  %v735 = vrot.slane %v297, %v734
  %v737 = vunpack.c.l.s4 1983009808
  %v738 = vunpack.c.0.s8 %v737
  %v739 = vlaneseq
  %v740 = vshrl.u32 %v739, 7
  %v741 = vsub.s32 %v738, %v740
  %v742 = vrot.slane %v298, %v741
  %v744 = vunpack.c.l.s4 1983009808
  %v745 = vunpack.c.0.s8 %v744
  %v746 = vlaneseq
  %v747 = vshrl.u32 %v746, 7
  %v748 = vsub.s32 %v745, %v747
  %v749 = vrot.slane %v299, %v748
  %v751 = vunpack.c.l.s4 1983009808
  %v752 = vunpack.c.0.s8 %v751
  %v753 = vlaneseq
  %v754 = vshrl.u32 %v753, 7
  %v755 = vsub.s32 %v752, %v754
  %v756 = vrot.slane %v300, %v755
  %v758 = vunpack.c.l.s4 1983009808
  %v759 = vunpack.c.0.s8 %v758
  %v760 = vlaneseq
  %v761 = vshrl.u32 %v760, 7
  %v762 = vsub.s32 %v759, %v761
  %v763 = vrot.slane %v301, %v762
  %v765 = vunpack.c.l.s4 1983009808
  %v766 = vunpack.c.0.s8 %v765
  %v767 = vlaneseq
  %v768 = vshrl.u32 %v767, 7
  %v769 = vsub.s32 %v766, %v768
  %v770 = vrot.slane %v302, %v769
  %v772 = vunpack.c.l.s4 1983009808
  %v773 = vunpack.c.0.s8 %v772
  %v774 = vlaneseq
  %v775 = vshrl.u32 %v774, 7
  %v776 = vsub.s32 %v773, %v775
  %v777 = vrot.slane %v303, %v776
  %v779 = vunpack.c.l.s4 1983009808
  %v780 = vunpack.c.0.s8 %v779
  %v781 = vlaneseq
  %v782 = vshrl.u32 %v781, 7
  %v783 = vsub.s32 %v780, %v782
  %v784 = vrot.slane %v304, %v783
  %v786 = vunpack.c.l.s4 1983009808
  %v787 = vunpack.c.0.s8 %v786
  %v788 = vlaneseq
  %v789 = vshrl.u32 %v788, 7
  %v790 = vsub.s32 %v787, %v789
  %v791 = vrot.slane %v305, %v790
  %v793 = vunpack.c.l.s4 1983009808
  %v794 = vunpack.c.0.s8 %v793
  %v795 = vlaneseq
  %v796 = vshrl.u32 %v795, 7
  %v797 = vsub.s32 %v794, %v796
  %v798 = vrot.slane %v306, %v797
  %v800 = vunpack.c.l.s4 1983009808
  %v801 = vunpack.c.0.s8 %v800
  %v802 = vlaneseq
  %v803 = vshrl.u32 %v802, 7
  %v804 = vsub.s32 %v801, %v803
  %v805 = vrot.slane %v307, %v804
  %v807 = vunpack.c.l.s4 1983009808
  %v808 = vunpack.c.0.s8 %v807
  %v809 = vlaneseq
  %v810 = vshrl.u32 %v809, 7
  %v811 = vsub.s32 %v808, %v810
  %v812 = vrot.slane %v308, %v811
  %v814 = vunpack.c.l.s4 1983009808
  %v815 = vunpack.c.0.s8 %v814
  %v816 = vlaneseq
  %v817 = vshrl.u32 %v816, 7
  %v818 = vsub.s32 %v815, %v817
  %v819 = vrot.slane %v309, %v818
  %v821 = vunpack.c.l.s4 1983009808
  %v822 = vunpack.c.0.s8 %v821
  %v823 = vlaneseq
  %v824 = vshrl.u32 %v823, 7
  %v825 = vsub.s32 %v822, %v824
  %v826 = vrot.slane %v310, %v825
  %v828 = vunpack.c.l.s4 1983009808
  %v829 = vunpack.c.0.s8 %v828
  %v830 = vlaneseq
  %v831 = vshrl.u32 %v830, 7
  %v832 = vsub.s32 %v829, %v831
  %v833 = vrot.slane %v311, %v832
  %v835 = vunpack.c.l.s4 1983009808
  %v836 = vunpack.c.0.s8 %v835
  %v837 = vlaneseq
  %v838 = vshrl.u32 %v837, 7
  %v839 = vsub.s32 %v836, %v838
  %v840 = vrot.slane %v312, %v839
  %v842 = vunpack.c.l.s4 1983009808
  %v843 = vunpack.c.0.s8 %v842
  %v844 = vlaneseq
  %v845 = vshrl.u32 %v844, 7
  %v846 = vsub.s32 %v843, %v845
  %v847 = vrot.slane %v313, %v846
  %v849 = vunpack.c.l.s4 1983009808
  %v850 = vunpack.c.0.s8 %v849
  %v851 = vlaneseq
  %v852 = vshrl.u32 %v851, 7
  %v853 = vsub.s32 %v850, %v852
  %v854 = vrot.slane %v314, %v853
  %v856 = vunpack.c.l.s4 1983009808
  %v857 = vunpack.c.0.s8 %v856
  %v858 = vlaneseq
  %v859 = vshrl.u32 %v858, 7
  %v860 = vsub.s32 %v857, %v859
  %v861 = vrot.slane %v315, %v860
  %v863 = vunpack.c.l.s4 1983009808
  %v864 = vunpack.c.0.s8 %v863
  %v865 = vlaneseq
  %v866 = vshrl.u32 %v865, 7
  %v867 = vsub.s32 %v864, %v866
  %v868 = vrot.slane %v316, %v867
  %v870 = vunpack.c.l.s4 1983009808
  %v871 = vunpack.c.0.s8 %v870
  %v872 = vlaneseq
  %v873 = vshrl.u32 %v872, 7
  %v874 = vsub.s32 %v871, %v873
  %v875 = vrot.slane %v317, %v874
  %v877 = vunpack.c.l.s4 1983009808
  %v878 = vunpack.c.0.s8 %v877
  %v879 = vlaneseq
  %v880 = vshrl.u32 %v879, 7
  %v881 = vsub.s32 %v878, %v880
  %v882 = vrot.slane %v318, %v881
  %v884 = vunpack.c.l.s4 1983009808
  %v885 = vunpack.c.0.s8 %v884
  %v886 = vlaneseq
  %v887 = vshrl.u32 %v886, 7
  %v888 = vsub.s32 %v885, %v887
  %v889 = vrot.slane %v319, %v888
  %v891 = vunpack.c.l.s4 1983009808
  %v892 = vunpack.c.0.s8 %v891
  %v893 = vlaneseq
  %v894 = vshrl.u32 %v893, 7
  %v895 = vsub.s32 %v892, %v894
  %v896 = vrot.slane %v320, %v895
  %v898 = vunpack.c.l.s4 1983009808
  %v899 = vunpack.c.0.s8 %v898
  %v900 = vlaneseq
  %v901 = vshrl.u32 %v900, 7
  %v902 = vsub.s32 %v899, %v901
  %v903 = vrot.slane %v321, %v902
  %v905 = vunpack.c.l.s4 1983009808
  %v906 = vunpack.c.0.s8 %v905
  %v907 = vlaneseq
  %v908 = vshrl.u32 %v907, 7
  %v909 = vsub.s32 %v906, %v908
  %v910 = vrot.slane %v322, %v909
  %v912 = vunpack.c.l.s4 1983009808
  %v913 = vunpack.c.0.s8 %v912
  %v914 = vlaneseq
  %v915 = vshrl.u32 %v914, 7
  %v916 = vsub.s32 %v913, %v915
  %v917 = vrot.slane %v323, %v916
  %v919 = vunpack.c.l.s4 1983009808
  %v920 = vunpack.c.0.s8 %v919
  %v921 = vlaneseq
  %v922 = vshrl.u32 %v921, 7
  %v923 = vsub.s32 %v920, %v922
  %v924 = vrot.slane %v324, %v923
  %v926 = vunpack.c.l.s4 1983009808
  %v927 = vunpack.c.0.s8 %v926
  %v928 = vlaneseq
  %v929 = vshrl.u32 %v928, 7
  %v930 = vsub.s32 %v927, %v929
  %v931 = vrot.slane %v325, %v930
  %v933 = vunpack.c.l.s4 1983009808
  %v934 = vunpack.c.0.s8 %v933
  %v935 = vlaneseq
  %v936 = vshrl.u32 %v935, 7
  %v937 = vsub.s32 %v934, %v936
  %v938 = vrot.slane %v326, %v937
  %v940 = vunpack.c.l.s4 1983009808
  %v941 = vunpack.c.0.s8 %v940
  %v942 = vlaneseq
  %v943 = vshrl.u32 %v942, 7
  %v944 = vsub.s32 %v941, %v943
  %v945 = vrot.slane %v327, %v944
  %v947 = vunpack.c.l.s4 1983009808
  %v948 = vunpack.c.0.s8 %v947
  %v949 = vlaneseq
  %v950 = vshrl.u32 %v949, 7
  %v951 = vsub.s32 %v948, %v950
  %v952 = vrot.slane %v328, %v951
  %v954 = vunpack.c.l.s4 1983009808
  %v955 = vunpack.c.0.s8 %v954
  %v956 = vlaneseq
  %v957 = vshrl.u32 %v956, 7
  %v958 = vsub.s32 %v955, %v957
  %v959 = vrot.slane %v329, %v958
  %v961 = vunpack.c.l.s4 1983009808
  %v962 = vunpack.c.0.s8 %v961
  %v963 = vlaneseq
  %v964 = vshrl.u32 %v963, 7
  %v965 = vsub.s32 %v962, %v964
  %v966 = vrot.slane %v330, %v965
  %v968 = vunpack.c.l.s4 1983009808
  %v969 = vunpack.c.0.s8 %v968
  %v970 = vlaneseq
  %v971 = vshrl.u32 %v970, 7
  %v972 = vsub.s32 %v969, %v971
  %v973 = vrot.slane %v331, %v972
  %v975 = vunpack.c.l.s4 1983009808
  %v976 = vunpack.c.0.s8 %v975
  %v977 = vlaneseq
  %v978 = vshrl.u32 %v977, 7
  %v979 = vsub.s32 %v976, %v978
  %v980 = vrot.slane %v332, %v979
  %v982 = vunpack.c.l.s4 1983009808
  %v983 = vunpack.c.0.s8 %v982
  %v984 = vlaneseq
  %v985 = vshrl.u32 %v984, 7
  %v986 = vsub.s32 %v983, %v985
  %v987 = vrot.slane %v333, %v986
  %v989 = vunpack.c.l.s4 1983009808
  %v990 = vunpack.c.0.s8 %v989
  %v991 = vlaneseq
  %v992 = vshrl.u32 %v991, 7
  %v993 = vsub.s32 %v990, %v992
  %v994 = vrot.slane %v334, %v993
  %v996 = vunpack.c.l.s4 1983009808
  %v997 = vunpack.c.0.s8 %v996
  %v998 = vlaneseq
  %v999 = vshrl.u32 %v998, 7
  %v1000 = vsub.s32 %v997, %v999
  %v1001 = vrot.slane %v335, %v1000
  %v1003 = vunpack.c.l.s4 1983009808
  %v1004 = vunpack.c.0.s8 %v1003
  %v1005 = vlaneseq
  %v1006 = vshrl.u32 %v1005, 7
  %v1007 = vsub.s32 %v1004, %v1006
  %v1008 = vrot.slane %v336, %v1007
  %v1010 = vunpack.c.l.s4 1983009808
  %v1011 = vunpack.c.0.s8 %v1010
  %v1012 = vlaneseq
  %v1013 = vshrl.u32 %v1012, 7
  %v1014 = vsub.s32 %v1011, %v1013
  %v1015 = vrot.slane %v337, %v1014
  %v1017 = vunpack.c.l.s4 1983009808
  %v1018 = vunpack.c.0.s8 %v1017
  %v1019 = vlaneseq
  %v1020 = vshrl.u32 %v1019, 7
  %v1021 = vsub.s32 %v1018, %v1020
  %v1022 = vrot.slane %v338, %v1021
  %v1024 = vunpack.c.l.s4 1983009808
  %v1025 = vunpack.c.0.s8 %v1024
  %v1026 = vlaneseq
  %v1027 = vshrl.u32 %v1026, 7
  %v1028 = vsub.s32 %v1025, %v1027
  %v1029 = vrot.slane %v339, %v1028
  %v1031 = vunpack.c.l.s4 1983009808
  %v1032 = vunpack.c.0.s8 %v1031
  %v1033 = vlaneseq
  %v1034 = vshrl.u32 %v1033, 7
  %v1035 = vsub.s32 %v1032, %v1034
  %v1036 = vrot.slane %v340, %v1035
  %v1038 = vunpack.c.l.s4 1983009808
  %v1039 = vunpack.c.0.s8 %v1038
  %v1040 = vlaneseq
  %v1041 = vshrl.u32 %v1040, 7
  %v1042 = vsub.s32 %v1039, %v1041
  %v1043 = vrot.slane %v341, %v1042
  %v1045 = vunpack.c.l.s4 1983009808
  %v1046 = vunpack.c.0.s8 %v1045
  %v1047 = vlaneseq
  %v1048 = vshrl.u32 %v1047, 7
  %v1049 = vsub.s32 %v1046, %v1048
  %v1050 = vrot.slane %v342, %v1049
  %v1052 = vunpack.c.l.s4 1983009808
  %v1053 = vunpack.c.0.s8 %v1052
  %v1054 = vlaneseq
  %v1055 = vshrl.u32 %v1054, 7
  %v1056 = vsub.s32 %v1053, %v1055
  %v1057 = vrot.slane %v343, %v1056
  %v1059 = vunpack.c.l.s4 1983009808
  %v1060 = vunpack.c.0.s8 %v1059
  %v1061 = vlaneseq
  %v1062 = vshrl.u32 %v1061, 7
  %v1063 = vsub.s32 %v1060, %v1062
  %v1064 = vrot.slane %v344, %v1063
  %v1066 = vunpack.c.l.s4 1983009808
  %v1067 = vunpack.c.0.s8 %v1066
  %v1068 = vlaneseq
  %v1069 = vshrl.u32 %v1068, 7
  %v1070 = vsub.s32 %v1067, %v1069
  %v1071 = vrot.slane %v345, %v1070
  %v1073 = vunpack.c.l.s4 1983009808
  %v1074 = vunpack.c.0.s8 %v1073
  %v1075 = vlaneseq
  %v1076 = vshrl.u32 %v1075, 7
  %v1077 = vsub.s32 %v1074, %v1076
  %v1078 = vrot.slane %v346, %v1077
  %v1080 = vunpack.c.l.s4 1983009808
  %v1081 = vunpack.c.0.s8 %v1080
  %v1082 = vlaneseq
  %v1083 = vshrl.u32 %v1082, 7
  %v1084 = vsub.s32 %v1081, %v1083
  %v1085 = vrot.slane %v347, %v1084
  %v1087 = vunpack.c.l.s4 1983009808
  %v1088 = vunpack.c.0.s8 %v1087
  %v1089 = vlaneseq
  %v1090 = vshrl.u32 %v1089, 7
  %v1091 = vsub.s32 %v1088, %v1090
  %v1092 = vrot.slane %v348, %v1091
  %v1094 = vunpack.c.l.s4 1983009808
  %v1095 = vunpack.c.0.s8 %v1094
  %v1096 = vlaneseq
  %v1097 = vshrl.u32 %v1096, 7
  %v1098 = vsub.s32 %v1095, %v1097
  %v1099 = vrot.slane %v349, %v1098
  %v1101 = vunpack.c.l.s4 1983009808
  %v1102 = vunpack.c.0.s8 %v1101
  %v1103 = vlaneseq
  %v1104 = vshrl.u32 %v1103, 7
  %v1105 = vsub.s32 %v1102, %v1104
  %v1106 = vrot.slane %v350, %v1105
  %v1108 = vunpack.c.l.s4 1983009808
  %v1109 = vunpack.c.0.s8 %v1108
  %v1110 = vlaneseq
  %v1111 = vshrl.u32 %v1110, 7
  %v1112 = vsub.s32 %v1109, %v1111
  %v1113 = vrot.slane %v351, %v1112
  %v1115 = vunpack.c.l.s4 1983009808
  %v1116 = vunpack.c.0.s8 %v1115
  %v1117 = vlaneseq
  %v1118 = vshrl.u32 %v1117, 7
  %v1119 = vsub.s32 %v1116, %v1118
  %v1120 = vrot.slane %v352, %v1119
  %v1122 = vunpack.c.l.s4 1983009808
  %v1123 = vunpack.c.0.s8 %v1122
  %v1124 = vlaneseq
  %v1125 = vshrl.u32 %v1124, 7
  %v1126 = vsub.s32 %v1123, %v1125
  %v1127 = vrot.slane %v353, %v1126
  %v1129 = vunpack.c.l.s4 1983009808
  %v1130 = vunpack.c.0.s8 %v1129
  %v1131 = vlaneseq
  %v1132 = vshrl.u32 %v1131, 7
  %v1133 = vsub.s32 %v1130, %v1132
  %v1134 = vrot.slane %v354, %v1133
  %v1136 = vunpack.c.l.s4 1983009808
  %v1137 = vunpack.c.0.s8 %v1136
  %v1138 = vlaneseq
  %v1139 = vshrl.u32 %v1138, 7
  %v1140 = vsub.s32 %v1137, %v1139
  %v1141 = vrot.slane %v355, %v1140
  %v1143 = vunpack.c.l.s4 1983009808
  %v1144 = vunpack.c.0.s8 %v1143
  %v1145 = vlaneseq
  %v1146 = vshrl.u32 %v1145, 7
  %v1147 = vsub.s32 %v1144, %v1146
  %v1148 = vrot.slane %v356, %v1147
  %v1150 = vunpack.c.l.s4 1983009808
  %v1151 = vunpack.c.0.s8 %v1150
  %v1152 = vlaneseq
  %v1153 = vshrl.u32 %v1152, 7
  %v1154 = vsub.s32 %v1151, %v1153
  %v1155 = vrot.slane %v357, %v1154
  %v1157 = vunpack.c.l.s4 1983009808
  %v1158 = vunpack.c.0.s8 %v1157
  %v1159 = vlaneseq
  %v1160 = vshrl.u32 %v1159, 7
  %v1161 = vsub.s32 %v1158, %v1160
  %v1162 = vrot.slane %v358, %v1161
  %v1164 = vunpack.c.l.s4 1983009808
  %v1165 = vunpack.c.0.s8 %v1164
  %v1166 = vlaneseq
  %v1167 = vshrl.u32 %v1166, 7
  %v1168 = vsub.s32 %v1165, %v1167
  %v1169 = vrot.slane %v359, %v1168
  %v1171 = vunpack.c.l.s4 1983009808
  %v1172 = vunpack.c.0.s8 %v1171
  %v1173 = vlaneseq
  %v1174 = vshrl.u32 %v1173, 7
  %v1175 = vsub.s32 %v1172, %v1174
  %v1176 = vrot.slane %v360, %v1175
  %v1178 = vunpack.c.l.s4 1983009808
  %v1179 = vunpack.c.0.s8 %v1178
  %v1180 = vlaneseq
  %v1181 = vshrl.u32 %v1180, 7
  %v1182 = vsub.s32 %v1179, %v1181
  %v1183 = vrot.slane %v361, %v1182
  %v1185 = vunpack.c.l.s4 1983009808
  %v1186 = vunpack.c.0.s8 %v1185
  %v1187 = vlaneseq
  %v1188 = vshrl.u32 %v1187, 7
  %v1189 = vsub.s32 %v1186, %v1188
  %v1190 = vrot.slane %v362, %v1189
  %v1192 = vunpack.c.l.s4 1983009808
  %v1193 = vunpack.c.0.s8 %v1192
  %v1194 = vlaneseq
  %v1195 = vshrl.u32 %v1194, 7
  %v1196 = vsub.s32 %v1193, %v1195
  %v1197 = vrot.slane %v363, %v1196
  %v1199 = vunpack.c.l.s4 1983009808
  %v1200 = vunpack.c.0.s8 %v1199
  %v1201 = vlaneseq
  %v1202 = vshrl.u32 %v1201, 7
  %v1203 = vsub.s32 %v1200, %v1202
  %v1204 = vrot.slane %v364, %v1203
  %v1206 = vunpack.c.l.s4 1983009808
  %v1207 = vunpack.c.0.s8 %v1206
  %v1208 = vlaneseq
  %v1209 = vshrl.u32 %v1208, 7
  %v1210 = vsub.s32 %v1207, %v1209
  %v1211 = vrot.slane %v365, %v1210
  %v1213 = vunpack.c.l.s4 1983009808
  %v1214 = vunpack.c.0.s8 %v1213
  %v1215 = vlaneseq
  %v1216 = vshrl.u32 %v1215, 7
  %v1217 = vsub.s32 %v1214, %v1216
  %v1218 = vrot.slane %v366, %v1217
  %v1220 = vunpack.c.l.s4 1983009808
  %v1221 = vunpack.c.0.s8 %v1220
  %v1222 = vlaneseq
  %v1223 = vshrl.u32 %v1222, 7
  %v1224 = vsub.s32 %v1221, %v1223
  %v1225 = vrot.slane %v367, %v1224
  %v1227 = vunpack.c.l.s4 1983009808
  %v1228 = vunpack.c.0.s8 %v1227
  %v1229 = vlaneseq
  %v1230 = vshrl.u32 %v1229, 7
  %v1231 = vsub.s32 %v1228, %v1230
  %v1232 = vrot.slane %v368, %v1231
  %v1234 = vunpack.c.l.s4 1983009808
  %v1235 = vunpack.c.0.s8 %v1234
  %v1236 = vlaneseq
  %v1237 = vshrl.u32 %v1236, 7
  %v1238 = vsub.s32 %v1235, %v1237
  %v1239 = vrot.slane %v369, %v1238
  %v1241 = vunpack.c.l.s4 1983009808
  %v1242 = vunpack.c.0.s8 %v1241
  %v1243 = vlaneseq
  %v1244 = vshrl.u32 %v1243, 7
  %v1245 = vsub.s32 %v1242, %v1244
  %v1246 = vrot.slane %v370, %v1245
  %v1248 = vunpack.c.l.s4 1983009808
  %v1249 = vunpack.c.0.s8 %v1248
  %v1250 = vlaneseq
  %v1251 = vshrl.u32 %v1250, 7
  %v1252 = vsub.s32 %v1249, %v1251
  %v1253 = vrot.slane %v371, %v1252
  %v1255 = vunpack.c.l.s4 1983009808
  %v1256 = vunpack.c.0.s8 %v1255
  %v1257 = vlaneseq
  %v1258 = vshrl.u32 %v1257, 7
  %v1259 = vsub.s32 %v1256, %v1258
  %v1260 = vrot.slane %v372, %v1259
  %v1262 = vunpack.c.l.s4 1983009808
  %v1263 = vunpack.c.0.s8 %v1262
  %v1264 = vlaneseq
  %v1265 = vshrl.u32 %v1264, 7
  %v1266 = vsub.s32 %v1263, %v1265
  %v1267 = vrot.slane %v373, %v1266
  %v1269 = vunpack.c.l.s4 1983009808
  %v1270 = vunpack.c.0.s8 %v1269
  %v1271 = vlaneseq
  %v1272 = vshrl.u32 %v1271, 7
  %v1273 = vsub.s32 %v1270, %v1272
  %v1274 = vrot.slane %v374, %v1273
  %v1276 = vunpack.c.l.s4 1983009808
  %v1277 = vunpack.c.0.s8 %v1276
  %v1278 = vlaneseq
  %v1279 = vshrl.u32 %v1278, 7
  %v1280 = vsub.s32 %v1277, %v1279
  %v1281 = vrot.slane %v375, %v1280
  %v1283 = vunpack.c.l.s4 1983009808
  %v1284 = vunpack.c.0.s8 %v1283
  %v1285 = vlaneseq
  %v1286 = vshrl.u32 %v1285, 7
  %v1287 = vsub.s32 %v1284, %v1286
  %v1288 = vrot.slane %v376, %v1287
  %v1290 = vunpack.c.l.s4 1983009808
  %v1291 = vunpack.c.0.s8 %v1290
  %v1292 = vlaneseq
  %v1293 = vshrl.u32 %v1292, 7
  %v1294 = vsub.s32 %v1291, %v1293
  %v1295 = vrot.slane %v377, %v1294
  %v1297 = vunpack.c.l.s4 1983009808
  %v1298 = vunpack.c.0.s8 %v1297
  %v1299 = vlaneseq
  %v1300 = vshrl.u32 %v1299, 7
  %v1301 = vsub.s32 %v1298, %v1300
  %v1302 = vrot.slane %v378, %v1301
  %v1304 = vunpack.c.l.s4 1983009808
  %v1305 = vunpack.c.0.s8 %v1304
  %v1306 = vlaneseq
  %v1307 = vshrl.u32 %v1306, 7
  %v1308 = vsub.s32 %v1305, %v1307
  %v1309 = vrot.slane %v379, %v1308
  %v1311 = vunpack.c.l.s4 1983009808
  %v1312 = vunpack.c.0.s8 %v1311
  %v1313 = vlaneseq
  %v1314 = vshrl.u32 %v1313, 7
  %v1315 = vsub.s32 %v1312, %v1314
  %v1316 = vrot.slane %v380, %v1315
  %v1318 = vunpack.c.l.s4 1983009808
  %v1319 = vunpack.c.0.s8 %v1318
  %v1320 = vlaneseq
  %v1321 = vshrl.u32 %v1320, 7
  %v1322 = vsub.s32 %v1319, %v1321
  %v1323 = vrot.slane %v381, %v1322
  %v1325 = vunpack.c.l.s4 1983009808
  %v1326 = vunpack.c.0.s8 %v1325
  %v1327 = vlaneseq
  %v1328 = vshrl.u32 %v1327, 7
  %v1329 = vsub.s32 %v1326, %v1328
  %v1330 = vrot.slane %v382, %v1329
  %v1332 = vunpack.c.l.s4 1983009808
  %v1333 = vunpack.c.0.s8 %v1332
  %v1334 = vlaneseq
  %v1335 = vshrl.u32 %v1334, 7
  %v1336 = vsub.s32 %v1333, %v1335
  %v1337 = vrot.slane %v383, %v1336
  %v1339 = vunpack.c.l.s4 1983009808
  %v1340 = vunpack.c.0.s8 %v1339
  %v1341 = vlaneseq
  %v1342 = vshrl.u32 %v1341, 7
  %v1343 = vsub.s32 %v1340, %v1342
  %v1344 = vrot.slane %v384, %v1343
  %v1346 = vunpack.c.l.s4 1983009808
  %v1347 = vunpack.c.0.s8 %v1346
  %v1348 = vlaneseq
  %v1349 = vshrl.u32 %v1348, 7
  %v1350 = vsub.s32 %v1347, %v1349
  %v1351 = vrot.slane %v385, %v1350
  %v1353 = vunpack.c.l.s4 1983009808
  %v1354 = vunpack.c.0.s8 %v1353
  %v1355 = vlaneseq
  %v1356 = vshrl.u32 %v1355, 7
  %v1357 = vsub.s32 %v1354, %v1356
  %v1358 = vrot.slane %v386, %v1357
  %v1360 = vunpack.c.l.s4 1983009808
  %v1361 = vunpack.c.0.s8 %v1360
  %v1362 = vlaneseq
  %v1363 = vshrl.u32 %v1362, 7
  %v1364 = vsub.s32 %v1361, %v1363
  %v1365 = vrot.slane %v387, %v1364
  %v1367 = vunpack.c.l.s4 1983009808
  %v1368 = vunpack.c.0.s8 %v1367
  %v1369 = vlaneseq
  %v1370 = vshrl.u32 %v1369, 7
  %v1371 = vsub.s32 %v1368, %v1370
  %v1372 = vrot.slane %v388, %v1371
  %v1374 = vunpack.c.l.s4 1983009808
  %v1375 = vunpack.c.0.s8 %v1374
  %v1376 = vlaneseq
  %v1377 = vshrl.u32 %v1376, 7
  %v1378 = vsub.s32 %v1375, %v1377
  %v1379 = vrot.slane %v389, %v1378
  %v1381 = vunpack.c.l.s4 1983009808
  %v1382 = vunpack.c.0.s8 %v1381
  %v1383 = vlaneseq
  %v1384 = vshrl.u32 %v1383, 7
  %v1385 = vsub.s32 %v1382, %v1384
  %v1386 = vrot.slane %v390, %v1385
  %v1388 = vunpack.c.l.s4 1983009808
  %v1389 = vunpack.c.0.s8 %v1388
  %v1390 = vlaneseq
  %v1391 = vshrl.u32 %v1390, 7
  %v1392 = vsub.s32 %v1389, %v1391
  %v1393 = vrot.slane %v391, %v1392
  %v1395 = vunpack.c.l.s4 1983009808
  %v1396 = vunpack.c.0.s8 %v1395
  %v1397 = vlaneseq
  %v1398 = vshrl.u32 %v1397, 7
  %v1399 = vsub.s32 %v1396, %v1398
  %v1400 = vrot.slane %v392, %v1399
  %v1402 = vunpack.c.l.s4 1983009808
  %v1403 = vunpack.c.0.s8 %v1402
  %v1404 = vlaneseq
  %v1405 = vshrl.u32 %v1404, 7
  %v1406 = vsub.s32 %v1403, %v1405
  %v1407 = vrot.slane %v393, %v1406
  %v1409 = vunpack.c.l.s4 1983009808
  %v1410 = vunpack.c.0.s8 %v1409
  %v1411 = vlaneseq
  %v1412 = vshrl.u32 %v1411, 7
  %v1413 = vsub.s32 %v1410, %v1412
  %v1414 = vrot.slane %v394, %v1413
  %v1416 = vunpack.c.l.s4 1983009808
  %v1417 = vunpack.c.0.s8 %v1416
  %v1418 = vlaneseq
  %v1419 = vshrl.u32 %v1418, 7
  %v1420 = vsub.s32 %v1417, %v1419
  %v1421 = vrot.slane %v395, %v1420
  %v1423 = vunpack.c.l.s4 1983009808
  %v1424 = vunpack.c.0.s8 %v1423
  %v1425 = vlaneseq
  %v1426 = vshrl.u32 %v1425, 7
  %v1427 = vsub.s32 %v1424, %v1426
  %v1428 = vrot.slane %v396, %v1427
  %v1430 = vunpack.c.l.s4 1983009808
  %v1431 = vunpack.c.0.s8 %v1430
  %v1432 = vlaneseq
  %v1433 = vshrl.u32 %v1432, 7
  %v1434 = vsub.s32 %v1431, %v1433
  %v1435 = vrot.slane %v397, %v1434
  %1436 = vset.pattern.permute.xlu0 0
  %1437 = vperm.xlu0 %1436, %v546
  %v1438 = vpop.permute.xlu0 %1437
  %1439 = vset.pattern.permute.xlu0 0
  %1440 = vperm.xlu0 %1439, %v553
  %v1441 = vpop.permute.xlu0 %1440
  %1442 = vset.pattern.permute.xlu0 0
  %1443 = vperm.xlu0 %1442, %v560
  %v1444 = vpop.permute.xlu0 %1443
  %1445 = vset.pattern.permute.xlu0 0
  %1446 = vperm.xlu0 %1445, %v567
  %v1447 = vpop.permute.xlu0 %1446
  %1448 = vset.pattern.permute.xlu0 0
  %1449 = vperm.xlu0 %1448, %v574
  %v1450 = vpop.permute.xlu0 %1449
  %1451 = vset.pattern.permute.xlu0 0
  %1452 = vperm.xlu0 %1451, %v581
  %v1453 = vpop.permute.xlu0 %1452
  %1454 = vset.pattern.permute.xlu0 0
  %1455 = vperm.xlu0 %1454, %v588
  %v1456 = vpop.permute.xlu0 %1455
  %1457 = vset.pattern.permute.xlu0 0
  %1458 = vperm.xlu0 %1457, %v595
  %v1459 = vpop.permute.xlu0 %1458
  %1460 = vset.pattern.permute.xlu0 0
  %1461 = vperm.xlu0 %1460, %v602
  %v1462 = vpop.permute.xlu0 %1461
  %1463 = vset.pattern.permute.xlu0 0
  %1464 = vperm.xlu0 %1463, %v609
  %v1465 = vpop.permute.xlu0 %1464
  %1466 = vset.pattern.permute.xlu0 0
  %1467 = vperm.xlu0 %1466, %v616
  %v1468 = vpop.permute.xlu0 %1467
  %1469 = vset.pattern.permute.xlu0 0
  %1470 = vperm.xlu0 %1469, %v623
  %v1471 = vpop.permute.xlu0 %1470
  %1472 = vset.pattern.permute.xlu0 0
  %1473 = vperm.xlu0 %1472, %v630
  %v1474 = vpop.permute.xlu0 %1473
  %1475 = vset.pattern.permute.xlu0 0
  %1476 = vperm.xlu0 %1475, %v637
  %v1477 = vpop.permute.xlu0 %1476
  %1478 = vset.pattern.permute.xlu0 0
  %1479 = vperm.xlu0 %1478, %v644
  %v1480 = vpop.permute.xlu0 %1479
  %1481 = vset.pattern.permute.xlu0 0
  %1482 = vperm.xlu0 %1481, %v651
  %v1483 = vpop.permute.xlu0 %1482
  %1484 = vset.pattern.permute.xlu0 0
  %1485 = vperm.xlu0 %1484, %v658
  %v1486 = vpop.permute.xlu0 %1485
  %1487 = vset.pattern.permute.xlu0 0
  %1488 = vperm.xlu0 %1487, %v665
  %v1489 = vpop.permute.xlu0 %1488
  %1490 = vset.pattern.permute.xlu0 0
  %1491 = vperm.xlu0 %1490, %v672
  %v1492 = vpop.permute.xlu0 %1491
  %1493 = vset.pattern.permute.xlu0 0
  %1494 = vperm.xlu0 %1493, %v679
  %v1495 = vpop.permute.xlu0 %1494
  %1496 = vset.pattern.permute.xlu0 0
  %1497 = vperm.xlu0 %1496, %v686
  %v1498 = vpop.permute.xlu0 %1497
  %1499 = vset.pattern.permute.xlu0 0
  %1500 = vperm.xlu0 %1499, %v693
  %v1501 = vpop.permute.xlu0 %1500
  %1502 = vset.pattern.permute.xlu0 0
  %1503 = vperm.xlu0 %1502, %v700
  %v1504 = vpop.permute.xlu0 %1503
  %1505 = vset.pattern.permute.xlu0 0
  %1506 = vperm.xlu0 %1505, %v707
  %v1507 = vpop.permute.xlu0 %1506
  %1508 = vset.pattern.permute.xlu0 0
  %1509 = vperm.xlu0 %1508, %v714
  %v1510 = vpop.permute.xlu0 %1509
  %1511 = vset.pattern.permute.xlu0 0
  %1512 = vperm.xlu0 %1511, %v721
  %v1513 = vpop.permute.xlu0 %1512
  %1514 = vset.pattern.permute.xlu0 0
  %1515 = vperm.xlu0 %1514, %v728
  %v1516 = vpop.permute.xlu0 %1515
  %1517 = vset.pattern.permute.xlu0 0
  %1518 = vperm.xlu0 %1517, %v735
  %v1519 = vpop.permute.xlu0 %1518
  %1520 = vset.pattern.permute.xlu0 0
  %1521 = vperm.xlu0 %1520, %v742
  %v1522 = vpop.permute.xlu0 %1521
  %1523 = vset.pattern.permute.xlu0 0
  %1524 = vperm.xlu0 %1523, %v749
  %v1525 = vpop.permute.xlu0 %1524
  %1526 = vset.pattern.permute.xlu0 0
  %1527 = vperm.xlu0 %1526, %v756
  %v1528 = vpop.permute.xlu0 %1527
  %1529 = vset.pattern.permute.xlu0 0
  %1530 = vperm.xlu0 %1529, %v763
  %v1531 = vpop.permute.xlu0 %1530
  %1532 = vset.pattern.permute.xlu0 0
  %1533 = vperm.xlu0 %1532, %v770
  %v1534 = vpop.permute.xlu0 %1533
  %1535 = vset.pattern.permute.xlu0 0
  %1536 = vperm.xlu0 %1535, %v777
  %v1537 = vpop.permute.xlu0 %1536
  %1538 = vset.pattern.permute.xlu0 0
  %1539 = vperm.xlu0 %1538, %v784
  %v1540 = vpop.permute.xlu0 %1539
  %1541 = vset.pattern.permute.xlu0 0
  %1542 = vperm.xlu0 %1541, %v791
  %v1543 = vpop.permute.xlu0 %1542
  %1544 = vset.pattern.permute.xlu0 0
  %1545 = vperm.xlu0 %1544, %v798
  %v1546 = vpop.permute.xlu0 %1545
  %1547 = vset.pattern.permute.xlu0 0
  %1548 = vperm.xlu0 %1547, %v805
  %v1549 = vpop.permute.xlu0 %1548
  %1550 = vset.pattern.permute.xlu0 0
  %1551 = vperm.xlu0 %1550, %v812
  %v1552 = vpop.permute.xlu0 %1551
  %1553 = vset.pattern.permute.xlu0 0
  %1554 = vperm.xlu0 %1553, %v819
  %v1555 = vpop.permute.xlu0 %1554
  %1556 = vset.pattern.permute.xlu0 0
  %1557 = vperm.xlu0 %1556, %v826
  %v1558 = vpop.permute.xlu0 %1557
  %1559 = vset.pattern.permute.xlu0 0
  %1560 = vperm.xlu0 %1559, %v833
  %v1561 = vpop.permute.xlu0 %1560
  %1562 = vset.pattern.permute.xlu0 0
  %1563 = vperm.xlu0 %1562, %v840
  %v1564 = vpop.permute.xlu0 %1563
  %1565 = vset.pattern.permute.xlu0 0
  %1566 = vperm.xlu0 %1565, %v847
  %v1567 = vpop.permute.xlu0 %1566
  %1568 = vset.pattern.permute.xlu0 0
  %1569 = vperm.xlu0 %1568, %v854
  %v1570 = vpop.permute.xlu0 %1569
  %1571 = vset.pattern.permute.xlu0 0
  %1572 = vperm.xlu0 %1571, %v861
  %v1573 = vpop.permute.xlu0 %1572
  %1574 = vset.pattern.permute.xlu0 0
  %1575 = vperm.xlu0 %1574, %v868
  %v1576 = vpop.permute.xlu0 %1575
  %1577 = vset.pattern.permute.xlu0 0
  %1578 = vperm.xlu0 %1577, %v875
  %v1579 = vpop.permute.xlu0 %1578
  %1580 = vset.pattern.permute.xlu0 0
  %1581 = vperm.xlu0 %1580, %v882
  %v1582 = vpop.permute.xlu0 %1581
  %1583 = vset.pattern.permute.xlu0 0
  %1584 = vperm.xlu0 %1583, %v889
  %v1585 = vpop.permute.xlu0 %1584
  %1586 = vset.pattern.permute.xlu0 0
  %1587 = vperm.xlu0 %1586, %v896
  %v1588 = vpop.permute.xlu0 %1587
  %1589 = vset.pattern.permute.xlu0 0
  %1590 = vperm.xlu0 %1589, %v903
  %v1591 = vpop.permute.xlu0 %1590
  %1592 = vset.pattern.permute.xlu0 0
  %1593 = vperm.xlu0 %1592, %v910
  %v1594 = vpop.permute.xlu0 %1593
  %1595 = vset.pattern.permute.xlu0 0
  %1596 = vperm.xlu0 %1595, %v917
  %v1597 = vpop.permute.xlu0 %1596
  %1598 = vset.pattern.permute.xlu0 0
  %1599 = vperm.xlu0 %1598, %v924
  %v1600 = vpop.permute.xlu0 %1599
  %1601 = vset.pattern.permute.xlu0 0
  %1602 = vperm.xlu0 %1601, %v931
  %v1603 = vpop.permute.xlu0 %1602
  %1604 = vset.pattern.permute.xlu0 0
  %1605 = vperm.xlu0 %1604, %v938
  %v1606 = vpop.permute.xlu0 %1605
  %1607 = vset.pattern.permute.xlu0 0
  %1608 = vperm.xlu0 %1607, %v945
  %v1609 = vpop.permute.xlu0 %1608
  %1610 = vset.pattern.permute.xlu0 0
  %1611 = vperm.xlu0 %1610, %v952
  %v1612 = vpop.permute.xlu0 %1611
  %1613 = vset.pattern.permute.xlu0 0
  %1614 = vperm.xlu0 %1613, %v959
  %v1615 = vpop.permute.xlu0 %1614
  %1616 = vset.pattern.permute.xlu0 0
  %1617 = vperm.xlu0 %1616, %v966
  %v1618 = vpop.permute.xlu0 %1617
  %1619 = vset.pattern.permute.xlu0 0
  %1620 = vperm.xlu0 %1619, %v973
  %v1621 = vpop.permute.xlu0 %1620
  %1622 = vset.pattern.permute.xlu0 0
  %1623 = vperm.xlu0 %1622, %v980
  %v1624 = vpop.permute.xlu0 %1623
  %1625 = vset.pattern.permute.xlu0 0
  %1626 = vperm.xlu0 %1625, %v987
  %v1627 = vpop.permute.xlu0 %1626
  %1628 = vset.pattern.permute.xlu0 0
  %1629 = vperm.xlu0 %1628, %v994
  %v1630 = vpop.permute.xlu0 %1629
  %1631 = vset.pattern.permute.xlu0 0
  %1632 = vperm.xlu0 %1631, %v1001
  %v1633 = vpop.permute.xlu0 %1632
  %1634 = vset.pattern.permute.xlu0 0
  %1635 = vperm.xlu0 %1634, %v1008
  %v1636 = vpop.permute.xlu0 %1635
  %1637 = vset.pattern.permute.xlu0 0
  %1638 = vperm.xlu0 %1637, %v1015
  %v1639 = vpop.permute.xlu0 %1638
  %1640 = vset.pattern.permute.xlu0 0
  %1641 = vperm.xlu0 %1640, %v1022
  %v1642 = vpop.permute.xlu0 %1641
  %1643 = vset.pattern.permute.xlu0 0
  %1644 = vperm.xlu0 %1643, %v1029
  %v1645 = vpop.permute.xlu0 %1644
  %1646 = vset.pattern.permute.xlu0 0
  %1647 = vperm.xlu0 %1646, %v1036
  %v1648 = vpop.permute.xlu0 %1647
  %1649 = vset.pattern.permute.xlu0 0
  %1650 = vperm.xlu0 %1649, %v1043
  %v1651 = vpop.permute.xlu0 %1650
  %1652 = vset.pattern.permute.xlu0 0
  %1653 = vperm.xlu0 %1652, %v1050
  %v1654 = vpop.permute.xlu0 %1653
  %1655 = vset.pattern.permute.xlu0 0
  %1656 = vperm.xlu0 %1655, %v1057
  %v1657 = vpop.permute.xlu0 %1656
  %1658 = vset.pattern.permute.xlu0 0
  %1659 = vperm.xlu0 %1658, %v1064
  %v1660 = vpop.permute.xlu0 %1659
  %1661 = vset.pattern.permute.xlu0 0
  %1662 = vperm.xlu0 %1661, %v1071
  %v1663 = vpop.permute.xlu0 %1662
  %1664 = vset.pattern.permute.xlu0 0
  %1665 = vperm.xlu0 %1664, %v1078
  %v1666 = vpop.permute.xlu0 %1665
  %1667 = vset.pattern.permute.xlu0 0
  %1668 = vperm.xlu0 %1667, %v1085
  %v1669 = vpop.permute.xlu0 %1668
  %1670 = vset.pattern.permute.xlu0 0
  %1671 = vperm.xlu0 %1670, %v1092
  %v1672 = vpop.permute.xlu0 %1671
  %1673 = vset.pattern.permute.xlu0 0
  %1674 = vperm.xlu0 %1673, %v1099
  %v1675 = vpop.permute.xlu0 %1674
  %1676 = vset.pattern.permute.xlu0 0
  %1677 = vperm.xlu0 %1676, %v1106
  %v1678 = vpop.permute.xlu0 %1677
  %1679 = vset.pattern.permute.xlu0 0
  %1680 = vperm.xlu0 %1679, %v1113
  %v1681 = vpop.permute.xlu0 %1680
  %1682 = vset.pattern.permute.xlu0 0
  %1683 = vperm.xlu0 %1682, %v1120
  %v1684 = vpop.permute.xlu0 %1683
  %1685 = vset.pattern.permute.xlu0 0
  %1686 = vperm.xlu0 %1685, %v1127
  %v1687 = vpop.permute.xlu0 %1686
  %1688 = vset.pattern.permute.xlu0 0
  %1689 = vperm.xlu0 %1688, %v1134
  %v1690 = vpop.permute.xlu0 %1689
  %1691 = vset.pattern.permute.xlu0 0
  %1692 = vperm.xlu0 %1691, %v1141
  %v1693 = vpop.permute.xlu0 %1692
  %1694 = vset.pattern.permute.xlu0 0
  %1695 = vperm.xlu0 %1694, %v1148
  %v1696 = vpop.permute.xlu0 %1695
  %1697 = vset.pattern.permute.xlu0 0
  %1698 = vperm.xlu0 %1697, %v1155
  %v1699 = vpop.permute.xlu0 %1698
  %1700 = vset.pattern.permute.xlu0 0
  %1701 = vperm.xlu0 %1700, %v1162
  %v1702 = vpop.permute.xlu0 %1701
  %1703 = vset.pattern.permute.xlu0 0
  %1704 = vperm.xlu0 %1703, %v1169
  %v1705 = vpop.permute.xlu0 %1704
  %1706 = vset.pattern.permute.xlu0 0
  %1707 = vperm.xlu0 %1706, %v1176
  %v1708 = vpop.permute.xlu0 %1707
  %1709 = vset.pattern.permute.xlu0 0
  %1710 = vperm.xlu0 %1709, %v1183
  %v1711 = vpop.permute.xlu0 %1710
  %1712 = vset.pattern.permute.xlu0 0
  %1713 = vperm.xlu0 %1712, %v1190
  %v1714 = vpop.permute.xlu0 %1713
  %1715 = vset.pattern.permute.xlu0 0
  %1716 = vperm.xlu0 %1715, %v1197
  %v1717 = vpop.permute.xlu0 %1716
  %1718 = vset.pattern.permute.xlu0 0
  %1719 = vperm.xlu0 %1718, %v1204
  %v1720 = vpop.permute.xlu0 %1719
  %1721 = vset.pattern.permute.xlu0 0
  %1722 = vperm.xlu0 %1721, %v1211
  %v1723 = vpop.permute.xlu0 %1722
  %1724 = vset.pattern.permute.xlu0 0
  %1725 = vperm.xlu0 %1724, %v1218
  %v1726 = vpop.permute.xlu0 %1725
  %1727 = vset.pattern.permute.xlu0 0
  %1728 = vperm.xlu0 %1727, %v1225
  %v1729 = vpop.permute.xlu0 %1728
  %1730 = vset.pattern.permute.xlu0 0
  %1731 = vperm.xlu0 %1730, %v1232
  %v1732 = vpop.permute.xlu0 %1731
  %1733 = vset.pattern.permute.xlu0 0
  %1734 = vperm.xlu0 %1733, %v1239
  %v1735 = vpop.permute.xlu0 %1734
  %1736 = vset.pattern.permute.xlu0 0
  %1737 = vperm.xlu0 %1736, %v1246
  %v1738 = vpop.permute.xlu0 %1737
  %1739 = vset.pattern.permute.xlu0 0
  %1740 = vperm.xlu0 %1739, %v1253
  %v1741 = vpop.permute.xlu0 %1740
  %1742 = vset.pattern.permute.xlu0 0
  %1743 = vperm.xlu0 %1742, %v1260
  %v1744 = vpop.permute.xlu0 %1743
  %1745 = vset.pattern.permute.xlu0 0
  %1746 = vperm.xlu0 %1745, %v1267
  %v1747 = vpop.permute.xlu0 %1746
  %1748 = vset.pattern.permute.xlu0 0
  %1749 = vperm.xlu0 %1748, %v1274
  %v1750 = vpop.permute.xlu0 %1749
  %1751 = vset.pattern.permute.xlu0 0
  %1752 = vperm.xlu0 %1751, %v1281
  %v1753 = vpop.permute.xlu0 %1752
  %1754 = vset.pattern.permute.xlu0 0
  %1755 = vperm.xlu0 %1754, %v1288
  %v1756 = vpop.permute.xlu0 %1755
  %1757 = vset.pattern.permute.xlu0 0
  %1758 = vperm.xlu0 %1757, %v1295
  %v1759 = vpop.permute.xlu0 %1758
  %1760 = vset.pattern.permute.xlu0 0
  %1761 = vperm.xlu0 %1760, %v1302
  %v1762 = vpop.permute.xlu0 %1761
  %1763 = vset.pattern.permute.xlu0 0
  %1764 = vperm.xlu0 %1763, %v1309
  %v1765 = vpop.permute.xlu0 %1764
  %1766 = vset.pattern.permute.xlu0 0
  %1767 = vperm.xlu0 %1766, %v1316
  %v1768 = vpop.permute.xlu0 %1767
  %1769 = vset.pattern.permute.xlu0 0
  %1770 = vperm.xlu0 %1769, %v1323
  %v1771 = vpop.permute.xlu0 %1770
  %1772 = vset.pattern.permute.xlu0 0
  %1773 = vperm.xlu0 %1772, %v1330
  %v1774 = vpop.permute.xlu0 %1773
  %1775 = vset.pattern.permute.xlu0 0
  %1776 = vperm.xlu0 %1775, %v1337
  %v1777 = vpop.permute.xlu0 %1776
  %1778 = vset.pattern.permute.xlu0 0
  %1779 = vperm.xlu0 %1778, %v1344
  %v1780 = vpop.permute.xlu0 %1779
  %1781 = vset.pattern.permute.xlu0 0
  %1782 = vperm.xlu0 %1781, %v1351
  %v1783 = vpop.permute.xlu0 %1782
  %1784 = vset.pattern.permute.xlu0 0
  %1785 = vperm.xlu0 %1784, %v1358
  %v1786 = vpop.permute.xlu0 %1785
  %1787 = vset.pattern.permute.xlu0 0
  %1788 = vperm.xlu0 %1787, %v1365
  %v1789 = vpop.permute.xlu0 %1788
  %1790 = vset.pattern.permute.xlu0 0
  %1791 = vperm.xlu0 %1790, %v1372
  %v1792 = vpop.permute.xlu0 %1791
  %1793 = vset.pattern.permute.xlu0 0
  %1794 = vperm.xlu0 %1793, %v1379
  %v1795 = vpop.permute.xlu0 %1794
  %1796 = vset.pattern.permute.xlu0 0
  %1797 = vperm.xlu0 %1796, %v1386
  %v1798 = vpop.permute.xlu0 %1797
  %1799 = vset.pattern.permute.xlu0 0
  %1800 = vperm.xlu0 %1799, %v1393
  %v1801 = vpop.permute.xlu0 %1800
  %1802 = vset.pattern.permute.xlu0 0
  %1803 = vperm.xlu0 %1802, %v1400
  %v1804 = vpop.permute.xlu0 %1803
  %1805 = vset.pattern.permute.xlu0 0
  %1806 = vperm.xlu0 %1805, %v1407
  %v1807 = vpop.permute.xlu0 %1806
  %1808 = vset.pattern.permute.xlu0 0
  %1809 = vperm.xlu0 %1808, %v1414
  %v1810 = vpop.permute.xlu0 %1809
  %1811 = vset.pattern.permute.xlu0 0
  %1812 = vperm.xlu0 %1811, %v1421
  %v1813 = vpop.permute.xlu0 %1812
  %1814 = vset.pattern.permute.xlu0 0
  %1815 = vperm.xlu0 %1814, %v1428
  %v1816 = vpop.permute.xlu0 %1815
  %1817 = vset.pattern.permute.xlu0 0
  %1818 = vperm.xlu0 %1817, %v1435
  %v1819 = vpop.permute.xlu0 %1818
  %v1820 = vlaneseq
  %v1821 = vand.u32 %v1820, 127
  %v1822 = vlaneseq
  %v1823 = vshrl.u32 %v1822, 7
  %v1824 = vsub.s32 %v1821, %v1823
  %v1825 = vrot.slane %v1438, %v1824
  %v1826 = vlaneseq
  %v1827 = vshrl.u32 %v1826, 7
  %v1828 = vsub.s32 %v1821, %v1827
  %v1829 = vrot.slane %v1441, %v1828
  %v1830 = vlaneseq
  %v1831 = vshrl.u32 %v1830, 7
  %v1832 = vsub.s32 %v1821, %v1831
  %v1833 = vrot.slane %v1444, %v1832
  %v1834 = vlaneseq
  %v1835 = vshrl.u32 %v1834, 7
  %v1836 = vsub.s32 %v1821, %v1835
  %v1837 = vrot.slane %v1447, %v1836
  %v1838 = vlaneseq
  %v1839 = vshrl.u32 %v1838, 7
  %v1840 = vsub.s32 %v1821, %v1839
  %v1841 = vrot.slane %v1450, %v1840
  %v1842 = vlaneseq
  %v1843 = vshrl.u32 %v1842, 7
  %v1844 = vsub.s32 %v1821, %v1843
  %v1845 = vrot.slane %v1453, %v1844
  %v1846 = vlaneseq
  %v1847 = vshrl.u32 %v1846, 7
  %v1848 = vsub.s32 %v1821, %v1847
  %v1849 = vrot.slane %v1456, %v1848
  %v1850 = vlaneseq
  %v1851 = vshrl.u32 %v1850, 7
  %v1852 = vsub.s32 %v1821, %v1851
  %v1853 = vrot.slane %v1459, %v1852
  %v1854 = vlaneseq
  %v1855 = vshrl.u32 %v1854, 7
  %v1856 = vsub.s32 %v1821, %v1855
  %v1857 = vrot.slane %v1462, %v1856
  %v1858 = vlaneseq
  %v1859 = vshrl.u32 %v1858, 7
  %v1860 = vsub.s32 %v1821, %v1859
  %v1861 = vrot.slane %v1465, %v1860
  %v1862 = vlaneseq
  %v1863 = vshrl.u32 %v1862, 7
  %v1864 = vsub.s32 %v1821, %v1863
  %v1865 = vrot.slane %v1468, %v1864
  %v1866 = vlaneseq
  %v1867 = vshrl.u32 %v1866, 7
  %v1868 = vsub.s32 %v1821, %v1867
  %v1869 = vrot.slane %v1471, %v1868
  %v1870 = vlaneseq
  %v1871 = vshrl.u32 %v1870, 7
  %v1872 = vsub.s32 %v1821, %v1871
  %v1873 = vrot.slane %v1474, %v1872
  %v1874 = vlaneseq
  %v1875 = vshrl.u32 %v1874, 7
  %v1876 = vsub.s32 %v1821, %v1875
  %v1877 = vrot.slane %v1477, %v1876
  %v1878 = vlaneseq
  %v1879 = vshrl.u32 %v1878, 7
  %v1880 = vsub.s32 %v1821, %v1879
  %v1881 = vrot.slane %v1480, %v1880
  %v1882 = vlaneseq
  %v1883 = vshrl.u32 %v1882, 7
  %v1884 = vsub.s32 %v1821, %v1883
  %v1885 = vrot.slane %v1483, %v1884
  %v1886 = vlaneseq
  %v1887 = vshrl.u32 %v1886, 7
  %v1888 = vsub.s32 %v1821, %v1887
  %v1889 = vrot.slane %v1486, %v1888
  %v1890 = vlaneseq
  %v1891 = vshrl.u32 %v1890, 7
  %v1892 = vsub.s32 %v1821, %v1891
  %v1893 = vrot.slane %v1489, %v1892
  %v1894 = vlaneseq
  %v1895 = vshrl.u32 %v1894, 7
  %v1896 = vsub.s32 %v1821, %v1895
  %v1897 = vrot.slane %v1492, %v1896
  %v1898 = vlaneseq
  %v1899 = vshrl.u32 %v1898, 7
  %v1900 = vsub.s32 %v1821, %v1899
  %v1901 = vrot.slane %v1495, %v1900
  %v1902 = vlaneseq
  %v1903 = vshrl.u32 %v1902, 7
  %v1904 = vsub.s32 %v1821, %v1903
  %v1905 = vrot.slane %v1498, %v1904
  %v1906 = vlaneseq
  %v1907 = vshrl.u32 %v1906, 7
  %v1908 = vsub.s32 %v1821, %v1907
  %v1909 = vrot.slane %v1501, %v1908
  %v1910 = vlaneseq
  %v1911 = vshrl.u32 %v1910, 7
  %v1912 = vsub.s32 %v1821, %v1911
  %v1913 = vrot.slane %v1504, %v1912
  %v1914 = vlaneseq
  %v1915 = vshrl.u32 %v1914, 7
  %v1916 = vsub.s32 %v1821, %v1915
  %v1917 = vrot.slane %v1507, %v1916
  %v1918 = vlaneseq
  %v1919 = vshrl.u32 %v1918, 7
  %v1920 = vsub.s32 %v1821, %v1919
  %v1921 = vrot.slane %v1510, %v1920
  %v1922 = vlaneseq
  %v1923 = vshrl.u32 %v1922, 7
  %v1924 = vsub.s32 %v1821, %v1923
  %v1925 = vrot.slane %v1513, %v1924
  %v1926 = vlaneseq
  %v1927 = vshrl.u32 %v1926, 7
  %v1928 = vsub.s32 %v1821, %v1927
  %v1929 = vrot.slane %v1516, %v1928
  %v1930 = vlaneseq
  %v1931 = vshrl.u32 %v1930, 7
  %v1932 = vsub.s32 %v1821, %v1931
  %v1933 = vrot.slane %v1519, %v1932
  %v1934 = vlaneseq
  %v1935 = vshrl.u32 %v1934, 7
  %v1936 = vsub.s32 %v1821, %v1935
  %v1937 = vrot.slane %v1522, %v1936
  %v1938 = vlaneseq
  %v1939 = vshrl.u32 %v1938, 7
  %v1940 = vsub.s32 %v1821, %v1939
  %v1941 = vrot.slane %v1525, %v1940
  %v1942 = vlaneseq
  %v1943 = vshrl.u32 %v1942, 7
  %v1944 = vsub.s32 %v1821, %v1943
  %v1945 = vrot.slane %v1528, %v1944
  %v1946 = vlaneseq
  %v1947 = vshrl.u32 %v1946, 7
  %v1948 = vsub.s32 %v1821, %v1947
  %v1949 = vrot.slane %v1531, %v1948
  %v1950 = vlaneseq
  %v1951 = vshrl.u32 %v1950, 7
  %v1952 = vsub.s32 %v1821, %v1951
  %v1953 = vrot.slane %v1534, %v1952
  %v1954 = vlaneseq
  %v1955 = vshrl.u32 %v1954, 7
  %v1956 = vsub.s32 %v1821, %v1955
  %v1957 = vrot.slane %v1537, %v1956
  %v1958 = vlaneseq
  %v1959 = vshrl.u32 %v1958, 7
  %v1960 = vsub.s32 %v1821, %v1959
  %v1961 = vrot.slane %v1540, %v1960
  %v1962 = vlaneseq
  %v1963 = vshrl.u32 %v1962, 7
  %v1964 = vsub.s32 %v1821, %v1963
  %v1965 = vrot.slane %v1543, %v1964
  %v1966 = vlaneseq
  %v1967 = vshrl.u32 %v1966, 7
  %v1968 = vsub.s32 %v1821, %v1967
  %v1969 = vrot.slane %v1546, %v1968
  %v1970 = vlaneseq
  %v1971 = vshrl.u32 %v1970, 7
  %v1972 = vsub.s32 %v1821, %v1971
  %v1973 = vrot.slane %v1549, %v1972
  %v1974 = vlaneseq
  %v1975 = vshrl.u32 %v1974, 7
  %v1976 = vsub.s32 %v1821, %v1975
  %v1977 = vrot.slane %v1552, %v1976
  %v1978 = vlaneseq
  %v1979 = vshrl.u32 %v1978, 7
  %v1980 = vsub.s32 %v1821, %v1979
  %v1981 = vrot.slane %v1555, %v1980
  %v1982 = vlaneseq
  %v1983 = vshrl.u32 %v1982, 7
  %v1984 = vsub.s32 %v1821, %v1983
  %v1985 = vrot.slane %v1558, %v1984
  %v1986 = vlaneseq
  %v1987 = vshrl.u32 %v1986, 7
  %v1988 = vsub.s32 %v1821, %v1987
  %v1989 = vrot.slane %v1561, %v1988
  %v1990 = vlaneseq
  %v1991 = vshrl.u32 %v1990, 7
  %v1992 = vsub.s32 %v1821, %v1991
  %v1993 = vrot.slane %v1564, %v1992
  %v1994 = vlaneseq
  %v1995 = vshrl.u32 %v1994, 7
  %v1996 = vsub.s32 %v1821, %v1995
  %v1997 = vrot.slane %v1567, %v1996
  %v1998 = vlaneseq
  %v1999 = vshrl.u32 %v1998, 7
  %v2000 = vsub.s32 %v1821, %v1999
  %v2001 = vrot.slane %v1570, %v2000
  %v2002 = vlaneseq
  %v2003 = vshrl.u32 %v2002, 7
  %v2004 = vsub.s32 %v1821, %v2003
  %v2005 = vrot.slane %v1573, %v2004
  %v2006 = vlaneseq
  %v2007 = vshrl.u32 %v2006, 7
  %v2008 = vsub.s32 %v1821, %v2007
  %v2009 = vrot.slane %v1576, %v2008
  %v2010 = vlaneseq
  %v2011 = vshrl.u32 %v2010, 7
  %v2012 = vsub.s32 %v1821, %v2011
  %v2013 = vrot.slane %v1579, %v2012
  %v2014 = vlaneseq
  %v2015 = vshrl.u32 %v2014, 7
  %v2016 = vsub.s32 %v1821, %v2015
  %v2017 = vrot.slane %v1582, %v2016
  %v2018 = vlaneseq
  %v2019 = vshrl.u32 %v2018, 7
  %v2020 = vsub.s32 %v1821, %v2019
  %v2021 = vrot.slane %v1585, %v2020
  %v2022 = vlaneseq
  %v2023 = vshrl.u32 %v2022, 7
  %v2024 = vsub.s32 %v1821, %v2023
  %v2025 = vrot.slane %v1588, %v2024
  %v2026 = vlaneseq
  %v2027 = vshrl.u32 %v2026, 7
  %v2028 = vsub.s32 %v1821, %v2027
  %v2029 = vrot.slane %v1591, %v2028
  %v2030 = vlaneseq
  %v2031 = vshrl.u32 %v2030, 7
  %v2032 = vsub.s32 %v1821, %v2031
  %v2033 = vrot.slane %v1594, %v2032
  %v2034 = vlaneseq
  %v2035 = vshrl.u32 %v2034, 7
  %v2036 = vsub.s32 %v1821, %v2035
  %v2037 = vrot.slane %v1597, %v2036
  %v2038 = vlaneseq
  %v2039 = vshrl.u32 %v2038, 7
  %v2040 = vsub.s32 %v1821, %v2039
  %v2041 = vrot.slane %v1600, %v2040
  %v2042 = vlaneseq
  %v2043 = vshrl.u32 %v2042, 7
  %v2044 = vsub.s32 %v1821, %v2043
  %v2045 = vrot.slane %v1603, %v2044
  %v2046 = vlaneseq
  %v2047 = vshrl.u32 %v2046, 7
  %v2048 = vsub.s32 %v1821, %v2047
  %v2049 = vrot.slane %v1606, %v2048
  %v2050 = vlaneseq
  %v2051 = vshrl.u32 %v2050, 7
  %v2052 = vsub.s32 %v1821, %v2051
  %v2053 = vrot.slane %v1609, %v2052
  %v2054 = vlaneseq
  %v2055 = vshrl.u32 %v2054, 7
  %v2056 = vsub.s32 %v1821, %v2055
  %v2057 = vrot.slane %v1612, %v2056
  %v2058 = vlaneseq
  %v2059 = vshrl.u32 %v2058, 7
  %v2060 = vsub.s32 %v1821, %v2059
  %v2061 = vrot.slane %v1615, %v2060
  %v2062 = vlaneseq
  %v2063 = vshrl.u32 %v2062, 7
  %v2064 = vsub.s32 %v1821, %v2063
  %v2065 = vrot.slane %v1618, %v2064
  %v2066 = vlaneseq
  %v2067 = vshrl.u32 %v2066, 7
  %v2068 = vsub.s32 %v1821, %v2067
  %v2069 = vrot.slane %v1621, %v2068
  %v2070 = vlaneseq
  %v2071 = vshrl.u32 %v2070, 7
  %v2072 = vsub.s32 %v1821, %v2071
  %v2073 = vrot.slane %v1624, %v2072
  %v2074 = vlaneseq
  %v2075 = vshrl.u32 %v2074, 7
  %v2076 = vsub.s32 %v1821, %v2075
  %v2077 = vrot.slane %v1627, %v2076
  %v2078 = vlaneseq
  %v2079 = vshrl.u32 %v2078, 7
  %v2080 = vsub.s32 %v1821, %v2079
  %v2081 = vrot.slane %v1630, %v2080
  %v2082 = vlaneseq
  %v2083 = vshrl.u32 %v2082, 7
  %v2084 = vsub.s32 %v1821, %v2083
  %v2085 = vrot.slane %v1633, %v2084
  %v2086 = vlaneseq
  %v2087 = vshrl.u32 %v2086, 7
  %v2088 = vsub.s32 %v1821, %v2087
  %v2089 = vrot.slane %v1636, %v2088
  %v2090 = vlaneseq
  %v2091 = vshrl.u32 %v2090, 7
  %v2092 = vsub.s32 %v1821, %v2091
  %v2093 = vrot.slane %v1639, %v2092
  %v2094 = vlaneseq
  %v2095 = vshrl.u32 %v2094, 7
  %v2096 = vsub.s32 %v1821, %v2095
  %v2097 = vrot.slane %v1642, %v2096
  %v2098 = vlaneseq
  %v2099 = vshrl.u32 %v2098, 7
  %v2100 = vsub.s32 %v1821, %v2099
  %v2101 = vrot.slane %v1645, %v2100
  %v2102 = vlaneseq
  %v2103 = vshrl.u32 %v2102, 7
  %v2104 = vsub.s32 %v1821, %v2103
  %v2105 = vrot.slane %v1648, %v2104
  %v2106 = vlaneseq
  %v2107 = vshrl.u32 %v2106, 7
  %v2108 = vsub.s32 %v1821, %v2107
  %v2109 = vrot.slane %v1651, %v2108
  %v2110 = vlaneseq
  %v2111 = vshrl.u32 %v2110, 7
  %v2112 = vsub.s32 %v1821, %v2111
  %v2113 = vrot.slane %v1654, %v2112
  %v2114 = vlaneseq
  %v2115 = vshrl.u32 %v2114, 7
  %v2116 = vsub.s32 %v1821, %v2115
  %v2117 = vrot.slane %v1657, %v2116
  %v2118 = vlaneseq
  %v2119 = vshrl.u32 %v2118, 7
  %v2120 = vsub.s32 %v1821, %v2119
  %v2121 = vrot.slane %v1660, %v2120
  %v2122 = vlaneseq
  %v2123 = vshrl.u32 %v2122, 7
  %v2124 = vsub.s32 %v1821, %v2123
  %v2125 = vrot.slane %v1663, %v2124
  %v2126 = vlaneseq
  %v2127 = vshrl.u32 %v2126, 7
  %v2128 = vsub.s32 %v1821, %v2127
  %v2129 = vrot.slane %v1666, %v2128
  %v2130 = vlaneseq
  %v2131 = vshrl.u32 %v2130, 7
  %v2132 = vsub.s32 %v1821, %v2131
  %v2133 = vrot.slane %v1669, %v2132
  %v2134 = vlaneseq
  %v2135 = vshrl.u32 %v2134, 7
  %v2136 = vsub.s32 %v1821, %v2135
  %v2137 = vrot.slane %v1672, %v2136
  %v2138 = vlaneseq
  %v2139 = vshrl.u32 %v2138, 7
  %v2140 = vsub.s32 %v1821, %v2139
  %v2141 = vrot.slane %v1675, %v2140
  %v2142 = vlaneseq
  %v2143 = vshrl.u32 %v2142, 7
  %v2144 = vsub.s32 %v1821, %v2143
  %v2145 = vrot.slane %v1678, %v2144
  %v2146 = vlaneseq
  %v2147 = vshrl.u32 %v2146, 7
  %v2148 = vsub.s32 %v1821, %v2147
  %v2149 = vrot.slane %v1681, %v2148
  %v2150 = vlaneseq
  %v2151 = vshrl.u32 %v2150, 7
  %v2152 = vsub.s32 %v1821, %v2151
  %v2153 = vrot.slane %v1684, %v2152
  %v2154 = vlaneseq
  %v2155 = vshrl.u32 %v2154, 7
  %v2156 = vsub.s32 %v1821, %v2155
  %v2157 = vrot.slane %v1687, %v2156
  %v2158 = vlaneseq
  %v2159 = vshrl.u32 %v2158, 7
  %v2160 = vsub.s32 %v1821, %v2159
  %v2161 = vrot.slane %v1690, %v2160
  %v2162 = vlaneseq
  %v2163 = vshrl.u32 %v2162, 7
  %v2164 = vsub.s32 %v1821, %v2163
  %v2165 = vrot.slane %v1693, %v2164
  %v2166 = vlaneseq
  %v2167 = vshrl.u32 %v2166, 7
  %v2168 = vsub.s32 %v1821, %v2167
  %v2169 = vrot.slane %v1696, %v2168
  %v2170 = vlaneseq
  %v2171 = vshrl.u32 %v2170, 7
  %v2172 = vsub.s32 %v1821, %v2171
  %v2173 = vrot.slane %v1699, %v2172
  %v2174 = vlaneseq
  %v2175 = vshrl.u32 %v2174, 7
  %v2176 = vsub.s32 %v1821, %v2175
  %v2177 = vrot.slane %v1702, %v2176
  %v2178 = vlaneseq
  %v2179 = vshrl.u32 %v2178, 7
  %v2180 = vsub.s32 %v1821, %v2179
  %v2181 = vrot.slane %v1705, %v2180
  %v2182 = vlaneseq
  %v2183 = vshrl.u32 %v2182, 7
  %v2184 = vsub.s32 %v1821, %v2183
  %v2185 = vrot.slane %v1708, %v2184
  %v2186 = vlaneseq
  %v2187 = vshrl.u32 %v2186, 7
  %v2188 = vsub.s32 %v1821, %v2187
  %v2189 = vrot.slane %v1711, %v2188
  %v2190 = vlaneseq
  %v2191 = vshrl.u32 %v2190, 7
  %v2192 = vsub.s32 %v1821, %v2191
  %v2193 = vrot.slane %v1714, %v2192
  %v2194 = vlaneseq
  %v2195 = vshrl.u32 %v2194, 7
  %v2196 = vsub.s32 %v1821, %v2195
  %v2197 = vrot.slane %v1717, %v2196
  %v2198 = vlaneseq
  %v2199 = vshrl.u32 %v2198, 7
  %v2200 = vsub.s32 %v1821, %v2199
  %v2201 = vrot.slane %v1720, %v2200
  %v2202 = vlaneseq
  %v2203 = vshrl.u32 %v2202, 7
  %v2204 = vsub.s32 %v1821, %v2203
  %v2205 = vrot.slane %v1723, %v2204
  %v2206 = vlaneseq
  %v2207 = vshrl.u32 %v2206, 7
  %v2208 = vsub.s32 %v1821, %v2207
  %v2209 = vrot.slane %v1726, %v2208
  %v2210 = vlaneseq
  %v2211 = vshrl.u32 %v2210, 7
  %v2212 = vsub.s32 %v1821, %v2211
  %v2213 = vrot.slane %v1729, %v2212
  %v2214 = vlaneseq
  %v2215 = vshrl.u32 %v2214, 7
  %v2216 = vsub.s32 %v1821, %v2215
  %v2217 = vrot.slane %v1732, %v2216
  %v2218 = vlaneseq
  %v2219 = vshrl.u32 %v2218, 7
  %v2220 = vsub.s32 %v1821, %v2219
  %v2221 = vrot.slane %v1735, %v2220
  %v2222 = vlaneseq
  %v2223 = vshrl.u32 %v2222, 7
  %v2224 = vsub.s32 %v1821, %v2223
  %v2225 = vrot.slane %v1738, %v2224
  %v2226 = vlaneseq
  %v2227 = vshrl.u32 %v2226, 7
  %v2228 = vsub.s32 %v1821, %v2227
  %v2229 = vrot.slane %v1741, %v2228
  %v2230 = vlaneseq
  %v2231 = vshrl.u32 %v2230, 7
  %v2232 = vsub.s32 %v1821, %v2231
  %v2233 = vrot.slane %v1744, %v2232
  %v2234 = vlaneseq
  %v2235 = vshrl.u32 %v2234, 7
  %v2236 = vsub.s32 %v1821, %v2235
  %v2237 = vrot.slane %v1747, %v2236
  %v2238 = vlaneseq
  %v2239 = vshrl.u32 %v2238, 7
  %v2240 = vsub.s32 %v1821, %v2239
  %v2241 = vrot.slane %v1750, %v2240
  %v2242 = vlaneseq
  %v2243 = vshrl.u32 %v2242, 7
  %v2244 = vsub.s32 %v1821, %v2243
  %v2245 = vrot.slane %v1753, %v2244
  %v2246 = vlaneseq
  %v2247 = vshrl.u32 %v2246, 7
  %v2248 = vsub.s32 %v1821, %v2247
  %v2249 = vrot.slane %v1756, %v2248
  %v2250 = vlaneseq
  %v2251 = vshrl.u32 %v2250, 7
  %v2252 = vsub.s32 %v1821, %v2251
  %v2253 = vrot.slane %v1759, %v2252
  %v2254 = vlaneseq
  %v2255 = vshrl.u32 %v2254, 7
  %v2256 = vsub.s32 %v1821, %v2255
  %v2257 = vrot.slane %v1762, %v2256
  %v2258 = vlaneseq
  %v2259 = vshrl.u32 %v2258, 7
  %v2260 = vsub.s32 %v1821, %v2259
  %v2261 = vrot.slane %v1765, %v2260
  %v2262 = vlaneseq
  %v2263 = vshrl.u32 %v2262, 7
  %v2264 = vsub.s32 %v1821, %v2263
  %v2265 = vrot.slane %v1768, %v2264
  %v2266 = vlaneseq
  %v2267 = vshrl.u32 %v2266, 7
  %v2268 = vsub.s32 %v1821, %v2267
  %v2269 = vrot.slane %v1771, %v2268
  %v2270 = vlaneseq
  %v2271 = vshrl.u32 %v2270, 7
  %v2272 = vsub.s32 %v1821, %v2271
  %v2273 = vrot.slane %v1774, %v2272
  %v2274 = vlaneseq
  %v2275 = vshrl.u32 %v2274, 7
  %v2276 = vsub.s32 %v1821, %v2275
  %v2277 = vrot.slane %v1777, %v2276
  %v2278 = vlaneseq
  %v2279 = vshrl.u32 %v2278, 7
  %v2280 = vsub.s32 %v1821, %v2279
  %v2281 = vrot.slane %v1780, %v2280
  %v2282 = vlaneseq
  %v2283 = vshrl.u32 %v2282, 7
  %v2284 = vsub.s32 %v1821, %v2283
  %v2285 = vrot.slane %v1783, %v2284
  %v2286 = vlaneseq
  %v2287 = vshrl.u32 %v2286, 7
  %v2288 = vsub.s32 %v1821, %v2287
  %v2289 = vrot.slane %v1786, %v2288
  %v2290 = vlaneseq
  %v2291 = vshrl.u32 %v2290, 7
  %v2292 = vsub.s32 %v1821, %v2291
  %v2293 = vrot.slane %v1789, %v2292
  %v2294 = vlaneseq
  %v2295 = vshrl.u32 %v2294, 7
  %v2296 = vsub.s32 %v1821, %v2295
  %v2297 = vrot.slane %v1792, %v2296
  %v2298 = vlaneseq
  %v2299 = vshrl.u32 %v2298, 7
  %v2300 = vsub.s32 %v1821, %v2299
  %v2301 = vrot.slane %v1795, %v2300
  %v2302 = vlaneseq
  %v2303 = vshrl.u32 %v2302, 7
  %v2304 = vsub.s32 %v1821, %v2303
  %v2305 = vrot.slane %v1798, %v2304
  %v2306 = vlaneseq
  %v2307 = vshrl.u32 %v2306, 7
  %v2308 = vsub.s32 %v1821, %v2307
  %v2309 = vrot.slane %v1801, %v2308
  %v2310 = vlaneseq
  %v2311 = vshrl.u32 %v2310, 7
  %v2312 = vsub.s32 %v1821, %v2311
  %v2313 = vrot.slane %v1804, %v2312
  %v2314 = vlaneseq
  %v2315 = vshrl.u32 %v2314, 7
  %v2316 = vsub.s32 %v1821, %v2315
  %v2317 = vrot.slane %v1807, %v2316
  %v2318 = vlaneseq
  %v2319 = vshrl.u32 %v2318, 7
  %v2320 = vsub.s32 %v1821, %v2319
  %v2321 = vrot.slane %v1810, %v2320
  %v2322 = vlaneseq
  %v2323 = vshrl.u32 %v2322, 7
  %v2324 = vsub.s32 %v1821, %v2323
  %v2325 = vrot.slane %v1813, %v2324
  %v2326 = vlaneseq
  %v2327 = vshrl.u32 %v2326, 7
  %v2328 = vsub.s32 %v1821, %v2327
  %v2329 = vrot.slane %v1816, %v2328
  %v2330 = vlaneseq
  %v2331 = vshrl.u32 %v2330, 7
  %v2332 = vsub.s32 %v1821, %v2331
  %v2333 = vrot.slane %v1819, %v2332
  %vm2334 = vcmask 1041409
  %v2335 = vsel %vm2334, %v1829, %v1825
  %vm2336 = vcmask 1042434
  %v2337 = vsel %vm2336, %v1833, %v2335
  %vm2338 = vcmask 1043459
  %v2339 = vsel %vm2338, %v1837, %v2337
  %vm2340 = vcmask 1044484
  %v2341 = vsel %vm2340, %v1841, %v2339
  %vm2342 = vcmask 1045509
  %v2343 = vsel %vm2342, %v1845, %v2341
  %vm2344 = vcmask 1046534
  %v2345 = vsel %vm2344, %v1849, %v2343
  %vm2346 = vcmask 1047559
  %v2347 = vsel %vm2346, %v1853, %v2345
  %v2348 = vsel %vm2334, %v1861, %v1857
  %v2349 = vsel %vm2336, %v1865, %v2348
  %v2350 = vsel %vm2338, %v1869, %v2349
  %v2351 = vsel %vm2340, %v1873, %v2350
  %v2352 = vsel %vm2342, %v1877, %v2351
  %v2353 = vsel %vm2344, %v1881, %v2352
  %v2354 = vsel %vm2346, %v1885, %v2353
  %v2355 = vsel %vm2334, %v1893, %v1889
  %v2356 = vsel %vm2336, %v1897, %v2355
  %v2357 = vsel %vm2338, %v1901, %v2356
  %v2358 = vsel %vm2340, %v1905, %v2357
  %v2359 = vsel %vm2342, %v1909, %v2358
  %v2360 = vsel %vm2344, %v1913, %v2359
  %v2361 = vsel %vm2346, %v1917, %v2360
  %v2362 = vsel %vm2334, %v1925, %v1921
  %v2363 = vsel %vm2336, %v1929, %v2362
  %v2364 = vsel %vm2338, %v1933, %v2363
  %v2365 = vsel %vm2340, %v1937, %v2364
  %v2366 = vsel %vm2342, %v1941, %v2365
  %v2367 = vsel %vm2344, %v1945, %v2366
  %v2368 = vsel %vm2346, %v1949, %v2367
  %v2369 = vsel %vm2334, %v1957, %v1953
  %v2370 = vsel %vm2336, %v1961, %v2369
  %v2371 = vsel %vm2338, %v1965, %v2370
  %v2372 = vsel %vm2340, %v1969, %v2371
  %v2373 = vsel %vm2342, %v1973, %v2372
  %v2374 = vsel %vm2344, %v1977, %v2373
  %v2375 = vsel %vm2346, %v1981, %v2374
  %v2376 = vsel %vm2334, %v1989, %v1985
  %v2377 = vsel %vm2336, %v1993, %v2376
  %v2378 = vsel %vm2338, %v1997, %v2377
  %v2379 = vsel %vm2340, %v2001, %v2378
  %v2380 = vsel %vm2342, %v2005, %v2379
  %v2381 = vsel %vm2344, %v2009, %v2380
  %v2382 = vsel %vm2346, %v2013, %v2381
  %v2383 = vsel %vm2334, %v2021, %v2017
  %v2384 = vsel %vm2336, %v2025, %v2383
  %v2385 = vsel %vm2338, %v2029, %v2384
  %v2386 = vsel %vm2340, %v2033, %v2385
  %v2387 = vsel %vm2342, %v2037, %v2386
  %v2388 = vsel %vm2344, %v2041, %v2387
  %v2389 = vsel %vm2346, %v2045, %v2388
  %v2390 = vsel %vm2334, %v2053, %v2049
  %v2391 = vsel %vm2336, %v2057, %v2390
  %v2392 = vsel %vm2338, %v2061, %v2391
  %v2393 = vsel %vm2340, %v2065, %v2392
  %v2394 = vsel %vm2342, %v2069, %v2393
  %v2395 = vsel %vm2344, %v2073, %v2394
  %v2396 = vsel %vm2346, %v2077, %v2395
  %v2397 = vsel %vm2334, %v2085, %v2081
  %v2398 = vsel %vm2336, %v2089, %v2397
  %v2399 = vsel %vm2338, %v2093, %v2398
  %v2400 = vsel %vm2340, %v2097, %v2399
  %v2401 = vsel %vm2342, %v2101, %v2400
  %v2402 = vsel %vm2344, %v2105, %v2401
  %v2403 = vsel %vm2346, %v2109, %v2402
  %v2404 = vsel %vm2334, %v2117, %v2113
  %v2405 = vsel %vm2336, %v2121, %v2404
  %v2406 = vsel %vm2338, %v2125, %v2405
  %v2407 = vsel %vm2340, %v2129, %v2406
  %v2408 = vsel %vm2342, %v2133, %v2407
  %v2409 = vsel %vm2344, %v2137, %v2408
  %v2410 = vsel %vm2346, %v2141, %v2409
  %v2411 = vsel %vm2334, %v2149, %v2145
  %v2412 = vsel %vm2336, %v2153, %v2411
  %v2413 = vsel %vm2338, %v2157, %v2412
  %v2414 = vsel %vm2340, %v2161, %v2413
  %v2415 = vsel %vm2342, %v2165, %v2414
  %v2416 = vsel %vm2344, %v2169, %v2415
  %v2417 = vsel %vm2346, %v2173, %v2416
  %v2418 = vsel %vm2334, %v2181, %v2177
  %v2419 = vsel %vm2336, %v2185, %v2418
  %v2420 = vsel %vm2338, %v2189, %v2419
  %v2421 = vsel %vm2340, %v2193, %v2420
  %v2422 = vsel %vm2342, %v2197, %v2421
  %v2423 = vsel %vm2344, %v2201, %v2422
  %v2424 = vsel %vm2346, %v2205, %v2423
  %v2425 = vsel %vm2334, %v2213, %v2209
  %v2426 = vsel %vm2336, %v2217, %v2425
  %v2427 = vsel %vm2338, %v2221, %v2426
  %v2428 = vsel %vm2340, %v2225, %v2427
  %v2429 = vsel %vm2342, %v2229, %v2428
  %v2430 = vsel %vm2344, %v2233, %v2429
  %v2431 = vsel %vm2346, %v2237, %v2430
  %v2432 = vsel %vm2334, %v2245, %v2241
  %v2433 = vsel %vm2336, %v2249, %v2432
  %v2434 = vsel %vm2338, %v2253, %v2433
  %v2435 = vsel %vm2340, %v2257, %v2434
  %v2436 = vsel %vm2342, %v2261, %v2435
  %v2437 = vsel %vm2344, %v2265, %v2436
  %v2438 = vsel %vm2346, %v2269, %v2437
  %v2439 = vsel %vm2334, %v2277, %v2273
  %v2440 = vsel %vm2336, %v2281, %v2439
  %v2441 = vsel %vm2338, %v2285, %v2440
  %v2442 = vsel %vm2340, %v2289, %v2441
  %v2443 = vsel %vm2342, %v2293, %v2442
  %v2444 = vsel %vm2344, %v2297, %v2443
  %v2445 = vsel %vm2346, %v2301, %v2444
  %v2446 = vsel %vm2334, %v2309, %v2305
  %v2447 = vsel %vm2336, %v2313, %v2446
  %v2448 = vsel %vm2338, %v2317, %v2447
  %v2449 = vsel %vm2340, %v2321, %v2448
  %v2450 = vsel %vm2342, %v2325, %v2449
  %v2451 = vsel %vm2344, %v2329, %v2450
  %v2452 = vsel %vm2346, %v2333, %v2451
  %2469 = vmatprep.subr.mxu0 0.0
  %2470 = vmatpush1.msra.mxu0 %v2452
  %2471 = vmatprep.subr.mxu0 0.0
  %2472 = vmatpush1.msra.mxu0 %v2445
  %2473 = vmatprep.subr.mxu0 0.0
  %2474 = vmatpush1.msra.mxu0 %v2438
  %2475 = vmatprep.subr.mxu0 0.0
  %2476 = vmatpush1.msra.mxu0 %v2431
  %2477 = vmatprep.subr.mxu0 0.0
  %2478 = vmatpush1.msra.mxu0 %v2424
  %2479 = vmatprep.subr.mxu0 0.0
  %2480 = vmatpush1.msra.mxu0 %v2417
  %2481 = vmatprep.subr.mxu0 0.0
  %2482 = vmatpush1.msra.mxu0 %v2410
  %2483 = vmatprep.subr.mxu0 0.0
  %2484 = vmatpush1.msra.mxu0 %v2403
  %2485 = vmatprep.subr.mxu0 0.0
  %2486 = vmatpush1.msra.mxu0 %v2396
  %2487 = vmatprep.subr.mxu0 0.0
  %2488 = vmatpush1.msra.mxu0 %v2389
  %2489 = vmatprep.subr.mxu0 0.0
  %2490 = vmatpush1.msra.mxu0 %v2382
  %2491 = vmatprep.subr.mxu0 0.0
  %2492 = vmatpush1.msra.mxu0 %v2375
  %2493 = vmatprep.subr.mxu0 0.0
  %2494 = vmatpush1.msra.mxu0 %v2368
  %2495 = vmatprep.subr.mxu0 0.0
  %2496 = vmatpush1.msra.mxu0 %v2361
  %2497 = vmatprep.subr.mxu0 0.0
  %2498 = vmatpush1.msra.mxu0 %v2354
  %2499 = vmatprep.subr.mxu0 0.0
  %2500 = vmatpush1.msra.mxu0 %v2347
  %2501 = vmatprep.subr.mxu0 0.0
  %2502 = vmatpush2.msra.mxu0 0.0
  %2503 = vmatprep.subr.mxu0 0.0
  %2504 = vmatpush2.msra.mxu0 0.0
  %2505 = vmatprep.subr.mxu0 0.0
  %2506 = vmatpush2.msra.mxu0 0.0
  %2507 = vmatprep.subr.mxu0 0.0
  %2508 = vmatpush2.msra.mxu0 0.0
  %2509 = vmatprep.subr.mxu0 0.0
  %2510 = vmatpush2.msra.mxu0 0.0
  %2511 = vmatprep.subr.mxu0 0.0
  %2512 = vmatpush2.msra.mxu0 0.0
  %2513 = vmatprep.subr.mxu0 0.0
  %2514 = vmatpush2.msra.mxu0 0.0
  %2515 = vmatprep.subr.mxu0 0.0
  %2516 = vmatpush2.msra.mxu0 0.0
  %2517 = vmatprep.subr.mxu0 0.0
  %2518 = vmatpush2.msra.mxu0 0.0
  %2519 = vmatprep.subr.mxu0 0.0
  %2520 = vmatpush2.msra.mxu0 0.0
  %2521 = vmatprep.subr.mxu0 0.0
  %2522 = vmatpush2.msra.mxu0 0.0
  %2523 = vmatprep.subr.mxu0 0.0
  %2524 = vmatpush2.msra.mxu0 0.0
  %2525 = vmatprep.subr.mxu0 0.0
  %2526 = vmatpush2.msra.mxu0 0.0
  %2527 = vmatprep.subr.mxu0 0.0
  %2528 = vmatpush2.msra.mxu0 0.0
  %2529 = vmatprep.subr.mxu0 0.0
  %2530 = vmatpush2.msra.mxu0 0.0
  %2531 = vmatprep.subr.mxu0 0.0
  %2532 = vmatpush2.msra.mxu0 0.0
  %2533 = vmatprep.mubr.f32.mxu0 0.0
  %2534 = vmatmul.mubr.f32.gmra.mxu0 %v398
  %v2535 = vpop.f32.mrf.mxu0
  %v2536 = vadd.f32 %v405, %v2535
  %v2537 = vpop.f32.mrf.mxu0
  %2538 = vmatprep.mubr.f32.mxu0 0.0
  %2539 = vmatmul.mubr.f32.gmra.mxu0 %v399
  %v2540 = vpop.f32.mrf.mxu0
  %v2541 = vadd.f32 %v410, %v2540
  %v2542 = vpop.f32.mrf.mxu0
  %2543 = vdwg.mxu0
  %vm2544 = vcmask 15360
  %2545 = vst.msk [vmem:[%s3] sm:$0xff] %vm2544, %v2536
  %vm2546 = vcmask 9216
  %2547 = vst.msk [vmem:[%s3 + $0x8] sm:$0x3] %vm2546, %v2541
  // Predicated region
  $region14: #{_lambda_.41} parent=0 // pred_check
    _
  $region15: #{_lambda_.41} parent=0 // pred_check_branch
    %2549 = sbr.rel (0) target = $region17
  $region16: #{_lambda_.41} parent=0 // pred_region
    _
  $region17: #{_lambda_.41} parent=0 // pred_fallthru
    _
  // Predicated region
  $region18: #{_lambda_.41} parent=0 // pred_check
    _
  $region19: #{_lambda_.41} parent=0 // pred_check_branch
    %2551 = sbr.rel (0) target = $region21
  $region20: #{_lambda_.41} parent=0 // pred_region
    _
  $region21: #{_lambda_.41} parent=0 // pred_fallthru
    _

</llo_original>
